<compile_context>
chip_gen: v7x
topology: tpu7x:2x2x1
jax: 0.10.0
libtpu: 0.0.40
codegen_flags: <defaults>
</compile_context>

<pallas_src>
import functools

import jax
import jax.numpy as jnp
from jax.experimental import pallas as pl
from jax.experimental.pallas import tpu as pltpu

_NEG_INF = -1e30


# ---------------------------------------------------------------------------
# in-kernel helpers
# ---------------------------------------------------------------------------
def _lstm_cell_from_gates(gates, c, Hp):
    """PyTorch LSTM gate order (i, f, g, o); gate blocks are Hp(=128)-lane aligned."""
    i = jax.nn.sigmoid(gates[:, 0:Hp])
    f = jax.nn.sigmoid(gates[:, Hp:2 * Hp])
    g = jnp.tanh(gates[:, 2 * Hp:3 * Hp])
    o = jax.nn.sigmoid(gates[:, 3 * Hp:4 * Hp])
    c_new = f * c + i * g
    h_new = o * jnp.tanh(c_new)
    return h_new, c_new


def _l2_normalize(x):
    # F.normalize(x, 2, -1): x / max(||x||, 1e-12)  ==  x * rsqrt(max(ss, 1e-24))
    ss = jnp.sum(x * x, axis=-1, keepdims=True)
    return x * jax.lax.rsqrt(jnp.maximum(ss, 1e-24))


# ---------------------------------------------------------------------------
# Fused encoder + decoder kernel (single invocation, no grid)
# ---------------------------------------------------------------------------
def autos_kernel(gx_ref,                      # [Tenc, Bp, 4Hp] f32  embed@W_ih + b (hoisted)
                 ewhh_ref,                    # [Hp, 4Hp]       bf16 encoder W_hh^T
                 mlp_w_ref, mlp_b_ref,        # [Hp, Hp] f32, [1, Hp] f32
                 reg_w_ref, reg_b_ref,        # [Hp, 128] f32, [1, 128] f32
                 dec_w_ref,                   # [Vp+Hp, 4Hp]    bf16 [dec_emb@W_ih+b ; W_hh^T]
                 att_w_ref, att_b_ref,        # [2Hp, Hp] bf16, [1, Hp] f32
                 out_w_ref, out_b_ref,        # [Hp, Vp] bf16, [1, Vp] f32 (pad cols = -1e30)
                 pv_ref,                      # out: [Bp, 128] f32 (col 0 = predict_value)
                 logp_ref):                   # out: [Tdec, Bp, Vp] f32 log-probs
    Tenc = gx_ref.shape[0]
    Tdec = logp_ref.shape[0]
    Bp = gx_ref.shape[1]
    Hp = ewhh_ref.shape[0]
    Vp = out_w_ref.shape[1]

    # ------------------------- encoder ------------------------------------
    w_hh_enc = ewhh_ref[...]                                  # bf16, loop-invariant

    h = jnp.zeros((Bp, Hp), jnp.float32)
    c = jnp.zeros((Bp, Hp), jnp.float32)
    acc = jnp.zeros((Bp, Hp), jnp.float32)
    enc_outs = []                                             # live in vregs, no scratch
    for t in range(Tenc):                                     # fully unrolled
        gates = gx_ref[t] + jnp.dot(h.astype(jnp.bfloat16), w_hh_enc,
                                    preferred_element_type=jnp.float32)
        h, c = _lstm_cell_from_gates(gates, c, Hp)
        h_n = _l2_normalize(h)                                # F.normalize(out, 2, -1)
        enc_outs.append(h_n)
        acc = acc + h_n

    # feat_emb = F.normalize(mean_over_time, 2, dim=-1)
    arch = _l2_normalize(acc * (1.0 / Tenc))                  # [Bp, Hp]

    # predictor: Linear+ReLU -> Linear(H,1) -> sigmoid  (runs once; f32 is fine)
    hid = jnp.maximum(
        jnp.dot(arch, mlp_w_ref[...], preferred_element_type=jnp.float32) + mlp_b_ref[...],
        0.0)
    pv_ref[...] = jax.nn.sigmoid(
        jnp.dot(hid, reg_w_ref[...], preferred_element_type=jnp.float32) + reg_b_ref[...])

    # ------------------------- decoder ------------------------------------
    dec_w = dec_w_ref[...]                                    # bf16 [Vp+Hp, 4Hp]
    att_w = att_w_ref[...]                                    # bf16 [2Hp, Hp]
    att_b = att_b_ref[...]
    out_w = out_w_ref[...]                                    # bf16 [Hp, Vp]
    out_b = out_b_ref[...]

    vocab_iota = jax.lax.broadcasted_iota(jnp.int32, (Bp, Vp), 1)
    onehot = (vocab_iota == 0).astype(jnp.bfloat16)           # SOS token id = 0

    # decoder_hidden = (feat_emb, feat_emb)
    h = arch
    c = arch

    for t in range(Tdec):                                     # fully unrolled
        # folded embedding+bias and recurrent projection in ONE fused MXU op
        lhs = jnp.concatenate([onehot, h.astype(jnp.bfloat16)], axis=-1)   # [Bp, Vp+Hp]
        gates = jnp.dot(lhs, dec_w, preferred_element_type=jnp.float32)    # [Bp, 4Hp]
        h, c = _lstm_cell_from_gates(gates, c, Hp)

        # dot-product attention over (normalized) encoder outputs, fully unrolled
        s = [jnp.sum(enc_outs[k] * h, axis=-1, keepdims=True) for k in range(Tenc)]
        m = s[0]
        for k in range(1, Tenc):
            m = jnp.maximum(m, s[k])
        e = [jnp.exp(s[k] - m) for k in range(Tenc)]
        denom = e[0]
        for k in range(1, Tenc):
            denom = denom + e[k]
        inv = pl.reciprocal(denom, approx=True)               # EUP, off the VPU slots
        mix = (e[0] * inv) * enc_outs[0]
        for k in range(1, Tenc):
            mix = mix + (e[k] * inv) * enc_outs[k]            # [Bp, Hp]

        # fused attention projection: concat(mix, h) @ [W_mix ; W_h]
        att_lhs = jnp.concatenate([mix.astype(jnp.bfloat16), h.astype(jnp.bfloat16)],
                                  axis=-1)                     # [Bp, 2Hp]
        att_out = jnp.tanh(
            jnp.dot(att_lhs, att_w, preferred_element_type=jnp.float32) + att_b)

        # lane-dense (Vp) logits; padded vocab lanes carry -1e30 via out_b padding
        logits = (jnp.dot(att_out.astype(jnp.bfloat16), out_w,
                          preferred_element_type=jnp.float32) + out_b)     # [Bp, Vp]

        # greedy feedback from logits (keeps exp/sum/log off the recurrent chain)
        lm = jnp.max(logits, axis=-1, keepdims=True)
        cand = jnp.where(logits >= lm, vocab_iota, Vp)
        pred = jnp.min(cand, axis=-1)                          # first argmax index, [Bp]
        onehot = (vocab_iota == pred[:, None]).astype(jnp.bfloat16)

        # log_softmax written off the critical path
        lse = lm + jnp.log(jnp.sum(jnp.exp(logits - lm), axis=-1, keepdims=True))
        logp_ref[t] = logits - lse


# ---------------------------------------------------------------------------
# JAX wrapper (embedding/projection hoisting, gate/lane/batch padding, fusion)
# ---------------------------------------------------------------------------
_VMEM = pl.BlockSpec(memory_space=pltpu.MemorySpace.VMEM)


def _round_up(x, m):
    return ((x + m - 1) // m) * m


def _pad_gate_cols(w, H, Hp):
    """[..., 4H] -> [..., 4Hp]: each of the 4 LSTM gate blocks zero-padded to Hp lanes."""
    lead = w.shape[:-1]
    w = w.reshape(lead + (4, H))
    w = jnp.pad(w, [(0, 0)] * len(lead) + [(0, 0), (0, Hp - H)])
    return w.reshape(lead + (4 * Hp,))


@functools.partial(jax.jit, static_argnames=("t_dec",))
def autos_forward(params, input_variable, t_dec=8):
    B, T = input_variable.shape
    H = params["enc_w_hh_t"].shape[0]
    V = params["dec_emb"].shape[0]
    Hp = _round_up(max(H, 128), 128)                       # gate blocks lane-aligned
    Vp = _round_up(max(V, 128), 128)                       # lane-dense vocab
    Bp = _round_up(max(B, 8), 8)                           # sublane-aligned batch
    hi = jax.lax.Precision.HIGHEST

    # Encoder: fold embedding lookup + input projection + bias out of the recurrence.
    enc_rows = jnp.dot(params["enc_emb"], params["enc_w_ih_t"], precision=hi) + params["enc_b"]
    gx = jnp.take(enc_rows, input_variable, axis=0)                      # [B, T, 4H]
    gx = jnp.transpose(gx, (1, 0, 2)).astype(jnp.float32)                # [T, B, 4H]
    gx = _pad_gate_cols(gx, H, Hp)                                       # [T, B, 4Hp]
    gx = jnp.pad(gx, ((0, 0), (0, Bp - B), (0, 0)))                      # [T, Bp, 4Hp]

    # Encoder recurrent weight: gate-pad columns, pad rows, bf16 for one-pass MXU.
    ewhh = _pad_gate_cols(params["enc_w_hh_t"], H, Hp)
    ewhh = jnp.pad(ewhh, ((0, Hp - H), (0, 0))).astype(jnp.bfloat16)     # [Hp, 4Hp]

    # Predictor MLP / regressor (run once; keep f32; regressor lane-padded to 128).
    mlp_w = jnp.pad(params["mlp_w_t"], ((0, Hp - H), (0, Hp - H)))
    mlp_b = jnp.pad(params["mlp_b"], ((0, 0), (0, Hp - H)))
    reg_w = jnp.pad(params["reg_w_t"], ((0, Hp - H), (0, 127)))          # [Hp, 128]
    reg_b = jnp.pad(params["reg_b"], ((0, 0), (0, 127)))                 # [1, 128]

    # Decoder: fold embedding + input projection + bias into a table, fuse with W_hh.
    dec_rows = jnp.dot(params["dec_emb"], params["dec_w_ih_t"], precision=hi) + params["dec_b"]
    dec_rows = _pad_gate_cols(dec_rows, H, Hp)                           # [V, 4Hp]
    dec_rows = jnp.pad(dec_rows, ((0, Vp - V), (0, 0)))                  # [Vp, 4Hp]
    dwhh = _pad_gate_cols(params["dec_w_hh_t"], H, Hp)
    dwhh = jnp.pad(dwhh, ((0, Hp - H), (0, 0)))                          # [Hp, 4Hp]
    dec_w = jnp.concatenate([dec_rows, dwhh], axis=0).astype(jnp.bfloat16)   # [Vp+Hp, 4Hp]

    # Attention weight kept fused in cat(mix, h) order, padded per half.
    att_wm = jnp.pad(params["att_w_t"][:H, :], ((0, Hp - H), (0, Hp - H)))
    att_wh = jnp.pad(params["att_w_t"][H:, :], ((0, Hp - H), (0, Hp - H)))
    att_w = jnp.concatenate([att_wm, att_wh], axis=0).astype(jnp.bfloat16)   # [2Hp, Hp]
    att_b = jnp.pad(params["att_b"], ((0, 0), (0, Hp - H)))

    # Lane-dense output head; padded vocab biases = -1e30 keep softmax/argmax exact.
    out_w = jnp.pad(params["out_w_t"], ((0, Hp - H), (0, Vp - V))).astype(jnp.bfloat16)
    out_b = jnp.pad(params["out_b"], ((0, 0), (0, Vp - V)), constant_values=_NEG_INF)

    pv, logp_tbv = pl.pallas_call(
        autos_kernel,
        out_shape=(jax.ShapeDtypeStruct((Bp, 128), jnp.float32),          # predict_value slab
                   jax.ShapeDtypeStruct((t_dec, Bp, Vp), jnp.float32)),   # log-probs [T,Bp,Vp]
        in_specs=[_VMEM] * 11,
        out_specs=(_VMEM, _VMEM),
    )(gx, ewhh, mlp_w, mlp_b, reg_w, reg_b, dec_w, att_w, att_b, out_w, out_b)

    predict_value = pv[:B, :1]                                             # [B, 1]
    decoder_outputs = jnp.transpose(logp_tbv, (1, 0, 2))[:B, :, :V]        # [B, Tdec, V]
    # Token sequence recomputed by argmax (identical to in-kernel greedy feedback).
    feat = jnp.argmax(decoder_outputs, axis=-1).astype(jnp.int32)[..., None]  # [B, Tdec, 1]
    return predict_value, decoder_outputs, feat


# ---------------------------------------------------------------------------
# Deterministic parameter construction (shapes implied by the module)
# ---------------------------------------------------------------------------
def init_params(key, vocab, emb, hidden):
    ks = jax.random.split(key, 16)
    bound = 1.0 / (hidden ** 0.5)
    u = lambda kk, shape: jax.random.uniform(kk, shape, jnp.float32, -bound, bound)
    return dict(
        enc_emb=0.1 * jax.random.normal(ks[0], (vocab, emb), jnp.float32),
        enc_w_ih_t=u(ks[1], (emb, 4 * hidden)),
        enc_w_hh_t=u(ks[2], (hidden, 4 * hidden)),
        enc_b=u(ks[3], (1, 4 * hidden)),
        mlp_w_t=u(ks[4], (hidden, hidden)),
        mlp_b=u(ks[5], (1, hidden)),
        reg_w_t=u(ks[6], (hidden, 1)),
        reg_b=u(ks[7], (1, 1)),
        dec_emb=0.1 * jax.random.normal(ks[8], (vocab, emb), jnp.float32),
        dec_w_ih_t=u(ks[9], (emb, 4 * hidden)),
        dec_w_hh_t=u(ks[10], (hidden, 4 * hidden)),
        dec_b=u(ks[11], (1, 4 * hidden)),
        att_w_t=u(ks[12], (2 * hidden, hidden)),
        att_b=u(ks[13], (1, hidden)),
        out_w_t=u(ks[14], (hidden, vocab)),
        out_b=u(ks[15], (1, vocab)),
    )


if __name__ == "__main__":
    B, T_ENC, T_DEC = 2, 8, 8
    VOCAB, EMB, HIDDEN = 16, 32, 32

    key = jax.random.PRNGKey(0)
    pkey, dkey = jax.random.split(key)
    params = init_params(pkey, VOCAB, EMB, HIDDEN)
    input_variable = jax.random.randint(dkey, (B, T_ENC), 0, VOCAB, dtype=jnp.int32)

    predict_value, decoder_outputs, feat = autos_forward(params, input_variable, t_dec=T_DEC)
    jax.block_until_ready((predict_value, decoder_outputs, feat))

    assert predict_value.shape == (B, 1)
    assert decoder_outputs.shape == (B, T_DEC, VOCAB)
    assert feat.shape == (B, T_DEC, 1)
    assert bool(jnp.all(jnp.isfinite(predict_value)))
    assert bool(jnp.all(jnp.isfinite(decoder_outputs)))
    assert bool(jnp.all((feat >= 0) & (feat < VOCAB)))

    print("KERNEL_OK")
</pallas_src>

<mosaic_0001>
module attributes {stable_mosaic.version = 11 : i64} {
  func.func @autos_kernel(%arg0: memref<8x8x512xf32, #tpu.memory_space<vmem>>, %arg1: memref<128x512xbf16, #tpu.memory_space<vmem>>, %arg2: memref<128x128xf32, #tpu.memory_space<vmem>>, %arg3: memref<1x128xf32, #tpu.memory_space<vmem>>, %arg4: memref<128x128xf32, #tpu.memory_space<vmem>>, %arg5: memref<1x128xf32, #tpu.memory_space<vmem>>, %arg6: memref<256x512xbf16, #tpu.memory_space<vmem>>, %arg7: memref<256x128xbf16, #tpu.memory_space<vmem>>, %arg8: memref<1x128xf32, #tpu.memory_space<vmem>>, %arg9: memref<128x128xbf16, #tpu.memory_space<vmem>>, %arg10: memref<1x128xf32, #tpu.memory_space<vmem>>, %arg11: memref<8x128xf32, #tpu.memory_space<vmem>>, %arg12: memref<8x8x128xf32, #tpu.memory_space<vmem>>) attributes {dimension_semantics = [], scalar_prefetch = 0 : i64, scratch_operands = 0 : i64, tpu.core_type = #tpu.core_type<tc>} {
    %c0 = arith.constant 0 : index
    %c0_0 = arith.constant 0 : index
    %0 = vector.load %arg1[%c0, %c0_0] : memref<128x512xbf16, #tpu.memory_space<vmem>>, vector<128x512xbf16>
    %cst = arith.constant 0.000000e+00 : f32
    %1 = vector.broadcast %cst : f32 to vector<8x128xf32>
    %cst_1 = arith.constant 0.000000e+00 : f32
    %2 = vector.broadcast %cst_1 : f32 to vector<8x128xf32>
    %cst_2 = arith.constant 0.000000e+00 : f32
    %3 = vector.broadcast %cst_2 : f32 to vector<8x128xf32>
    %c0_3 = arith.constant 0 : index
    %c0_4 = arith.constant 0 : index
    %c0_5 = arith.constant 0 : index
    %4 = vector.load %arg0[%c0_3, %c0_4, %c0_5] : memref<8x8x512xf32, #tpu.memory_space<vmem>>, vector<1x8x512xf32>
    %5 = vector.shape_cast %4 : vector<1x8x512xf32> to vector<8x512xf32>
    %6 = arith.truncf %1 : vector<8x128xf32> to vector<8x128xbf16>
    %cst_6 = arith.constant dense<0.000000e+00> : vector<8x512xf32>
    %7 = tpu.matmul %6, %0, %cst_6 {dimension_numbers = #tpu.dot_dimension_numbers<[1], [0], [0], [1], [0, 0, 1, 1], [], []>} : vector<8x128xbf16>, vector<128x512xbf16>, vector<8x512xf32> -> vector<8x512xf32>
    %8 = arith.addf %5, %7 : vector<8x512xf32>
    %9 = vector.extract_strided_slice %8 {offsets = [0, 0], sizes = [8, 128], strides = [1, 1]} : vector<8x512xf32> to vector<8x128xf32>
    %10 = arith.negf %9 : vector<8x128xf32>
    %11 = math.exp %10 : vector<8x128xf32>
    %cst_7 = arith.constant 1.000000e+00 : f32
    %12 = vector.broadcast %cst_7 : f32 to vector<8x128xf32>
    %13 = arith.addf %12, %11 : vector<8x128xf32>
    %14 = arith.divf %12, %13 : vector<8x128xf32>
    %15 = vector.extract_strided_slice %8 {offsets = [0, 128], sizes = [8, 128], strides = [1, 1]} : vector<8x512xf32> to vector<8x128xf32>
    %16 = arith.negf %15 : vector<8x128xf32>
    %17 = math.exp %16 : vector<8x128xf32>
    %cst_8 = arith.constant 1.000000e+00 : f32
    %18 = vector.broadcast %cst_8 : f32 to vector<8x128xf32>
    %19 = arith.addf %18, %17 : vector<8x128xf32>
    %20 = arith.divf %18, %19 : vector<8x128xf32>
    %21 = vector.extract_strided_slice %8 {offsets = [0, 256], sizes = [8, 128], strides = [1, 1]} : vector<8x512xf32> to vector<8x128xf32>
    %22 = math.tanh %21 : vector<8x128xf32>
    %23 = vector.extract_strided_slice %8 {offsets = [0, 384], sizes = [8, 128], strides = [1, 1]} : vector<8x512xf32> to vector<8x128xf32>
    %24 = arith.negf %23 : vector<8x128xf32>
    %25 = math.exp %24 : vector<8x128xf32>
    %cst_9 = arith.constant 1.000000e+00 : f32
    %26 = vector.broadcast %cst_9 : f32 to vector<8x128xf32>
    %27 = arith.addf %26, %25 : vector<8x128xf32>
    %28 = arith.divf %26, %27 : vector<8x128xf32>
    %29 = arith.mulf %20, %2 : vector<8x128xf32>
    %30 = arith.mulf %14, %22 : vector<8x128xf32>
    %31 = arith.addf %29, %30 : vector<8x128xf32>
    %32 = math.tanh %31 : vector<8x128xf32>
    %33 = arith.mulf %28, %32 : vector<8x128xf32>
    %34 = arith.mulf %33, %33 : vector<8x128xf32>
    %cst_10 = arith.constant dense<0.000000e+00> : vector<8xf32>
    %35 = vector.multi_reduction <add>, %34, %cst_10 [1] : vector<8x128xf32> to vector<8xf32>
    %36 = vector.shape_cast %35 : vector<8xf32> to vector<8x1xf32>
    %cst_11 = arith.constant 1.000000e-24 : f32
    %37 = vector.broadcast %cst_11 : f32 to vector<8x1xf32>
    %38 = arith.maximumf %36, %37 : vector<8x1xf32>
    %39 = math.rsqrt %38 : vector<8x1xf32>
    %40 = vector.broadcast %39 : vector<8x1xf32> to vector<8x128xf32>
    %41 = arith.mulf %33, %40 : vector<8x128xf32>
    %42 = arith.addf %3, %41 : vector<8x128xf32>
    %c1 = arith.constant 1 : index
    %c0_12 = arith.constant 0 : index
    %c0_13 = arith.constant 0 : index
    %43 = vector.load %arg0[%c1, %c0_12, %c0_13] : memref<8x8x512xf32, #tpu.memory_space<vmem>>, vector<1x8x512xf32>
    %44 = vector.shape_cast %43 : vector<1x8x512xf32> to vector<8x512xf32>
    %45 = arith.truncf %33 : vector<8x128xf32> to vector<8x128xbf16>
    %cst_14 = arith.constant dense<0.000000e+00> : vector<8x512xf32>
    %46 = tpu.matmul %45, %0, %cst_14 {dimension_numbers = #tpu.dot_dimension_numbers<[1], [0], [0], [1], [0, 0, 1, 1], [], []>} : vector<8x128xbf16>, vector<128x512xbf16>, vector<8x512xf32> -> vector<8x512xf32>
    %47 = arith.addf %44, %46 : vector<8x512xf32>
    %48 = vector.extract_strided_slice %47 {offsets = [0, 0], sizes = [8, 128], strides = [1, 1]} : vector<8x512xf32> to vector<8x128xf32>
    %49 = arith.negf %48 : vector<8x128xf32>
    %50 = math.exp %49 : vector<8x128xf32>
    %cst_15 = arith.constant 1.000000e+00 : f32
    %51 = vector.broadcast %cst_15 : f32 to vector<8x128xf32>
    %52 = arith.addf %51, %50 : vector<8x128xf32>
    %53 = arith.divf %51, %52 : vector<8x128xf32>
    %54 = vector.extract_strided_slice %47 {offsets = [0, 128], sizes = [8, 128], strides = [1, 1]} : vector<8x512xf32> to vector<8x128xf32>
    %55 = arith.negf %54 : vector<8x128xf32>
    %56 = math.exp %55 : vector<8x128xf32>
    %cst_16 = arith.constant 1.000000e+00 : f32
    %57 = vector.broadcast %cst_16 : f32 to vector<8x128xf32>
    %58 = arith.addf %57, %56 : vector<8x128xf32>
    %59 = arith.divf %57, %58 : vector<8x128xf32>
    %60 = vector.extract_strided_slice %47 {offsets = [0, 256], sizes = [8, 128], strides = [1, 1]} : vector<8x512xf32> to vector<8x128xf32>
    %61 = math.tanh %60 : vector<8x128xf32>
    %62 = vector.extract_strided_slice %47 {offsets = [0, 384], sizes = [8, 128], strides = [1, 1]} : vector<8x512xf32> to vector<8x128xf32>
    %63 = arith.negf %62 : vector<8x128xf32>
    %64 = math.exp %63 : vector<8x128xf32>
    %cst_17 = arith.constant 1.000000e+00 : f32
    %65 = vector.broadcast %cst_17 : f32 to vector<8x128xf32>
    %66 = arith.addf %65, %64 : vector<8x128xf32>
    %67 = arith.divf %65, %66 : vector<8x128xf32>
    %68 = arith.mulf %59, %31 : vector<8x128xf32>
    %69 = arith.mulf %53, %61 : vector<8x128xf32>
    %70 = arith.addf %68, %69 : vector<8x128xf32>
    %71 = math.tanh %70 : vector<8x128xf32>
    %72 = arith.mulf %67, %71 : vector<8x128xf32>
    %73 = arith.mulf %72, %72 : vector<8x128xf32>
    %cst_18 = arith.constant dense<0.000000e+00> : vector<8xf32>
    %74 = vector.multi_reduction <add>, %73, %cst_18 [1] : vector<8x128xf32> to vector<8xf32>
    %75 = vector.shape_cast %74 : vector<8xf32> to vector<8x1xf32>
    %cst_19 = arith.constant 1.000000e-24 : f32
    %76 = vector.broadcast %cst_19 : f32 to vector<8x1xf32>
    %77 = arith.maximumf %75, %76 : vector<8x1xf32>
    %78 = math.rsqrt %77 : vector<8x1xf32>
    %79 = vector.broadcast %78 : vector<8x1xf32> to vector<8x128xf32>
    %80 = arith.mulf %72, %79 : vector<8x128xf32>
    %81 = arith.addf %42, %80 : vector<8x128xf32>
    %c2 = arith.constant 2 : index
    %c0_20 = arith.constant 0 : index
    %c0_21 = arith.constant 0 : index
    %82 = vector.load %arg0[%c2, %c0_20, %c0_21] : memref<8x8x512xf32, #tpu.memory_space<vmem>>, vector<1x8x512xf32>
    %83 = vector.shape_cast %82 : vector<1x8x512xf32> to vector<8x512xf32>
    %84 = arith.truncf %72 : vector<8x128xf32> to vector<8x128xbf16>
    %cst_22 = arith.constant dense<0.000000e+00> : vector<8x512xf32>
    %85 = tpu.matmul %84, %0, %cst_22 {dimension_numbers = #tpu.dot_dimension_numbers<[1], [0], [0], [1], [0, 0, 1, 1], [], []>} : vector<8x128xbf16>, vector<128x512xbf16>, vector<8x512xf32> -> vector<8x512xf32>
    %86 = arith.addf %83, %85 : vector<8x512xf32>
    %87 = vector.extract_strided_slice %86 {offsets = [0, 0], sizes = [8, 128], strides = [1, 1]} : vector<8x512xf32> to vector<8x128xf32>
    %88 = arith.negf %87 : vector<8x128xf32>
    %89 = math.exp %88 : vector<8x128xf32>
    %cst_23 = arith.constant 1.000000e+00 : f32
    %90 = vector.broadcast %cst_23 : f32 to vector<8x128xf32>
    %91 = arith.addf %90, %89 : vector<8x128xf32>
    %92 = arith.divf %90, %91 : vector<8x128xf32>
    %93 = vector.extract_strided_slice %86 {offsets = [0, 128], sizes = [8, 128], strides = [1, 1]} : vector<8x512xf32> to vector<8x128xf32>
    %94 = arith.negf %93 : vector<8x128xf32>
    %95 = math.exp %94 : vector<8x128xf32>
    %cst_24 = arith.constant 1.000000e+00 : f32
    %96 = vector.broadcast %cst_24 : f32 to vector<8x128xf32>
    %97 = arith.addf %96, %95 : vector<8x128xf32>
    %98 = arith.divf %96, %97 : vector<8x128xf32>
    %99 = vector.extract_strided_slice %86 {offsets = [0, 256], sizes = [8, 128], strides = [1, 1]} : vector<8x512xf32> to vector<8x128xf32>
    %100 = math.tanh %99 : vector<8x128xf32>
    %101 = vector.extract_strided_slice %86 {offsets = [0, 384], sizes = [8, 128], strides = [1, 1]} : vector<8x512xf32> to vector<8x128xf32>
    %102 = arith.negf %101 : vector<8x128xf32>
    %103 = math.exp %102 : vector<8x128xf32>
    %cst_25 = arith.constant 1.000000e+00 : f32
    %104 = vector.broadcast %cst_25 : f32 to vector<8x128xf32>
    %105 = arith.addf %104, %103 : vector<8x128xf32>
    %106 = arith.divf %104, %105 : vector<8x128xf32>
    %107 = arith.mulf %98, %70 : vector<8x128xf32>
    %108 = arith.mulf %92, %100 : vector<8x128xf32>
    %109 = arith.addf %107, %108 : vector<8x128xf32>
    %110 = math.tanh %109 : vector<8x128xf32>
    %111 = arith.mulf %106, %110 : vector<8x128xf32>
    %112 = arith.mulf %111, %111 : vector<8x128xf32>
    %cst_26 = arith.constant dense<0.000000e+00> : vector<8xf32>
    %113 = vector.multi_reduction <add>, %112, %cst_26 [1] : vector<8x128xf32> to vector<8xf32>
    %114 = vector.shape_cast %113 : vector<8xf32> to vector<8x1xf32>
    %cst_27 = arith.constant 1.000000e-24 : f32
    %115 = vector.broadcast %cst_27 : f32 to vector<8x1xf32>
    %116 = arith.maximumf %114, %115 : vector<8x1xf32>
    %117 = math.rsqrt %116 : vector<8x1xf32>
    %118 = vector.broadcast %117 : vector<8x1xf32> to vector<8x128xf32>
    %119 = arith.mulf %111, %118 : vector<8x128xf32>
    %120 = arith.addf %81, %119 : vector<8x128xf32>
    %c3 = arith.constant 3 : index
    %c0_28 = arith.constant 0 : index
    %c0_29 = arith.constant 0 : index
    %121 = vector.load %arg0[%c3, %c0_28, %c0_29] : memref<8x8x512xf32, #tpu.memory_space<vmem>>, vector<1x8x512xf32>
    %122 = vector.shape_cast %121 : vector<1x8x512xf32> to vector<8x512xf32>
    %123 = arith.truncf %111 : vector<8x128xf32> to vector<8x128xbf16>
    %cst_30 = arith.constant dense<0.000000e+00> : vector<8x512xf32>
    %124 = tpu.matmul %123, %0, %cst_30 {dimension_numbers = #tpu.dot_dimension_numbers<[1], [0], [0], [1], [0, 0, 1, 1], [], []>} : vector<8x128xbf16>, vector<128x512xbf16>, vector<8x512xf32> -> vector<8x512xf32>
    %125 = arith.addf %122, %124 : vector<8x512xf32>
    %126 = vector.extract_strided_slice %125 {offsets = [0, 0], sizes = [8, 128], strides = [1, 1]} : vector<8x512xf32> to vector<8x128xf32>
    %127 = arith.negf %126 : vector<8x128xf32>
    %128 = math.exp %127 : vector<8x128xf32>
    %cst_31 = arith.constant 1.000000e+00 : f32
    %129 = vector.broadcast %cst_31 : f32 to vector<8x128xf32>
    %130 = arith.addf %129, %128 : vector<8x128xf32>
    %131 = arith.divf %129, %130 : vector<8x128xf32>
    %132 = vector.extract_strided_slice %125 {offsets = [0, 128], sizes = [8, 128], strides = [1, 1]} : vector<8x512xf32> to vector<8x128xf32>
    %133 = arith.negf %132 : vector<8x128xf32>
    %134 = math.exp %133 : vector<8x128xf32>
    %cst_32 = arith.constant 1.000000e+00 : f32
    %135 = vector.broadcast %cst_32 : f32 to vector<8x128xf32>
    %136 = arith.addf %135, %134 : vector<8x128xf32>
    %137 = arith.divf %135, %136 : vector<8x128xf32>
    %138 = vector.extract_strided_slice %125 {offsets = [0, 256], sizes = [8, 128], strides = [1, 1]} : vector<8x512xf32> to vector<8x128xf32>
    %139 = math.tanh %138 : vector<8x128xf32>
    %140 = vector.extract_strided_slice %125 {offsets = [0, 384], sizes = [8, 128], strides = [1, 1]} : vector<8x512xf32> to vector<8x128xf32>
    %141 = arith.negf %140 : vector<8x128xf32>
    %142 = math.exp %141 : vector<8x128xf32>
    %cst_33 = arith.constant 1.000000e+00 : f32
    %143 = vector.broadcast %cst_33 : f32 to vector<8x128xf32>
    %144 = arith.addf %143, %142 : vector<8x128xf32>
    %145 = arith.divf %143, %144 : vector<8x128xf32>
    %146 = arith.mulf %137, %109 : vector<8x128xf32>
    %147 = arith.mulf %131, %139 : vector<8x128xf32>
    %148 = arith.addf %146, %147 : vector<8x128xf32>
    %149 = math.tanh %148 : vector<8x128xf32>
    %150 = arith.mulf %145, %149 : vector<8x128xf32>
    %151 = arith.mulf %150, %150 : vector<8x128xf32>
    %cst_34 = arith.constant dense<0.000000e+00> : vector<8xf32>
    %152 = vector.multi_reduction <add>, %151, %cst_34 [1] : vector<8x128xf32> to vector<8xf32>
    %153 = vector.shape_cast %152 : vector<8xf32> to vector<8x1xf32>
    %cst_35 = arith.constant 1.000000e-24 : f32
    %154 = vector.broadcast %cst_35 : f32 to vector<8x1xf32>
    %155 = arith.maximumf %153, %154 : vector<8x1xf32>
    %156 = math.rsqrt %155 : vector<8x1xf32>
    %157 = vector.broadcast %156 : vector<8x1xf32> to vector<8x128xf32>
    %158 = arith.mulf %150, %157 : vector<8x128xf32>
    %159 = arith.addf %120, %158 : vector<8x128xf32>
    %c4 = arith.constant 4 : index
    %c0_36 = arith.constant 0 : index
    %c0_37 = arith.constant 0 : index
    %160 = vector.load %arg0[%c4, %c0_36, %c0_37] : memref<8x8x512xf32, #tpu.memory_space<vmem>>, vector<1x8x512xf32>
    %161 = vector.shape_cast %160 : vector<1x8x512xf32> to vector<8x512xf32>
    %162 = arith.truncf %150 : vector<8x128xf32> to vector<8x128xbf16>
    %cst_38 = arith.constant dense<0.000000e+00> : vector<8x512xf32>
    %163 = tpu.matmul %162, %0, %cst_38 {dimension_numbers = #tpu.dot_dimension_numbers<[1], [0], [0], [1], [0, 0, 1, 1], [], []>} : vector<8x128xbf16>, vector<128x512xbf16>, vector<8x512xf32> -> vector<8x512xf32>
    %164 = arith.addf %161, %163 : vector<8x512xf32>
    %165 = vector.extract_strided_slice %164 {offsets = [0, 0], sizes = [8, 128], strides = [1, 1]} : vector<8x512xf32> to vector<8x128xf32>
    %166 = arith.negf %165 : vector<8x128xf32>
    %167 = math.exp %166 : vector<8x128xf32>
    %cst_39 = arith.constant 1.000000e+00 : f32
    %168 = vector.broadcast %cst_39 : f32 to vector<8x128xf32>
    %169 = arith.addf %168, %167 : vector<8x128xf32>
    %170 = arith.divf %168, %169 : vector<8x128xf32>
    %171 = vector.extract_strided_slice %164 {offsets = [0, 128], sizes = [8, 128], strides = [1, 1]} : vector<8x512xf32> to vector<8x128xf32>
    %172 = arith.negf %171 : vector<8x128xf32>
    %173 = math.exp %172 : vector<8x128xf32>
    %cst_40 = arith.constant 1.000000e+00 : f32
    %174 = vector.broadcast %cst_40 : f32 to vector<8x128xf32>
    %175 = arith.addf %174, %173 : vector<8x128xf32>
    %176 = arith.divf %174, %175 : vector<8x128xf32>
    %177 = vector.extract_strided_slice %164 {offsets = [0, 256], sizes = [8, 128], strides = [1, 1]} : vector<8x512xf32> to vector<8x128xf32>
    %178 = math.tanh %177 : vector<8x128xf32>
    %179 = vector.extract_strided_slice %164 {offsets = [0, 384], sizes = [8, 128], strides = [1, 1]} : vector<8x512xf32> to vector<8x128xf32>
    %180 = arith.negf %179 : vector<8x128xf32>
    %181 = math.exp %180 : vector<8x128xf32>
    %cst_41 = arith.constant 1.000000e+00 : f32
    %182 = vector.broadcast %cst_41 : f32 to vector<8x128xf32>
    %183 = arith.addf %182, %181 : vector<8x128xf32>
    %184 = arith.divf %182, %183 : vector<8x128xf32>
    %185 = arith.mulf %176, %148 : vector<8x128xf32>
    %186 = arith.mulf %170, %178 : vector<8x128xf32>
    %187 = arith.addf %185, %186 : vector<8x128xf32>
    %188 = math.tanh %187 : vector<8x128xf32>
    %189 = arith.mulf %184, %188 : vector<8x128xf32>
    %190 = arith.mulf %189, %189 : vector<8x128xf32>
    %cst_42 = arith.constant dense<0.000000e+00> : vector<8xf32>
    %191 = vector.multi_reduction <add>, %190, %cst_42 [1] : vector<8x128xf32> to vector<8xf32>
    %192 = vector.shape_cast %191 : vector<8xf32> to vector<8x1xf32>
    %cst_43 = arith.constant 1.000000e-24 : f32
    %193 = vector.broadcast %cst_43 : f32 to vector<8x1xf32>
    %194 = arith.maximumf %192, %193 : vector<8x1xf32>
    %195 = math.rsqrt %194 : vector<8x1xf32>
    %196 = vector.broadcast %195 : vector<8x1xf32> to vector<8x128xf32>
    %197 = arith.mulf %189, %196 : vector<8x128xf32>
    %198 = arith.addf %159, %197 : vector<8x128xf32>
    %c5 = arith.constant 5 : index
    %c0_44 = arith.constant 0 : index
    %c0_45 = arith.constant 0 : index
    %199 = vector.load %arg0[%c5, %c0_44, %c0_45] : memref<8x8x512xf32, #tpu.memory_space<vmem>>, vector<1x8x512xf32>
    %200 = vector.shape_cast %199 : vector<1x8x512xf32> to vector<8x512xf32>
    %201 = arith.truncf %189 : vector<8x128xf32> to vector<8x128xbf16>
    %cst_46 = arith.constant dense<0.000000e+00> : vector<8x512xf32>
    %202 = tpu.matmul %201, %0, %cst_46 {dimension_numbers = #tpu.dot_dimension_numbers<[1], [0], [0], [1], [0, 0, 1, 1], [], []>} : vector<8x128xbf16>, vector<128x512xbf16>, vector<8x512xf32> -> vector<8x512xf32>
    %203 = arith.addf %200, %202 : vector<8x512xf32>
    %204 = vector.extract_strided_slice %203 {offsets = [0, 0], sizes = [8, 128], strides = [1, 1]} : vector<8x512xf32> to vector<8x128xf32>
    %205 = arith.negf %204 : vector<8x128xf32>
    %206 = math.exp %205 : vector<8x128xf32>
    %cst_47 = arith.constant 1.000000e+00 : f32
    %207 = vector.broadcast %cst_47 : f32 to vector<8x128xf32>
    %208 = arith.addf %207, %206 : vector<8x128xf32>
    %209 = arith.divf %207, %208 : vector<8x128xf32>
    %210 = vector.extract_strided_slice %203 {offsets = [0, 128], sizes = [8, 128], strides = [1, 1]} : vector<8x512xf32> to vector<8x128xf32>
    %211 = arith.negf %210 : vector<8x128xf32>
    %212 = math.exp %211 : vector<8x128xf32>
    %cst_48 = arith.constant 1.000000e+00 : f32
    %213 = vector.broadcast %cst_48 : f32 to vector<8x128xf32>
    %214 = arith.addf %213, %212 : vector<8x128xf32>
    %215 = arith.divf %213, %214 : vector<8x128xf32>
    %216 = vector.extract_strided_slice %203 {offsets = [0, 256], sizes = [8, 128], strides = [1, 1]} : vector<8x512xf32> to vector<8x128xf32>
    %217 = math.tanh %216 : vector<8x128xf32>
    %218 = vector.extract_strided_slice %203 {offsets = [0, 384], sizes = [8, 128], strides = [1, 1]} : vector<8x512xf32> to vector<8x128xf32>
    %219 = arith.negf %218 : vector<8x128xf32>
    %220 = math.exp %219 : vector<8x128xf32>
    %cst_49 = arith.constant 1.000000e+00 : f32
    %221 = vector.broadcast %cst_49 : f32 to vector<8x128xf32>
    %222 = arith.addf %221, %220 : vector<8x128xf32>
    %223 = arith.divf %221, %222 : vector<8x128xf32>
    %224 = arith.mulf %215, %187 : vector<8x128xf32>
    %225 = arith.mulf %209, %217 : vector<8x128xf32>
    %226 = arith.addf %224, %225 : vector<8x128xf32>
    %227 = math.tanh %226 : vector<8x128xf32>
    %228 = arith.mulf %223, %227 : vector<8x128xf32>
    %229 = arith.mulf %228, %228 : vector<8x128xf32>
    %cst_50 = arith.constant dense<0.000000e+00> : vector<8xf32>
    %230 = vector.multi_reduction <add>, %229, %cst_50 [1] : vector<8x128xf32> to vector<8xf32>
    %231 = vector.shape_cast %230 : vector<8xf32> to vector<8x1xf32>
    %cst_51 = arith.constant 1.000000e-24 : f32
    %232 = vector.broadcast %cst_51 : f32 to vector<8x1xf32>
    %233 = arith.maximumf %231, %232 : vector<8x1xf32>
    %234 = math.rsqrt %233 : vector<8x1xf32>
    %235 = vector.broadcast %234 : vector<8x1xf32> to vector<8x128xf32>
    %236 = arith.mulf %228, %235 : vector<8x128xf32>
    %237 = arith.addf %198, %236 : vector<8x128xf32>
    %c6 = arith.constant 6 : index
    %c0_52 = arith.constant 0 : index
    %c0_53 = arith.constant 0 : index
    %238 = vector.load %arg0[%c6, %c0_52, %c0_53] : memref<8x8x512xf32, #tpu.memory_space<vmem>>, vector<1x8x512xf32>
    %239 = vector.shape_cast %238 : vector<1x8x512xf32> to vector<8x512xf32>
    %240 = arith.truncf %228 : vector<8x128xf32> to vector<8x128xbf16>
    %cst_54 = arith.constant dense<0.000000e+00> : vector<8x512xf32>
    %241 = tpu.matmul %240, %0, %cst_54 {dimension_numbers = #tpu.dot_dimension_numbers<[1], [0], [0], [1], [0, 0, 1, 1], [], []>} : vector<8x128xbf16>, vector<128x512xbf16>, vector<8x512xf32> -> vector<8x512xf32>
    %242 = arith.addf %239, %241 : vector<8x512xf32>
    %243 = vector.extract_strided_slice %242 {offsets = [0, 0], sizes = [8, 128], strides = [1, 1]} : vector<8x512xf32> to vector<8x128xf32>
    %244 = arith.negf %243 : vector<8x128xf32>
    %245 = math.exp %244 : vector<8x128xf32>
    %cst_55 = arith.constant 1.000000e+00 : f32
    %246 = vector.broadcast %cst_55 : f32 to vector<8x128xf32>
    %247 = arith.addf %246, %245 : vector<8x128xf32>
    %248 = arith.divf %246, %247 : vector<8x128xf32>
    %249 = vector.extract_strided_slice %242 {offsets = [0, 128], sizes = [8, 128], strides = [1, 1]} : vector<8x512xf32> to vector<8x128xf32>
    %250 = arith.negf %249 : vector<8x128xf32>
    %251 = math.exp %250 : vector<8x128xf32>
    %cst_56 = arith.constant 1.000000e+00 : f32
    %252 = vector.broadcast %cst_56 : f32 to vector<8x128xf32>
    %253 = arith.addf %252, %251 : vector<8x128xf32>
    %254 = arith.divf %252, %253 : vector<8x128xf32>
    %255 = vector.extract_strided_slice %242 {offsets = [0, 256], sizes = [8, 128], strides = [1, 1]} : vector<8x512xf32> to vector<8x128xf32>
    %256 = math.tanh %255 : vector<8x128xf32>
    %257 = vector.extract_strided_slice %242 {offsets = [0, 384], sizes = [8, 128], strides = [1, 1]} : vector<8x512xf32> to vector<8x128xf32>
    %258 = arith.negf %257 : vector<8x128xf32>
    %259 = math.exp %258 : vector<8x128xf32>
    %cst_57 = arith.constant 1.000000e+00 : f32
    %260 = vector.broadcast %cst_57 : f32 to vector<8x128xf32>
    %261 = arith.addf %260, %259 : vector<8x128xf32>
    %262 = arith.divf %260, %261 : vector<8x128xf32>
    %263 = arith.mulf %254, %226 : vector<8x128xf32>
    %264 = arith.mulf %248, %256 : vector<8x128xf32>
    %265 = arith.addf %263, %264 : vector<8x128xf32>
    %266 = math.tanh %265 : vector<8x128xf32>
    %267 = arith.mulf %262, %266 : vector<8x128xf32>
    %268 = arith.mulf %267, %267 : vector<8x128xf32>
    %cst_58 = arith.constant dense<0.000000e+00> : vector<8xf32>
    %269 = vector.multi_reduction <add>, %268, %cst_58 [1] : vector<8x128xf32> to vector<8xf32>
    %270 = vector.shape_cast %269 : vector<8xf32> to vector<8x1xf32>
    %cst_59 = arith.constant 1.000000e-24 : f32
    %271 = vector.broadcast %cst_59 : f32 to vector<8x1xf32>
    %272 = arith.maximumf %270, %271 : vector<8x1xf32>
    %273 = math.rsqrt %272 : vector<8x1xf32>
    %274 = vector.broadcast %273 : vector<8x1xf32> to vector<8x128xf32>
    %275 = arith.mulf %267, %274 : vector<8x128xf32>
    %276 = arith.addf %237, %275 : vector<8x128xf32>
    %c7 = arith.constant 7 : index
    %c0_60 = arith.constant 0 : index
    %c0_61 = arith.constant 0 : index
    %277 = vector.load %arg0[%c7, %c0_60, %c0_61] : memref<8x8x512xf32, #tpu.memory_space<vmem>>, vector<1x8x512xf32>
    %278 = vector.shape_cast %277 : vector<1x8x512xf32> to vector<8x512xf32>
    %279 = arith.truncf %267 : vector<8x128xf32> to vector<8x128xbf16>
    %cst_62 = arith.constant dense<0.000000e+00> : vector<8x512xf32>
    %280 = tpu.matmul %279, %0, %cst_62 {dimension_numbers = #tpu.dot_dimension_numbers<[1], [0], [0], [1], [0, 0, 1, 1], [], []>} : vector<8x128xbf16>, vector<128x512xbf16>, vector<8x512xf32> -> vector<8x512xf32>
    %281 = arith.addf %278, %280 : vector<8x512xf32>
    %282 = vector.extract_strided_slice %281 {offsets = [0, 0], sizes = [8, 128], strides = [1, 1]} : vector<8x512xf32> to vector<8x128xf32>
    %283 = arith.negf %282 : vector<8x128xf32>
    %284 = math.exp %283 : vector<8x128xf32>
    %cst_63 = arith.constant 1.000000e+00 : f32
    %285 = vector.broadcast %cst_63 : f32 to vector<8x128xf32>
    %286 = arith.addf %285, %284 : vector<8x128xf32>
    %287 = arith.divf %285, %286 : vector<8x128xf32>
    %288 = vector.extract_strided_slice %281 {offsets = [0, 128], sizes = [8, 128], strides = [1, 1]} : vector<8x512xf32> to vector<8x128xf32>
    %289 = arith.negf %288 : vector<8x128xf32>
    %290 = math.exp %289 : vector<8x128xf32>
    %cst_64 = arith.constant 1.000000e+00 : f32
    %291 = vector.broadcast %cst_64 : f32 to vector<8x128xf32>
    %292 = arith.addf %291, %290 : vector<8x128xf32>
    %293 = arith.divf %291, %292 : vector<8x128xf32>
    %294 = vector.extract_strided_slice %281 {offsets = [0, 256], sizes = [8, 128], strides = [1, 1]} : vector<8x512xf32> to vector<8x128xf32>
    %295 = math.tanh %294 : vector<8x128xf32>
    %296 = vector.extract_strided_slice %281 {offsets = [0, 384], sizes = [8, 128], strides = [1, 1]} : vector<8x512xf32> to vector<8x128xf32>
    %297 = arith.negf %296 : vector<8x128xf32>
    %298 = math.exp %297 : vector<8x128xf32>
    %cst_65 = arith.constant 1.000000e+00 : f32
    %299 = vector.broadcast %cst_65 : f32 to vector<8x128xf32>
    %300 = arith.addf %299, %298 : vector<8x128xf32>
    %301 = arith.divf %299, %300 : vector<8x128xf32>
    %302 = arith.mulf %293, %265 : vector<8x128xf32>
    %303 = arith.mulf %287, %295 : vector<8x128xf32>
    %304 = arith.addf %302, %303 : vector<8x128xf32>
    %305 = math.tanh %304 : vector<8x128xf32>
    %306 = arith.mulf %301, %305 : vector<8x128xf32>
    %307 = arith.mulf %306, %306 : vector<8x128xf32>
    %cst_66 = arith.constant dense<0.000000e+00> : vector<8xf32>
    %308 = vector.multi_reduction <add>, %307, %cst_66 [1] : vector<8x128xf32> to vector<8xf32>
    %309 = vector.shape_cast %308 : vector<8xf32> to vector<8x1xf32>
    %cst_67 = arith.constant 1.000000e-24 : f32
    %310 = vector.broadcast %cst_67 : f32 to vector<8x1xf32>
    %311 = arith.maximumf %309, %310 : vector<8x1xf32>
    %312 = math.rsqrt %311 : vector<8x1xf32>
    %313 = vector.broadcast %312 : vector<8x1xf32> to vector<8x128xf32>
    %314 = arith.mulf %306, %313 : vector<8x128xf32>
    %315 = arith.addf %276, %314 : vector<8x128xf32>
    %cst_68 = arith.constant 1.250000e-01 : f32
    %316 = vector.broadcast %cst_68 : f32 to vector<8x128xf32>
    %317 = arith.mulf %315, %316 : vector<8x128xf32>
    %318 = arith.mulf %317, %317 : vector<8x128xf32>
    %cst_69 = arith.constant dense<0.000000e+00> : vector<8xf32>
    %319 = vector.multi_reduction <add>, %318, %cst_69 [1] : vector<8x128xf32> to vector<8xf32>
    %320 = vector.shape_cast %319 : vector<8xf32> to vector<8x1xf32>
    %cst_70 = arith.constant 1.000000e-24 : f32
    %321 = vector.broadcast %cst_70 : f32 to vector<8x1xf32>
    %322 = arith.maximumf %320, %321 : vector<8x1xf32>
    %323 = math.rsqrt %322 : vector<8x1xf32>
    %324 = vector.broadcast %323 : vector<8x1xf32> to vector<8x128xf32>
    %325 = arith.mulf %317, %324 : vector<8x128xf32>
    %c0_71 = arith.constant 0 : index
    %c0_72 = arith.constant 0 : index
    %326 = vector.load %arg2[%c0_71, %c0_72] : memref<128x128xf32, #tpu.memory_space<vmem>>, vector<128x128xf32>
    %cst_73 = arith.constant dense<0.000000e+00> : vector<8x128xf32>
    %327 = tpu.matmul %325, %326, %cst_73 {dimension_numbers = #tpu.dot_dimension_numbers<[1], [0], [0], [1], [0, 0, 1, 1], [], []>} : vector<8x128xf32>, vector<128x128xf32>, vector<8x128xf32> -> vector<8x128xf32>
    %c0_74 = arith.constant 0 : index
    %c0_75 = arith.constant 0 : index
    %328 = vector.load %arg3[%c0_74, %c0_75] : memref<1x128xf32, #tpu.memory_space<vmem>>, vector<1x128xf32>
    %329 = vector.broadcast %328 : vector<1x128xf32> to vector<8x128xf32>
    %330 = arith.addf %327, %329 : vector<8x128xf32>
    %cst_76 = arith.constant 0.000000e+00 : f32
    %331 = vector.broadcast %cst_76 : f32 to vector<8x128xf32>
    %332 = arith.maximumf %330, %331 : vector<8x128xf32>
    %c0_77 = arith.constant 0 : index
    %c0_78 = arith.constant 0 : index
    %333 = vector.load %arg4[%c0_77, %c0_78] : memref<128x128xf32, #tpu.memory_space<vmem>>, vector<128x128xf32>
    %cst_79 = arith.constant dense<0.000000e+00> : vector<8x128xf32>
    %334 = tpu.matmul %332, %333, %cst_79 {dimension_numbers = #tpu.dot_dimension_numbers<[1], [0], [0], [1], [0, 0, 1, 1], [], []>} : vector<8x128xf32>, vector<128x128xf32>, vector<8x128xf32> -> vector<8x128xf32>
    %c0_80 = arith.constant 0 : index
    %c0_81 = arith.constant 0 : index
    %335 = vector.load %arg5[%c0_80, %c0_81] : memref<1x128xf32, #tpu.memory_space<vmem>>, vector<1x128xf32>
    %336 = vector.broadcast %335 : vector<1x128xf32> to vector<8x128xf32>
    %337 = arith.addf %334, %336 : vector<8x128xf32>
    %338 = arith.negf %337 : vector<8x128xf32>
    %339 = math.exp %338 : vector<8x128xf32>
    %cst_82 = arith.constant 1.000000e+00 : f32
    %340 = vector.broadcast %cst_82 : f32 to vector<8x128xf32>
    %341 = arith.addf %340, %339 : vector<8x128xf32>
    %342 = arith.divf %340, %341 : vector<8x128xf32>
    %c0_83 = arith.constant 0 : index
    %c0_84 = arith.constant 0 : index
    %343 = vector.load %arg11[%c0_83, %c0_84] : memref<8x128xf32, #tpu.memory_space<vmem>>, vector<8x128xf32>
    tpu.vector_store %arg11[%c0_83, %c0_84], %342 {strides = array<i32>} : memref<8x128xf32, #tpu.memory_space<vmem>>, vector<8x128xf32>,
    %c0_85 = arith.constant 0 : index
    %c0_86 = arith.constant 0 : index
    %344 = vector.load %arg6[%c0_85, %c0_86] : memref<256x512xbf16, #tpu.memory_space<vmem>>, vector<256x512xbf16>
    %c0_87 = arith.constant 0 : index
    %c0_88 = arith.constant 0 : index
    %345 = vector.load %arg7[%c0_87, %c0_88] : memref<256x128xbf16, #tpu.memory_space<vmem>>, vector<256x128xbf16>
    %c0_89 = arith.constant 0 : index
    %c0_90 = arith.constant 0 : index
    %346 = vector.load %arg8[%c0_89, %c0_90] : memref<1x128xf32, #tpu.memory_space<vmem>>, vector<1x128xf32>
    %c0_91 = arith.constant 0 : index
    %c0_92 = arith.constant 0 : index
    %347 = vector.load %arg9[%c0_91, %c0_92] : memref<128x128xbf16, #tpu.memory_space<vmem>>, vector<128x128xbf16>
    %c0_93 = arith.constant 0 : index
    %c0_94 = arith.constant 0 : index
    %348 = vector.load %arg10[%c0_93, %c0_94] : memref<1x128xf32, #tpu.memory_space<vmem>>, vector<1x128xf32>
    %349 = tpu.iota {dimensions = array<i32: 1>} : vector<8x128xi32>
    %c0_i32 = arith.constant 0 : i32
    %350 = vector.broadcast %c0_i32 : i32 to vector<8x128xi32>
    %351 = arith.cmpi eq, %349, %350 : vector<8x128xi32>
    %352 = arith.extui %351 : vector<8x128xi1> to vector<8x128xi32>
    %353 = arith.sitofp %352 : vector<8x128xi32> to vector<8x128xf32>
    %354 = arith.truncf %353 : vector<8x128xf32> to vector<8x128xbf16>
    %355 = arith.truncf %325 : vector<8x128xf32> to vector<8x128xbf16>
    %356 = tpu.concatenate %354, %355 in 1 : vector<8x128xbf16>, vector<8x128xbf16> -> vector<8x256xbf16>
    %cst_95 = arith.constant dense<0.000000e+00> : vector<8x512xf32>
    %357 = tpu.matmul %356, %344, %cst_95 {dimension_numbers = #tpu.dot_dimension_numbers<[1], [0], [0], [1], [0, 0, 1, 1], [], []>} : vector<8x256xbf16>, vector<256x512xbf16>, vector<8x512xf32> -> vector<8x512xf32>
    %358 = vector.extract_strided_slice %357 {offsets = [0, 0], sizes = [8, 128], strides = [1, 1]} : vector<8x512xf32> to vector<8x128xf32>
    %359 = arith.negf %358 : vector<8x128xf32>
    %360 = math.exp %359 : vector<8x128xf32>
    %cst_96 = arith.constant 1.000000e+00 : f32
    %361 = vector.broadcast %cst_96 : f32 to vector<8x128xf32>
    %362 = arith.addf %361, %360 : vector<8x128xf32>
    %363 = arith.divf %361, %362 : vector<8x128xf32>
    %364 = vector.extract_strided_slice %357 {offsets = [0, 128], sizes = [8, 128], strides = [1, 1]} : vector<8x512xf32> to vector<8x128xf32>
    %365 = arith.negf %364 : vector<8x128xf32>
    %366 = math.exp %365 : vector<8x128xf32>
    %cst_97 = arith.constant 1.000000e+00 : f32
    %367 = vector.broadcast %cst_97 : f32 to vector<8x128xf32>
    %368 = arith.addf %367, %366 : vector<8x128xf32>
    %369 = arith.divf %367, %368 : vector<8x128xf32>
    %370 = vector.extract_strided_slice %357 {offsets = [0, 256], sizes = [8, 128], strides = [1, 1]} : vector<8x512xf32> to vector<8x128xf32>
    %371 = math.tanh %370 : vector<8x128xf32>
    %372 = vector.extract_strided_slice %357 {offsets = [0, 384], sizes = [8, 128], strides = [1, 1]} : vector<8x512xf32> to vector<8x128xf32>
    %373 = arith.negf %372 : vector<8x128xf32>
    %374 = math.exp %373 : vector<8x128xf32>
    %cst_98 = arith.constant 1.000000e+00 : f32
    %375 = vector.broadcast %cst_98 : f32 to vector<8x128xf32>
    %376 = arith.addf %375, %374 : vector<8x128xf32>
    %377 = arith.divf %375, %376 : vector<8x128xf32>
    %378 = arith.mulf %369, %325 : vector<8x128xf32>
    %379 = arith.mulf %363, %371 : vector<8x128xf32>
    %380 = arith.addf %378, %379 : vector<8x128xf32>
    %381 = math.tanh %380 : vector<8x128xf32>
    %382 = arith.mulf %377, %381 : vector<8x128xf32>
    %383 = arith.mulf %41, %382 : vector<8x128xf32>
    %cst_99 = arith.constant dense<0.000000e+00> : vector<8xf32>
    %384 = vector.multi_reduction <add>, %383, %cst_99 [1] : vector<8x128xf32> to vector<8xf32>
    %385 = vector.shape_cast %384 : vector<8xf32> to vector<8x1xf32>
    %386 = arith.mulf %80, %382 : vector<8x128xf32>
    %cst_100 = arith.constant dense<0.000000e+00> : vector<8xf32>
    %387 = vector.multi_reduction <add>, %386, %cst_100 [1] : vector<8x128xf32> to vector<8xf32>
    %388 = vector.shape_cast %387 : vector<8xf32> to vector<8x1xf32>
    %389 = arith.mulf %119, %382 : vector<8x128xf32>
    %cst_101 = arith.constant dense<0.000000e+00> : vector<8xf32>
    %390 = vector.multi_reduction <add>, %389, %cst_101 [1] : vector<8x128xf32> to vector<8xf32>
    %391 = vector.shape_cast %390 : vector<8xf32> to vector<8x1xf32>
    %392 = arith.mulf %158, %382 : vector<8x128xf32>
    %cst_102 = arith.constant dense<0.000000e+00> : vector<8xf32>
    %393 = vector.multi_reduction <add>, %392, %cst_102 [1] : vector<8x128xf32> to vector<8xf32>
    %394 = vector.shape_cast %393 : vector<8xf32> to vector<8x1xf32>
    %395 = arith.mulf %197, %382 : vector<8x128xf32>
    %cst_103 = arith.constant dense<0.000000e+00> : vector<8xf32>
    %396 = vector.multi_reduction <add>, %395, %cst_103 [1] : vector<8x128xf32> to vector<8xf32>
    %397 = vector.shape_cast %396 : vector<8xf32> to vector<8x1xf32>
    %398 = arith.mulf %236, %382 : vector<8x128xf32>
    %cst_104 = arith.constant dense<0.000000e+00> : vector<8xf32>
    %399 = vector.multi_reduction <add>, %398, %cst_104 [1] : vector<8x128xf32> to vector<8xf32>
    %400 = vector.shape_cast %399 : vector<8xf32> to vector<8x1xf32>
    %401 = arith.mulf %275, %382 : vector<8x128xf32>
    %cst_105 = arith.constant dense<0.000000e+00> : vector<8xf32>
    %402 = vector.multi_reduction <add>, %401, %cst_105 [1] : vector<8x128xf32> to vector<8xf32>
    %403 = vector.shape_cast %402 : vector<8xf32> to vector<8x1xf32>
    %404 = arith.mulf %314, %382 : vector<8x128xf32>
    %cst_106 = arith.constant dense<0.000000e+00> : vector<8xf32>
    %405 = vector.multi_reduction <add>, %404, %cst_106 [1] : vector<8x128xf32> to vector<8xf32>
    %406 = vector.shape_cast %405 : vector<8xf32> to vector<8x1xf32>
    %407 = arith.maximumf %385, %388 : vector<8x1xf32>
    %408 = arith.maximumf %407, %391 : vector<8x1xf32>
    %409 = arith.maximumf %408, %394 : vector<8x1xf32>
    %410 = arith.maximumf %409, %397 : vector<8x1xf32>
    %411 = arith.maximumf %410, %400 : vector<8x1xf32>
    %412 = arith.maximumf %411, %403 : vector<8x1xf32>
    %413 = arith.maximumf %412, %406 : vector<8x1xf32>
    %414 = arith.subf %385, %413 : vector<8x1xf32>
    %415 = math.exp %414 : vector<8x1xf32>
    %416 = arith.subf %388, %413 : vector<8x1xf32>
    %417 = math.exp %416 : vector<8x1xf32>
    %418 = arith.subf %391, %413 : vector<8x1xf32>
    %419 = math.exp %418 : vector<8x1xf32>
    %420 = arith.subf %394, %413 : vector<8x1xf32>
    %421 = math.exp %420 : vector<8x1xf32>
    %422 = arith.subf %397, %413 : vector<8x1xf32>
    %423 = math.exp %422 : vector<8x1xf32>
    %424 = arith.subf %400, %413 : vector<8x1xf32>
    %425 = math.exp %424 : vector<8x1xf32>
    %426 = arith.subf %403, %413 : vector<8x1xf32>
    %427 = math.exp %426 : vector<8x1xf32>
    %428 = arith.subf %406, %413 : vector<8x1xf32>
    %429 = math.exp %428 : vector<8x1xf32>
    %430 = arith.addf %415, %417 : vector<8x1xf32>
    %431 = arith.addf %430, %419 : vector<8x1xf32>
    %432 = arith.addf %431, %421 : vector<8x1xf32>
    %433 = arith.addf %432, %423 : vector<8x1xf32>
    %434 = arith.addf %433, %425 : vector<8x1xf32>
    %435 = arith.addf %434, %427 : vector<8x1xf32>
    %436 = arith.addf %435, %429 : vector<8x1xf32>
    %437 = tpu.reciprocal %436 {approx = true} : vector<8x1xf32> -> vector<8x1xf32>
    %438 = arith.mulf %415, %437 : vector<8x1xf32>
    %439 = vector.broadcast %438 : vector<8x1xf32> to vector<8x128xf32>
    %440 = arith.mulf %439, %41 : vector<8x128xf32>
    %441 = arith.mulf %417, %437 : vector<8x1xf32>
    %442 = vector.broadcast %441 : vector<8x1xf32> to vector<8x128xf32>
    %443 = arith.mulf %442, %80 : vector<8x128xf32>
    %444 = arith.addf %440, %443 : vector<8x128xf32>
    %445 = arith.mulf %419, %437 : vector<8x1xf32>
    %446 = vector.broadcast %445 : vector<8x1xf32> to vector<8x128xf32>
    %447 = arith.mulf %446, %119 : vector<8x128xf32>
    %448 = arith.addf %444, %447 : vector<8x128xf32>
    %449 = arith.mulf %421, %437 : vector<8x1xf32>
    %450 = vector.broadcast %449 : vector<8x1xf32> to vector<8x128xf32>
    %451 = arith.mulf %450, %158 : vector<8x128xf32>
    %452 = arith.addf %448, %451 : vector<8x128xf32>
    %453 = arith.mulf %423, %437 : vector<8x1xf32>
    %454 = vector.broadcast %453 : vector<8x1xf32> to vector<8x128xf32>
    %455 = arith.mulf %454, %197 : vector<8x128xf32>
    %456 = arith.addf %452, %455 : vector<8x128xf32>
    %457 = arith.mulf %425, %437 : vector<8x1xf32>
    %458 = vector.broadcast %457 : vector<8x1xf32> to vector<8x128xf32>
    %459 = arith.mulf %458, %236 : vector<8x128xf32>
    %460 = arith.addf %456, %459 : vector<8x128xf32>
    %461 = arith.mulf %427, %437 : vector<8x1xf32>
    %462 = vector.broadcast %461 : vector<8x1xf32> to vector<8x128xf32>
    %463 = arith.mulf %462, %275 : vector<8x128xf32>
    %464 = arith.addf %460, %463 : vector<8x128xf32>
    %465 = arith.mulf %429, %437 : vector<8x1xf32>
    %466 = vector.broadcast %465 : vector<8x1xf32> to vector<8x128xf32>
    %467 = arith.mulf %466, %314 : vector<8x128xf32>
    %468 = arith.addf %464, %467 : vector<8x128xf32>
    %469 = arith.truncf %468 : vector<8x128xf32> to vector<8x128xbf16>
    %470 = arith.truncf %382 : vector<8x128xf32> to vector<8x128xbf16>
    %471 = tpu.concatenate %469, %470 in 1 : vector<8x128xbf16>, vector<8x128xbf16> -> vector<8x256xbf16>
    %cst_107 = arith.constant dense<0.000000e+00> : vector<8x128xf32>
    %472 = tpu.matmul %471, %345, %cst_107 {dimension_numbers = #tpu.dot_dimension_numbers<[1], [0], [0], [1], [0, 0, 1, 1], [], []>} : vector<8x256xbf16>, vector<256x128xbf16>, vector<8x128xf32> -> vector<8x128xf32>
    %473 = vector.broadcast %346 : vector<1x128xf32> to vector<8x128xf32>
    %474 = arith.addf %472, %473 : vector<8x128xf32>
    %475 = math.tanh %474 : vector<8x128xf32>
    %476 = arith.truncf %475 : vector<8x128xf32> to vector<8x128xbf16>
    %cst_108 = arith.constant dense<0.000000e+00> : vector<8x128xf32>
    %477 = tpu.matmul %476, %347, %cst_108 {dimension_numbers = #tpu.dot_dimension_numbers<[1], [0], [0], [1], [0, 0, 1, 1], [], []>} : vector<8x128xbf16>, vector<128x128xbf16>, vector<8x128xf32> -> vector<8x128xf32>
    %478 = vector.broadcast %348 : vector<1x128xf32> to vector<8x128xf32>
    %479 = arith.addf %477, %478 : vector<8x128xf32>
    %cst_109 = arith.constant dense<0xFF800000> : vector<8xf32>
    %480 = vector.multi_reduction <maximumf>, %479, %cst_109 [1] : vector<8x128xf32> to vector<8xf32>
    %481 = vector.shape_cast %480 : vector<8xf32> to vector<8x1xf32>
    %482 = vector.broadcast %481 : vector<8x1xf32> to vector<8x128xf32>
    %483 = arith.cmpf oge, %479, %482 : vector<8x128xf32>
    %c128_i32 = arith.constant 128 : i32
    %484 = vector.broadcast %c128_i32 : i32 to vector<8x128xi32>
    %485 = arith.select %483, %349, %484 : vector<8x128xi1>, vector<8x128xi32>
    %cst_110 = arith.constant dense<2147483647> : vector<8xi32>
    %486 = vector.multi_reduction <minsi>, %485, %cst_110 [1] : vector<8x128xi32> to vector<8xi32>
    %487 = vector.shape_cast %486 : vector<8xi32> to vector<8x1xi32>
    %488 = vector.broadcast %487 : vector<8x1xi32> to vector<8x128xi32>
    %489 = arith.cmpi eq, %349, %488 : vector<8x128xi32>
    %490 = arith.extui %489 : vector<8x128xi1> to vector<8x128xi32>
    %491 = arith.sitofp %490 : vector<8x128xi32> to vector<8x128xf32>
    %492 = arith.truncf %491 : vector<8x128xf32> to vector<8x128xbf16>
    %493 = vector.broadcast %481 : vector<8x1xf32> to vector<8x128xf32>
    %494 = arith.subf %479, %493 : vector<8x128xf32>
    %495 = math.exp %494 : vector<8x128xf32>
    %cst_111 = arith.constant dense<0.000000e+00> : vector<8xf32>
    %496 = vector.multi_reduction <add>, %495, %cst_111 [1] : vector<8x128xf32> to vector<8xf32>
    %497 = vector.shape_cast %496 : vector<8xf32> to vector<8x1xf32>
    %498 = math.log %497 : vector<8x1xf32>
    %499 = arith.addf %481, %498 : vector<8x1xf32>
    %500 = vector.broadcast %499 : vector<8x1xf32> to vector<8x128xf32>
    %501 = arith.subf %479, %500 : vector<8x128xf32>
    %c0_112 = arith.constant 0 : index
    %c0_113 = arith.constant 0 : index
    %c0_114 = arith.constant 0 : index
    %502 = vector.load %arg12[%c0_112, %c0_113, %c0_114] : memref<8x8x128xf32, #tpu.memory_space<vmem>>, vector<1x8x128xf32>
    %503 = vector.shape_cast %502 : vector<1x8x128xf32> to vector<8x128xf32>
    %504 = vector.shape_cast %501 : vector<8x128xf32> to vector<1x8x128xf32>
    tpu.vector_store %arg12[%c0_112, %c0_113, %c0_114], %504 {strides = array<i32>} : memref<8x8x128xf32, #tpu.memory_space<vmem>>, vector<1x8x128xf32>,
    %505 = arith.truncf %382 : vector<8x128xf32> to vector<8x128xbf16>
    %506 = tpu.concatenate %492, %505 in 1 : vector<8x128xbf16>, vector<8x128xbf16> -> vector<8x256xbf16>
    %cst_115 = arith.constant dense<0.000000e+00> : vector<8x512xf32>
    %507 = tpu.matmul %506, %344, %cst_115 {dimension_numbers = #tpu.dot_dimension_numbers<[1], [0], [0], [1], [0, 0, 1, 1], [], []>} : vector<8x256xbf16>, vector<256x512xbf16>, vector<8x512xf32> -> vector<8x512xf32>
    %508 = vector.extract_strided_slice %507 {offsets = [0, 0], sizes = [8, 128], strides = [1, 1]} : vector<8x512xf32> to vector<8x128xf32>
    %509 = arith.negf %508 : vector<8x128xf32>
    %510 = math.exp %509 : vector<8x128xf32>
    %cst_116 = arith.constant 1.000000e+00 : f32
    %511 = vector.broadcast %cst_116 : f32 to vector<8x128xf32>
    %512 = arith.addf %511, %510 : vector<8x128xf32>
    %513 = arith.divf %511, %512 : vector<8x128xf32>
    %514 = vector.extract_strided_slice %507 {offsets = [0, 128], sizes = [8, 128], strides = [1, 1]} : vector<8x512xf32> to vector<8x128xf32>
    %515 = arith.negf %514 : vector<8x128xf32>
    %516 = math.exp %515 : vector<8x128xf32>
    %cst_117 = arith.constant 1.000000e+00 : f32
    %517 = vector.broadcast %cst_117 : f32 to vector<8x128xf32>
    %518 = arith.addf %517, %516 : vector<8x128xf32>
    %519 = arith.divf %517, %518 : vector<8x128xf32>
    %520 = vector.extract_strided_slice %507 {offsets = [0, 256], sizes = [8, 128], strides = [1, 1]} : vector<8x512xf32> to vector<8x128xf32>
    %521 = math.tanh %520 : vector<8x128xf32>
    %522 = vector.extract_strided_slice %507 {offsets = [0, 384], sizes = [8, 128], strides = [1, 1]} : vector<8x512xf32> to vector<8x128xf32>
    %523 = arith.negf %522 : vector<8x128xf32>
    %524 = math.exp %523 : vector<8x128xf32>
    %cst_118 = arith.constant 1.000000e+00 : f32
    %525 = vector.broadcast %cst_118 : f32 to vector<8x128xf32>
    %526 = arith.addf %525, %524 : vector<8x128xf32>
    %527 = arith.divf %525, %526 : vector<8x128xf32>
    %528 = arith.mulf %519, %380 : vector<8x128xf32>
    %529 = arith.mulf %513, %521 : vector<8x128xf32>
    %530 = arith.addf %528, %529 : vector<8x128xf32>
    %531 = math.tanh %530 : vector<8x128xf32>
    %532 = arith.mulf %527, %531 : vector<8x128xf32>
    %533 = arith.mulf %41, %532 : vector<8x128xf32>
    %cst_119 = arith.constant dense<0.000000e+00> : vector<8xf32>
    %534 = vector.multi_reduction <add>, %533, %cst_119 [1] : vector<8x128xf32> to vector<8xf32>
    %535 = vector.shape_cast %534 : vector<8xf32> to vector<8x1xf32>
    %536 = arith.mulf %80, %532 : vector<8x128xf32>
    %cst_120 = arith.constant dense<0.000000e+00> : vector<8xf32>
    %537 = vector.multi_reduction <add>, %536, %cst_120 [1] : vector<8x128xf32> to vector<8xf32>
    %538 = vector.shape_cast %537 : vector<8xf32> to vector<8x1xf32>
    %539 = arith.mulf %119, %532 : vector<8x128xf32>
    %cst_121 = arith.constant dense<0.000000e+00> : vector<8xf32>
    %540 = vector.multi_reduction <add>, %539, %cst_121 [1] : vector<8x128xf32> to vector<8xf32>
    %541 = vector.shape_cast %540 : vector<8xf32> to vector<8x1xf32>
    %542 = arith.mulf %158, %532 : vector<8x128xf32>
    %cst_122 = arith.constant dense<0.000000e+00> : vector<8xf32>
    %543 = vector.multi_reduction <add>, %542, %cst_122 [1] : vector<8x128xf32> to vector<8xf32>
    %544 = vector.shape_cast %543 : vector<8xf32> to vector<8x1xf32>
    %545 = arith.mulf %197, %532 : vector<8x128xf32>
    %cst_123 = arith.constant dense<0.000000e+00> : vector<8xf32>
    %546 = vector.multi_reduction <add>, %545, %cst_123 [1] : vector<8x128xf32> to vector<8xf32>
    %547 = vector.shape_cast %546 : vector<8xf32> to vector<8x1xf32>
    %548 = arith.mulf %236, %532 : vector<8x128xf32>
    %cst_124 = arith.constant dense<0.000000e+00> : vector<8xf32>
    %549 = vector.multi_reduction <add>, %548, %cst_124 [1] : vector<8x128xf32> to vector<8xf32>
    %550 = vector.shape_cast %549 : vector<8xf32> to vector<8x1xf32>
    %551 = arith.mulf %275, %532 : vector<8x128xf32>
    %cst_125 = arith.constant dense<0.000000e+00> : vector<8xf32>
    %552 = vector.multi_reduction <add>, %551, %cst_125 [1] : vector<8x128xf32> to vector<8xf32>
    %553 = vector.shape_cast %552 : vector<8xf32> to vector<8x1xf32>
    %554 = arith.mulf %314, %532 : vector<8x128xf32>
    %cst_126 = arith.constant dense<0.000000e+00> : vector<8xf32>
    %555 = vector.multi_reduction <add>, %554, %cst_126 [1] : vector<8x128xf32> to vector<8xf32>
    %556 = vector.shape_cast %555 : vector<8xf32> to vector<8x1xf32>
    %557 = arith.maximumf %535, %538 : vector<8x1xf32>
    %558 = arith.maximumf %557, %541 : vector<8x1xf32>
    %559 = arith.maximumf %558, %544 : vector<8x1xf32>
    %560 = arith.maximumf %559, %547 : vector<8x1xf32>
    %561 = arith.maximumf %560, %550 : vector<8x1xf32>
    %562 = arith.maximumf %561, %553 : vector<8x1xf32>
    %563 = arith.maximumf %562, %556 : vector<8x1xf32>
    %564 = arith.subf %535, %563 : vector<8x1xf32>
    %565 = math.exp %564 : vector<8x1xf32>
    %566 = arith.subf %538, %563 : vector<8x1xf32>
    %567 = math.exp %566 : vector<8x1xf32>
    %568 = arith.subf %541, %563 : vector<8x1xf32>
    %569 = math.exp %568 : vector<8x1xf32>
    %570 = arith.subf %544, %563 : vector<8x1xf32>
    %571 = math.exp %570 : vector<8x1xf32>
    %572 = arith.subf %547, %563 : vector<8x1xf32>
    %573 = math.exp %572 : vector<8x1xf32>
    %574 = arith.subf %550, %563 : vector<8x1xf32>
    %575 = math.exp %574 : vector<8x1xf32>
    %576 = arith.subf %553, %563 : vector<8x1xf32>
    %577 = math.exp %576 : vector<8x1xf32>
    %578 = arith.subf %556, %563 : vector<8x1xf32>
    %579 = math.exp %578 : vector<8x1xf32>
    %580 = arith.addf %565, %567 : vector<8x1xf32>
    %581 = arith.addf %580, %569 : vector<8x1xf32>
    %582 = arith.addf %581, %571 : vector<8x1xf32>
    %583 = arith.addf %582, %573 : vector<8x1xf32>
    %584 = arith.addf %583, %575 : vector<8x1xf32>
    %585 = arith.addf %584, %577 : vector<8x1xf32>
    %586 = arith.addf %585, %579 : vector<8x1xf32>
    %587 = tpu.reciprocal %586 {approx = true} : vector<8x1xf32> -> vector<8x1xf32>
    %588 = arith.mulf %565, %587 : vector<8x1xf32>
    %589 = vector.broadcast %588 : vector<8x1xf32> to vector<8x128xf32>
    %590 = arith.mulf %589, %41 : vector<8x128xf32>
    %591 = arith.mulf %567, %587 : vector<8x1xf32>
    %592 = vector.broadcast %591 : vector<8x1xf32> to vector<8x128xf32>
    %593 = arith.mulf %592, %80 : vector<8x128xf32>
    %594 = arith.addf %590, %593 : vector<8x128xf32>
    %595 = arith.mulf %569, %587 : vector<8x1xf32>
    %596 = vector.broadcast %595 : vector<8x1xf32> to vector<8x128xf32>
    %597 = arith.mulf %596, %119 : vector<8x128xf32>
    %598 = arith.addf %594, %597 : vector<8x128xf32>
    %599 = arith.mulf %571, %587 : vector<8x1xf32>
    %600 = vector.broadcast %599 : vector<8x1xf32> to vector<8x128xf32>
    %601 = arith.mulf %600, %158 : vector<8x128xf32>
    %602 = arith.addf %598, %601 : vector<8x128xf32>
    %603 = arith.mulf %573, %587 : vector<8x1xf32>
    %604 = vector.broadcast %603 : vector<8x1xf32> to vector<8x128xf32>
    %605 = arith.mulf %604, %197 : vector<8x128xf32>
    %606 = arith.addf %602, %605 : vector<8x128xf32>
    %607 = arith.mulf %575, %587 : vector<8x1xf32>
    %608 = vector.broadcast %607 : vector<8x1xf32> to vector<8x128xf32>
    %609 = arith.mulf %608, %236 : vector<8x128xf32>
    %610 = arith.addf %606, %609 : vector<8x128xf32>
    %611 = arith.mulf %577, %587 : vector<8x1xf32>
    %612 = vector.broadcast %611 : vector<8x1xf32> to vector<8x128xf32>
    %613 = arith.mulf %612, %275 : vector<8x128xf32>
    %614 = arith.addf %610, %613 : vector<8x128xf32>
    %615 = arith.mulf %579, %587 : vector<8x1xf32>
    %616 = vector.broadcast %615 : vector<8x1xf32> to vector<8x128xf32>
    %617 = arith.mulf %616, %314 : vector<8x128xf32>
    %618 = arith.addf %614, %617 : vector<8x128xf32>
    %619 = arith.truncf %618 : vector<8x128xf32> to vector<8x128xbf16>
    %620 = arith.truncf %532 : vector<8x128xf32> to vector<8x128xbf16>
    %621 = tpu.concatenate %619, %620 in 1 : vector<8x128xbf16>, vector<8x128xbf16> -> vector<8x256xbf16>
    %cst_127 = arith.constant dense<0.000000e+00> : vector<8x128xf32>
    %622 = tpu.matmul %621, %345, %cst_127 {dimension_numbers = #tpu.dot_dimension_numbers<[1], [0], [0], [1], [0, 0, 1, 1], [], []>} : vector<8x256xbf16>, vector<256x128xbf16>, vector<8x128xf32> -> vector<8x128xf32>
    %623 = vector.broadcast %346 : vector<1x128xf32> to vector<8x128xf32>
    %624 = arith.addf %622, %623 : vector<8x128xf32>
    %625 = math.tanh %624 : vector<8x128xf32>
    %626 = arith.truncf %625 : vector<8x128xf32> to vector<8x128xbf16>
    %cst_128 = arith.constant dense<0.000000e+00> : vector<8x128xf32>
    %627 = tpu.matmul %626, %347, %cst_128 {dimension_numbers = #tpu.dot_dimension_numbers<[1], [0], [0], [1], [0, 0, 1, 1], [], []>} : vector<8x128xbf16>, vector<128x128xbf16>, vector<8x128xf32> -> vector<8x128xf32>
    %628 = vector.broadcast %348 : vector<1x128xf32> to vector<8x128xf32>
    %629 = arith.addf %627, %628 : vector<8x128xf32>
    %cst_129 = arith.constant dense<0xFF800000> : vector<8xf32>
    %630 = vector.multi_reduction <maximumf>, %629, %cst_129 [1] : vector<8x128xf32> to vector<8xf32>
    %631 = vector.shape_cast %630 : vector<8xf32> to vector<8x1xf32>
    %632 = vector.broadcast %631 : vector<8x1xf32> to vector<8x128xf32>
    %633 = arith.cmpf oge, %629, %632 : vector<8x128xf32>
    %c128_i32_130 = arith.constant 128 : i32
    %634 = vector.broadcast %c128_i32_130 : i32 to vector<8x128xi32>
    %635 = arith.select %633, %349, %634 : vector<8x128xi1>, vector<8x128xi32>
    %cst_131 = arith.constant dense<2147483647> : vector<8xi32>
    %636 = vector.multi_reduction <minsi>, %635, %cst_131 [1] : vector<8x128xi32> to vector<8xi32>
    %637 = vector.shape_cast %636 : vector<8xi32> to vector<8x1xi32>
    %638 = vector.broadcast %637 : vector<8x1xi32> to vector<8x128xi32>
    %639 = arith.cmpi eq, %349, %638 : vector<8x128xi32>
    %640 = arith.extui %639 : vector<8x128xi1> to vector<8x128xi32>
    %641 = arith.sitofp %640 : vector<8x128xi32> to vector<8x128xf32>
    %642 = arith.truncf %641 : vector<8x128xf32> to vector<8x128xbf16>
    %643 = vector.broadcast %631 : vector<8x1xf32> to vector<8x128xf32>
    %644 = arith.subf %629, %643 : vector<8x128xf32>
    %645 = math.exp %644 : vector<8x128xf32>
    %cst_132 = arith.constant dense<0.000000e+00> : vector<8xf32>
    %646 = vector.multi_reduction <add>, %645, %cst_132 [1] : vector<8x128xf32> to vector<8xf32>
    %647 = vector.shape_cast %646 : vector<8xf32> to vector<8x1xf32>
    %648 = math.log %647 : vector<8x1xf32>
    %649 = arith.addf %631, %648 : vector<8x1xf32>
    %650 = vector.broadcast %649 : vector<8x1xf32> to vector<8x128xf32>
    %651 = arith.subf %629, %650 : vector<8x128xf32>
    %c1_133 = arith.constant 1 : index
    %c0_134 = arith.constant 0 : index
    %c0_135 = arith.constant 0 : index
    %652 = vector.load %arg12[%c1_133, %c0_134, %c0_135] : memref<8x8x128xf32, #tpu.memory_space<vmem>>, vector<1x8x128xf32>
    %653 = vector.shape_cast %652 : vector<1x8x128xf32> to vector<8x128xf32>
    %654 = vector.shape_cast %651 : vector<8x128xf32> to vector<1x8x128xf32>
    tpu.vector_store %arg12[%c1_133, %c0_134, %c0_135], %654 {strides = array<i32>} : memref<8x8x128xf32, #tpu.memory_space<vmem>>, vector<1x8x128xf32>,
    %655 = arith.truncf %532 : vector<8x128xf32> to vector<8x128xbf16>
    %656 = tpu.concatenate %642, %655 in 1 : vector<8x128xbf16>, vector<8x128xbf16> -> vector<8x256xbf16>
    %cst_136 = arith.constant dense<0.000000e+00> : vector<8x512xf32>
    %657 = tpu.matmul %656, %344, %cst_136 {dimension_numbers = #tpu.dot_dimension_numbers<[1], [0], [0], [1], [0, 0, 1, 1], [], []>} : vector<8x256xbf16>, vector<256x512xbf16>, vector<8x512xf32> -> vector<8x512xf32>
    %658 = vector.extract_strided_slice %657 {offsets = [0, 0], sizes = [8, 128], strides = [1, 1]} : vector<8x512xf32> to vector<8x128xf32>
    %659 = arith.negf %658 : vector<8x128xf32>
    %660 = math.exp %659 : vector<8x128xf32>
    %cst_137 = arith.constant 1.000000e+00 : f32
    %661 = vector.broadcast %cst_137 : f32 to vector<8x128xf32>
    %662 = arith.addf %661, %660 : vector<8x128xf32>
    %663 = arith.divf %661, %662 : vector<8x128xf32>
    %664 = vector.extract_strided_slice %657 {offsets = [0, 128], sizes = [8, 128], strides = [1, 1]} : vector<8x512xf32> to vector<8x128xf32>
    %665 = arith.negf %664 : vector<8x128xf32>
    %666 = math.exp %665 : vector<8x128xf32>
    %cst_138 = arith.constant 1.000000e+00 : f32
    %667 = vector.broadcast %cst_138 : f32 to vector<8x128xf32>
    %668 = arith.addf %667, %666 : vector<8x128xf32>
    %669 = arith.divf %667, %668 : vector<8x128xf32>
    %670 = vector.extract_strided_slice %657 {offsets = [0, 256], sizes = [8, 128], strides = [1, 1]} : vector<8x512xf32> to vector<8x128xf32>
    %671 = math.tanh %670 : vector<8x128xf32>
    %672 = vector.extract_strided_slice %657 {offsets = [0, 384], sizes = [8, 128], strides = [1, 1]} : vector<8x512xf32> to vector<8x128xf32>
    %673 = arith.negf %672 : vector<8x128xf32>
    %674 = math.exp %673 : vector<8x128xf32>
    %cst_139 = arith.constant 1.000000e+00 : f32
    %675 = vector.broadcast %cst_139 : f32 to vector<8x128xf32>
    %676 = arith.addf %675, %674 : vector<8x128xf32>
    %677 = arith.divf %675, %676 : vector<8x128xf32>
    %678 = arith.mulf %669, %530 : vector<8x128xf32>
    %679 = arith.mulf %663, %671 : vector<8x128xf32>
    %680 = arith.addf %678, %679 : vector<8x128xf32>
    %681 = math.tanh %680 : vector<8x128xf32>
    %682 = arith.mulf %677, %681 : vector<8x128xf32>
    %683 = arith.mulf %41, %682 : vector<8x128xf32>
    %cst_140 = arith.constant dense<0.000000e+00> : vector<8xf32>
    %684 = vector.multi_reduction <add>, %683, %cst_140 [1] : vector<8x128xf32> to vector<8xf32>
    %685 = vector.shape_cast %684 : vector<8xf32> to vector<8x1xf32>
    %686 = arith.mulf %80, %682 : vector<8x128xf32>
    %cst_141 = arith.constant dense<0.000000e+00> : vector<8xf32>
    %687 = vector.multi_reduction <add>, %686, %cst_141 [1] : vector<8x128xf32> to vector<8xf32>
    %688 = vector.shape_cast %687 : vector<8xf32> to vector<8x1xf32>
    %689 = arith.mulf %119, %682 : vector<8x128xf32>
    %cst_142 = arith.constant dense<0.000000e+00> : vector<8xf32>
    %690 = vector.multi_reduction <add>, %689, %cst_142 [1] : vector<8x128xf32> to vector<8xf32>
    %691 = vector.shape_cast %690 : vector<8xf32> to vector<8x1xf32>
    %692 = arith.mulf %158, %682 : vector<8x128xf32>
    %cst_143 = arith.constant dense<0.000000e+00> : vector<8xf32>
    %693 = vector.multi_reduction <add>, %692, %cst_143 [1] : vector<8x128xf32> to vector<8xf32>
    %694 = vector.shape_cast %693 : vector<8xf32> to vector<8x1xf32>
    %695 = arith.mulf %197, %682 : vector<8x128xf32>
    %cst_144 = arith.constant dense<0.000000e+00> : vector<8xf32>
    %696 = vector.multi_reduction <add>, %695, %cst_144 [1] : vector<8x128xf32> to vector<8xf32>
    %697 = vector.shape_cast %696 : vector<8xf32> to vector<8x1xf32>
    %698 = arith.mulf %236, %682 : vector<8x128xf32>
    %cst_145 = arith.constant dense<0.000000e+00> : vector<8xf32>
    %699 = vector.multi_reduction <add>, %698, %cst_145 [1] : vector<8x128xf32> to vector<8xf32>
    %700 = vector.shape_cast %699 : vector<8xf32> to vector<8x1xf32>
    %701 = arith.mulf %275, %682 : vector<8x128xf32>
    %cst_146 = arith.constant dense<0.000000e+00> : vector<8xf32>
    %702 = vector.multi_reduction <add>, %701, %cst_146 [1] : vector<8x128xf32> to vector<8xf32>
    %703 = vector.shape_cast %702 : vector<8xf32> to vector<8x1xf32>
    %704 = arith.mulf %314, %682 : vector<8x128xf32>
    %cst_147 = arith.constant dense<0.000000e+00> : vector<8xf32>
    %705 = vector.multi_reduction <add>, %704, %cst_147 [1] : vector<8x128xf32> to vector<8xf32>
    %706 = vector.shape_cast %705 : vector<8xf32> to vector<8x1xf32>
    %707 = arith.maximumf %685, %688 : vector<8x1xf32>
    %708 = arith.maximumf %707, %691 : vector<8x1xf32>
    %709 = arith.maximumf %708, %694 : vector<8x1xf32>
    %710 = arith.maximumf %709, %697 : vector<8x1xf32>
    %711 = arith.maximumf %710, %700 : vector<8x1xf32>
    %712 = arith.maximumf %711, %703 : vector<8x1xf32>
    %713 = arith.maximumf %712, %706 : vector<8x1xf32>
    %714 = arith.subf %685, %713 : vector<8x1xf32>
    %715 = math.exp %714 : vector<8x1xf32>
    %716 = arith.subf %688, %713 : vector<8x1xf32>
    %717 = math.exp %716 : vector<8x1xf32>
    %718 = arith.subf %691, %713 : vector<8x1xf32>
    %719 = math.exp %718 : vector<8x1xf32>
    %720 = arith.subf %694, %713 : vector<8x1xf32>
    %721 = math.exp %720 : vector<8x1xf32>
    %722 = arith.subf %697, %713 : vector<8x1xf32>
    %723 = math.exp %722 : vector<8x1xf32>
    %724 = arith.subf %700, %713 : vector<8x1xf32>
    %725 = math.exp %724 : vector<8x1xf32>
    %726 = arith.subf %703, %713 : vector<8x1xf32>
    %727 = math.exp %726 : vector<8x1xf32>
    %728 = arith.subf %706, %713 : vector<8x1xf32>
    %729 = math.exp %728 : vector<8x1xf32>
    %730 = arith.addf %715, %717 : vector<8x1xf32>
    %731 = arith.addf %730, %719 : vector<8x1xf32>
    %732 = arith.addf %731, %721 : vector<8x1xf32>
    %733 = arith.addf %732, %723 : vector<8x1xf32>
    %734 = arith.addf %733, %725 : vector<8x1xf32>
    %735 = arith.addf %734, %727 : vector<8x1xf32>
    %736 = arith.addf %735, %729 : vector<8x1xf32>
    %737 = tpu.reciprocal %736 {approx = true} : vector<8x1xf32> -> vector<8x1xf32>
    %738 = arith.mulf %715, %737 : vector<8x1xf32>
    %739 = vector.broadcast %738 : vector<8x1xf32> to vector<8x128xf32>
    %740 = arith.mulf %739, %41 : vector<8x128xf32>
    %741 = arith.mulf %717, %737 : vector<8x1xf32>
    %742 = vector.broadcast %741 : vector<8x1xf32> to vector<8x128xf32>
    %743 = arith.mulf %742, %80 : vector<8x128xf32>
    %744 = arith.addf %740, %743 : vector<8x128xf32>
    %745 = arith.mulf %719, %737 : vector<8x1xf32>
    %746 = vector.broadcast %745 : vector<8x1xf32> to vector<8x128xf32>
    %747 = arith.mulf %746, %119 : vector<8x128xf32>
    %748 = arith.addf %744, %747 : vector<8x128xf32>
    %749 = arith.mulf %721, %737 : vector<8x1xf32>
    %750 = vector.broadcast %749 : vector<8x1xf32> to vector<8x128xf32>
    %751 = arith.mulf %750, %158 : vector<8x128xf32>
    %752 = arith.addf %748, %751 : vector<8x128xf32>
    %753 = arith.mulf %723, %737 : vector<8x1xf32>
    %754 = vector.broadcast %753 : vector<8x1xf32> to vector<8x128xf32>
    %755 = arith.mulf %754, %197 : vector<8x128xf32>
    %756 = arith.addf %752, %755 : vector<8x128xf32>
    %757 = arith.mulf %725, %737 : vector<8x1xf32>
    %758 = vector.broadcast %757 : vector<8x1xf32> to vector<8x128xf32>
    %759 = arith.mulf %758, %236 : vector<8x128xf32>
    %760 = arith.addf %756, %759 : vector<8x128xf32>
    %761 = arith.mulf %727, %737 : vector<8x1xf32>
    %762 = vector.broadcast %761 : vector<8x1xf32> to vector<8x128xf32>
    %763 = arith.mulf %762, %275 : vector<8x128xf32>
    %764 = arith.addf %760, %763 : vector<8x128xf32>
    %765 = arith.mulf %729, %737 : vector<8x1xf32>
    %766 = vector.broadcast %765 : vector<8x1xf32> to vector<8x128xf32>
    %767 = arith.mulf %766, %314 : vector<8x128xf32>
    %768 = arith.addf %764, %767 : vector<8x128xf32>
    %769 = arith.truncf %768 : vector<8x128xf32> to vector<8x128xbf16>
    %770 = arith.truncf %682 : vector<8x128xf32> to vector<8x128xbf16>
    %771 = tpu.concatenate %769, %770 in 1 : vector<8x128xbf16>, vector<8x128xbf16> -> vector<8x256xbf16>
    %cst_148 = arith.constant dense<0.000000e+00> : vector<8x128xf32>
    %772 = tpu.matmul %771, %345, %cst_148 {dimension_numbers = #tpu.dot_dimension_numbers<[1], [0], [0], [1], [0, 0, 1, 1], [], []>} : vector<8x256xbf16>, vector<256x128xbf16>, vector<8x128xf32> -> vector<8x128xf32>
    %773 = vector.broadcast %346 : vector<1x128xf32> to vector<8x128xf32>
    %774 = arith.addf %772, %773 : vector<8x128xf32>
    %775 = math.tanh %774 : vector<8x128xf32>
    %776 = arith.truncf %775 : vector<8x128xf32> to vector<8x128xbf16>
    %cst_149 = arith.constant dense<0.000000e+00> : vector<8x128xf32>
    %777 = tpu.matmul %776, %347, %cst_149 {dimension_numbers = #tpu.dot_dimension_numbers<[1], [0], [0], [1], [0, 0, 1, 1], [], []>} : vector<8x128xbf16>, vector<128x128xbf16>, vector<8x128xf32> -> vector<8x128xf32>
    %778 = vector.broadcast %348 : vector<1x128xf32> to vector<8x128xf32>
    %779 = arith.addf %777, %778 : vector<8x128xf32>
    %cst_150 = arith.constant dense<0xFF800000> : vector<8xf32>
    %780 = vector.multi_reduction <maximumf>, %779, %cst_150 [1] : vector<8x128xf32> to vector<8xf32>
    %781 = vector.shape_cast %780 : vector<8xf32> to vector<8x1xf32>
    %782 = vector.broadcast %781 : vector<8x1xf32> to vector<8x128xf32>
    %783 = arith.cmpf oge, %779, %782 : vector<8x128xf32>
    %c128_i32_151 = arith.constant 128 : i32
    %784 = vector.broadcast %c128_i32_151 : i32 to vector<8x128xi32>
    %785 = arith.select %783, %349, %784 : vector<8x128xi1>, vector<8x128xi32>
    %cst_152 = arith.constant dense<2147483647> : vector<8xi32>
    %786 = vector.multi_reduction <minsi>, %785, %cst_152 [1] : vector<8x128xi32> to vector<8xi32>
    %787 = vector.shape_cast %786 : vector<8xi32> to vector<8x1xi32>
    %788 = vector.broadcast %787 : vector<8x1xi32> to vector<8x128xi32>
    %789 = arith.cmpi eq, %349, %788 : vector<8x128xi32>
    %790 = arith.extui %789 : vector<8x128xi1> to vector<8x128xi32>
    %791 = arith.sitofp %790 : vector<8x128xi32> to vector<8x128xf32>
    %792 = arith.truncf %791 : vector<8x128xf32> to vector<8x128xbf16>
    %793 = vector.broadcast %781 : vector<8x1xf32> to vector<8x128xf32>
    %794 = arith.subf %779, %793 : vector<8x128xf32>
    %795 = math.exp %794 : vector<8x128xf32>
    %cst_153 = arith.constant dense<0.000000e+00> : vector<8xf32>
    %796 = vector.multi_reduction <add>, %795, %cst_153 [1] : vector<8x128xf32> to vector<8xf32>
    %797 = vector.shape_cast %796 : vector<8xf32> to vector<8x1xf32>
    %798 = math.log %797 : vector<8x1xf32>
    %799 = arith.addf %781, %798 : vector<8x1xf32>
    %800 = vector.broadcast %799 : vector<8x1xf32> to vector<8x128xf32>
    %801 = arith.subf %779, %800 : vector<8x128xf32>
    %c2_154 = arith.constant 2 : index
    %c0_155 = arith.constant 0 : index
    %c0_156 = arith.constant 0 : index
    %802 = vector.load %arg12[%c2_154, %c0_155, %c0_156] : memref<8x8x128xf32, #tpu.memory_space<vmem>>, vector<1x8x128xf32>
    %803 = vector.shape_cast %802 : vector<1x8x128xf32> to vector<8x128xf32>
    %804 = vector.shape_cast %801 : vector<8x128xf32> to vector<1x8x128xf32>
    tpu.vector_store %arg12[%c2_154, %c0_155, %c0_156], %804 {strides = array<i32>} : memref<8x8x128xf32, #tpu.memory_space<vmem>>, vector<1x8x128xf32>,
    %805 = arith.truncf %682 : vector<8x128xf32> to vector<8x128xbf16>
    %806 = tpu.concatenate %792, %805 in 1 : vector<8x128xbf16>, vector<8x128xbf16> -> vector<8x256xbf16>
    %cst_157 = arith.constant dense<0.000000e+00> : vector<8x512xf32>
    %807 = tpu.matmul %806, %344, %cst_157 {dimension_numbers = #tpu.dot_dimension_numbers<[1], [0], [0], [1], [0, 0, 1, 1], [], []>} : vector<8x256xbf16>, vector<256x512xbf16>, vector<8x512xf32> -> vector<8x512xf32>
    %808 = vector.extract_strided_slice %807 {offsets = [0, 0], sizes = [8, 128], strides = [1, 1]} : vector<8x512xf32> to vector<8x128xf32>
    %809 = arith.negf %808 : vector<8x128xf32>
    %810 = math.exp %809 : vector<8x128xf32>
    %cst_158 = arith.constant 1.000000e+00 : f32
    %811 = vector.broadcast %cst_158 : f32 to vector<8x128xf32>
    %812 = arith.addf %811, %810 : vector<8x128xf32>
    %813 = arith.divf %811, %812 : vector<8x128xf32>
    %814 = vector.extract_strided_slice %807 {offsets = [0, 128], sizes = [8, 128], strides = [1, 1]} : vector<8x512xf32> to vector<8x128xf32>
    %815 = arith.negf %814 : vector<8x128xf32>
    %816 = math.exp %815 : vector<8x128xf32>
    %cst_159 = arith.constant 1.000000e+00 : f32
    %817 = vector.broadcast %cst_159 : f32 to vector<8x128xf32>
    %818 = arith.addf %817, %816 : vector<8x128xf32>
    %819 = arith.divf %817, %818 : vector<8x128xf32>
    %820 = vector.extract_strided_slice %807 {offsets = [0, 256], sizes = [8, 128], strides = [1, 1]} : vector<8x512xf32> to vector<8x128xf32>
    %821 = math.tanh %820 : vector<8x128xf32>
    %822 = vector.extract_strided_slice %807 {offsets = [0, 384], sizes = [8, 128], strides = [1, 1]} : vector<8x512xf32> to vector<8x128xf32>
    %823 = arith.negf %822 : vector<8x128xf32>
    %824 = math.exp %823 : vector<8x128xf32>
    %cst_160 = arith.constant 1.000000e+00 : f32
    %825 = vector.broadcast %cst_160 : f32 to vector<8x128xf32>
    %826 = arith.addf %825, %824 : vector<8x128xf32>
    %827 = arith.divf %825, %826 : vector<8x128xf32>
    %828 = arith.mulf %819, %680 : vector<8x128xf32>
    %829 = arith.mulf %813, %821 : vector<8x128xf32>
    %830 = arith.addf %828, %829 : vector<8x128xf32>
    %831 = math.tanh %830 : vector<8x128xf32>
    %832 = arith.mulf %827, %831 : vector<8x128xf32>
    %833 = arith.mulf %41, %832 : vector<8x128xf32>
    %cst_161 = arith.constant dense<0.000000e+00> : vector<8xf32>
    %834 = vector.multi_reduction <add>, %833, %cst_161 [1] : vector<8x128xf32> to vector<8xf32>
    %835 = vector.shape_cast %834 : vector<8xf32> to vector<8x1xf32>
    %836 = arith.mulf %80, %832 : vector<8x128xf32>
    %cst_162 = arith.constant dense<0.000000e+00> : vector<8xf32>
    %837 = vector.multi_reduction <add>, %836, %cst_162 [1] : vector<8x128xf32> to vector<8xf32>
    %838 = vector.shape_cast %837 : vector<8xf32> to vector<8x1xf32>
    %839 = arith.mulf %119, %832 : vector<8x128xf32>
    %cst_163 = arith.constant dense<0.000000e+00> : vector<8xf32>
    %840 = vector.multi_reduction <add>, %839, %cst_163 [1] : vector<8x128xf32> to vector<8xf32>
    %841 = vector.shape_cast %840 : vector<8xf32> to vector<8x1xf32>
    %842 = arith.mulf %158, %832 : vector<8x128xf32>
    %cst_164 = arith.constant dense<0.000000e+00> : vector<8xf32>
    %843 = vector.multi_reduction <add>, %842, %cst_164 [1] : vector<8x128xf32> to vector<8xf32>
    %844 = vector.shape_cast %843 : vector<8xf32> to vector<8x1xf32>
    %845 = arith.mulf %197, %832 : vector<8x128xf32>
    %cst_165 = arith.constant dense<0.000000e+00> : vector<8xf32>
    %846 = vector.multi_reduction <add>, %845, %cst_165 [1] : vector<8x128xf32> to vector<8xf32>
    %847 = vector.shape_cast %846 : vector<8xf32> to vector<8x1xf32>
    %848 = arith.mulf %236, %832 : vector<8x128xf32>
    %cst_166 = arith.constant dense<0.000000e+00> : vector<8xf32>
    %849 = vector.multi_reduction <add>, %848, %cst_166 [1] : vector<8x128xf32> to vector<8xf32>
    %850 = vector.shape_cast %849 : vector<8xf32> to vector<8x1xf32>
    %851 = arith.mulf %275, %832 : vector<8x128xf32>
    %cst_167 = arith.constant dense<0.000000e+00> : vector<8xf32>
    %852 = vector.multi_reduction <add>, %851, %cst_167 [1] : vector<8x128xf32> to vector<8xf32>
    %853 = vector.shape_cast %852 : vector<8xf32> to vector<8x1xf32>
    %854 = arith.mulf %314, %832 : vector<8x128xf32>
    %cst_168 = arith.constant dense<0.000000e+00> : vector<8xf32>
    %855 = vector.multi_reduction <add>, %854, %cst_168 [1] : vector<8x128xf32> to vector<8xf32>
    %856 = vector.shape_cast %855 : vector<8xf32> to vector<8x1xf32>
    %857 = arith.maximumf %835, %838 : vector<8x1xf32>
    %858 = arith.maximumf %857, %841 : vector<8x1xf32>
    %859 = arith.maximumf %858, %844 : vector<8x1xf32>
    %860 = arith.maximumf %859, %847 : vector<8x1xf32>
    %861 = arith.maximumf %860, %850 : vector<8x1xf32>
    %862 = arith.maximumf %861, %853 : vector<8x1xf32>
    %863 = arith.maximumf %862, %856 : vector<8x1xf32>
    %864 = arith.subf %835, %863 : vector<8x1xf32>
    %865 = math.exp %864 : vector<8x1xf32>
    %866 = arith.subf %838, %863 : vector<8x1xf32>
    %867 = math.exp %866 : vector<8x1xf32>
    %868 = arith.subf %841, %863 : vector<8x1xf32>
    %869 = math.exp %868 : vector<8x1xf32>
    %870 = arith.subf %844, %863 : vector<8x1xf32>
    %871 = math.exp %870 : vector<8x1xf32>
    %872 = arith.subf %847, %863 : vector<8x1xf32>
    %873 = math.exp %872 : vector<8x1xf32>
    %874 = arith.subf %850, %863 : vector<8x1xf32>
    %875 = math.exp %874 : vector<8x1xf32>
    %876 = arith.subf %853, %863 : vector<8x1xf32>
    %877 = math.exp %876 : vector<8x1xf32>
    %878 = arith.subf %856, %863 : vector<8x1xf32>
    %879 = math.exp %878 : vector<8x1xf32>
    %880 = arith.addf %865, %867 : vector<8x1xf32>
    %881 = arith.addf %880, %869 : vector<8x1xf32>
    %882 = arith.addf %881, %871 : vector<8x1xf32>
    %883 = arith.addf %882, %873 : vector<8x1xf32>
    %884 = arith.addf %883, %875 : vector<8x1xf32>
    %885 = arith.addf %884, %877 : vector<8x1xf32>
    %886 = arith.addf %885, %879 : vector<8x1xf32>
    %887 = tpu.reciprocal %886 {approx = true} : vector<8x1xf32> -> vector<8x1xf32>
    %888 = arith.mulf %865, %887 : vector<8x1xf32>
    %889 = vector.broadcast %888 : vector<8x1xf32> to vector<8x128xf32>
    %890 = arith.mulf %889, %41 : vector<8x128xf32>
    %891 = arith.mulf %867, %887 : vector<8x1xf32>
    %892 = vector.broadcast %891 : vector<8x1xf32> to vector<8x128xf32>
    %893 = arith.mulf %892, %80 : vector<8x128xf32>
    %894 = arith.addf %890, %893 : vector<8x128xf32>
    %895 = arith.mulf %869, %887 : vector<8x1xf32>
    %896 = vector.broadcast %895 : vector<8x1xf32> to vector<8x128xf32>
    %897 = arith.mulf %896, %119 : vector<8x128xf32>
    %898 = arith.addf %894, %897 : vector<8x128xf32>
    %899 = arith.mulf %871, %887 : vector<8x1xf32>
    %900 = vector.broadcast %899 : vector<8x1xf32> to vector<8x128xf32>
    %901 = arith.mulf %900, %158 : vector<8x128xf32>
    %902 = arith.addf %898, %901 : vector<8x128xf32>
    %903 = arith.mulf %873, %887 : vector<8x1xf32>
    %904 = vector.broadcast %903 : vector<8x1xf32> to vector<8x128xf32>
    %905 = arith.mulf %904, %197 : vector<8x128xf32>
    %906 = arith.addf %902, %905 : vector<8x128xf32>
    %907 = arith.mulf %875, %887 : vector<8x1xf32>
    %908 = vector.broadcast %907 : vector<8x1xf32> to vector<8x128xf32>
    %909 = arith.mulf %908, %236 : vector<8x128xf32>
    %910 = arith.addf %906, %909 : vector<8x128xf32>
    %911 = arith.mulf %877, %887 : vector<8x1xf32>
    %912 = vector.broadcast %911 : vector<8x1xf32> to vector<8x128xf32>
    %913 = arith.mulf %912, %275 : vector<8x128xf32>
    %914 = arith.addf %910, %913 : vector<8x128xf32>
    %915 = arith.mulf %879, %887 : vector<8x1xf32>
    %916 = vector.broadcast %915 : vector<8x1xf32> to vector<8x128xf32>
    %917 = arith.mulf %916, %314 : vector<8x128xf32>
    %918 = arith.addf %914, %917 : vector<8x128xf32>
    %919 = arith.truncf %918 : vector<8x128xf32> to vector<8x128xbf16>
    %920 = arith.truncf %832 : vector<8x128xf32> to vector<8x128xbf16>
    %921 = tpu.concatenate %919, %920 in 1 : vector<8x128xbf16>, vector<8x128xbf16> -> vector<8x256xbf16>
    %cst_169 = arith.constant dense<0.000000e+00> : vector<8x128xf32>
    %922 = tpu.matmul %921, %345, %cst_169 {dimension_numbers = #tpu.dot_dimension_numbers<[1], [0], [0], [1], [0, 0, 1, 1], [], []>} : vector<8x256xbf16>, vector<256x128xbf16>, vector<8x128xf32> -> vector<8x128xf32>
    %923 = vector.broadcast %346 : vector<1x128xf32> to vector<8x128xf32>
    %924 = arith.addf %922, %923 : vector<8x128xf32>
    %925 = math.tanh %924 : vector<8x128xf32>
    %926 = arith.truncf %925 : vector<8x128xf32> to vector<8x128xbf16>
    %cst_170 = arith.constant dense<0.000000e+00> : vector<8x128xf32>
    %927 = tpu.matmul %926, %347, %cst_170 {dimension_numbers = #tpu.dot_dimension_numbers<[1], [0], [0], [1], [0, 0, 1, 1], [], []>} : vector<8x128xbf16>, vector<128x128xbf16>, vector<8x128xf32> -> vector<8x128xf32>
    %928 = vector.broadcast %348 : vector<1x128xf32> to vector<8x128xf32>
    %929 = arith.addf %927, %928 : vector<8x128xf32>
    %cst_171 = arith.constant dense<0xFF800000> : vector<8xf32>
    %930 = vector.multi_reduction <maximumf>, %929, %cst_171 [1] : vector<8x128xf32> to vector<8xf32>
    %931 = vector.shape_cast %930 : vector<8xf32> to vector<8x1xf32>
    %932 = vector.broadcast %931 : vector<8x1xf32> to vector<8x128xf32>
    %933 = arith.cmpf oge, %929, %932 : vector<8x128xf32>
    %c128_i32_172 = arith.constant 128 : i32
    %934 = vector.broadcast %c128_i32_172 : i32 to vector<8x128xi32>
    %935 = arith.select %933, %349, %934 : vector<8x128xi1>, vector<8x128xi32>
    %cst_173 = arith.constant dense<2147483647> : vector<8xi32>
    %936 = vector.multi_reduction <minsi>, %935, %cst_173 [1] : vector<8x128xi32> to vector<8xi32>
    %937 = vector.shape_cast %936 : vector<8xi32> to vector<8x1xi32>
    %938 = vector.broadcast %937 : vector<8x1xi32> to vector<8x128xi32>
    %939 = arith.cmpi eq, %349, %938 : vector<8x128xi32>
    %940 = arith.extui %939 : vector<8x128xi1> to vector<8x128xi32>
    %941 = arith.sitofp %940 : vector<8x128xi32> to vector<8x128xf32>
    %942 = arith.truncf %941 : vector<8x128xf32> to vector<8x128xbf16>
    %943 = vector.broadcast %931 : vector<8x1xf32> to vector<8x128xf32>
    %944 = arith.subf %929, %943 : vector<8x128xf32>
    %945 = math.exp %944 : vector<8x128xf32>
    %cst_174 = arith.constant dense<0.000000e+00> : vector<8xf32>
    %946 = vector.multi_reduction <add>, %945, %cst_174 [1] : vector<8x128xf32> to vector<8xf32>
    %947 = vector.shape_cast %946 : vector<8xf32> to vector<8x1xf32>
    %948 = math.log %947 : vector<8x1xf32>
    %949 = arith.addf %931, %948 : vector<8x1xf32>
    %950 = vector.broadcast %949 : vector<8x1xf32> to vector<8x128xf32>
    %951 = arith.subf %929, %950 : vector<8x128xf32>
    %c3_175 = arith.constant 3 : index
    %c0_176 = arith.constant 0 : index
    %c0_177 = arith.constant 0 : index
    %952 = vector.load %arg12[%c3_175, %c0_176, %c0_177] : memref<8x8x128xf32, #tpu.memory_space<vmem>>, vector<1x8x128xf32>
    %953 = vector.shape_cast %952 : vector<1x8x128xf32> to vector<8x128xf32>
    %954 = vector.shape_cast %951 : vector<8x128xf32> to vector<1x8x128xf32>
    tpu.vector_store %arg12[%c3_175, %c0_176, %c0_177], %954 {strides = array<i32>} : memref<8x8x128xf32, #tpu.memory_space<vmem>>, vector<1x8x128xf32>,
    %955 = arith.truncf %832 : vector<8x128xf32> to vector<8x128xbf16>
    %956 = tpu.concatenate %942, %955 in 1 : vector<8x128xbf16>, vector<8x128xbf16> -> vector<8x256xbf16>
    %cst_178 = arith.constant dense<0.000000e+00> : vector<8x512xf32>
    %957 = tpu.matmul %956, %344, %cst_178 {dimension_numbers = #tpu.dot_dimension_numbers<[1], [0], [0], [1], [0, 0, 1, 1], [], []>} : vector<8x256xbf16>, vector<256x512xbf16>, vector<8x512xf32> -> vector<8x512xf32>
    %958 = vector.extract_strided_slice %957 {offsets = [0, 0], sizes = [8, 128], strides = [1, 1]} : vector<8x512xf32> to vector<8x128xf32>
    %959 = arith.negf %958 : vector<8x128xf32>
    %960 = math.exp %959 : vector<8x128xf32>
    %cst_179 = arith.constant 1.000000e+00 : f32
    %961 = vector.broadcast %cst_179 : f32 to vector<8x128xf32>
    %962 = arith.addf %961, %960 : vector<8x128xf32>
    %963 = arith.divf %961, %962 : vector<8x128xf32>
    %964 = vector.extract_strided_slice %957 {offsets = [0, 128], sizes = [8, 128], strides = [1, 1]} : vector<8x512xf32> to vector<8x128xf32>
    %965 = arith.negf %964 : vector<8x128xf32>
    %966 = math.exp %965 : vector<8x128xf32>
    %cst_180 = arith.constant 1.000000e+00 : f32
    %967 = vector.broadcast %cst_180 : f32 to vector<8x128xf32>
    %968 = arith.addf %967, %966 : vector<8x128xf32>
    %969 = arith.divf %967, %968 : vector<8x128xf32>
    %970 = vector.extract_strided_slice %957 {offsets = [0, 256], sizes = [8, 128], strides = [1, 1]} : vector<8x512xf32> to vector<8x128xf32>
    %971 = math.tanh %970 : vector<8x128xf32>
    %972 = vector.extract_strided_slice %957 {offsets = [0, 384], sizes = [8, 128], strides = [1, 1]} : vector<8x512xf32> to vector<8x128xf32>
    %973 = arith.negf %972 : vector<8x128xf32>
    %974 = math.exp %973 : vector<8x128xf32>
    %cst_181 = arith.constant 1.000000e+00 : f32
    %975 = vector.broadcast %cst_181 : f32 to vector<8x128xf32>
    %976 = arith.addf %975, %974 : vector<8x128xf32>
    %977 = arith.divf %975, %976 : vector<8x128xf32>
    %978 = arith.mulf %969, %830 : vector<8x128xf32>
    %979 = arith.mulf %963, %971 : vector<8x128xf32>
    %980 = arith.addf %978, %979 : vector<8x128xf32>
    %981 = math.tanh %980 : vector<8x128xf32>
    %982 = arith.mulf %977, %981 : vector<8x128xf32>
    %983 = arith.mulf %41, %982 : vector<8x128xf32>
    %cst_182 = arith.constant dense<0.000000e+00> : vector<8xf32>
    %984 = vector.multi_reduction <add>, %983, %cst_182 [1] : vector<8x128xf32> to vector<8xf32>
    %985 = vector.shape_cast %984 : vector<8xf32> to vector<8x1xf32>
    %986 = arith.mulf %80, %982 : vector<8x128xf32>
    %cst_183 = arith.constant dense<0.000000e+00> : vector<8xf32>
    %987 = vector.multi_reduction <add>, %986, %cst_183 [1] : vector<8x128xf32> to vector<8xf32>
    %988 = vector.shape_cast %987 : vector<8xf32> to vector<8x1xf32>
    %989 = arith.mulf %119, %982 : vector<8x128xf32>
    %cst_184 = arith.constant dense<0.000000e+00> : vector<8xf32>
    %990 = vector.multi_reduction <add>, %989, %cst_184 [1] : vector<8x128xf32> to vector<8xf32>
    %991 = vector.shape_cast %990 : vector<8xf32> to vector<8x1xf32>
    %992 = arith.mulf %158, %982 : vector<8x128xf32>
    %cst_185 = arith.constant dense<0.000000e+00> : vector<8xf32>
    %993 = vector.multi_reduction <add>, %992, %cst_185 [1] : vector<8x128xf32> to vector<8xf32>
    %994 = vector.shape_cast %993 : vector<8xf32> to vector<8x1xf32>
    %995 = arith.mulf %197, %982 : vector<8x128xf32>
    %cst_186 = arith.constant dense<0.000000e+00> : vector<8xf32>
    %996 = vector.multi_reduction <add>, %995, %cst_186 [1] : vector<8x128xf32> to vector<8xf32>
    %997 = vector.shape_cast %996 : vector<8xf32> to vector<8x1xf32>
    %998 = arith.mulf %236, %982 : vector<8x128xf32>
    %cst_187 = arith.constant dense<0.000000e+00> : vector<8xf32>
    %999 = vector.multi_reduction <add>, %998, %cst_187 [1] : vector<8x128xf32> to vector<8xf32>
    %1000 = vector.shape_cast %999 : vector<8xf32> to vector<8x1xf32>
    %1001 = arith.mulf %275, %982 : vector<8x128xf32>
    %cst_188 = arith.constant dense<0.000000e+00> : vector<8xf32>
    %1002 = vector.multi_reduction <add>, %1001, %cst_188 [1] : vector<8x128xf32> to vector<8xf32>
    %1003 = vector.shape_cast %1002 : vector<8xf32> to vector<8x1xf32>
    %1004 = arith.mulf %314, %982 : vector<8x128xf32>
    %cst_189 = arith.constant dense<0.000000e+00> : vector<8xf32>
    %1005 = vector.multi_reduction <add>, %1004, %cst_189 [1] : vector<8x128xf32> to vector<8xf32>
    %1006 = vector.shape_cast %1005 : vector<8xf32> to vector<8x1xf32>
    %1007 = arith.maximumf %985, %988 : vector<8x1xf32>
    %1008 = arith.maximumf %1007, %991 : vector<8x1xf32>
    %1009 = arith.maximumf %1008, %994 : vector<8x1xf32>
    %1010 = arith.maximumf %1009, %997 : vector<8x1xf32>
    %1011 = arith.maximumf %1010, %1000 : vector<8x1xf32>
    %1012 = arith.maximumf %1011, %1003 : vector<8x1xf32>
    %1013 = arith.maximumf %1012, %1006 : vector<8x1xf32>
    %1014 = arith.subf %985, %1013 : vector<8x1xf32>
    %1015 = math.exp %1014 : vector<8x1xf32>
    %1016 = arith.subf %988, %1013 : vector<8x1xf32>
    %1017 = math.exp %1016 : vector<8x1xf32>
    %1018 = arith.subf %991, %1013 : vector<8x1xf32>
    %1019 = math.exp %1018 : vector<8x1xf32>
    %1020 = arith.subf %994, %1013 : vector<8x1xf32>
    %1021 = math.exp %1020 : vector<8x1xf32>
    %1022 = arith.subf %997, %1013 : vector<8x1xf32>
    %1023 = math.exp %1022 : vector<8x1xf32>
    %1024 = arith.subf %1000, %1013 : vector<8x1xf32>
    %1025 = math.exp %1024 : vector<8x1xf32>
    %1026 = arith.subf %1003, %1013 : vector<8x1xf32>
    %1027 = math.exp %1026 : vector<8x1xf32>
    %1028 = arith.subf %1006, %1013 : vector<8x1xf32>
    %1029 = math.exp %1028 : vector<8x1xf32>
    %1030 = arith.addf %1015, %1017 : vector<8x1xf32>
    %1031 = arith.addf %1030, %1019 : vector<8x1xf32>
    %1032 = arith.addf %1031, %1021 : vector<8x1xf32>
    %1033 = arith.addf %1032, %1023 : vector<8x1xf32>
    %1034 = arith.addf %1033, %1025 : vector<8x1xf32>
    %1035 = arith.addf %1034, %1027 : vector<8x1xf32>
    %1036 = arith.addf %1035, %1029 : vector<8x1xf32>
    %1037 = tpu.reciprocal %1036 {approx = true} : vector<8x1xf32> -> vector<8x1xf32>
    %1038 = arith.mulf %1015, %1037 : vector<8x1xf32>
    %1039 = vector.broadcast %1038 : vector<8x1xf32> to vector<8x128xf32>
    %1040 = arith.mulf %1039, %41 : vector<8x128xf32>
    %1041 = arith.mulf %1017, %1037 : vector<8x1xf32>
    %1042 = vector.broadcast %1041 : vector<8x1xf32> to vector<8x128xf32>
    %1043 = arith.mulf %1042, %80 : vector<8x128xf32>
    %1044 = arith.addf %1040, %1043 : vector<8x128xf32>
    %1045 = arith.mulf %1019, %1037 : vector<8x1xf32>
    %1046 = vector.broadcast %1045 : vector<8x1xf32> to vector<8x128xf32>
    %1047 = arith.mulf %1046, %119 : vector<8x128xf32>
    %1048 = arith.addf %1044, %1047 : vector<8x128xf32>
    %1049 = arith.mulf %1021, %1037 : vector<8x1xf32>
    %1050 = vector.broadcast %1049 : vector<8x1xf32> to vector<8x128xf32>
    %1051 = arith.mulf %1050, %158 : vector<8x128xf32>
    %1052 = arith.addf %1048, %1051 : vector<8x128xf32>
    %1053 = arith.mulf %1023, %1037 : vector<8x1xf32>
    %1054 = vector.broadcast %1053 : vector<8x1xf32> to vector<8x128xf32>
    %1055 = arith.mulf %1054, %197 : vector<8x128xf32>
    %1056 = arith.addf %1052, %1055 : vector<8x128xf32>
    %1057 = arith.mulf %1025, %1037 : vector<8x1xf32>
    %1058 = vector.broadcast %1057 : vector<8x1xf32> to vector<8x128xf32>
    %1059 = arith.mulf %1058, %236 : vector<8x128xf32>
    %1060 = arith.addf %1056, %1059 : vector<8x128xf32>
    %1061 = arith.mulf %1027, %1037 : vector<8x1xf32>
    %1062 = vector.broadcast %1061 : vector<8x1xf32> to vector<8x128xf32>
    %1063 = arith.mulf %1062, %275 : vector<8x128xf32>
    %1064 = arith.addf %1060, %1063 : vector<8x128xf32>
    %1065 = arith.mulf %1029, %1037 : vector<8x1xf32>
    %1066 = vector.broadcast %1065 : vector<8x1xf32> to vector<8x128xf32>
    %1067 = arith.mulf %1066, %314 : vector<8x128xf32>
    %1068 = arith.addf %1064, %1067 : vector<8x128xf32>
    %1069 = arith.truncf %1068 : vector<8x128xf32> to vector<8x128xbf16>
    %1070 = arith.truncf %982 : vector<8x128xf32> to vector<8x128xbf16>
    %1071 = tpu.concatenate %1069, %1070 in 1 : vector<8x128xbf16>, vector<8x128xbf16> -> vector<8x256xbf16>
    %cst_190 = arith.constant dense<0.000000e+00> : vector<8x128xf32>
    %1072 = tpu.matmul %1071, %345, %cst_190 {dimension_numbers = #tpu.dot_dimension_numbers<[1], [0], [0], [1], [0, 0, 1, 1], [], []>} : vector<8x256xbf16>, vector<256x128xbf16>, vector<8x128xf32> -> vector<8x128xf32>
    %1073 = vector.broadcast %346 : vector<1x128xf32> to vector<8x128xf32>
    %1074 = arith.addf %1072, %1073 : vector<8x128xf32>
    %1075 = math.tanh %1074 : vector<8x128xf32>
    %1076 = arith.truncf %1075 : vector<8x128xf32> to vector<8x128xbf16>
    %cst_191 = arith.constant dense<0.000000e+00> : vector<8x128xf32>
    %1077 = tpu.matmul %1076, %347, %cst_191 {dimension_numbers = #tpu.dot_dimension_numbers<[1], [0], [0], [1], [0, 0, 1, 1], [], []>} : vector<8x128xbf16>, vector<128x128xbf16>, vector<8x128xf32> -> vector<8x128xf32>
    %1078 = vector.broadcast %348 : vector<1x128xf32> to vector<8x128xf32>
    %1079 = arith.addf %1077, %1078 : vector<8x128xf32>
    %cst_192 = arith.constant dense<0xFF800000> : vector<8xf32>
    %1080 = vector.multi_reduction <maximumf>, %1079, %cst_192 [1] : vector<8x128xf32> to vector<8xf32>
    %1081 = vector.shape_cast %1080 : vector<8xf32> to vector<8x1xf32>
    %1082 = vector.broadcast %1081 : vector<8x1xf32> to vector<8x128xf32>
    %1083 = arith.cmpf oge, %1079, %1082 : vector<8x128xf32>
    %c128_i32_193 = arith.constant 128 : i32
    %1084 = vector.broadcast %c128_i32_193 : i32 to vector<8x128xi32>
    %1085 = arith.select %1083, %349, %1084 : vector<8x128xi1>, vector<8x128xi32>
    %cst_194 = arith.constant dense<2147483647> : vector<8xi32>
    %1086 = vector.multi_reduction <minsi>, %1085, %cst_194 [1] : vector<8x128xi32> to vector<8xi32>
    %1087 = vector.shape_cast %1086 : vector<8xi32> to vector<8x1xi32>
    %1088 = vector.broadcast %1087 : vector<8x1xi32> to vector<8x128xi32>
    %1089 = arith.cmpi eq, %349, %1088 : vector<8x128xi32>
    %1090 = arith.extui %1089 : vector<8x128xi1> to vector<8x128xi32>
    %1091 = arith.sitofp %1090 : vector<8x128xi32> to vector<8x128xf32>
    %1092 = arith.truncf %1091 : vector<8x128xf32> to vector<8x128xbf16>
    %1093 = vector.broadcast %1081 : vector<8x1xf32> to vector<8x128xf32>
    %1094 = arith.subf %1079, %1093 : vector<8x128xf32>
    %1095 = math.exp %1094 : vector<8x128xf32>
    %cst_195 = arith.constant dense<0.000000e+00> : vector<8xf32>
    %1096 = vector.multi_reduction <add>, %1095, %cst_195 [1] : vector<8x128xf32> to vector<8xf32>
    %1097 = vector.shape_cast %1096 : vector<8xf32> to vector<8x1xf32>
    %1098 = math.log %1097 : vector<8x1xf32>
    %1099 = arith.addf %1081, %1098 : vector<8x1xf32>
    %1100 = vector.broadcast %1099 : vector<8x1xf32> to vector<8x128xf32>
    %1101 = arith.subf %1079, %1100 : vector<8x128xf32>
    %c4_196 = arith.constant 4 : index
    %c0_197 = arith.constant 0 : index
    %c0_198 = arith.constant 0 : index
    %1102 = vector.load %arg12[%c4_196, %c0_197, %c0_198] : memref<8x8x128xf32, #tpu.memory_space<vmem>>, vector<1x8x128xf32>
    %1103 = vector.shape_cast %1102 : vector<1x8x128xf32> to vector<8x128xf32>
    %1104 = vector.shape_cast %1101 : vector<8x128xf32> to vector<1x8x128xf32>
    tpu.vector_store %arg12[%c4_196, %c0_197, %c0_198], %1104 {strides = array<i32>} : memref<8x8x128xf32, #tpu.memory_space<vmem>>, vector<1x8x128xf32>,
    %1105 = arith.truncf %982 : vector<8x128xf32> to vector<8x128xbf16>
    %1106 = tpu.concatenate %1092, %1105 in 1 : vector<8x128xbf16>, vector<8x128xbf16> -> vector<8x256xbf16>
    %cst_199 = arith.constant dense<0.000000e+00> : vector<8x512xf32>
    %1107 = tpu.matmul %1106, %344, %cst_199 {dimension_numbers = #tpu.dot_dimension_numbers<[1], [0], [0], [1], [0, 0, 1, 1], [], []>} : vector<8x256xbf16>, vector<256x512xbf16>, vector<8x512xf32> -> vector<8x512xf32>
    %1108 = vector.extract_strided_slice %1107 {offsets = [0, 0], sizes = [8, 128], strides = [1, 1]} : vector<8x512xf32> to vector<8x128xf32>
    %1109 = arith.negf %1108 : vector<8x128xf32>
    %1110 = math.exp %1109 : vector<8x128xf32>
    %cst_200 = arith.constant 1.000000e+00 : f32
    %1111 = vector.broadcast %cst_200 : f32 to vector<8x128xf32>
    %1112 = arith.addf %1111, %1110 : vector<8x128xf32>
    %1113 = arith.divf %1111, %1112 : vector<8x128xf32>
    %1114 = vector.extract_strided_slice %1107 {offsets = [0, 128], sizes = [8, 128], strides = [1, 1]} : vector<8x512xf32> to vector<8x128xf32>
    %1115 = arith.negf %1114 : vector<8x128xf32>
    %1116 = math.exp %1115 : vector<8x128xf32>
    %cst_201 = arith.constant 1.000000e+00 : f32
    %1117 = vector.broadcast %cst_201 : f32 to vector<8x128xf32>
    %1118 = arith.addf %1117, %1116 : vector<8x128xf32>
    %1119 = arith.divf %1117, %1118 : vector<8x128xf32>
    %1120 = vector.extract_strided_slice %1107 {offsets = [0, 256], sizes = [8, 128], strides = [1, 1]} : vector<8x512xf32> to vector<8x128xf32>
    %1121 = math.tanh %1120 : vector<8x128xf32>
    %1122 = vector.extract_strided_slice %1107 {offsets = [0, 384], sizes = [8, 128], strides = [1, 1]} : vector<8x512xf32> to vector<8x128xf32>
    %1123 = arith.negf %1122 : vector<8x128xf32>
    %1124 = math.exp %1123 : vector<8x128xf32>
    %cst_202 = arith.constant 1.000000e+00 : f32
    %1125 = vector.broadcast %cst_202 : f32 to vector<8x128xf32>
    %1126 = arith.addf %1125, %1124 : vector<8x128xf32>
    %1127 = arith.divf %1125, %1126 : vector<8x128xf32>
    %1128 = arith.mulf %1119, %980 : vector<8x128xf32>
    %1129 = arith.mulf %1113, %1121 : vector<8x128xf32>
    %1130 = arith.addf %1128, %1129 : vector<8x128xf32>
    %1131 = math.tanh %1130 : vector<8x128xf32>
    %1132 = arith.mulf %1127, %1131 : vector<8x128xf32>
    %1133 = arith.mulf %41, %1132 : vector<8x128xf32>
    %cst_203 = arith.constant dense<0.000000e+00> : vector<8xf32>
    %1134 = vector.multi_reduction <add>, %1133, %cst_203 [1] : vector<8x128xf32> to vector<8xf32>
    %1135 = vector.shape_cast %1134 : vector<8xf32> to vector<8x1xf32>
    %1136 = arith.mulf %80, %1132 : vector<8x128xf32>
    %cst_204 = arith.constant dense<0.000000e+00> : vector<8xf32>
    %1137 = vector.multi_reduction <add>, %1136, %cst_204 [1] : vector<8x128xf32> to vector<8xf32>
    %1138 = vector.shape_cast %1137 : vector<8xf32> to vector<8x1xf32>
    %1139 = arith.mulf %119, %1132 : vector<8x128xf32>
    %cst_205 = arith.constant dense<0.000000e+00> : vector<8xf32>
    %1140 = vector.multi_reduction <add>, %1139, %cst_205 [1] : vector<8x128xf32> to vector<8xf32>
    %1141 = vector.shape_cast %1140 : vector<8xf32> to vector<8x1xf32>
    %1142 = arith.mulf %158, %1132 : vector<8x128xf32>
    %cst_206 = arith.constant dense<0.000000e+00> : vector<8xf32>
    %1143 = vector.multi_reduction <add>, %1142, %cst_206 [1] : vector<8x128xf32> to vector<8xf32>
    %1144 = vector.shape_cast %1143 : vector<8xf32> to vector<8x1xf32>
    %1145 = arith.mulf %197, %1132 : vector<8x128xf32>
    %cst_207 = arith.constant dense<0.000000e+00> : vector<8xf32>
    %1146 = vector.multi_reduction <add>, %1145, %cst_207 [1] : vector<8x128xf32> to vector<8xf32>
    %1147 = vector.shape_cast %1146 : vector<8xf32> to vector<8x1xf32>
    %1148 = arith.mulf %236, %1132 : vector<8x128xf32>
    %cst_208 = arith.constant dense<0.000000e+00> : vector<8xf32>
    %1149 = vector.multi_reduction <add>, %1148, %cst_208 [1] : vector<8x128xf32> to vector<8xf32>
    %1150 = vector.shape_cast %1149 : vector<8xf32> to vector<8x1xf32>
    %1151 = arith.mulf %275, %1132 : vector<8x128xf32>
    %cst_209 = arith.constant dense<0.000000e+00> : vector<8xf32>
    %1152 = vector.multi_reduction <add>, %1151, %cst_209 [1] : vector<8x128xf32> to vector<8xf32>
    %1153 = vector.shape_cast %1152 : vector<8xf32> to vector<8x1xf32>
    %1154 = arith.mulf %314, %1132 : vector<8x128xf32>
    %cst_210 = arith.constant dense<0.000000e+00> : vector<8xf32>
    %1155 = vector.multi_reduction <add>, %1154, %cst_210 [1] : vector<8x128xf32> to vector<8xf32>
    %1156 = vector.shape_cast %1155 : vector<8xf32> to vector<8x1xf32>
    %1157 = arith.maximumf %1135, %1138 : vector<8x1xf32>
    %1158 = arith.maximumf %1157, %1141 : vector<8x1xf32>
    %1159 = arith.maximumf %1158, %1144 : vector<8x1xf32>
    %1160 = arith.maximumf %1159, %1147 : vector<8x1xf32>
    %1161 = arith.maximumf %1160, %1150 : vector<8x1xf32>
    %1162 = arith.maximumf %1161, %1153 : vector<8x1xf32>
    %1163 = arith.maximumf %1162, %1156 : vector<8x1xf32>
    %1164 = arith.subf %1135, %1163 : vector<8x1xf32>
    %1165 = math.exp %1164 : vector<8x1xf32>
    %1166 = arith.subf %1138, %1163 : vector<8x1xf32>
    %1167 = math.exp %1166 : vector<8x1xf32>
    %1168 = arith.subf %1141, %1163 : vector<8x1xf32>
    %1169 = math.exp %1168 : vector<8x1xf32>
    %1170 = arith.subf %1144, %1163 : vector<8x1xf32>
    %1171 = math.exp %1170 : vector<8x1xf32>
    %1172 = arith.subf %1147, %1163 : vector<8x1xf32>
    %1173 = math.exp %1172 : vector<8x1xf32>
    %1174 = arith.subf %1150, %1163 : vector<8x1xf32>
    %1175 = math.exp %1174 : vector<8x1xf32>
    %1176 = arith.subf %1153, %1163 : vector<8x1xf32>
    %1177 = math.exp %1176 : vector<8x1xf32>
    %1178 = arith.subf %1156, %1163 : vector<8x1xf32>
    %1179 = math.exp %1178 : vector<8x1xf32>
    %1180 = arith.addf %1165, %1167 : vector<8x1xf32>
    %1181 = arith.addf %1180, %1169 : vector<8x1xf32>
    %1182 = arith.addf %1181, %1171 : vector<8x1xf32>
    %1183 = arith.addf %1182, %1173 : vector<8x1xf32>
    %1184 = arith.addf %1183, %1175 : vector<8x1xf32>
    %1185 = arith.addf %1184, %1177 : vector<8x1xf32>
    %1186 = arith.addf %1185, %1179 : vector<8x1xf32>
    %1187 = tpu.reciprocal %1186 {approx = true} : vector<8x1xf32> -> vector<8x1xf32>
    %1188 = arith.mulf %1165, %1187 : vector<8x1xf32>
    %1189 = vector.broadcast %1188 : vector<8x1xf32> to vector<8x128xf32>
    %1190 = arith.mulf %1189, %41 : vector<8x128xf32>
    %1191 = arith.mulf %1167, %1187 : vector<8x1xf32>
    %1192 = vector.broadcast %1191 : vector<8x1xf32> to vector<8x128xf32>
    %1193 = arith.mulf %1192, %80 : vector<8x128xf32>
    %1194 = arith.addf %1190, %1193 : vector<8x128xf32>
    %1195 = arith.mulf %1169, %1187 : vector<8x1xf32>
    %1196 = vector.broadcast %1195 : vector<8x1xf32> to vector<8x128xf32>
    %1197 = arith.mulf %1196, %119 : vector<8x128xf32>
    %1198 = arith.addf %1194, %1197 : vector<8x128xf32>
    %1199 = arith.mulf %1171, %1187 : vector<8x1xf32>
    %1200 = vector.broadcast %1199 : vector<8x1xf32> to vector<8x128xf32>
    %1201 = arith.mulf %1200, %158 : vector<8x128xf32>
    %1202 = arith.addf %1198, %1201 : vector<8x128xf32>
    %1203 = arith.mulf %1173, %1187 : vector<8x1xf32>
    %1204 = vector.broadcast %1203 : vector<8x1xf32> to vector<8x128xf32>
    %1205 = arith.mulf %1204, %197 : vector<8x128xf32>
    %1206 = arith.addf %1202, %1205 : vector<8x128xf32>
    %1207 = arith.mulf %1175, %1187 : vector<8x1xf32>
    %1208 = vector.broadcast %1207 : vector<8x1xf32> to vector<8x128xf32>
    %1209 = arith.mulf %1208, %236 : vector<8x128xf32>
    %1210 = arith.addf %1206, %1209 : vector<8x128xf32>
    %1211 = arith.mulf %1177, %1187 : vector<8x1xf32>
    %1212 = vector.broadcast %1211 : vector<8x1xf32> to vector<8x128xf32>
    %1213 = arith.mulf %1212, %275 : vector<8x128xf32>
    %1214 = arith.addf %1210, %1213 : vector<8x128xf32>
    %1215 = arith.mulf %1179, %1187 : vector<8x1xf32>
    %1216 = vector.broadcast %1215 : vector<8x1xf32> to vector<8x128xf32>
    %1217 = arith.mulf %1216, %314 : vector<8x128xf32>
    %1218 = arith.addf %1214, %1217 : vector<8x128xf32>
    %1219 = arith.truncf %1218 : vector<8x128xf32> to vector<8x128xbf16>
    %1220 = arith.truncf %1132 : vector<8x128xf32> to vector<8x128xbf16>
    %1221 = tpu.concatenate %1219, %1220 in 1 : vector<8x128xbf16>, vector<8x128xbf16> -> vector<8x256xbf16>
    %cst_211 = arith.constant dense<0.000000e+00> : vector<8x128xf32>
    %1222 = tpu.matmul %1221, %345, %cst_211 {dimension_numbers = #tpu.dot_dimension_numbers<[1], [0], [0], [1], [0, 0, 1, 1], [], []>} : vector<8x256xbf16>, vector<256x128xbf16>, vector<8x128xf32> -> vector<8x128xf32>
    %1223 = vector.broadcast %346 : vector<1x128xf32> to vector<8x128xf32>
    %1224 = arith.addf %1222, %1223 : vector<8x128xf32>
    %1225 = math.tanh %1224 : vector<8x128xf32>
    %1226 = arith.truncf %1225 : vector<8x128xf32> to vector<8x128xbf16>
    %cst_212 = arith.constant dense<0.000000e+00> : vector<8x128xf32>
    %1227 = tpu.matmul %1226, %347, %cst_212 {dimension_numbers = #tpu.dot_dimension_numbers<[1], [0], [0], [1], [0, 0, 1, 1], [], []>} : vector<8x128xbf16>, vector<128x128xbf16>, vector<8x128xf32> -> vector<8x128xf32>
    %1228 = vector.broadcast %348 : vector<1x128xf32> to vector<8x128xf32>
    %1229 = arith.addf %1227, %1228 : vector<8x128xf32>
    %cst_213 = arith.constant dense<0xFF800000> : vector<8xf32>
    %1230 = vector.multi_reduction <maximumf>, %1229, %cst_213 [1] : vector<8x128xf32> to vector<8xf32>
    %1231 = vector.shape_cast %1230 : vector<8xf32> to vector<8x1xf32>
    %1232 = vector.broadcast %1231 : vector<8x1xf32> to vector<8x128xf32>
    %1233 = arith.cmpf oge, %1229, %1232 : vector<8x128xf32>
    %c128_i32_214 = arith.constant 128 : i32
    %1234 = vector.broadcast %c128_i32_214 : i32 to vector<8x128xi32>
    %1235 = arith.select %1233, %349, %1234 : vector<8x128xi1>, vector<8x128xi32>
    %cst_215 = arith.constant dense<2147483647> : vector<8xi32>
    %1236 = vector.multi_reduction <minsi>, %1235, %cst_215 [1] : vector<8x128xi32> to vector<8xi32>
    %1237 = vector.shape_cast %1236 : vector<8xi32> to vector<8x1xi32>
    %1238 = vector.broadcast %1237 : vector<8x1xi32> to vector<8x128xi32>
    %1239 = arith.cmpi eq, %349, %1238 : vector<8x128xi32>
    %1240 = arith.extui %1239 : vector<8x128xi1> to vector<8x128xi32>
    %1241 = arith.sitofp %1240 : vector<8x128xi32> to vector<8x128xf32>
    %1242 = arith.truncf %1241 : vector<8x128xf32> to vector<8x128xbf16>
    %1243 = vector.broadcast %1231 : vector<8x1xf32> to vector<8x128xf32>
    %1244 = arith.subf %1229, %1243 : vector<8x128xf32>
    %1245 = math.exp %1244 : vector<8x128xf32>
    %cst_216 = arith.constant dense<0.000000e+00> : vector<8xf32>
    %1246 = vector.multi_reduction <add>, %1245, %cst_216 [1] : vector<8x128xf32> to vector<8xf32>
    %1247 = vector.shape_cast %1246 : vector<8xf32> to vector<8x1xf32>
    %1248 = math.log %1247 : vector<8x1xf32>
    %1249 = arith.addf %1231, %1248 : vector<8x1xf32>
    %1250 = vector.broadcast %1249 : vector<8x1xf32> to vector<8x128xf32>
    %1251 = arith.subf %1229, %1250 : vector<8x128xf32>
    %c5_217 = arith.constant 5 : index
    %c0_218 = arith.constant 0 : index
    %c0_219 = arith.constant 0 : index
    %1252 = vector.load %arg12[%c5_217, %c0_218, %c0_219] : memref<8x8x128xf32, #tpu.memory_space<vmem>>, vector<1x8x128xf32>
    %1253 = vector.shape_cast %1252 : vector<1x8x128xf32> to vector<8x128xf32>
    %1254 = vector.shape_cast %1251 : vector<8x128xf32> to vector<1x8x128xf32>
    tpu.vector_store %arg12[%c5_217, %c0_218, %c0_219], %1254 {strides = array<i32>} : memref<8x8x128xf32, #tpu.memory_space<vmem>>, vector<1x8x128xf32>,
    %1255 = arith.truncf %1132 : vector<8x128xf32> to vector<8x128xbf16>
    %1256 = tpu.concatenate %1242, %1255 in 1 : vector<8x128xbf16>, vector<8x128xbf16> -> vector<8x256xbf16>
    %cst_220 = arith.constant dense<0.000000e+00> : vector<8x512xf32>
    %1257 = tpu.matmul %1256, %344, %cst_220 {dimension_numbers = #tpu.dot_dimension_numbers<[1], [0], [0], [1], [0, 0, 1, 1], [], []>} : vector<8x256xbf16>, vector<256x512xbf16>, vector<8x512xf32> -> vector<8x512xf32>
    %1258 = vector.extract_strided_slice %1257 {offsets = [0, 0], sizes = [8, 128], strides = [1, 1]} : vector<8x512xf32> to vector<8x128xf32>
    %1259 = arith.negf %1258 : vector<8x128xf32>
    %1260 = math.exp %1259 : vector<8x128xf32>
    %cst_221 = arith.constant 1.000000e+00 : f32
    %1261 = vector.broadcast %cst_221 : f32 to vector<8x128xf32>
    %1262 = arith.addf %1261, %1260 : vector<8x128xf32>
    %1263 = arith.divf %1261, %1262 : vector<8x128xf32>
    %1264 = vector.extract_strided_slice %1257 {offsets = [0, 128], sizes = [8, 128], strides = [1, 1]} : vector<8x512xf32> to vector<8x128xf32>
    %1265 = arith.negf %1264 : vector<8x128xf32>
    %1266 = math.exp %1265 : vector<8x128xf32>
    %cst_222 = arith.constant 1.000000e+00 : f32
    %1267 = vector.broadcast %cst_222 : f32 to vector<8x128xf32>
    %1268 = arith.addf %1267, %1266 : vector<8x128xf32>
    %1269 = arith.divf %1267, %1268 : vector<8x128xf32>
    %1270 = vector.extract_strided_slice %1257 {offsets = [0, 256], sizes = [8, 128], strides = [1, 1]} : vector<8x512xf32> to vector<8x128xf32>
    %1271 = math.tanh %1270 : vector<8x128xf32>
    %1272 = vector.extract_strided_slice %1257 {offsets = [0, 384], sizes = [8, 128], strides = [1, 1]} : vector<8x512xf32> to vector<8x128xf32>
    %1273 = arith.negf %1272 : vector<8x128xf32>
    %1274 = math.exp %1273 : vector<8x128xf32>
    %cst_223 = arith.constant 1.000000e+00 : f32
    %1275 = vector.broadcast %cst_223 : f32 to vector<8x128xf32>
    %1276 = arith.addf %1275, %1274 : vector<8x128xf32>
    %1277 = arith.divf %1275, %1276 : vector<8x128xf32>
    %1278 = arith.mulf %1269, %1130 : vector<8x128xf32>
    %1279 = arith.mulf %1263, %1271 : vector<8x128xf32>
    %1280 = arith.addf %1278, %1279 : vector<8x128xf32>
    %1281 = math.tanh %1280 : vector<8x128xf32>
    %1282 = arith.mulf %1277, %1281 : vector<8x128xf32>
    %1283 = arith.mulf %41, %1282 : vector<8x128xf32>
    %cst_224 = arith.constant dense<0.000000e+00> : vector<8xf32>
    %1284 = vector.multi_reduction <add>, %1283, %cst_224 [1] : vector<8x128xf32> to vector<8xf32>
    %1285 = vector.shape_cast %1284 : vector<8xf32> to vector<8x1xf32>
    %1286 = arith.mulf %80, %1282 : vector<8x128xf32>
    %cst_225 = arith.constant dense<0.000000e+00> : vector<8xf32>
    %1287 = vector.multi_reduction <add>, %1286, %cst_225 [1] : vector<8x128xf32> to vector<8xf32>
    %1288 = vector.shape_cast %1287 : vector<8xf32> to vector<8x1xf32>
    %1289 = arith.mulf %119, %1282 : vector<8x128xf32>
    %cst_226 = arith.constant dense<0.000000e+00> : vector<8xf32>
    %1290 = vector.multi_reduction <add>, %1289, %cst_226 [1] : vector<8x128xf32> to vector<8xf32>
    %1291 = vector.shape_cast %1290 : vector<8xf32> to vector<8x1xf32>
    %1292 = arith.mulf %158, %1282 : vector<8x128xf32>
    %cst_227 = arith.constant dense<0.000000e+00> : vector<8xf32>
    %1293 = vector.multi_reduction <add>, %1292, %cst_227 [1] : vector<8x128xf32> to vector<8xf32>
    %1294 = vector.shape_cast %1293 : vector<8xf32> to vector<8x1xf32>
    %1295 = arith.mulf %197, %1282 : vector<8x128xf32>
    %cst_228 = arith.constant dense<0.000000e+00> : vector<8xf32>
    %1296 = vector.multi_reduction <add>, %1295, %cst_228 [1] : vector<8x128xf32> to vector<8xf32>
    %1297 = vector.shape_cast %1296 : vector<8xf32> to vector<8x1xf32>
    %1298 = arith.mulf %236, %1282 : vector<8x128xf32>
    %cst_229 = arith.constant dense<0.000000e+00> : vector<8xf32>
    %1299 = vector.multi_reduction <add>, %1298, %cst_229 [1] : vector<8x128xf32> to vector<8xf32>
    %1300 = vector.shape_cast %1299 : vector<8xf32> to vector<8x1xf32>
    %1301 = arith.mulf %275, %1282 : vector<8x128xf32>
    %cst_230 = arith.constant dense<0.000000e+00> : vector<8xf32>
    %1302 = vector.multi_reduction <add>, %1301, %cst_230 [1] : vector<8x128xf32> to vector<8xf32>
    %1303 = vector.shape_cast %1302 : vector<8xf32> to vector<8x1xf32>
    %1304 = arith.mulf %314, %1282 : vector<8x128xf32>
    %cst_231 = arith.constant dense<0.000000e+00> : vector<8xf32>
    %1305 = vector.multi_reduction <add>, %1304, %cst_231 [1] : vector<8x128xf32> to vector<8xf32>
    %1306 = vector.shape_cast %1305 : vector<8xf32> to vector<8x1xf32>
    %1307 = arith.maximumf %1285, %1288 : vector<8x1xf32>
    %1308 = arith.maximumf %1307, %1291 : vector<8x1xf32>
    %1309 = arith.maximumf %1308, %1294 : vector<8x1xf32>
    %1310 = arith.maximumf %1309, %1297 : vector<8x1xf32>
    %1311 = arith.maximumf %1310, %1300 : vector<8x1xf32>
    %1312 = arith.maximumf %1311, %1303 : vector<8x1xf32>
    %1313 = arith.maximumf %1312, %1306 : vector<8x1xf32>
    %1314 = arith.subf %1285, %1313 : vector<8x1xf32>
    %1315 = math.exp %1314 : vector<8x1xf32>
    %1316 = arith.subf %1288, %1313 : vector<8x1xf32>
    %1317 = math.exp %1316 : vector<8x1xf32>
    %1318 = arith.subf %1291, %1313 : vector<8x1xf32>
    %1319 = math.exp %1318 : vector<8x1xf32>
    %1320 = arith.subf %1294, %1313 : vector<8x1xf32>
    %1321 = math.exp %1320 : vector<8x1xf32>
    %1322 = arith.subf %1297, %1313 : vector<8x1xf32>
    %1323 = math.exp %1322 : vector<8x1xf32>
    %1324 = arith.subf %1300, %1313 : vector<8x1xf32>
    %1325 = math.exp %1324 : vector<8x1xf32>
    %1326 = arith.subf %1303, %1313 : vector<8x1xf32>
    %1327 = math.exp %1326 : vector<8x1xf32>
    %1328 = arith.subf %1306, %1313 : vector<8x1xf32>
    %1329 = math.exp %1328 : vector<8x1xf32>
    %1330 = arith.addf %1315, %1317 : vector<8x1xf32>
    %1331 = arith.addf %1330, %1319 : vector<8x1xf32>
    %1332 = arith.addf %1331, %1321 : vector<8x1xf32>
    %1333 = arith.addf %1332, %1323 : vector<8x1xf32>
    %1334 = arith.addf %1333, %1325 : vector<8x1xf32>
    %1335 = arith.addf %1334, %1327 : vector<8x1xf32>
    %1336 = arith.addf %1335, %1329 : vector<8x1xf32>
    %1337 = tpu.reciprocal %1336 {approx = true} : vector<8x1xf32> -> vector<8x1xf32>
    %1338 = arith.mulf %1315, %1337 : vector<8x1xf32>
    %1339 = vector.broadcast %1338 : vector<8x1xf32> to vector<8x128xf32>
    %1340 = arith.mulf %1339, %41 : vector<8x128xf32>
    %1341 = arith.mulf %1317, %1337 : vector<8x1xf32>
    %1342 = vector.broadcast %1341 : vector<8x1xf32> to vector<8x128xf32>
    %1343 = arith.mulf %1342, %80 : vector<8x128xf32>
    %1344 = arith.addf %1340, %1343 : vector<8x128xf32>
    %1345 = arith.mulf %1319, %1337 : vector<8x1xf32>
    %1346 = vector.broadcast %1345 : vector<8x1xf32> to vector<8x128xf32>
    %1347 = arith.mulf %1346, %119 : vector<8x128xf32>
    %1348 = arith.addf %1344, %1347 : vector<8x128xf32>
    %1349 = arith.mulf %1321, %1337 : vector<8x1xf32>
    %1350 = vector.broadcast %1349 : vector<8x1xf32> to vector<8x128xf32>
    %1351 = arith.mulf %1350, %158 : vector<8x128xf32>
    %1352 = arith.addf %1348, %1351 : vector<8x128xf32>
    %1353 = arith.mulf %1323, %1337 : vector<8x1xf32>
    %1354 = vector.broadcast %1353 : vector<8x1xf32> to vector<8x128xf32>
    %1355 = arith.mulf %1354, %197 : vector<8x128xf32>
    %1356 = arith.addf %1352, %1355 : vector<8x128xf32>
    %1357 = arith.mulf %1325, %1337 : vector<8x1xf32>
    %1358 = vector.broadcast %1357 : vector<8x1xf32> to vector<8x128xf32>
    %1359 = arith.mulf %1358, %236 : vector<8x128xf32>
    %1360 = arith.addf %1356, %1359 : vector<8x128xf32>
    %1361 = arith.mulf %1327, %1337 : vector<8x1xf32>
    %1362 = vector.broadcast %1361 : vector<8x1xf32> to vector<8x128xf32>
    %1363 = arith.mulf %1362, %275 : vector<8x128xf32>
    %1364 = arith.addf %1360, %1363 : vector<8x128xf32>
    %1365 = arith.mulf %1329, %1337 : vector<8x1xf32>
    %1366 = vector.broadcast %1365 : vector<8x1xf32> to vector<8x128xf32>
    %1367 = arith.mulf %1366, %314 : vector<8x128xf32>
    %1368 = arith.addf %1364, %1367 : vector<8x128xf32>
    %1369 = arith.truncf %1368 : vector<8x128xf32> to vector<8x128xbf16>
    %1370 = arith.truncf %1282 : vector<8x128xf32> to vector<8x128xbf16>
    %1371 = tpu.concatenate %1369, %1370 in 1 : vector<8x128xbf16>, vector<8x128xbf16> -> vector<8x256xbf16>
    %cst_232 = arith.constant dense<0.000000e+00> : vector<8x128xf32>
    %1372 = tpu.matmul %1371, %345, %cst_232 {dimension_numbers = #tpu.dot_dimension_numbers<[1], [0], [0], [1], [0, 0, 1, 1], [], []>} : vector<8x256xbf16>, vector<256x128xbf16>, vector<8x128xf32> -> vector<8x128xf32>
    %1373 = vector.broadcast %346 : vector<1x128xf32> to vector<8x128xf32>
    %1374 = arith.addf %1372, %1373 : vector<8x128xf32>
    %1375 = math.tanh %1374 : vector<8x128xf32>
    %1376 = arith.truncf %1375 : vector<8x128xf32> to vector<8x128xbf16>
    %cst_233 = arith.constant dense<0.000000e+00> : vector<8x128xf32>
    %1377 = tpu.matmul %1376, %347, %cst_233 {dimension_numbers = #tpu.dot_dimension_numbers<[1], [0], [0], [1], [0, 0, 1, 1], [], []>} : vector<8x128xbf16>, vector<128x128xbf16>, vector<8x128xf32> -> vector<8x128xf32>
    %1378 = vector.broadcast %348 : vector<1x128xf32> to vector<8x128xf32>
    %1379 = arith.addf %1377, %1378 : vector<8x128xf32>
    %cst_234 = arith.constant dense<0xFF800000> : vector<8xf32>
    %1380 = vector.multi_reduction <maximumf>, %1379, %cst_234 [1] : vector<8x128xf32> to vector<8xf32>
    %1381 = vector.shape_cast %1380 : vector<8xf32> to vector<8x1xf32>
    %1382 = vector.broadcast %1381 : vector<8x1xf32> to vector<8x128xf32>
    %1383 = arith.cmpf oge, %1379, %1382 : vector<8x128xf32>
    %c128_i32_235 = arith.constant 128 : i32
    %1384 = vector.broadcast %c128_i32_235 : i32 to vector<8x128xi32>
    %1385 = arith.select %1383, %349, %1384 : vector<8x128xi1>, vector<8x128xi32>
    %cst_236 = arith.constant dense<2147483647> : vector<8xi32>
    %1386 = vector.multi_reduction <minsi>, %1385, %cst_236 [1] : vector<8x128xi32> to vector<8xi32>
    %1387 = vector.shape_cast %1386 : vector<8xi32> to vector<8x1xi32>
    %1388 = vector.broadcast %1387 : vector<8x1xi32> to vector<8x128xi32>
    %1389 = arith.cmpi eq, %349, %1388 : vector<8x128xi32>
    %1390 = arith.extui %1389 : vector<8x128xi1> to vector<8x128xi32>
    %1391 = arith.sitofp %1390 : vector<8x128xi32> to vector<8x128xf32>
    %1392 = arith.truncf %1391 : vector<8x128xf32> to vector<8x128xbf16>
    %1393 = vector.broadcast %1381 : vector<8x1xf32> to vector<8x128xf32>
    %1394 = arith.subf %1379, %1393 : vector<8x128xf32>
    %1395 = math.exp %1394 : vector<8x128xf32>
    %cst_237 = arith.constant dense<0.000000e+00> : vector<8xf32>
    %1396 = vector.multi_reduction <add>, %1395, %cst_237 [1] : vector<8x128xf32> to vector<8xf32>
    %1397 = vector.shape_cast %1396 : vector<8xf32> to vector<8x1xf32>
    %1398 = math.log %1397 : vector<8x1xf32>
    %1399 = arith.addf %1381, %1398 : vector<8x1xf32>
    %1400 = vector.broadcast %1399 : vector<8x1xf32> to vector<8x128xf32>
    %1401 = arith.subf %1379, %1400 : vector<8x128xf32>
    %c6_238 = arith.constant 6 : index
    %c0_239 = arith.constant 0 : index
    %c0_240 = arith.constant 0 : index
    %1402 = vector.load %arg12[%c6_238, %c0_239, %c0_240] : memref<8x8x128xf32, #tpu.memory_space<vmem>>, vector<1x8x128xf32>
    %1403 = vector.shape_cast %1402 : vector<1x8x128xf32> to vector<8x128xf32>
    %1404 = vector.shape_cast %1401 : vector<8x128xf32> to vector<1x8x128xf32>
    tpu.vector_store %arg12[%c6_238, %c0_239, %c0_240], %1404 {strides = array<i32>} : memref<8x8x128xf32, #tpu.memory_space<vmem>>, vector<1x8x128xf32>,
    %1405 = arith.truncf %1282 : vector<8x128xf32> to vector<8x128xbf16>
    %1406 = tpu.concatenate %1392, %1405 in 1 : vector<8x128xbf16>, vector<8x128xbf16> -> vector<8x256xbf16>
    %cst_241 = arith.constant dense<0.000000e+00> : vector<8x512xf32>
    %1407 = tpu.matmul %1406, %344, %cst_241 {dimension_numbers = #tpu.dot_dimension_numbers<[1], [0], [0], [1], [0, 0, 1, 1], [], []>} : vector<8x256xbf16>, vector<256x512xbf16>, vector<8x512xf32> -> vector<8x512xf32>
    %1408 = vector.extract_strided_slice %1407 {offsets = [0, 0], sizes = [8, 128], strides = [1, 1]} : vector<8x512xf32> to vector<8x128xf32>
    %1409 = arith.negf %1408 : vector<8x128xf32>
    %1410 = math.exp %1409 : vector<8x128xf32>
    %cst_242 = arith.constant 1.000000e+00 : f32
    %1411 = vector.broadcast %cst_242 : f32 to vector<8x128xf32>
    %1412 = arith.addf %1411, %1410 : vector<8x128xf32>
    %1413 = arith.divf %1411, %1412 : vector<8x128xf32>
    %1414 = vector.extract_strided_slice %1407 {offsets = [0, 128], sizes = [8, 128], strides = [1, 1]} : vector<8x512xf32> to vector<8x128xf32>
    %1415 = arith.negf %1414 : vector<8x128xf32>
    %1416 = math.exp %1415 : vector<8x128xf32>
    %cst_243 = arith.constant 1.000000e+00 : f32
    %1417 = vector.broadcast %cst_243 : f32 to vector<8x128xf32>
    %1418 = arith.addf %1417, %1416 : vector<8x128xf32>
    %1419 = arith.divf %1417, %1418 : vector<8x128xf32>
    %1420 = vector.extract_strided_slice %1407 {offsets = [0, 256], sizes = [8, 128], strides = [1, 1]} : vector<8x512xf32> to vector<8x128xf32>
    %1421 = math.tanh %1420 : vector<8x128xf32>
    %1422 = vector.extract_strided_slice %1407 {offsets = [0, 384], sizes = [8, 128], strides = [1, 1]} : vector<8x512xf32> to vector<8x128xf32>
    %1423 = arith.negf %1422 : vector<8x128xf32>
    %1424 = math.exp %1423 : vector<8x128xf32>
    %cst_244 = arith.constant 1.000000e+00 : f32
    %1425 = vector.broadcast %cst_244 : f32 to vector<8x128xf32>
    %1426 = arith.addf %1425, %1424 : vector<8x128xf32>
    %1427 = arith.divf %1425, %1426 : vector<8x128xf32>
    %1428 = arith.mulf %1419, %1280 : vector<8x128xf32>
    %1429 = arith.mulf %1413, %1421 : vector<8x128xf32>
    %1430 = arith.addf %1428, %1429 : vector<8x128xf32>
    %1431 = math.tanh %1430 : vector<8x128xf32>
    %1432 = arith.mulf %1427, %1431 : vector<8x128xf32>
    %1433 = arith.mulf %41, %1432 : vector<8x128xf32>
    %cst_245 = arith.constant dense<0.000000e+00> : vector<8xf32>
    %1434 = vector.multi_reduction <add>, %1433, %cst_245 [1] : vector<8x128xf32> to vector<8xf32>
    %1435 = vector.shape_cast %1434 : vector<8xf32> to vector<8x1xf32>
    %1436 = arith.mulf %80, %1432 : vector<8x128xf32>
    %cst_246 = arith.constant dense<0.000000e+00> : vector<8xf32>
    %1437 = vector.multi_reduction <add>, %1436, %cst_246 [1] : vector<8x128xf32> to vector<8xf32>
    %1438 = vector.shape_cast %1437 : vector<8xf32> to vector<8x1xf32>
    %1439 = arith.mulf %119, %1432 : vector<8x128xf32>
    %cst_247 = arith.constant dense<0.000000e+00> : vector<8xf32>
    %1440 = vector.multi_reduction <add>, %1439, %cst_247 [1] : vector<8x128xf32> to vector<8xf32>
    %1441 = vector.shape_cast %1440 : vector<8xf32> to vector<8x1xf32>
    %1442 = arith.mulf %158, %1432 : vector<8x128xf32>
    %cst_248 = arith.constant dense<0.000000e+00> : vector<8xf32>
    %1443 = vector.multi_reduction <add>, %1442, %cst_248 [1] : vector<8x128xf32> to vector<8xf32>
    %1444 = vector.shape_cast %1443 : vector<8xf32> to vector<8x1xf32>
    %1445 = arith.mulf %197, %1432 : vector<8x128xf32>
    %cst_249 = arith.constant dense<0.000000e+00> : vector<8xf32>
    %1446 = vector.multi_reduction <add>, %1445, %cst_249 [1] : vector<8x128xf32> to vector<8xf32>
    %1447 = vector.shape_cast %1446 : vector<8xf32> to vector<8x1xf32>
    %1448 = arith.mulf %236, %1432 : vector<8x128xf32>
    %cst_250 = arith.constant dense<0.000000e+00> : vector<8xf32>
    %1449 = vector.multi_reduction <add>, %1448, %cst_250 [1] : vector<8x128xf32> to vector<8xf32>
    %1450 = vector.shape_cast %1449 : vector<8xf32> to vector<8x1xf32>
    %1451 = arith.mulf %275, %1432 : vector<8x128xf32>
    %cst_251 = arith.constant dense<0.000000e+00> : vector<8xf32>
    %1452 = vector.multi_reduction <add>, %1451, %cst_251 [1] : vector<8x128xf32> to vector<8xf32>
    %1453 = vector.shape_cast %1452 : vector<8xf32> to vector<8x1xf32>
    %1454 = arith.mulf %314, %1432 : vector<8x128xf32>
    %cst_252 = arith.constant dense<0.000000e+00> : vector<8xf32>
    %1455 = vector.multi_reduction <add>, %1454, %cst_252 [1] : vector<8x128xf32> to vector<8xf32>
    %1456 = vector.shape_cast %1455 : vector<8xf32> to vector<8x1xf32>
    %1457 = arith.maximumf %1435, %1438 : vector<8x1xf32>
    %1458 = arith.maximumf %1457, %1441 : vector<8x1xf32>
    %1459 = arith.maximumf %1458, %1444 : vector<8x1xf32>
    %1460 = arith.maximumf %1459, %1447 : vector<8x1xf32>
    %1461 = arith.maximumf %1460, %1450 : vector<8x1xf32>
    %1462 = arith.maximumf %1461, %1453 : vector<8x1xf32>
    %1463 = arith.maximumf %1462, %1456 : vector<8x1xf32>
    %1464 = arith.subf %1435, %1463 : vector<8x1xf32>
    %1465 = math.exp %1464 : vector<8x1xf32>
    %1466 = arith.subf %1438, %1463 : vector<8x1xf32>
    %1467 = math.exp %1466 : vector<8x1xf32>
    %1468 = arith.subf %1441, %1463 : vector<8x1xf32>
    %1469 = math.exp %1468 : vector<8x1xf32>
    %1470 = arith.subf %1444, %1463 : vector<8x1xf32>
    %1471 = math.exp %1470 : vector<8x1xf32>
    %1472 = arith.subf %1447, %1463 : vector<8x1xf32>
    %1473 = math.exp %1472 : vector<8x1xf32>
    %1474 = arith.subf %1450, %1463 : vector<8x1xf32>
    %1475 = math.exp %1474 : vector<8x1xf32>
    %1476 = arith.subf %1453, %1463 : vector<8x1xf32>
    %1477 = math.exp %1476 : vector<8x1xf32>
    %1478 = arith.subf %1456, %1463 : vector<8x1xf32>
    %1479 = math.exp %1478 : vector<8x1xf32>
    %1480 = arith.addf %1465, %1467 : vector<8x1xf32>
    %1481 = arith.addf %1480, %1469 : vector<8x1xf32>
    %1482 = arith.addf %1481, %1471 : vector<8x1xf32>
    %1483 = arith.addf %1482, %1473 : vector<8x1xf32>
    %1484 = arith.addf %1483, %1475 : vector<8x1xf32>
    %1485 = arith.addf %1484, %1477 : vector<8x1xf32>
    %1486 = arith.addf %1485, %1479 : vector<8x1xf32>
    %1487 = tpu.reciprocal %1486 {approx = true} : vector<8x1xf32> -> vector<8x1xf32>
    %1488 = arith.mulf %1465, %1487 : vector<8x1xf32>
    %1489 = vector.broadcast %1488 : vector<8x1xf32> to vector<8x128xf32>
    %1490 = arith.mulf %1489, %41 : vector<8x128xf32>
    %1491 = arith.mulf %1467, %1487 : vector<8x1xf32>
    %1492 = vector.broadcast %1491 : vector<8x1xf32> to vector<8x128xf32>
    %1493 = arith.mulf %1492, %80 : vector<8x128xf32>
    %1494 = arith.addf %1490, %1493 : vector<8x128xf32>
    %1495 = arith.mulf %1469, %1487 : vector<8x1xf32>
    %1496 = vector.broadcast %1495 : vector<8x1xf32> to vector<8x128xf32>
    %1497 = arith.mulf %1496, %119 : vector<8x128xf32>
    %1498 = arith.addf %1494, %1497 : vector<8x128xf32>
    %1499 = arith.mulf %1471, %1487 : vector<8x1xf32>
    %1500 = vector.broadcast %1499 : vector<8x1xf32> to vector<8x128xf32>
    %1501 = arith.mulf %1500, %158 : vector<8x128xf32>
    %1502 = arith.addf %1498, %1501 : vector<8x128xf32>
    %1503 = arith.mulf %1473, %1487 : vector<8x1xf32>
    %1504 = vector.broadcast %1503 : vector<8x1xf32> to vector<8x128xf32>
    %1505 = arith.mulf %1504, %197 : vector<8x128xf32>
    %1506 = arith.addf %1502, %1505 : vector<8x128xf32>
    %1507 = arith.mulf %1475, %1487 : vector<8x1xf32>
    %1508 = vector.broadcast %1507 : vector<8x1xf32> to vector<8x128xf32>
    %1509 = arith.mulf %1508, %236 : vector<8x128xf32>
    %1510 = arith.addf %1506, %1509 : vector<8x128xf32>
    %1511 = arith.mulf %1477, %1487 : vector<8x1xf32>
    %1512 = vector.broadcast %1511 : vector<8x1xf32> to vector<8x128xf32>
    %1513 = arith.mulf %1512, %275 : vector<8x128xf32>
    %1514 = arith.addf %1510, %1513 : vector<8x128xf32>
    %1515 = arith.mulf %1479, %1487 : vector<8x1xf32>
    %1516 = vector.broadcast %1515 : vector<8x1xf32> to vector<8x128xf32>
    %1517 = arith.mulf %1516, %314 : vector<8x128xf32>
    %1518 = arith.addf %1514, %1517 : vector<8x128xf32>
    %1519 = arith.truncf %1518 : vector<8x128xf32> to vector<8x128xbf16>
    %1520 = arith.truncf %1432 : vector<8x128xf32> to vector<8x128xbf16>
    %1521 = tpu.concatenate %1519, %1520 in 1 : vector<8x128xbf16>, vector<8x128xbf16> -> vector<8x256xbf16>
    %cst_253 = arith.constant dense<0.000000e+00> : vector<8x128xf32>
    %1522 = tpu.matmul %1521, %345, %cst_253 {dimension_numbers = #tpu.dot_dimension_numbers<[1], [0], [0], [1], [0, 0, 1, 1], [], []>} : vector<8x256xbf16>, vector<256x128xbf16>, vector<8x128xf32> -> vector<8x128xf32>
    %1523 = vector.broadcast %346 : vector<1x128xf32> to vector<8x128xf32>
    %1524 = arith.addf %1522, %1523 : vector<8x128xf32>
    %1525 = math.tanh %1524 : vector<8x128xf32>
    %1526 = arith.truncf %1525 : vector<8x128xf32> to vector<8x128xbf16>
    %cst_254 = arith.constant dense<0.000000e+00> : vector<8x128xf32>
    %1527 = tpu.matmul %1526, %347, %cst_254 {dimension_numbers = #tpu.dot_dimension_numbers<[1], [0], [0], [1], [0, 0, 1, 1], [], []>} : vector<8x128xbf16>, vector<128x128xbf16>, vector<8x128xf32> -> vector<8x128xf32>
    %1528 = vector.broadcast %348 : vector<1x128xf32> to vector<8x128xf32>
    %1529 = arith.addf %1527, %1528 : vector<8x128xf32>
    %cst_255 = arith.constant dense<0xFF800000> : vector<8xf32>
    %1530 = vector.multi_reduction <maximumf>, %1529, %cst_255 [1] : vector<8x128xf32> to vector<8xf32>
    %1531 = vector.shape_cast %1530 : vector<8xf32> to vector<8x1xf32>
    %1532 = vector.broadcast %1531 : vector<8x1xf32> to vector<8x128xf32>
    %1533 = arith.subf %1529, %1532 : vector<8x128xf32>
    %1534 = math.exp %1533 : vector<8x128xf32>
    %cst_256 = arith.constant dense<0.000000e+00> : vector<8xf32>
    %1535 = vector.multi_reduction <add>, %1534, %cst_256 [1] : vector<8x128xf32> to vector<8xf32>
    %1536 = vector.shape_cast %1535 : vector<8xf32> to vector<8x1xf32>
    %1537 = math.log %1536 : vector<8x1xf32>
    %1538 = arith.addf %1531, %1537 : vector<8x1xf32>
    %1539 = vector.broadcast %1538 : vector<8x1xf32> to vector<8x128xf32>
    %1540 = arith.subf %1529, %1539 : vector<8x128xf32>
    %c7_257 = arith.constant 7 : index
    %c0_258 = arith.constant 0 : index
    %c0_259 = arith.constant 0 : index
    %1541 = vector.load %arg12[%c7_257, %c0_258, %c0_259] : memref<8x8x128xf32, #tpu.memory_space<vmem>>, vector<1x8x128xf32>
    %1542 = vector.shape_cast %1541 : vector<1x8x128xf32> to vector<8x128xf32>
    %1543 = vector.shape_cast %1540 : vector<8x128xf32> to vector<1x8x128xf32>
    tpu.vector_store %arg12[%c7_257, %c0_258, %c0_259], %1543 {strides = array<i32>} : memref<8x8x128xf32, #tpu.memory_space<vmem>>, vector<1x8x128xf32>,
    return
  }
}

</mosaic_0001>

<llo_original>
// kernel: autos_forward.1
$region0: #{autos_forward.1}
  #allocation0 [shape = 'u32[]', space=smem, size = 0x4, offset = 0x4, fixed_abs, tag = 'smem constant byte address 0x4 - core index']
  #allocation1 [shape = 'u32[144,128]{1,0:T(1,128)}', space=vmem, size = 0x12000, scoped, tag = 'internal scratch']
  %s0 = inlined_call_operand.vmem [shape: f32[8,8,512], index: 0, kind: input, shape index: {}]
  %s1 = inlined_call_operand.vmem [shape: bf16[128,512], index: 1, kind: input, shape index: {}]
  %s2 = inlined_call_operand.vmem [shape: f32[128,128], index: 2, kind: input, shape index: {}]
  %s3 = inlined_call_operand.vmem [shape: f32[1,128], index: 3, kind: input, shape index: {}]
  %s4 = inlined_call_operand.vmem [shape: f32[128,128], index: 4, kind: input, shape index: {}]
  %s5 = inlined_call_operand.vmem [shape: f32[1,128], index: 5, kind: input, shape index: {}]
  %s6 = inlined_call_operand.vmem [shape: bf16[256,512], index: 6, kind: input, shape index: {}]
  %s7 = inlined_call_operand.vmem [shape: bf16[256,128], index: 7, kind: input, shape index: {}]
  %s8 = inlined_call_operand.vmem [shape: f32[1,128], index: 8, kind: input, shape index: {}]
  %s9 = inlined_call_operand.vmem [shape: bf16[128,128], index: 9, kind: input, shape index: {}]
  %s10 = inlined_call_operand.vmem [shape: f32[1,128], index: 10, kind: input, shape index: {}]
  %s11 = inlined_call_operand.vmem [shape: f32[8,128], index: 11, kind: output, shape index: {0}]
  %s12 = inlined_call_operand.vmem [shape: f32[8,8,128], index: 12, kind: output, shape index: {1}]
  %13 = xla_tuple %s11, %s12
  %s14 = sld [smem:[#allocation0]]
  $region62: #{autos_forward.1} parent=0
    _
  %s16 = ssub.s32 1, %s14
  %s17 = scalar_select 0, %s16, %s14
  // Predicated region
  $region2: #{autos_forward.1} parent=0 // pred_check
    _
  $region3: #{autos_forward.1} parent=0 // pred_check_branch
    %19 = sbr.rel (0) target = $region5
  $region4: #{autos_forward.1} parent=0 // pred_region
    _
  $region5: #{autos_forward.1} parent=0 // pred_fallthru
    _
  // Predicated region
  $region6: #{autos_forward.1} parent=0 // pred_check
    _
  $region7: #{autos_forward.1} parent=0 // pred_check_branch
    %21 = sbr.rel (0) target = $region9
  $region8: #{autos_forward.1} parent=0 // pred_region
    _
  $region9: #{autos_forward.1} parent=0 // pred_fallthru
    _
  // Predicated region
  $region10: #{autos_forward.1} parent=0 // pred_check
    _
  $region11: #{autos_forward.1} parent=0 // pred_check_branch
    %23 = sbr.rel (0) target = $region13
  $region12: #{autos_forward.1} parent=0 // pred_region
    _
  $region13: #{autos_forward.1} parent=0 // pred_fallthru
    _
  // Predicated region
  $region14: #{autos_forward.1} parent=0 // pred_check
    _
  $region15: #{autos_forward.1} parent=0 // pred_check_branch
    %25 = sbr.rel (0) target = $region17
  $region16: #{autos_forward.1} parent=0 // pred_region
    _
  $region17: #{autos_forward.1} parent=0 // pred_fallthru
    _
  // Predicated region
  $region18: #{autos_forward.1} parent=0 // pred_check
    _
  $region19: #{autos_forward.1} parent=0 // pred_check_branch
    %27 = sbr.rel (0) target = $region21
  $region20: #{autos_forward.1} parent=0 // pred_region
    _
  $region21: #{autos_forward.1} parent=0 // pred_fallthru
    _
  // Predicated region
  $region22: #{autos_forward.1} parent=0 // pred_check
    _
  $region23: #{autos_forward.1} parent=0 // pred_check_branch
    %29 = sbr.rel (0) target = $region25
  $region24: #{autos_forward.1} parent=0 // pred_region
    _
  $region25: #{autos_forward.1} parent=0 // pred_fallthru
    _
  // Predicated region
  $region26: #{autos_forward.1} parent=0 // pred_check
    _
  $region27: #{autos_forward.1} parent=0 // pred_check_branch
    %31 = sbr.rel (0) target = $region29
  $region28: #{autos_forward.1} parent=0 // pred_region
    _
  $region29: #{autos_forward.1} parent=0 // pred_fallthru
    _
  // Predicated region
  $region30: #{autos_forward.1} parent=0 // pred_check
    _
  $region31: #{autos_forward.1} parent=0 // pred_check_branch
    %33 = sbr.rel (0) target = $region33
  $region32: #{autos_forward.1} parent=0 // pred_region
    _
  $region33: #{autos_forward.1} parent=0 // pred_fallthru
    _
  // Predicated region
  $region34: #{autos_forward.1} parent=0 // pred_check
    _
  $region35: #{autos_forward.1} parent=0 // pred_check_branch
    %35 = sbr.rel (0) target = $region37
  $region36: #{autos_forward.1} parent=0 // pred_region
    _
  $region37: #{autos_forward.1} parent=0 // pred_fallthru
    _
  // Predicated region
  $region38: #{autos_forward.1} parent=0 // pred_check
    _
  $region39: #{autos_forward.1} parent=0 // pred_check_branch
    %37 = sbr.rel (0) target = $region41
  $region40: #{autos_forward.1} parent=0 // pred_region
    _
  $region41: #{autos_forward.1} parent=0 // pred_fallthru
    _
  // Predicated region
  $region42: #{autos_forward.1} parent=0 // pred_check
    _
  $region43: #{autos_forward.1} parent=0 // pred_check_branch
    %39 = sbr.rel (0) target = $region45
  $region44: #{autos_forward.1} parent=0 // pred_region
    _
  $region45: #{autos_forward.1} parent=0 // pred_fallthru
    _
  %v41 = vld [vmem:[%s1] sm:$0xff]
  %v42 = vld [vmem:[%s1 + $0x8] sm:$0xff]
  %v43 = vld [vmem:[%s1 + $0x10] sm:$0xff]
  %v44 = vld [vmem:[%s1 + $0x18] sm:$0xff]
  %v45 = vld [vmem:[%s1 + $0x20] sm:$0xff]
  %v46 = vld [vmem:[%s1 + $0x28] sm:$0xff]
  %v47 = vld [vmem:[%s1 + $0x30] sm:$0xff]
  %v48 = vld [vmem:[%s1 + $0x38] sm:$0xff]
  %v49 = vld [vmem:[%s1 + $0x40] sm:$0xff]
  %v50 = vld [vmem:[%s1 + $0x48] sm:$0xff]
  %v51 = vld [vmem:[%s1 + $0x50] sm:$0xff]
  %v52 = vld [vmem:[%s1 + $0x58] sm:$0xff]
  %v53 = vld [vmem:[%s1 + $0x60] sm:$0xff]
  %v54 = vld [vmem:[%s1 + $0x68] sm:$0xff]
  %v55 = vld [vmem:[%s1 + $0x70] sm:$0xff]
  %v56 = vld [vmem:[%s1 + $0x78] sm:$0xff]
  %v57 = vld [vmem:[%s1 + $0x80] sm:$0xff]
  %v58 = vld [vmem:[%s1 + $0x88] sm:$0xff]
  %v59 = vld [vmem:[%s1 + $0x90] sm:$0xff]
  %v60 = vld [vmem:[%s1 + $0x98] sm:$0xff]
  %v61 = vld [vmem:[%s1 + $0xa0] sm:$0xff]
  %v62 = vld [vmem:[%s1 + $0xa8] sm:$0xff]
  %v63 = vld [vmem:[%s1 + $0xb0] sm:$0xff]
  %v64 = vld [vmem:[%s1 + $0xb8] sm:$0xff]
  %v65 = vld [vmem:[%s1 + $0xc0] sm:$0xff]
  %v66 = vld [vmem:[%s1 + $0xc8] sm:$0xff]
  %v67 = vld [vmem:[%s1 + $0xd0] sm:$0xff]
  %v68 = vld [vmem:[%s1 + $0xd8] sm:$0xff]
  %v69 = vld [vmem:[%s1 + $0xe0] sm:$0xff]
  %v70 = vld [vmem:[%s1 + $0xe8] sm:$0xff]
  %v71 = vld [vmem:[%s1 + $0xf0] sm:$0xff]
  %v72 = vld [vmem:[%s1 + $0xf8] sm:$0xff]
  %v73 = vld [vmem:[%s0] sm:$0xff]
  %v74 = vld [vmem:[%s0 + $0x8] sm:$0xff]
  %v75 = vld [vmem:[%s0 + $0x10] sm:$0xff]
  %v76 = vld [vmem:[%s0 + $0x18] sm:$0xff]
  %v109 = vunpack.c.l.b16 %v41
  %v110 = vunpack.c.h.b16 %v41
  %v111 = vunpack.c.l.b16 %v42
  %v112 = vunpack.c.h.b16 %v42
  %v113 = vunpack.c.l.b16 %v43
  %v114 = vunpack.c.h.b16 %v43
  %v115 = vunpack.c.l.b16 %v44
  %v116 = vunpack.c.h.b16 %v44
  %v117 = vunpack.c.l.b16 %v45
  %v118 = vunpack.c.h.b16 %v45
  %v119 = vunpack.c.l.b16 %v46
  %v120 = vunpack.c.h.b16 %v46
  %v121 = vunpack.c.l.b16 %v47
  %v122 = vunpack.c.h.b16 %v47
  %v123 = vunpack.c.l.b16 %v48
  %v124 = vunpack.c.h.b16 %v48
  %v125 = vunpack.c.l.b16 %v49
  %v126 = vunpack.c.h.b16 %v49
  %v127 = vunpack.c.l.b16 %v50
  %v128 = vunpack.c.h.b16 %v50
  %v129 = vunpack.c.l.b16 %v51
  %v130 = vunpack.c.h.b16 %v51
  %v131 = vunpack.c.l.b16 %v52
  %v132 = vunpack.c.h.b16 %v52
  %v133 = vunpack.c.l.b16 %v53
  %v134 = vunpack.c.h.b16 %v53
  %v135 = vunpack.c.l.b16 %v54
  %v136 = vunpack.c.h.b16 %v54
  %v137 = vunpack.c.l.b16 %v55
  %v138 = vunpack.c.h.b16 %v55
  %v139 = vunpack.c.l.b16 %v56
  %v140 = vunpack.c.h.b16 %v56
  %v141 = vunpack.c.l.b16 %v57
  %v142 = vunpack.c.h.b16 %v57
  %v143 = vunpack.c.l.b16 %v58
  %v144 = vunpack.c.h.b16 %v58
  %v145 = vunpack.c.l.b16 %v59
  %v146 = vunpack.c.h.b16 %v59
  %v147 = vunpack.c.l.b16 %v60
  %v148 = vunpack.c.h.b16 %v60
  %v149 = vunpack.c.l.b16 %v61
  %v150 = vunpack.c.h.b16 %v61
  %v151 = vunpack.c.l.b16 %v62
  %v152 = vunpack.c.h.b16 %v62
  %v153 = vunpack.c.l.b16 %v63
  %v154 = vunpack.c.h.b16 %v63
  %v155 = vunpack.c.l.b16 %v64
  %v156 = vunpack.c.h.b16 %v64
  %v157 = vunpack.c.l.b16 %v65
  %v158 = vunpack.c.h.b16 %v65
  %v159 = vunpack.c.l.b16 %v66
  %v160 = vunpack.c.h.b16 %v66
  %v161 = vunpack.c.l.b16 %v67
  %v162 = vunpack.c.h.b16 %v67
  %v163 = vunpack.c.l.b16 %v68
  %v164 = vunpack.c.h.b16 %v68
  %v165 = vunpack.c.l.b16 %v69
  %v166 = vunpack.c.h.b16 %v69
  %v167 = vunpack.c.l.b16 %v70
  %v168 = vunpack.c.h.b16 %v70
  %v169 = vunpack.c.l.b16 %v71
  %v170 = vunpack.c.h.b16 %v71
  %v171 = vunpack.c.l.b16 %v72
  %v172 = vunpack.c.h.b16 %v72
  %v173 = vpack.c.b16 %v113, %v109
  %v174 = vpack.c.b16 %v114, %v110
  %v175 = vpack.c.b16 %v115, %v111
  %v176 = vpack.c.b16 %v116, %v112
  %v177 = vpack.c.b16 %v121, %v117
  %v178 = vpack.c.b16 %v122, %v118
  %v179 = vpack.c.b16 %v123, %v119
  %v180 = vpack.c.b16 %v124, %v120
  %v181 = vpack.c.b16 %v129, %v125
  %v182 = vpack.c.b16 %v130, %v126
  %v183 = vpack.c.b16 %v131, %v127
  %v184 = vpack.c.b16 %v132, %v128
  %v185 = vpack.c.b16 %v137, %v133
  %v186 = vpack.c.b16 %v138, %v134
  %v187 = vpack.c.b16 %v139, %v135
  %v188 = vpack.c.b16 %v140, %v136
  %v189 = vpack.c.b16 %v145, %v141
  %v190 = vpack.c.b16 %v146, %v142
  %v191 = vpack.c.b16 %v147, %v143
  %v192 = vpack.c.b16 %v148, %v144
  %v193 = vpack.c.b16 %v153, %v149
  %v194 = vpack.c.b16 %v154, %v150
  %v195 = vpack.c.b16 %v155, %v151
  %v196 = vpack.c.b16 %v156, %v152
  %v197 = vpack.c.b16 %v161, %v157
  %v198 = vpack.c.b16 %v162, %v158
  %v199 = vpack.c.b16 %v163, %v159
  %v200 = vpack.c.b16 %v164, %v160
  %v201 = vpack.c.b16 %v169, %v165
  %v202 = vpack.c.b16 %v170, %v166
  %v203 = vpack.c.b16 %v171, %v167
  %v204 = vpack.c.b16 %v172, %v168
  %237 = vmatprep.subr.bf16.mxu0 %v174
  %238 = vmatpush1.bf16.msra.mxu0 %v173
  %239 = vmatprep.subr.bf16.mxu0 %v178
  %240 = vmatpush1.bf16.msra.mxu0 %v177
  %241 = vmatprep.subr.bf16.mxu0 %v182
  %242 = vmatpush1.bf16.msra.mxu0 %v181
  %243 = vmatprep.subr.bf16.mxu0 %v186
  %244 = vmatpush1.bf16.msra.mxu0 %v185
  %245 = vmatprep.subr.bf16.mxu0 %v190
  %246 = vmatpush1.bf16.msra.mxu0 %v189
  %247 = vmatprep.subr.bf16.mxu0 %v194
  %248 = vmatpush1.bf16.msra.mxu0 %v193
  %249 = vmatprep.subr.bf16.mxu0 %v198
  %250 = vmatpush1.bf16.msra.mxu0 %v197
  %251 = vmatprep.subr.bf16.mxu0 %v202
  %252 = vmatpush1.bf16.msra.mxu0 %v201
  %253 = vmatprep.subr.bf16.mxu0 0
  %254 = vmatpush1.bf16.msra.mxu0 0
  %255 = vmatprep.subr.bf16.mxu0 0
  %256 = vmatpush1.bf16.msra.mxu0 0
  %257 = vmatprep.subr.bf16.mxu0 0
  %258 = vmatpush1.bf16.msra.mxu0 0
  %259 = vmatprep.subr.bf16.mxu0 0
  %260 = vmatpush1.bf16.msra.mxu0 0
  %261 = vmatprep.subr.bf16.mxu0 0
  %262 = vmatpush1.bf16.msra.mxu0 0
  %263 = vmatprep.subr.bf16.mxu0 0
  %264 = vmatpush1.bf16.msra.mxu0 0
  %265 = vmatprep.subr.bf16.mxu0 0
  %266 = vmatpush1.bf16.msra.mxu0 0
  %267 = vmatprep.subr.bf16.mxu0 0
  %268 = vmatpush1.bf16.msra.mxu0 0
  %269 = vmatprep.mubr.bf16.mxu0 0
  %270 = vmatmul.mubr.bf16.gmra.mrb[0].mxu0 0
  %v271 = vpop.f32.mrb[0].mxu0
  %v272 = vadd.f32 0.0, %v271
  %v273 = vpop.f32.mrb[0].mxu0
  %v274 = vadd.f32 0.0, %v273
  %v275 = vpop.f32.mrb[0].mxu0
  %v276 = vpop.f32.mrb[0].mxu0
  %277 = vdwg.mxu0
  %278 = vmatprep.subr.bf16.mxu0 %v176
  %279 = vmatpush1.bf16.msra.mxu0 %v175
  %280 = vmatprep.subr.bf16.mxu0 %v180
  %281 = vmatpush1.bf16.msra.mxu0 %v179
  %282 = vmatprep.subr.bf16.mxu0 %v184
  %283 = vmatpush1.bf16.msra.mxu0 %v183
  %284 = vmatprep.subr.bf16.mxu0 %v188
  %285 = vmatpush1.bf16.msra.mxu0 %v187
  %286 = vmatprep.subr.bf16.mxu0 %v192
  %287 = vmatpush1.bf16.msra.mxu0 %v191
  %288 = vmatprep.subr.bf16.mxu0 %v196
  %289 = vmatpush1.bf16.msra.mxu0 %v195
  %290 = vmatprep.subr.bf16.mxu0 %v200
  %291 = vmatpush1.bf16.msra.mxu0 %v199
  %292 = vmatprep.subr.bf16.mxu0 %v204
  %293 = vmatpush1.bf16.msra.mxu0 %v203
  %294 = vmatprep.subr.bf16.mxu0 0
  %295 = vmatpush1.bf16.msra.mxu0 0
  %296 = vmatprep.subr.bf16.mxu0 0
  %297 = vmatpush1.bf16.msra.mxu0 0
  %298 = vmatprep.subr.bf16.mxu0 0
  %299 = vmatpush1.bf16.msra.mxu0 0
  %300 = vmatprep.subr.bf16.mxu0 0
  %301 = vmatpush1.bf16.msra.mxu0 0
  %302 = vmatprep.subr.bf16.mxu0 0
  %303 = vmatpush1.bf16.msra.mxu0 0
  %304 = vmatprep.subr.bf16.mxu0 0
  %305 = vmatpush1.bf16.msra.mxu0 0
  %306 = vmatprep.subr.bf16.mxu0 0
  %307 = vmatpush1.bf16.msra.mxu0 0
  %308 = vmatprep.subr.bf16.mxu0 0
  %309 = vmatpush1.bf16.msra.mxu0 0
  %310 = vmatprep.mubr.bf16.mxu0 0
  %311 = vmatmul.mubr.bf16.gmra.mrb[0].mxu0 0
  %v312 = vpop.f32.mrb[0].mxu0
  %v313 = vadd.f32 0.0, %v312
  %v314 = vpop.f32.mrb[0].mxu0
  %v315 = vadd.f32 0.0, %v314
  %v316 = vpop.f32.mrb[0].mxu0
  %v317 = vpop.f32.mrb[0].mxu0
  %318 = vdwg.mxu0
  %v319 = vadd.f32 %v73, %v272
  %v320 = vadd.f32 %v74, %v274
  %v321 = vadd.f32 %v75, %v313
  %v322 = vadd.f32 %v76, %v315
  %v323 = vxor.u32 %v319, 2147483648
  %v324 = vmul.f32 %v323, 1.442695
  %v325 = vpow.pop %v324
  %v326 = vadd.f32 %v325, 1.0
  %v327 = vrcp.pop %v326
  %v328 = vmul.f32 1.0, %v327
  %v329 = vxor.u32 %v320, 2147483648
  %v330 = vmul.f32 %v329, 1.442695
  %v331 = vpow.pop %v330
  %v332 = vadd.f32 %v331, 1.0
  %v333 = vrcp.pop %v332
  %v334 = vmul.f32 1.0, %v333
  %v335 = vtanh.pop %v321
  %v336 = vxor.u32 %v322, 2147483648
  %v337 = vmul.f32 %v336, 1.442695
  %v338 = vpow.pop %v337
  %v339 = vadd.f32 %v338, 1.0
  %v340 = vrcp.pop %v339
  %v341 = vmul.f32 1.0, %v340
  %v342 = vmul.f32 %v334, 0.0
  %v343 = vmul.f32 %v328, %v335
  %v344 = vadd.f32 %v342, %v343
  %v345 = vtanh.pop %v344
  %v346 = vmul.f32 %v341, %v345
  %v347 = vmul.f32 %v346, %v346
  %348 = vadd.xlane.f32.xlu0 %v347
  %v349 = vpop.xlane.xlu0 %348
  %v350 = vmax.f32 %v349, 1e-24
  %v351 = vrsqrt.pop %v350
  %v352 = vmul.f32 %v346, %v351
  %v353 = vadd.f32 %v352, 0.0
  %s354 = scalar_lea.vmem %s0, 32
  %v355 = vld [vmem:[%s354] sm:$0xff]
  %v356 = vld [vmem:[%s354 + $0x8] sm:$0xff]
  %v357 = vld [vmem:[%s354 + $0x10] sm:$0xff]
  %v358 = vld [vmem:[%s354 + $0x18] sm:$0xff]
  %v359 = vpack.c.bf16 %v346, %v346
  %360 = vmatprep.subr.bf16.mxu0 %v174
  %361 = vmatpush1.bf16.msra.mxu0 %v173
  %362 = vmatprep.subr.bf16.mxu0 %v178
  %363 = vmatpush1.bf16.msra.mxu0 %v177
  %364 = vmatprep.subr.bf16.mxu0 %v182
  %365 = vmatpush1.bf16.msra.mxu0 %v181
  %366 = vmatprep.subr.bf16.mxu0 %v186
  %367 = vmatpush1.bf16.msra.mxu0 %v185
  %368 = vmatprep.subr.bf16.mxu0 %v190
  %369 = vmatpush1.bf16.msra.mxu0 %v189
  %370 = vmatprep.subr.bf16.mxu0 %v194
  %371 = vmatpush1.bf16.msra.mxu0 %v193
  %372 = vmatprep.subr.bf16.mxu0 %v198
  %373 = vmatpush1.bf16.msra.mxu0 %v197
  %374 = vmatprep.subr.bf16.mxu0 %v202
  %375 = vmatpush1.bf16.msra.mxu0 %v201
  %376 = vmatprep.subr.bf16.mxu0 0
  %377 = vmatpush1.bf16.msra.mxu0 0
  %378 = vmatprep.subr.bf16.mxu0 0
  %379 = vmatpush1.bf16.msra.mxu0 0
  %380 = vmatprep.subr.bf16.mxu0 0
  %381 = vmatpush1.bf16.msra.mxu0 0
  %382 = vmatprep.subr.bf16.mxu0 0
  %383 = vmatpush1.bf16.msra.mxu0 0
  %384 = vmatprep.subr.bf16.mxu0 0
  %385 = vmatpush1.bf16.msra.mxu0 0
  %386 = vmatprep.subr.bf16.mxu0 0
  %387 = vmatpush1.bf16.msra.mxu0 0
  %388 = vmatprep.subr.bf16.mxu0 0
  %389 = vmatpush1.bf16.msra.mxu0 0
  %390 = vmatprep.subr.bf16.mxu0 0
  %391 = vmatpush1.bf16.msra.mxu0 0
  %392 = vmatprep.mubr.bf16.mxu0 0
  %393 = vmatmul.mubr.bf16.gmra.mrb[0].mxu0 %v359
  %v394 = vpop.f32.mrb[0].mxu0
  %v395 = vadd.f32 0.0, %v394
  %v396 = vpop.f32.mrb[0].mxu0
  %v397 = vadd.f32 0.0, %v396
  %v398 = vpop.f32.mrb[0].mxu0
  %v399 = vpop.f32.mrb[0].mxu0
  %400 = vdwg.mxu0
  %401 = vmatprep.subr.bf16.mxu0 %v176
  %402 = vmatpush1.bf16.msra.mxu0 %v175
  %403 = vmatprep.subr.bf16.mxu0 %v180
  %404 = vmatpush1.bf16.msra.mxu0 %v179
  %405 = vmatprep.subr.bf16.mxu0 %v184
  %406 = vmatpush1.bf16.msra.mxu0 %v183
  %407 = vmatprep.subr.bf16.mxu0 %v188
  %408 = vmatpush1.bf16.msra.mxu0 %v187
  %409 = vmatprep.subr.bf16.mxu0 %v192
  %410 = vmatpush1.bf16.msra.mxu0 %v191
  %411 = vmatprep.subr.bf16.mxu0 %v196
  %412 = vmatpush1.bf16.msra.mxu0 %v195
  %413 = vmatprep.subr.bf16.mxu0 %v200
  %414 = vmatpush1.bf16.msra.mxu0 %v199
  %415 = vmatprep.subr.bf16.mxu0 %v204
  %416 = vmatpush1.bf16.msra.mxu0 %v203
  %417 = vmatprep.subr.bf16.mxu0 0
  %418 = vmatpush1.bf16.msra.mxu0 0
  %419 = vmatprep.subr.bf16.mxu0 0
  %420 = vmatpush1.bf16.msra.mxu0 0
  %421 = vmatprep.subr.bf16.mxu0 0
  %422 = vmatpush1.bf16.msra.mxu0 0
  %423 = vmatprep.subr.bf16.mxu0 0
  %424 = vmatpush1.bf16.msra.mxu0 0
  %425 = vmatprep.subr.bf16.mxu0 0
  %426 = vmatpush1.bf16.msra.mxu0 0
  %427 = vmatprep.subr.bf16.mxu0 0
  %428 = vmatpush1.bf16.msra.mxu0 0
  %429 = vmatprep.subr.bf16.mxu0 0
  %430 = vmatpush1.bf16.msra.mxu0 0
  %431 = vmatprep.subr.bf16.mxu0 0
  %432 = vmatpush1.bf16.msra.mxu0 0
  %433 = vmatprep.mubr.bf16.mxu0 0
  %434 = vmatmul.mubr.bf16.gmra.mrb[0].mxu0 %v359
  %v435 = vpop.f32.mrb[0].mxu0
  %v436 = vadd.f32 0.0, %v435
  %v437 = vpop.f32.mrb[0].mxu0
  %v438 = vadd.f32 0.0, %v437
  %v439 = vpop.f32.mrb[0].mxu0
  %v440 = vpop.f32.mrb[0].mxu0
  %441 = vdwg.mxu0
  %v442 = vadd.f32 %v355, %v395
  %v443 = vadd.f32 %v356, %v397
  %v444 = vadd.f32 %v357, %v436
  %v445 = vadd.f32 %v358, %v438
  %v446 = vxor.u32 %v442, 2147483648
  %v447 = vmul.f32 %v446, 1.442695
  %v448 = vpow.pop %v447
  %v449 = vadd.f32 %v448, 1.0
  %v450 = vrcp.pop %v449
  %v451 = vmul.f32 1.0, %v450
  %v452 = vxor.u32 %v443, 2147483648
  %v453 = vmul.f32 %v452, 1.442695
  %v454 = vpow.pop %v453
  %v455 = vadd.f32 %v454, 1.0
  %v456 = vrcp.pop %v455
  %v457 = vmul.f32 1.0, %v456
  %v458 = vtanh.pop %v444
  %v459 = vxor.u32 %v445, 2147483648
  %v460 = vmul.f32 %v459, 1.442695
  %v461 = vpow.pop %v460
  %v462 = vadd.f32 %v461, 1.0
  %v463 = vrcp.pop %v462
  %v464 = vmul.f32 1.0, %v463
  %v465 = vmul.f32 %v457, %v344
  %v466 = vmul.f32 %v451, %v458
  %v467 = vadd.f32 %v465, %v466
  %v468 = vtanh.pop %v467
  %v469 = vmul.f32 %v464, %v468
  %v470 = vmul.f32 %v469, %v469
  %471 = vadd.xlane.f32.xlu0 %v470
  %v472 = vpop.xlane.xlu0 %471
  %v473 = vmax.f32 %v472, 1e-24
  %v474 = vrsqrt.pop %v473
  %v475 = vmul.f32 %v469, %v474
  %v476 = vadd.f32 %v353, %v475
  %s477 = scalar_lea.vmem %s0, 64
  %v478 = vld [vmem:[%s477] sm:$0xff]
  %v479 = vld [vmem:[%s477 + $0x8] sm:$0xff]
  %v480 = vld [vmem:[%s477 + $0x10] sm:$0xff]
  %v481 = vld [vmem:[%s477 + $0x18] sm:$0xff]
  %v482 = vpack.c.bf16 %v469, %v469
  %483 = vmatprep.subr.bf16.mxu0 %v174
  %484 = vmatpush1.bf16.msra.mxu0 %v173
  %485 = vmatprep.subr.bf16.mxu0 %v178
  %486 = vmatpush1.bf16.msra.mxu0 %v177
  %487 = vmatprep.subr.bf16.mxu0 %v182
  %488 = vmatpush1.bf16.msra.mxu0 %v181
  %489 = vmatprep.subr.bf16.mxu0 %v186
  %490 = vmatpush1.bf16.msra.mxu0 %v185
  %491 = vmatprep.subr.bf16.mxu0 %v190
  %492 = vmatpush1.bf16.msra.mxu0 %v189
  %493 = vmatprep.subr.bf16.mxu0 %v194
  %494 = vmatpush1.bf16.msra.mxu0 %v193
  %495 = vmatprep.subr.bf16.mxu0 %v198
  %496 = vmatpush1.bf16.msra.mxu0 %v197
  %497 = vmatprep.subr.bf16.mxu0 %v202
  %498 = vmatpush1.bf16.msra.mxu0 %v201
  %499 = vmatprep.subr.bf16.mxu0 0
  %500 = vmatpush1.bf16.msra.mxu0 0
  %501 = vmatprep.subr.bf16.mxu0 0
  %502 = vmatpush1.bf16.msra.mxu0 0
  %503 = vmatprep.subr.bf16.mxu0 0
  %504 = vmatpush1.bf16.msra.mxu0 0
  %505 = vmatprep.subr.bf16.mxu0 0
  %506 = vmatpush1.bf16.msra.mxu0 0
  %507 = vmatprep.subr.bf16.mxu0 0
  %508 = vmatpush1.bf16.msra.mxu0 0
  %509 = vmatprep.subr.bf16.mxu0 0
  %510 = vmatpush1.bf16.msra.mxu0 0
  %511 = vmatprep.subr.bf16.mxu0 0
  %512 = vmatpush1.bf16.msra.mxu0 0
  %513 = vmatprep.subr.bf16.mxu0 0
  %514 = vmatpush1.bf16.msra.mxu0 0
  %515 = vmatprep.mubr.bf16.mxu0 0
  %516 = vmatmul.mubr.bf16.gmra.mrb[0].mxu0 %v482
  %v517 = vpop.f32.mrb[0].mxu0
  %v518 = vadd.f32 0.0, %v517
  %v519 = vpop.f32.mrb[0].mxu0
  %v520 = vadd.f32 0.0, %v519
  %v521 = vpop.f32.mrb[0].mxu0
  %v522 = vpop.f32.mrb[0].mxu0
  %523 = vdwg.mxu0
  %524 = vmatprep.subr.bf16.mxu0 %v176
  %525 = vmatpush1.bf16.msra.mxu0 %v175
  %526 = vmatprep.subr.bf16.mxu0 %v180
  %527 = vmatpush1.bf16.msra.mxu0 %v179
  %528 = vmatprep.subr.bf16.mxu0 %v184
  %529 = vmatpush1.bf16.msra.mxu0 %v183
  %530 = vmatprep.subr.bf16.mxu0 %v188
  %531 = vmatpush1.bf16.msra.mxu0 %v187
  %532 = vmatprep.subr.bf16.mxu0 %v192
  %533 = vmatpush1.bf16.msra.mxu0 %v191
  %534 = vmatprep.subr.bf16.mxu0 %v196
  %535 = vmatpush1.bf16.msra.mxu0 %v195
  %536 = vmatprep.subr.bf16.mxu0 %v200
  %537 = vmatpush1.bf16.msra.mxu0 %v199
  %538 = vmatprep.subr.bf16.mxu0 %v204
  %539 = vmatpush1.bf16.msra.mxu0 %v203
  %540 = vmatprep.subr.bf16.mxu0 0
  %541 = vmatpush1.bf16.msra.mxu0 0
  %542 = vmatprep.subr.bf16.mxu0 0
  %543 = vmatpush1.bf16.msra.mxu0 0
  %544 = vmatprep.subr.bf16.mxu0 0
  %545 = vmatpush1.bf16.msra.mxu0 0
  %546 = vmatprep.subr.bf16.mxu0 0
  %547 = vmatpush1.bf16.msra.mxu0 0
  %548 = vmatprep.subr.bf16.mxu0 0
  %549 = vmatpush1.bf16.msra.mxu0 0
  %550 = vmatprep.subr.bf16.mxu0 0
  %551 = vmatpush1.bf16.msra.mxu0 0
  %552 = vmatprep.subr.bf16.mxu0 0
  %553 = vmatpush1.bf16.msra.mxu0 0
  %554 = vmatprep.subr.bf16.mxu0 0
  %555 = vmatpush1.bf16.msra.mxu0 0
  %556 = vmatprep.mubr.bf16.mxu0 0
  %557 = vmatmul.mubr.bf16.gmra.mrb[0].mxu0 %v482
  %v558 = vpop.f32.mrb[0].mxu0
  %v559 = vadd.f32 0.0, %v558
  %v560 = vpop.f32.mrb[0].mxu0
  %v561 = vadd.f32 0.0, %v560
  %v562 = vpop.f32.mrb[0].mxu0
  %v563 = vpop.f32.mrb[0].mxu0
  %564 = vdwg.mxu0
  %v565 = vadd.f32 %v478, %v518
  %v566 = vadd.f32 %v479, %v520
  %v567 = vadd.f32 %v480, %v559
  %v568 = vadd.f32 %v481, %v561
  %v569 = vxor.u32 %v565, 2147483648
  %v570 = vmul.f32 %v569, 1.442695
  %v571 = vpow.pop %v570
  %v572 = vadd.f32 %v571, 1.0
  %v573 = vrcp.pop %v572
  %v574 = vmul.f32 1.0, %v573
  %v575 = vxor.u32 %v566, 2147483648
  %v576 = vmul.f32 %v575, 1.442695
  %v577 = vpow.pop %v576
  %v578 = vadd.f32 %v577, 1.0
  %v579 = vrcp.pop %v578
  %v580 = vmul.f32 1.0, %v579
  %v581 = vtanh.pop %v567
  %v582 = vxor.u32 %v568, 2147483648
  %v583 = vmul.f32 %v582, 1.442695
  %v584 = vpow.pop %v583
  %v585 = vadd.f32 %v584, 1.0
  %v586 = vrcp.pop %v585
  %v587 = vmul.f32 1.0, %v586
  %v588 = vmul.f32 %v580, %v467
  %v589 = vmul.f32 %v574, %v581
  %v590 = vadd.f32 %v588, %v589
  %v591 = vtanh.pop %v590
  %v592 = vmul.f32 %v587, %v591
  %v593 = vmul.f32 %v592, %v592
  %594 = vadd.xlane.f32.xlu0 %v593
  %v595 = vpop.xlane.xlu0 %594
  %v596 = vmax.f32 %v595, 1e-24
  %v597 = vrsqrt.pop %v596
  %v598 = vmul.f32 %v592, %v597
  %v599 = vadd.f32 %v476, %v598
  %s600 = scalar_lea.vmem %s0, 96
  %v601 = vld [vmem:[%s600] sm:$0xff]
  %v602 = vld [vmem:[%s600 + $0x8] sm:$0xff]
  %v603 = vld [vmem:[%s600 + $0x10] sm:$0xff]
  %v604 = vld [vmem:[%s600 + $0x18] sm:$0xff]
  %v605 = vpack.c.bf16 %v592, %v592
  %606 = vmatprep.subr.bf16.mxu0 %v174
  %607 = vmatpush1.bf16.msra.mxu0 %v173
  %608 = vmatprep.subr.bf16.mxu0 %v178
  %609 = vmatpush1.bf16.msra.mxu0 %v177
  %610 = vmatprep.subr.bf16.mxu0 %v182
  %611 = vmatpush1.bf16.msra.mxu0 %v181
  %612 = vmatprep.subr.bf16.mxu0 %v186
  %613 = vmatpush1.bf16.msra.mxu0 %v185
  %614 = vmatprep.subr.bf16.mxu0 %v190
  %615 = vmatpush1.bf16.msra.mxu0 %v189
  %616 = vmatprep.subr.bf16.mxu0 %v194
  %617 = vmatpush1.bf16.msra.mxu0 %v193
  %618 = vmatprep.subr.bf16.mxu0 %v198
  %619 = vmatpush1.bf16.msra.mxu0 %v197
  %620 = vmatprep.subr.bf16.mxu0 %v202
  %621 = vmatpush1.bf16.msra.mxu0 %v201
  %622 = vmatprep.subr.bf16.mxu0 0
  %623 = vmatpush1.bf16.msra.mxu0 0
  %624 = vmatprep.subr.bf16.mxu0 0
  %625 = vmatpush1.bf16.msra.mxu0 0
  %626 = vmatprep.subr.bf16.mxu0 0
  %627 = vmatpush1.bf16.msra.mxu0 0
  %628 = vmatprep.subr.bf16.mxu0 0
  %629 = vmatpush1.bf16.msra.mxu0 0
  %630 = vmatprep.subr.bf16.mxu0 0
  %631 = vmatpush1.bf16.msra.mxu0 0
  %632 = vmatprep.subr.bf16.mxu0 0
  %633 = vmatpush1.bf16.msra.mxu0 0
  %634 = vmatprep.subr.bf16.mxu0 0
  %635 = vmatpush1.bf16.msra.mxu0 0
  %636 = vmatprep.subr.bf16.mxu0 0
  %637 = vmatpush1.bf16.msra.mxu0 0
  %638 = vmatprep.mubr.bf16.mxu0 0
  %639 = vmatmul.mubr.bf16.gmra.mrb[0].mxu0 %v605
  %v640 = vpop.f32.mrb[0].mxu0
  %v641 = vadd.f32 0.0, %v640
  %v642 = vpop.f32.mrb[0].mxu0
  %v643 = vadd.f32 0.0, %v642
  %v644 = vpop.f32.mrb[0].mxu0
  %v645 = vpop.f32.mrb[0].mxu0
  %646 = vdwg.mxu0
  %647 = vmatprep.subr.bf16.mxu0 %v176
  %648 = vmatpush1.bf16.msra.mxu0 %v175
  %649 = vmatprep.subr.bf16.mxu0 %v180
  %650 = vmatpush1.bf16.msra.mxu0 %v179
  %651 = vmatprep.subr.bf16.mxu0 %v184
  %652 = vmatpush1.bf16.msra.mxu0 %v183
  %653 = vmatprep.subr.bf16.mxu0 %v188
  %654 = vmatpush1.bf16.msra.mxu0 %v187
  %655 = vmatprep.subr.bf16.mxu0 %v192
  %656 = vmatpush1.bf16.msra.mxu0 %v191
  %657 = vmatprep.subr.bf16.mxu0 %v196
  %658 = vmatpush1.bf16.msra.mxu0 %v195
  %659 = vmatprep.subr.bf16.mxu0 %v200
  %660 = vmatpush1.bf16.msra.mxu0 %v199
  %661 = vmatprep.subr.bf16.mxu0 %v204
  %662 = vmatpush1.bf16.msra.mxu0 %v203
  %663 = vmatprep.subr.bf16.mxu0 0
  %664 = vmatpush1.bf16.msra.mxu0 0
  %665 = vmatprep.subr.bf16.mxu0 0
  %666 = vmatpush1.bf16.msra.mxu0 0
  %667 = vmatprep.subr.bf16.mxu0 0
  %668 = vmatpush1.bf16.msra.mxu0 0
  %669 = vmatprep.subr.bf16.mxu0 0
  %670 = vmatpush1.bf16.msra.mxu0 0
  %671 = vmatprep.subr.bf16.mxu0 0
  %672 = vmatpush1.bf16.msra.mxu0 0
  %673 = vmatprep.subr.bf16.mxu0 0
  %674 = vmatpush1.bf16.msra.mxu0 0
  %675 = vmatprep.subr.bf16.mxu0 0
  %676 = vmatpush1.bf16.msra.mxu0 0
  %677 = vmatprep.subr.bf16.mxu0 0
  %678 = vmatpush1.bf16.msra.mxu0 0
  %679 = vmatprep.mubr.bf16.mxu0 0
  %680 = vmatmul.mubr.bf16.gmra.mrb[0].mxu0 %v605
  %v681 = vpop.f32.mrb[0].mxu0
  %v682 = vadd.f32 0.0, %v681
  %v683 = vpop.f32.mrb[0].mxu0
  %v684 = vadd.f32 0.0, %v683
  %v685 = vpop.f32.mrb[0].mxu0
  %v686 = vpop.f32.mrb[0].mxu0
  %687 = vdwg.mxu0
  %v688 = vadd.f32 %v601, %v641
  %v689 = vadd.f32 %v602, %v643
  %v690 = vadd.f32 %v603, %v682
  %v691 = vadd.f32 %v604, %v684
  %v692 = vxor.u32 %v688, 2147483648
  %v693 = vmul.f32 %v692, 1.442695
  %v694 = vpow.pop %v693
  %v695 = vadd.f32 %v694, 1.0
  %v696 = vrcp.pop %v695
  %v697 = vmul.f32 1.0, %v696
  %v698 = vxor.u32 %v689, 2147483648
  %v699 = vmul.f32 %v698, 1.442695
  %v700 = vpow.pop %v699
  %v701 = vadd.f32 %v700, 1.0
  %v702 = vrcp.pop %v701
  %v703 = vmul.f32 1.0, %v702
  %v704 = vtanh.pop %v690
  %v705 = vxor.u32 %v691, 2147483648
  %v706 = vmul.f32 %v705, 1.442695
  %v707 = vpow.pop %v706
  %v708 = vadd.f32 %v707, 1.0
  %v709 = vrcp.pop %v708
  %v710 = vmul.f32 1.0, %v709
  %v711 = vmul.f32 %v703, %v590
  %v712 = vmul.f32 %v697, %v704
  %v713 = vadd.f32 %v711, %v712
  %v714 = vtanh.pop %v713
  %v715 = vmul.f32 %v710, %v714
  %v716 = vmul.f32 %v715, %v715
  %717 = vadd.xlane.f32.xlu0 %v716
  %v718 = vpop.xlane.xlu0 %717
  %v719 = vmax.f32 %v718, 1e-24
  %v720 = vrsqrt.pop %v719
  %v721 = vmul.f32 %v715, %v720
  %v722 = vadd.f32 %v599, %v721
  %s723 = scalar_lea.vmem %s0, 128
  %v724 = vld [vmem:[%s723] sm:$0xff]
  %v725 = vld [vmem:[%s723 + $0x8] sm:$0xff]
  %v726 = vld [vmem:[%s723 + $0x10] sm:$0xff]
  %v727 = vld [vmem:[%s723 + $0x18] sm:$0xff]
  %v728 = vpack.c.bf16 %v715, %v715
  %729 = vmatprep.subr.bf16.mxu0 %v174
  %730 = vmatpush1.bf16.msra.mxu0 %v173
  %731 = vmatprep.subr.bf16.mxu0 %v178
  %732 = vmatpush1.bf16.msra.mxu0 %v177
  %733 = vmatprep.subr.bf16.mxu0 %v182
  %734 = vmatpush1.bf16.msra.mxu0 %v181
  %735 = vmatprep.subr.bf16.mxu0 %v186
  %736 = vmatpush1.bf16.msra.mxu0 %v185
  %737 = vmatprep.subr.bf16.mxu0 %v190
  %738 = vmatpush1.bf16.msra.mxu0 %v189
  %739 = vmatprep.subr.bf16.mxu0 %v194
  %740 = vmatpush1.bf16.msra.mxu0 %v193
  %741 = vmatprep.subr.bf16.mxu0 %v198
  %742 = vmatpush1.bf16.msra.mxu0 %v197
  %743 = vmatprep.subr.bf16.mxu0 %v202
  %744 = vmatpush1.bf16.msra.mxu0 %v201
  %745 = vmatprep.subr.bf16.mxu0 0
  %746 = vmatpush1.bf16.msra.mxu0 0
  %747 = vmatprep.subr.bf16.mxu0 0
  %748 = vmatpush1.bf16.msra.mxu0 0
  %749 = vmatprep.subr.bf16.mxu0 0
  %750 = vmatpush1.bf16.msra.mxu0 0
  %751 = vmatprep.subr.bf16.mxu0 0
  %752 = vmatpush1.bf16.msra.mxu0 0
  %753 = vmatprep.subr.bf16.mxu0 0
  %754 = vmatpush1.bf16.msra.mxu0 0
  %755 = vmatprep.subr.bf16.mxu0 0
  %756 = vmatpush1.bf16.msra.mxu0 0
  %757 = vmatprep.subr.bf16.mxu0 0
  %758 = vmatpush1.bf16.msra.mxu0 0
  %759 = vmatprep.subr.bf16.mxu0 0
  %760 = vmatpush1.bf16.msra.mxu0 0
  %761 = vmatprep.mubr.bf16.mxu0 0
  %762 = vmatmul.mubr.bf16.gmra.mrb[0].mxu0 %v728
  %v763 = vpop.f32.mrb[0].mxu0
  %v764 = vadd.f32 0.0, %v763
  %v765 = vpop.f32.mrb[0].mxu0
  %v766 = vadd.f32 0.0, %v765
  %v767 = vpop.f32.mrb[0].mxu0
  %v768 = vpop.f32.mrb[0].mxu0
  %769 = vdwg.mxu0
  %770 = vmatprep.subr.bf16.mxu0 %v176
  %771 = vmatpush1.bf16.msra.mxu0 %v175
  %772 = vmatprep.subr.bf16.mxu0 %v180
  %773 = vmatpush1.bf16.msra.mxu0 %v179
  %774 = vmatprep.subr.bf16.mxu0 %v184
  %775 = vmatpush1.bf16.msra.mxu0 %v183
  %776 = vmatprep.subr.bf16.mxu0 %v188
  %777 = vmatpush1.bf16.msra.mxu0 %v187
  %778 = vmatprep.subr.bf16.mxu0 %v192
  %779 = vmatpush1.bf16.msra.mxu0 %v191
  %780 = vmatprep.subr.bf16.mxu0 %v196
  %781 = vmatpush1.bf16.msra.mxu0 %v195
  %782 = vmatprep.subr.bf16.mxu0 %v200
  %783 = vmatpush1.bf16.msra.mxu0 %v199
  %784 = vmatprep.subr.bf16.mxu0 %v204
  %785 = vmatpush1.bf16.msra.mxu0 %v203
  %786 = vmatprep.subr.bf16.mxu0 0
  %787 = vmatpush1.bf16.msra.mxu0 0
  %788 = vmatprep.subr.bf16.mxu0 0
  %789 = vmatpush1.bf16.msra.mxu0 0
  %790 = vmatprep.subr.bf16.mxu0 0
  %791 = vmatpush1.bf16.msra.mxu0 0
  %792 = vmatprep.subr.bf16.mxu0 0
  %793 = vmatpush1.bf16.msra.mxu0 0
  %794 = vmatprep.subr.bf16.mxu0 0
  %795 = vmatpush1.bf16.msra.mxu0 0
  %796 = vmatprep.subr.bf16.mxu0 0
  %797 = vmatpush1.bf16.msra.mxu0 0
  %798 = vmatprep.subr.bf16.mxu0 0
  %799 = vmatpush1.bf16.msra.mxu0 0
  %800 = vmatprep.subr.bf16.mxu0 0
  %801 = vmatpush1.bf16.msra.mxu0 0
  %802 = vmatprep.mubr.bf16.mxu0 0
  %803 = vmatmul.mubr.bf16.gmra.mrb[0].mxu0 %v728
  %v804 = vpop.f32.mrb[0].mxu0
  %v805 = vadd.f32 0.0, %v804
  %v806 = vpop.f32.mrb[0].mxu0
  %v807 = vadd.f32 0.0, %v806
  %v808 = vpop.f32.mrb[0].mxu0
  %v809 = vpop.f32.mrb[0].mxu0
  %810 = vdwg.mxu0
  %v811 = vadd.f32 %v724, %v764
  %v812 = vadd.f32 %v725, %v766
  %v813 = vadd.f32 %v726, %v805
  %v814 = vadd.f32 %v727, %v807
  %v815 = vxor.u32 %v811, 2147483648
  %v816 = vmul.f32 %v815, 1.442695
  %v817 = vpow.pop %v816
  %v818 = vadd.f32 %v817, 1.0
  %v819 = vrcp.pop %v818
  %v820 = vmul.f32 1.0, %v819
  %v821 = vxor.u32 %v812, 2147483648
  %v822 = vmul.f32 %v821, 1.442695
  %v823 = vpow.pop %v822
  %v824 = vadd.f32 %v823, 1.0
  %v825 = vrcp.pop %v824
  %v826 = vmul.f32 1.0, %v825
  %v827 = vtanh.pop %v813
  %v828 = vxor.u32 %v814, 2147483648
  %v829 = vmul.f32 %v828, 1.442695
  %v830 = vpow.pop %v829
  %v831 = vadd.f32 %v830, 1.0
  %v832 = vrcp.pop %v831
  %v833 = vmul.f32 1.0, %v832
  %v834 = vmul.f32 %v826, %v713
  %v835 = vmul.f32 %v820, %v827
  %v836 = vadd.f32 %v834, %v835
  %v837 = vtanh.pop %v836
  %v838 = vmul.f32 %v833, %v837
  %v839 = vmul.f32 %v838, %v838
  %840 = vadd.xlane.f32.xlu0 %v839
  %v841 = vpop.xlane.xlu0 %840
  %v842 = vmax.f32 %v841, 1e-24
  %v843 = vrsqrt.pop %v842
  %v844 = vmul.f32 %v838, %v843
  %v845 = vadd.f32 %v722, %v844
  %s846 = scalar_lea.vmem %s0, 160
  %v847 = vld [vmem:[%s846] sm:$0xff]
  %v848 = vld [vmem:[%s846 + $0x8] sm:$0xff]
  %v849 = vld [vmem:[%s846 + $0x10] sm:$0xff]
  %v850 = vld [vmem:[%s846 + $0x18] sm:$0xff]
  %v851 = vpack.c.bf16 %v838, %v838
  %852 = vmatprep.subr.bf16.mxu0 %v174
  %853 = vmatpush1.bf16.msra.mxu0 %v173
  %854 = vmatprep.subr.bf16.mxu0 %v178
  %855 = vmatpush1.bf16.msra.mxu0 %v177
  %856 = vmatprep.subr.bf16.mxu0 %v182
  %857 = vmatpush1.bf16.msra.mxu0 %v181
  %858 = vmatprep.subr.bf16.mxu0 %v186
  %859 = vmatpush1.bf16.msra.mxu0 %v185
  %860 = vmatprep.subr.bf16.mxu0 %v190
  %861 = vmatpush1.bf16.msra.mxu0 %v189
  %862 = vmatprep.subr.bf16.mxu0 %v194
  %863 = vmatpush1.bf16.msra.mxu0 %v193
  %864 = vmatprep.subr.bf16.mxu0 %v198
  %865 = vmatpush1.bf16.msra.mxu0 %v197
  %866 = vmatprep.subr.bf16.mxu0 %v202
  %867 = vmatpush1.bf16.msra.mxu0 %v201
  %868 = vmatprep.subr.bf16.mxu0 0
  %869 = vmatpush1.bf16.msra.mxu0 0
  %870 = vmatprep.subr.bf16.mxu0 0
  %871 = vmatpush1.bf16.msra.mxu0 0
  %872 = vmatprep.subr.bf16.mxu0 0
  %873 = vmatpush1.bf16.msra.mxu0 0
  %874 = vmatprep.subr.bf16.mxu0 0
  %875 = vmatpush1.bf16.msra.mxu0 0
  %876 = vmatprep.subr.bf16.mxu0 0
  %877 = vmatpush1.bf16.msra.mxu0 0
  %878 = vmatprep.subr.bf16.mxu0 0
  %879 = vmatpush1.bf16.msra.mxu0 0
  %880 = vmatprep.subr.bf16.mxu0 0
  %881 = vmatpush1.bf16.msra.mxu0 0
  %882 = vmatprep.subr.bf16.mxu0 0
  %883 = vmatpush1.bf16.msra.mxu0 0
  %884 = vmatprep.mubr.bf16.mxu0 0
  %885 = vmatmul.mubr.bf16.gmra.mrb[0].mxu0 %v851
  %v886 = vpop.f32.mrb[0].mxu0
  %v887 = vadd.f32 0.0, %v886
  %v888 = vpop.f32.mrb[0].mxu0
  %v889 = vadd.f32 0.0, %v888
  %v890 = vpop.f32.mrb[0].mxu0
  %v891 = vpop.f32.mrb[0].mxu0
  %892 = vdwg.mxu0
  %893 = vmatprep.subr.bf16.mxu0 %v176
  %894 = vmatpush1.bf16.msra.mxu0 %v175
  %895 = vmatprep.subr.bf16.mxu0 %v180
  %896 = vmatpush1.bf16.msra.mxu0 %v179
  %897 = vmatprep.subr.bf16.mxu0 %v184
  %898 = vmatpush1.bf16.msra.mxu0 %v183
  %899 = vmatprep.subr.bf16.mxu0 %v188
  %900 = vmatpush1.bf16.msra.mxu0 %v187
  %901 = vmatprep.subr.bf16.mxu0 %v192
  %902 = vmatpush1.bf16.msra.mxu0 %v191
  %903 = vmatprep.subr.bf16.mxu0 %v196
  %904 = vmatpush1.bf16.msra.mxu0 %v195
  %905 = vmatprep.subr.bf16.mxu0 %v200
  %906 = vmatpush1.bf16.msra.mxu0 %v199
  %907 = vmatprep.subr.bf16.mxu0 %v204
  %908 = vmatpush1.bf16.msra.mxu0 %v203
  %909 = vmatprep.subr.bf16.mxu0 0
  %910 = vmatpush1.bf16.msra.mxu0 0
  %911 = vmatprep.subr.bf16.mxu0 0
  %912 = vmatpush1.bf16.msra.mxu0 0
  %913 = vmatprep.subr.bf16.mxu0 0
  %914 = vmatpush1.bf16.msra.mxu0 0
  %915 = vmatprep.subr.bf16.mxu0 0
  %916 = vmatpush1.bf16.msra.mxu0 0
  %917 = vmatprep.subr.bf16.mxu0 0
  %918 = vmatpush1.bf16.msra.mxu0 0
  %919 = vmatprep.subr.bf16.mxu0 0
  %920 = vmatpush1.bf16.msra.mxu0 0
  %921 = vmatprep.subr.bf16.mxu0 0
  %922 = vmatpush1.bf16.msra.mxu0 0
  %923 = vmatprep.subr.bf16.mxu0 0
  %924 = vmatpush1.bf16.msra.mxu0 0
  %925 = vmatprep.mubr.bf16.mxu0 0
  %926 = vmatmul.mubr.bf16.gmra.mrb[0].mxu0 %v851
  %v927 = vpop.f32.mrb[0].mxu0
  %v928 = vadd.f32 0.0, %v927
  %v929 = vpop.f32.mrb[0].mxu0
  %v930 = vadd.f32 0.0, %v929
  %v931 = vpop.f32.mrb[0].mxu0
  %v932 = vpop.f32.mrb[0].mxu0
  %933 = vdwg.mxu0
  %v934 = vadd.f32 %v847, %v887
  %v935 = vadd.f32 %v848, %v889
  %v936 = vadd.f32 %v849, %v928
  %v937 = vadd.f32 %v850, %v930
  %v938 = vxor.u32 %v934, 2147483648
  %v939 = vmul.f32 %v938, 1.442695
  %v940 = vpow.pop %v939
  %v941 = vadd.f32 %v940, 1.0
  %v942 = vrcp.pop %v941
  %v943 = vmul.f32 1.0, %v942
  %v944 = vxor.u32 %v935, 2147483648
  %v945 = vmul.f32 %v944, 1.442695
  %v946 = vpow.pop %v945
  %v947 = vadd.f32 %v946, 1.0
  %v948 = vrcp.pop %v947
  %v949 = vmul.f32 1.0, %v948
  %v950 = vtanh.pop %v936
  %v951 = vxor.u32 %v937, 2147483648
  %v952 = vmul.f32 %v951, 1.442695
  %v953 = vpow.pop %v952
  %v954 = vadd.f32 %v953, 1.0
  %v955 = vrcp.pop %v954
  %v956 = vmul.f32 1.0, %v955
  %v957 = vmul.f32 %v949, %v836
  %v958 = vmul.f32 %v943, %v950
  %v959 = vadd.f32 %v957, %v958
  %v960 = vtanh.pop %v959
  %v961 = vmul.f32 %v956, %v960
  %v962 = vmul.f32 %v961, %v961
  %963 = vadd.xlane.f32.xlu0 %v962
  %v964 = vpop.xlane.xlu0 %963
  %v965 = vmax.f32 %v964, 1e-24
  %v966 = vrsqrt.pop %v965
  %v967 = vmul.f32 %v961, %v966
  %v968 = vadd.f32 %v845, %v967
  %s969 = scalar_lea.vmem %s0, 192
  %v970 = vld [vmem:[%s969] sm:$0xff]
  %v971 = vld [vmem:[%s969 + $0x8] sm:$0xff]
  %v972 = vld [vmem:[%s969 + $0x10] sm:$0xff]
  %v973 = vld [vmem:[%s969 + $0x18] sm:$0xff]
  %v974 = vpack.c.bf16 %v961, %v961
  %975 = vmatprep.subr.bf16.mxu0 %v174
  %976 = vmatpush1.bf16.msra.mxu0 %v173
  %977 = vmatprep.subr.bf16.mxu0 %v178
  %978 = vmatpush1.bf16.msra.mxu0 %v177
  %979 = vmatprep.subr.bf16.mxu0 %v182
  %980 = vmatpush1.bf16.msra.mxu0 %v181
  %981 = vmatprep.subr.bf16.mxu0 %v186
  %982 = vmatpush1.bf16.msra.mxu0 %v185
  %983 = vmatprep.subr.bf16.mxu0 %v190
  %984 = vmatpush1.bf16.msra.mxu0 %v189
  %985 = vmatprep.subr.bf16.mxu0 %v194
  %986 = vmatpush1.bf16.msra.mxu0 %v193
  %987 = vmatprep.subr.bf16.mxu0 %v198
  %988 = vmatpush1.bf16.msra.mxu0 %v197
  %989 = vmatprep.subr.bf16.mxu0 %v202
  %990 = vmatpush1.bf16.msra.mxu0 %v201
  %991 = vmatprep.subr.bf16.mxu0 0
  %992 = vmatpush1.bf16.msra.mxu0 0
  %993 = vmatprep.subr.bf16.mxu0 0
  %994 = vmatpush1.bf16.msra.mxu0 0
  %995 = vmatprep.subr.bf16.mxu0 0
  %996 = vmatpush1.bf16.msra.mxu0 0
  %997 = vmatprep.subr.bf16.mxu0 0
  %998 = vmatpush1.bf16.msra.mxu0 0
  %999 = vmatprep.subr.bf16.mxu0 0
  %1000 = vmatpush1.bf16.msra.mxu0 0
  %1001 = vmatprep.subr.bf16.mxu0 0
  %1002 = vmatpush1.bf16.msra.mxu0 0
  %1003 = vmatprep.subr.bf16.mxu0 0
  %1004 = vmatpush1.bf16.msra.mxu0 0
  %1005 = vmatprep.subr.bf16.mxu0 0
  %1006 = vmatpush1.bf16.msra.mxu0 0
  %1007 = vmatprep.mubr.bf16.mxu0 0
  %1008 = vmatmul.mubr.bf16.gmra.mrb[0].mxu0 %v974
  %v1009 = vpop.f32.mrb[0].mxu0
  %v1010 = vadd.f32 0.0, %v1009
  %v1011 = vpop.f32.mrb[0].mxu0
  %v1012 = vadd.f32 0.0, %v1011
  %v1013 = vpop.f32.mrb[0].mxu0
  %v1014 = vpop.f32.mrb[0].mxu0
  %1015 = vdwg.mxu0
  %1016 = vmatprep.subr.bf16.mxu0 %v176
  %1017 = vmatpush1.bf16.msra.mxu0 %v175
  %1018 = vmatprep.subr.bf16.mxu0 %v180
  %1019 = vmatpush1.bf16.msra.mxu0 %v179
  %1020 = vmatprep.subr.bf16.mxu0 %v184
  %1021 = vmatpush1.bf16.msra.mxu0 %v183
  %1022 = vmatprep.subr.bf16.mxu0 %v188
  %1023 = vmatpush1.bf16.msra.mxu0 %v187
  %1024 = vmatprep.subr.bf16.mxu0 %v192
  %1025 = vmatpush1.bf16.msra.mxu0 %v191
  %1026 = vmatprep.subr.bf16.mxu0 %v196
  %1027 = vmatpush1.bf16.msra.mxu0 %v195
  %1028 = vmatprep.subr.bf16.mxu0 %v200
  %1029 = vmatpush1.bf16.msra.mxu0 %v199
  %1030 = vmatprep.subr.bf16.mxu0 %v204
  %1031 = vmatpush1.bf16.msra.mxu0 %v203
  %1032 = vmatprep.subr.bf16.mxu0 0
  %1033 = vmatpush1.bf16.msra.mxu0 0
  %1034 = vmatprep.subr.bf16.mxu0 0
  %1035 = vmatpush1.bf16.msra.mxu0 0
  %1036 = vmatprep.subr.bf16.mxu0 0
  %1037 = vmatpush1.bf16.msra.mxu0 0
  %1038 = vmatprep.subr.bf16.mxu0 0
  %1039 = vmatpush1.bf16.msra.mxu0 0
  %1040 = vmatprep.subr.bf16.mxu0 0
  %1041 = vmatpush1.bf16.msra.mxu0 0
  %1042 = vmatprep.subr.bf16.mxu0 0
  %1043 = vmatpush1.bf16.msra.mxu0 0
  %1044 = vmatprep.subr.bf16.mxu0 0
  %1045 = vmatpush1.bf16.msra.mxu0 0
  %1046 = vmatprep.subr.bf16.mxu0 0
  %1047 = vmatpush1.bf16.msra.mxu0 0
  %1048 = vmatprep.mubr.bf16.mxu0 0
  %1049 = vmatmul.mubr.bf16.gmra.mrb[0].mxu0 %v974
  %v1050 = vpop.f32.mrb[0].mxu0
  %v1051 = vadd.f32 0.0, %v1050
  %v1052 = vpop.f32.mrb[0].mxu0
  %v1053 = vadd.f32 0.0, %v1052
  %v1054 = vpop.f32.mrb[0].mxu0
  %v1055 = vpop.f32.mrb[0].mxu0
  %1056 = vdwg.mxu0
  %v1057 = vadd.f32 %v970, %v1010
  %v1058 = vadd.f32 %v971, %v1012
  %v1059 = vadd.f32 %v972, %v1051
  %v1060 = vadd.f32 %v973, %v1053
  %v1061 = vxor.u32 %v1057, 2147483648
  %v1062 = vmul.f32 %v1061, 1.442695
  %v1063 = vpow.pop %v1062
  %v1064 = vadd.f32 %v1063, 1.0
  %v1065 = vrcp.pop %v1064
  %v1066 = vmul.f32 1.0, %v1065
  %v1067 = vxor.u32 %v1058, 2147483648
  %v1068 = vmul.f32 %v1067, 1.442695
  %v1069 = vpow.pop %v1068
  %v1070 = vadd.f32 %v1069, 1.0
  %v1071 = vrcp.pop %v1070
  %v1072 = vmul.f32 1.0, %v1071
  %v1073 = vtanh.pop %v1059
  %v1074 = vxor.u32 %v1060, 2147483648
  %v1075 = vmul.f32 %v1074, 1.442695
  %v1076 = vpow.pop %v1075
  %v1077 = vadd.f32 %v1076, 1.0
  %v1078 = vrcp.pop %v1077
  %v1079 = vmul.f32 1.0, %v1078
  %v1080 = vmul.f32 %v1072, %v959
  %v1081 = vmul.f32 %v1066, %v1073
  %v1082 = vadd.f32 %v1080, %v1081
  %v1083 = vtanh.pop %v1082
  %v1084 = vmul.f32 %v1079, %v1083
  %v1085 = vmul.f32 %v1084, %v1084
  %1086 = vadd.xlane.f32.xlu0 %v1085
  %v1087 = vpop.xlane.xlu0 %1086
  %v1088 = vmax.f32 %v1087, 1e-24
  %v1089 = vrsqrt.pop %v1088
  %v1090 = vmul.f32 %v1084, %v1089
  %v1091 = vadd.f32 %v968, %v1090
  %s1092 = scalar_lea.vmem %s0, 224
  %v1093 = vld [vmem:[%s1092] sm:$0xff]
  %v1094 = vld [vmem:[%s1092 + $0x8] sm:$0xff]
  %v1095 = vld [vmem:[%s1092 + $0x10] sm:$0xff]
  %v1096 = vld [vmem:[%s1092 + $0x18] sm:$0xff]
  %v1097 = vpack.c.bf16 %v1084, %v1084
  %1098 = vmatprep.subr.bf16.mxu0 %v174
  %1099 = vmatpush1.bf16.msra.mxu0 %v173
  %1100 = vmatprep.subr.bf16.mxu0 %v178
  %1101 = vmatpush1.bf16.msra.mxu0 %v177
  %1102 = vmatprep.subr.bf16.mxu0 %v182
  %1103 = vmatpush1.bf16.msra.mxu0 %v181
  %1104 = vmatprep.subr.bf16.mxu0 %v186
  %1105 = vmatpush1.bf16.msra.mxu0 %v185
  %1106 = vmatprep.subr.bf16.mxu0 %v190
  %1107 = vmatpush1.bf16.msra.mxu0 %v189
  %1108 = vmatprep.subr.bf16.mxu0 %v194
  %1109 = vmatpush1.bf16.msra.mxu0 %v193
  %1110 = vmatprep.subr.bf16.mxu0 %v198
  %1111 = vmatpush1.bf16.msra.mxu0 %v197
  %1112 = vmatprep.subr.bf16.mxu0 %v202
  %1113 = vmatpush1.bf16.msra.mxu0 %v201
  %1114 = vmatprep.subr.bf16.mxu0 0
  %1115 = vmatpush1.bf16.msra.mxu0 0
  %1116 = vmatprep.subr.bf16.mxu0 0
  %1117 = vmatpush1.bf16.msra.mxu0 0
  %1118 = vmatprep.subr.bf16.mxu0 0
  %1119 = vmatpush1.bf16.msra.mxu0 0
  %1120 = vmatprep.subr.bf16.mxu0 0
  %1121 = vmatpush1.bf16.msra.mxu0 0
  %1122 = vmatprep.subr.bf16.mxu0 0
  %1123 = vmatpush1.bf16.msra.mxu0 0
  %1124 = vmatprep.subr.bf16.mxu0 0
  %1125 = vmatpush1.bf16.msra.mxu0 0
  %1126 = vmatprep.subr.bf16.mxu0 0
  %1127 = vmatpush1.bf16.msra.mxu0 0
  %1128 = vmatprep.subr.bf16.mxu0 0
  %1129 = vmatpush1.bf16.msra.mxu0 0
  %1130 = vmatprep.mubr.bf16.mxu0 0
  %1131 = vmatmul.mubr.bf16.gmra.mrb[0].mxu0 %v1097
  %v1132 = vpop.f32.mrb[0].mxu0
  %v1133 = vadd.f32 0.0, %v1132
  %v1134 = vpop.f32.mrb[0].mxu0
  %v1135 = vadd.f32 0.0, %v1134
  %v1136 = vpop.f32.mrb[0].mxu0
  %v1137 = vpop.f32.mrb[0].mxu0
  %1138 = vdwg.mxu0
  %1139 = vmatprep.subr.bf16.mxu0 %v176
  %1140 = vmatpush1.bf16.msra.mxu0 %v175
  %1141 = vmatprep.subr.bf16.mxu0 %v180
  %1142 = vmatpush1.bf16.msra.mxu0 %v179
  %1143 = vmatprep.subr.bf16.mxu0 %v184
  %1144 = vmatpush1.bf16.msra.mxu0 %v183
  %1145 = vmatprep.subr.bf16.mxu0 %v188
  %1146 = vmatpush1.bf16.msra.mxu0 %v187
  %1147 = vmatprep.subr.bf16.mxu0 %v192
  %1148 = vmatpush1.bf16.msra.mxu0 %v191
  %1149 = vmatprep.subr.bf16.mxu0 %v196
  %1150 = vmatpush1.bf16.msra.mxu0 %v195
  %1151 = vmatprep.subr.bf16.mxu0 %v200
  %1152 = vmatpush1.bf16.msra.mxu0 %v199
  %1153 = vmatprep.subr.bf16.mxu0 %v204
  %1154 = vmatpush1.bf16.msra.mxu0 %v203
  %1155 = vmatprep.subr.bf16.mxu0 0
  %1156 = vmatpush1.bf16.msra.mxu0 0
  %1157 = vmatprep.subr.bf16.mxu0 0
  %1158 = vmatpush1.bf16.msra.mxu0 0
  %1159 = vmatprep.subr.bf16.mxu0 0
  %1160 = vmatpush1.bf16.msra.mxu0 0
  %1161 = vmatprep.subr.bf16.mxu0 0
  %1162 = vmatpush1.bf16.msra.mxu0 0
  %1163 = vmatprep.subr.bf16.mxu0 0
  %1164 = vmatpush1.bf16.msra.mxu0 0
  %1165 = vmatprep.subr.bf16.mxu0 0
  %1166 = vmatpush1.bf16.msra.mxu0 0
  %1167 = vmatprep.subr.bf16.mxu0 0
  %1168 = vmatpush1.bf16.msra.mxu0 0
  %1169 = vmatprep.subr.bf16.mxu0 0
  %1170 = vmatpush1.bf16.msra.mxu0 0
  %1171 = vmatprep.mubr.bf16.mxu0 0
  %1172 = vmatmul.mubr.bf16.gmra.mrb[0].mxu0 %v1097
  %v1173 = vpop.f32.mrb[0].mxu0
  %v1174 = vadd.f32 0.0, %v1173
  %v1175 = vpop.f32.mrb[0].mxu0
  %v1176 = vadd.f32 0.0, %v1175
  %v1177 = vpop.f32.mrb[0].mxu0
  %v1178 = vpop.f32.mrb[0].mxu0
  %1179 = vdwg.mxu0
  %v1180 = vadd.f32 %v1093, %v1133
  %v1181 = vadd.f32 %v1094, %v1135
  %v1182 = vadd.f32 %v1095, %v1174
  %v1183 = vadd.f32 %v1096, %v1176
  %v1184 = vxor.u32 %v1180, 2147483648
  %v1185 = vmul.f32 %v1184, 1.442695
  %v1186 = vpow.pop %v1185
  %v1187 = vadd.f32 %v1186, 1.0
  %v1188 = vrcp.pop %v1187
  %v1189 = vmul.f32 1.0, %v1188
  %v1190 = vxor.u32 %v1181, 2147483648
  %v1191 = vmul.f32 %v1190, 1.442695
  %v1192 = vpow.pop %v1191
  %v1193 = vadd.f32 %v1192, 1.0
  %v1194 = vrcp.pop %v1193
  %v1195 = vmul.f32 1.0, %v1194
  %v1196 = vtanh.pop %v1182
  %v1197 = vxor.u32 %v1183, 2147483648
  %v1198 = vmul.f32 %v1197, 1.442695
  %v1199 = vpow.pop %v1198
  %v1200 = vadd.f32 %v1199, 1.0
  %v1201 = vrcp.pop %v1200
  %v1202 = vmul.f32 1.0, %v1201
  %v1203 = vmul.f32 %v1195, %v1082
  %v1204 = vmul.f32 %v1189, %v1196
  %v1205 = vadd.f32 %v1203, %v1204
  %v1206 = vtanh.pop %v1205
  %v1207 = vmul.f32 %v1202, %v1206
  %v1208 = vmul.f32 %v1207, %v1207
  %1209 = vadd.xlane.f32.xlu0 %v1208
  %v1210 = vpop.xlane.xlu0 %1209
  %v1211 = vmax.f32 %v1210, 1e-24
  %v1212 = vrsqrt.pop %v1211
  %v1213 = vmul.f32 %v1207, %v1212
  %v1214 = vadd.f32 %v1091, %v1213
  %v1215 = vmul.f32 %v1214, 0.125
  %v1216 = vmul.f32 %v1215, %v1215
  %1217 = vadd.xlane.f32.xlu0 %v1216
  %v1218 = vpop.xlane.xlu0 %1217
  %v1219 = vmax.f32 %v1218, 1e-24
  %v1220 = vrsqrt.pop %v1219
  %v1221 = vmul.f32 %v1215, %v1220
  %v1222 = vld [vmem:[%s2] sm:$0xff]
  %v1223 = vld [vmem:[%s2 + $0x8] sm:$0xff]
  %v1224 = vld [vmem:[%s2 + $0x10] sm:$0xff]
  %v1225 = vld [vmem:[%s2 + $0x18] sm:$0xff]
  %v1226 = vld [vmem:[%s2 + $0x20] sm:$0xff]
  %v1227 = vld [vmem:[%s2 + $0x28] sm:$0xff]
  %v1228 = vld [vmem:[%s2 + $0x30] sm:$0xff]
  %v1229 = vld [vmem:[%s2 + $0x38] sm:$0xff]
  %v1230 = vld [vmem:[%s2 + $0x40] sm:$0xff]
  %v1231 = vld [vmem:[%s2 + $0x48] sm:$0xff]
  %v1232 = vld [vmem:[%s2 + $0x50] sm:$0xff]
  %v1233 = vld [vmem:[%s2 + $0x58] sm:$0xff]
  %v1234 = vld [vmem:[%s2 + $0x60] sm:$0xff]
  %v1235 = vld [vmem:[%s2 + $0x68] sm:$0xff]
  %v1236 = vld [vmem:[%s2 + $0x70] sm:$0xff]
  %v1237 = vld [vmem:[%s2 + $0x78] sm:$0xff]
  %v1238 = vld [vmem:[%s3] sm:$0x1]
  %v1240 = vlaneseq
  %v1241 = vshrl.u32 %v1240, 7
  %v1242 = vsub.s32 0, %v1241
  %v1243 = vrot.slane %v1238, %v1242
  %1245 = vmatprep.subr.mxu0 0.0
  %1246 = vmatpush1.msra.mxu0 %v1222
  %1247 = vmatprep.subr.mxu0 0.0
  %1248 = vmatpush1.msra.mxu0 %v1223
  %1249 = vmatprep.subr.mxu0 0.0
  %1250 = vmatpush1.msra.mxu0 %v1224
  %1251 = vmatprep.subr.mxu0 0.0
  %1252 = vmatpush1.msra.mxu0 %v1225
  %1253 = vmatprep.subr.mxu0 0.0
  %1254 = vmatpush1.msra.mxu0 %v1226
  %1255 = vmatprep.subr.mxu0 0.0
  %1256 = vmatpush1.msra.mxu0 %v1227
  %1257 = vmatprep.subr.mxu0 0.0
  %1258 = vmatpush1.msra.mxu0 %v1228
  %1259 = vmatprep.subr.mxu0 0.0
  %1260 = vmatpush1.msra.mxu0 %v1229
  %1261 = vmatprep.subr.mxu0 0.0
  %1262 = vmatpush1.msra.mxu0 %v1230
  %1263 = vmatprep.subr.mxu0 0.0
  %1264 = vmatpush1.msra.mxu0 %v1231
  %1265 = vmatprep.subr.mxu0 0.0
  %1266 = vmatpush1.msra.mxu0 %v1232
  %1267 = vmatprep.subr.mxu0 0.0
  %1268 = vmatpush1.msra.mxu0 %v1233
  %1269 = vmatprep.subr.mxu0 0.0
  %1270 = vmatpush1.msra.mxu0 %v1234
  %1271 = vmatprep.subr.mxu0 0.0
  %1272 = vmatpush1.msra.mxu0 %v1235
  %1273 = vmatprep.subr.mxu0 0.0
  %1274 = vmatpush1.msra.mxu0 %v1236
  %1275 = vmatprep.subr.mxu0 0.0
  %1276 = vmatpush1.msra.mxu0 %v1237
  %1277 = vmatprep.subr.mxu0 0.0
  %1278 = vmatpush1.msra.mxu0 0.0
  %1279 = vmatprep.subr.mxu0 0.0
  %1280 = vmatpush1.msra.mxu0 0.0
  %1281 = vmatprep.subr.mxu0 0.0
  %1282 = vmatpush1.msra.mxu0 0.0
  %1283 = vmatprep.subr.mxu0 0.0
  %1284 = vmatpush1.msra.mxu0 0.0
  %1285 = vmatprep.subr.mxu0 0.0
  %1286 = vmatpush1.msra.mxu0 0.0
  %1287 = vmatprep.subr.mxu0 0.0
  %1288 = vmatpush1.msra.mxu0 0.0
  %1289 = vmatprep.subr.mxu0 0.0
  %1290 = vmatpush1.msra.mxu0 0.0
  %1291 = vmatprep.subr.mxu0 0.0
  %1292 = vmatpush1.msra.mxu0 0.0
  %1293 = vmatprep.subr.mxu0 0.0
  %1294 = vmatpush1.msra.mxu0 0.0
  %1295 = vmatprep.subr.mxu0 0.0
  %1296 = vmatpush1.msra.mxu0 0.0
  %1297 = vmatprep.subr.mxu0 0.0
  %1298 = vmatpush1.msra.mxu0 0.0
  %1299 = vmatprep.subr.mxu0 0.0
  %1300 = vmatpush1.msra.mxu0 0.0
  %1301 = vmatprep.subr.mxu0 0.0
  %1302 = vmatpush1.msra.mxu0 0.0
  %1303 = vmatprep.subr.mxu0 0.0
  %1304 = vmatpush1.msra.mxu0 0.0
  %1305 = vmatprep.subr.mxu0 0.0
  %1306 = vmatpush1.msra.mxu0 0.0
  %1307 = vmatprep.subr.mxu0 0.0
  %1308 = vmatpush1.msra.mxu0 0.0
  %1309 = vmatprep.mubr.f32.mxu0 0.0
  %1310 = vmatmul.mubr.f32.gmra.mrb[0].mxu0 %v1221
  %v1311 = vpop.f32.mrb[0].mxu0
  %v1312 = vadd.f32 %v1243, %v1311
  %v1313 = vpop.f32.mrb[0].mxu0
  %1314 = vdwg.mxu0
  %v1315 = vmax.f32 %v1312, 0.0
  %v1316 = vld [vmem:[%s4] sm:$0xff]
  %v1317 = vld [vmem:[%s4 + $0x8] sm:$0xff]
  %v1318 = vld [vmem:[%s4 + $0x10] sm:$0xff]
  %v1319 = vld [vmem:[%s4 + $0x18] sm:$0xff]
  %v1320 = vld [vmem:[%s4 + $0x20] sm:$0xff]
  %v1321 = vld [vmem:[%s4 + $0x28] sm:$0xff]
  %v1322 = vld [vmem:[%s4 + $0x30] sm:$0xff]
  %v1323 = vld [vmem:[%s4 + $0x38] sm:$0xff]
  %v1324 = vld [vmem:[%s4 + $0x40] sm:$0xff]
  %v1325 = vld [vmem:[%s4 + $0x48] sm:$0xff]
  %v1326 = vld [vmem:[%s4 + $0x50] sm:$0xff]
  %v1327 = vld [vmem:[%s4 + $0x58] sm:$0xff]
  %v1328 = vld [vmem:[%s4 + $0x60] sm:$0xff]
  %v1329 = vld [vmem:[%s4 + $0x68] sm:$0xff]
  %v1330 = vld [vmem:[%s4 + $0x70] sm:$0xff]
  %v1331 = vld [vmem:[%s4 + $0x78] sm:$0xff]
  %v1332 = vld [vmem:[%s5] sm:$0x1]
  %v1334 = vlaneseq
  %v1335 = vshrl.u32 %v1334, 7
  %v1336 = vsub.s32 0, %v1335
  %v1337 = vrot.slane %v1332, %v1336
  %1339 = vmatprep.subr.mxu0 0.0
  %1340 = vmatpush1.msra.mxu0 %v1316
  %1341 = vmatprep.subr.mxu0 0.0
  %1342 = vmatpush1.msra.mxu0 %v1317
  %1343 = vmatprep.subr.mxu0 0.0
  %1344 = vmatpush1.msra.mxu0 %v1318
  %1345 = vmatprep.subr.mxu0 0.0
  %1346 = vmatpush1.msra.mxu0 %v1319
  %1347 = vmatprep.subr.mxu0 0.0
  %1348 = vmatpush1.msra.mxu0 %v1320
  %1349 = vmatprep.subr.mxu0 0.0
  %1350 = vmatpush1.msra.mxu0 %v1321
  %1351 = vmatprep.subr.mxu0 0.0
  %1352 = vmatpush1.msra.mxu0 %v1322
  %1353 = vmatprep.subr.mxu0 0.0
  %1354 = vmatpush1.msra.mxu0 %v1323
  %1355 = vmatprep.subr.mxu0 0.0
  %1356 = vmatpush1.msra.mxu0 %v1324
  %1357 = vmatprep.subr.mxu0 0.0
  %1358 = vmatpush1.msra.mxu0 %v1325
  %1359 = vmatprep.subr.mxu0 0.0
  %1360 = vmatpush1.msra.mxu0 %v1326
  %1361 = vmatprep.subr.mxu0 0.0
  %1362 = vmatpush1.msra.mxu0 %v1327
  %1363 = vmatprep.subr.mxu0 0.0
  %1364 = vmatpush1.msra.mxu0 %v1328
  %1365 = vmatprep.subr.mxu0 0.0
  %1366 = vmatpush1.msra.mxu0 %v1329
  %1367 = vmatprep.subr.mxu0 0.0
  %1368 = vmatpush1.msra.mxu0 %v1330
  %1369 = vmatprep.subr.mxu0 0.0
  %1370 = vmatpush1.msra.mxu0 %v1331
  %1371 = vmatprep.subr.mxu0 0.0
  %1372 = vmatpush1.msra.mxu0 0.0
  %1373 = vmatprep.subr.mxu0 0.0
  %1374 = vmatpush1.msra.mxu0 0.0
  %1375 = vmatprep.subr.mxu0 0.0
  %1376 = vmatpush1.msra.mxu0 0.0
  %1377 = vmatprep.subr.mxu0 0.0
  %1378 = vmatpush1.msra.mxu0 0.0
  %1379 = vmatprep.subr.mxu0 0.0
  %1380 = vmatpush1.msra.mxu0 0.0
  %1381 = vmatprep.subr.mxu0 0.0
  %1382 = vmatpush1.msra.mxu0 0.0
  %1383 = vmatprep.subr.mxu0 0.0
  %1384 = vmatpush1.msra.mxu0 0.0
  %1385 = vmatprep.subr.mxu0 0.0
  %1386 = vmatpush1.msra.mxu0 0.0
  %1387 = vmatprep.subr.mxu0 0.0
  %1388 = vmatpush1.msra.mxu0 0.0
  %1389 = vmatprep.subr.mxu0 0.0
  %1390 = vmatpush1.msra.mxu0 0.0
  %1391 = vmatprep.subr.mxu0 0.0
  %1392 = vmatpush1.msra.mxu0 0.0
  %1393 = vmatprep.subr.mxu0 0.0
  %1394 = vmatpush1.msra.mxu0 0.0
  %1395 = vmatprep.subr.mxu0 0.0
  %1396 = vmatpush1.msra.mxu0 0.0
  %1397 = vmatprep.subr.mxu0 0.0
  %1398 = vmatpush1.msra.mxu0 0.0
  %1399 = vmatprep.subr.mxu0 0.0
  %1400 = vmatpush1.msra.mxu0 0.0
  %1401 = vmatprep.subr.mxu0 0.0
  %1402 = vmatpush1.msra.mxu0 0.0
  %1403 = vmatprep.mubr.f32.mxu0 0.0
  %1404 = vmatmul.mubr.f32.gmra.mrb[0].mxu0 %v1315
  %v1405 = vpop.f32.mrb[0].mxu0
  %v1406 = vadd.f32 %v1337, %v1405
  %v1407 = vpop.f32.mrb[0].mxu0
  %1408 = vdwg.mxu0
  %v1409 = vxor.u32 %v1406, 2147483648
  %v1410 = vmul.f32 %v1409, 1.442695
  %v1411 = vpow.pop %v1410
  %v1412 = vadd.f32 %v1411, 1.0
  %v1413 = vrcp.pop %v1412
  %v1414 = vmul.f32 1.0, %v1413
  %1415 = vst [vmem:[%s11] sm:$0xff] %v1414
  %v1416 = vld [vmem:[%s6] sm:$0xff]
  %v1417 = vld [vmem:[%s6 + $0x8] sm:$0xff]
  %v1418 = vld [vmem:[%s6 + $0x10] sm:$0xff]
  %v1419 = vld [vmem:[%s6 + $0x18] sm:$0xff]
  %v1420 = vld [vmem:[%s6 + $0x20] sm:$0xff]
  %v1421 = vld [vmem:[%s6 + $0x28] sm:$0xff]
  %v1422 = vld [vmem:[%s6 + $0x30] sm:$0xff]
  %v1423 = vld [vmem:[%s6 + $0x38] sm:$0xff]
  %v1424 = vld [vmem:[%s6 + $0x40] sm:$0xff]
  %v1425 = vld [vmem:[%s6 + $0x48] sm:$0xff]
  %v1426 = vld [vmem:[%s6 + $0x50] sm:$0xff]
  %v1427 = vld [vmem:[%s6 + $0x58] sm:$0xff]
  %v1428 = vld [vmem:[%s6 + $0x60] sm:$0xff]
  %v1429 = vld [vmem:[%s6 + $0x68] sm:$0xff]
  %v1430 = vld [vmem:[%s6 + $0x70] sm:$0xff]
  %v1431 = vld [vmem:[%s6 + $0x78] sm:$0xff]
  %v1432 = vld [vmem:[%s6 + $0x80] sm:$0xff]
  %v1433 = vld [vmem:[%s6 + $0x88] sm:$0xff]
  %v1434 = vld [vmem:[%s6 + $0x90] sm:$0xff]
  %v1435 = vld [vmem:[%s6 + $0x98] sm:$0xff]
  %v1436 = vld [vmem:[%s6 + $0xa0] sm:$0xff]
  %v1437 = vld [vmem:[%s6 + $0xa8] sm:$0xff]
  %v1438 = vld [vmem:[%s6 + $0xb0] sm:$0xff]
  %v1439 = vld [vmem:[%s6 + $0xb8] sm:$0xff]
  %v1440 = vld [vmem:[%s6 + $0xc0] sm:$0xff]
  %v1441 = vld [vmem:[%s6 + $0xc8] sm:$0xff]
  %v1442 = vld [vmem:[%s6 + $0xd0] sm:$0xff]
  %v1443 = vld [vmem:[%s6 + $0xd8] sm:$0xff]
  %v1444 = vld [vmem:[%s6 + $0xe0] sm:$0xff]
  %v1445 = vld [vmem:[%s6 + $0xe8] sm:$0xff]
  %v1446 = vld [vmem:[%s6 + $0xf0] sm:$0xff]
  %v1447 = vld [vmem:[%s6 + $0xf8] sm:$0xff]
  %v1448 = vld [vmem:[%s6 + $0x100] sm:$0xff]
  %v1449 = vld [vmem:[%s6 + $0x108] sm:$0xff]
  %v1450 = vld [vmem:[%s6 + $0x110] sm:$0xff]
  %v1451 = vld [vmem:[%s6 + $0x118] sm:$0xff]
  %v1452 = vld [vmem:[%s6 + $0x120] sm:$0xff]
  %v1453 = vld [vmem:[%s6 + $0x128] sm:$0xff]
  %v1454 = vld [vmem:[%s6 + $0x130] sm:$0xff]
  %v1455 = vld [vmem:[%s6 + $0x138] sm:$0xff]
  %v1456 = vld [vmem:[%s6 + $0x140] sm:$0xff]
  %v1457 = vld [vmem:[%s6 + $0x148] sm:$0xff]
  %v1458 = vld [vmem:[%s6 + $0x150] sm:$0xff]
  %v1459 = vld [vmem:[%s6 + $0x158] sm:$0xff]
  %v1460 = vld [vmem:[%s6 + $0x160] sm:$0xff]
  %v1461 = vld [vmem:[%s6 + $0x168] sm:$0xff]
  %v1462 = vld [vmem:[%s6 + $0x170] sm:$0xff]
  %v1463 = vld [vmem:[%s6 + $0x178] sm:$0xff]
  %v1464 = vld [vmem:[%s6 + $0x180] sm:$0xff]
  %v1465 = vld [vmem:[%s6 + $0x188] sm:$0xff]
  %v1466 = vld [vmem:[%s6 + $0x190] sm:$0xff]
  %v1467 = vld [vmem:[%s6 + $0x198] sm:$0xff]
  %v1468 = vld [vmem:[%s6 + $0x1a0] sm:$0xff]
  %v1469 = vld [vmem:[%s6 + $0x1a8] sm:$0xff]
  %v1470 = vld [vmem:[%s6 + $0x1b0] sm:$0xff]
  %v1471 = vld [vmem:[%s6 + $0x1b8] sm:$0xff]
  %v1472 = vld [vmem:[%s6 + $0x1c0] sm:$0xff]
  %v1473 = vld [vmem:[%s6 + $0x1c8] sm:$0xff]
  %v1474 = vld [vmem:[%s6 + $0x1d0] sm:$0xff]
  %v1475 = vld [vmem:[%s6 + $0x1d8] sm:$0xff]
  %v1476 = vld [vmem:[%s6 + $0x1e0] sm:$0xff]
  %v1477 = vld [vmem:[%s6 + $0x1e8] sm:$0xff]
  %v1478 = vld [vmem:[%s6 + $0x1f0] sm:$0xff]
  %v1479 = vld [vmem:[%s6 + $0x1f8] sm:$0xff]
  %v1480 = vld [vmem:[%s7] sm:$0xf]
  %v1481 = vld [vmem:[%s7 + $0x4] sm:$0xf]
  %v1482 = vld [vmem:[%s7 + $0x8] sm:$0xf]
  %v1483 = vld [vmem:[%s7 + $0xc] sm:$0xf]
  %v1484 = vld [vmem:[%s7 + $0x10] sm:$0xf]
  %v1485 = vld [vmem:[%s7 + $0x14] sm:$0xf]
  %v1486 = vld [vmem:[%s7 + $0x18] sm:$0xf]
  %v1487 = vld [vmem:[%s7 + $0x1c] sm:$0xf]
  %v1488 = vld [vmem:[%s7 + $0x20] sm:$0xf]
  %v1489 = vld [vmem:[%s7 + $0x24] sm:$0xf]
  %v1490 = vld [vmem:[%s7 + $0x28] sm:$0xf]
  %v1491 = vld [vmem:[%s7 + $0x2c] sm:$0xf]
  %v1492 = vld [vmem:[%s7 + $0x30] sm:$0xf]
  %v1493 = vld [vmem:[%s7 + $0x34] sm:$0xf]
  %v1494 = vld [vmem:[%s7 + $0x38] sm:$0xf]
  %v1495 = vld [vmem:[%s7 + $0x3c] sm:$0xf]
  %v1496 = vld [vmem:[%s7 + $0x40] sm:$0xf]
  %v1497 = vld [vmem:[%s7 + $0x44] sm:$0xf]
  %v1498 = vld [vmem:[%s7 + $0x48] sm:$0xf]
  %v1499 = vld [vmem:[%s7 + $0x4c] sm:$0xf]
  %v1500 = vld [vmem:[%s7 + $0x50] sm:$0xf]
  %v1501 = vld [vmem:[%s7 + $0x54] sm:$0xf]
  %v1502 = vld [vmem:[%s7 + $0x58] sm:$0xf]
  %v1503 = vld [vmem:[%s7 + $0x5c] sm:$0xf]
  %v1504 = vld [vmem:[%s7 + $0x60] sm:$0xf]
  %v1505 = vld [vmem:[%s7 + $0x64] sm:$0xf]
  %v1506 = vld [vmem:[%s7 + $0x68] sm:$0xf]
  %v1507 = vld [vmem:[%s7 + $0x6c] sm:$0xf]
  %v1508 = vld [vmem:[%s7 + $0x70] sm:$0xf]
  %v1509 = vld [vmem:[%s7 + $0x74] sm:$0xf]
  %v1510 = vld [vmem:[%s7 + $0x78] sm:$0xf]
  %v1511 = vld [vmem:[%s7 + $0x7c] sm:$0xf]
  %v1512 = vld [vmem:[%s8] sm:$0x1]
  %v1513 = vld [vmem:[%s9] sm:$0xf]
  %v1514 = vld [vmem:[%s9 + $0x4] sm:$0xf]
  %v1515 = vld [vmem:[%s9 + $0x8] sm:$0xf]
  %v1516 = vld [vmem:[%s9 + $0xc] sm:$0xf]
  %v1517 = vld [vmem:[%s9 + $0x10] sm:$0xf]
  %v1518 = vld [vmem:[%s9 + $0x14] sm:$0xf]
  %v1519 = vld [vmem:[%s9 + $0x18] sm:$0xf]
  %v1520 = vld [vmem:[%s9 + $0x1c] sm:$0xf]
  %v1521 = vld [vmem:[%s9 + $0x20] sm:$0xf]
  %v1522 = vld [vmem:[%s9 + $0x24] sm:$0xf]
  %v1523 = vld [vmem:[%s9 + $0x28] sm:$0xf]
  %v1524 = vld [vmem:[%s9 + $0x2c] sm:$0xf]
  %v1525 = vld [vmem:[%s9 + $0x30] sm:$0xf]
  %v1526 = vld [vmem:[%s9 + $0x34] sm:$0xf]
  %v1527 = vld [vmem:[%s9 + $0x38] sm:$0xf]
  %v1528 = vld [vmem:[%s9 + $0x3c] sm:$0xf]
  %v1529 = vld [vmem:[%s10] sm:$0x1]
  %v1530 = vlaneseq
  %v1531 = vand.u32 %v1530, 127
  %vm1532 = vcmp.eq.s32.totalorder %v1531, 0
  %v1533 = vsel %vm1532, 1, 0
  %v1534 = vcvt.s32.f32 %v1533
  %v1535 = vpack.c.bf16 %v1534, %v1534
  %v1536 = vpack.c.bf16 %v1221, %v1221
  %v1601 = vunpack.c.l.b16 %v1416
  %v1602 = vunpack.c.h.b16 %v1416
  %v1603 = vunpack.c.l.b16 %v1417
  %v1604 = vunpack.c.h.b16 %v1417
  %v1605 = vunpack.c.l.b16 %v1418
  %v1606 = vunpack.c.h.b16 %v1418
  %v1607 = vunpack.c.l.b16 %v1419
  %v1608 = vunpack.c.h.b16 %v1419
  %v1609 = vunpack.c.l.b16 %v1420
  %v1610 = vunpack.c.h.b16 %v1420
  %v1611 = vunpack.c.l.b16 %v1421
  %v1612 = vunpack.c.h.b16 %v1421
  %v1613 = vunpack.c.l.b16 %v1422
  %v1614 = vunpack.c.h.b16 %v1422
  %v1615 = vunpack.c.l.b16 %v1423
  %v1616 = vunpack.c.h.b16 %v1423
  %v1617 = vunpack.c.l.b16 %v1424
  %v1618 = vunpack.c.h.b16 %v1424
  %v1619 = vunpack.c.l.b16 %v1425
  %v1620 = vunpack.c.h.b16 %v1425
  %v1621 = vunpack.c.l.b16 %v1426
  %v1622 = vunpack.c.h.b16 %v1426
  %v1623 = vunpack.c.l.b16 %v1427
  %v1624 = vunpack.c.h.b16 %v1427
  %v1625 = vunpack.c.l.b16 %v1428
  %v1626 = vunpack.c.h.b16 %v1428
  %v1627 = vunpack.c.l.b16 %v1429
  %v1628 = vunpack.c.h.b16 %v1429
  %v1629 = vunpack.c.l.b16 %v1430
  %v1630 = vunpack.c.h.b16 %v1430
  %v1631 = vunpack.c.l.b16 %v1431
  %v1632 = vunpack.c.h.b16 %v1431
  %v1633 = vunpack.c.l.b16 %v1432
  %v1634 = vunpack.c.h.b16 %v1432
  %v1635 = vunpack.c.l.b16 %v1433
  %v1636 = vunpack.c.h.b16 %v1433
  %v1637 = vunpack.c.l.b16 %v1434
  %v1638 = vunpack.c.h.b16 %v1434
  %v1639 = vunpack.c.l.b16 %v1435
  %v1640 = vunpack.c.h.b16 %v1435
  %v1641 = vunpack.c.l.b16 %v1436
  %v1642 = vunpack.c.h.b16 %v1436
  %v1643 = vunpack.c.l.b16 %v1437
  %v1644 = vunpack.c.h.b16 %v1437
  %v1645 = vunpack.c.l.b16 %v1438
  %v1646 = vunpack.c.h.b16 %v1438
  %v1647 = vunpack.c.l.b16 %v1439
  %v1648 = vunpack.c.h.b16 %v1439
  %v1649 = vunpack.c.l.b16 %v1440
  %v1650 = vunpack.c.h.b16 %v1440
  %v1651 = vunpack.c.l.b16 %v1441
  %v1652 = vunpack.c.h.b16 %v1441
  %v1653 = vunpack.c.l.b16 %v1442
  %v1654 = vunpack.c.h.b16 %v1442
  %v1655 = vunpack.c.l.b16 %v1443
  %v1656 = vunpack.c.h.b16 %v1443
  %v1657 = vunpack.c.l.b16 %v1444
  %v1658 = vunpack.c.h.b16 %v1444
  %v1659 = vunpack.c.l.b16 %v1445
  %v1660 = vunpack.c.h.b16 %v1445
  %v1661 = vunpack.c.l.b16 %v1446
  %v1662 = vunpack.c.h.b16 %v1446
  %v1663 = vunpack.c.l.b16 %v1447
  %v1664 = vunpack.c.h.b16 %v1447
  %v1665 = vunpack.c.l.b16 %v1448
  %v1666 = vunpack.c.h.b16 %v1448
  %v1667 = vunpack.c.l.b16 %v1449
  %v1668 = vunpack.c.h.b16 %v1449
  %v1669 = vunpack.c.l.b16 %v1450
  %v1670 = vunpack.c.h.b16 %v1450
  %v1671 = vunpack.c.l.b16 %v1451
  %v1672 = vunpack.c.h.b16 %v1451
  %v1673 = vunpack.c.l.b16 %v1452
  %v1674 = vunpack.c.h.b16 %v1452
  %v1675 = vunpack.c.l.b16 %v1453
  %v1676 = vunpack.c.h.b16 %v1453
  %v1677 = vunpack.c.l.b16 %v1454
  %v1678 = vunpack.c.h.b16 %v1454
  %v1679 = vunpack.c.l.b16 %v1455
  %v1680 = vunpack.c.h.b16 %v1455
  %v1681 = vunpack.c.l.b16 %v1456
  %v1682 = vunpack.c.h.b16 %v1456
  %v1683 = vunpack.c.l.b16 %v1457
  %v1684 = vunpack.c.h.b16 %v1457
  %v1685 = vunpack.c.l.b16 %v1458
  %v1686 = vunpack.c.h.b16 %v1458
  %v1687 = vunpack.c.l.b16 %v1459
  %v1688 = vunpack.c.h.b16 %v1459
  %v1689 = vunpack.c.l.b16 %v1460
  %v1690 = vunpack.c.h.b16 %v1460
  %v1691 = vunpack.c.l.b16 %v1461
  %v1692 = vunpack.c.h.b16 %v1461
  %v1693 = vunpack.c.l.b16 %v1462
  %v1694 = vunpack.c.h.b16 %v1462
  %v1695 = vunpack.c.l.b16 %v1463
  %v1696 = vunpack.c.h.b16 %v1463
  %v1697 = vunpack.c.l.b16 %v1464
  %v1698 = vunpack.c.h.b16 %v1464
  %v1699 = vunpack.c.l.b16 %v1465
  %v1700 = vunpack.c.h.b16 %v1465
  %v1701 = vunpack.c.l.b16 %v1466
  %v1702 = vunpack.c.h.b16 %v1466
  %v1703 = vunpack.c.l.b16 %v1467
  %v1704 = vunpack.c.h.b16 %v1467
  %v1705 = vunpack.c.l.b16 %v1468
  %v1706 = vunpack.c.h.b16 %v1468
  %v1707 = vunpack.c.l.b16 %v1469
  %v1708 = vunpack.c.h.b16 %v1469
  %v1709 = vunpack.c.l.b16 %v1470
  %v1710 = vunpack.c.h.b16 %v1470
  %v1711 = vunpack.c.l.b16 %v1471
  %v1712 = vunpack.c.h.b16 %v1471
  %v1713 = vunpack.c.l.b16 %v1472
  %v1714 = vunpack.c.h.b16 %v1472
  %v1715 = vunpack.c.l.b16 %v1473
  %v1716 = vunpack.c.h.b16 %v1473
  %v1717 = vunpack.c.l.b16 %v1474
  %v1718 = vunpack.c.h.b16 %v1474
  %v1719 = vunpack.c.l.b16 %v1475
  %v1720 = vunpack.c.h.b16 %v1475
  %v1721 = vunpack.c.l.b16 %v1476
  %v1722 = vunpack.c.h.b16 %v1476
  %v1723 = vunpack.c.l.b16 %v1477
  %v1724 = vunpack.c.h.b16 %v1477
  %v1725 = vunpack.c.l.b16 %v1478
  %v1726 = vunpack.c.h.b16 %v1478
  %v1727 = vunpack.c.l.b16 %v1479
  %v1728 = vunpack.c.h.b16 %v1479
  %v1729 = vpack.c.b16 %v1605, %v1601
  %v1730 = vpack.c.b16 %v1606, %v1602
  %v1731 = vpack.c.b16 %v1607, %v1603
  %v1732 = vpack.c.b16 %v1608, %v1604
  %v1733 = vpack.c.b16 %v1613, %v1609
  %v1734 = vpack.c.b16 %v1614, %v1610
  %v1735 = vpack.c.b16 %v1615, %v1611
  %v1736 = vpack.c.b16 %v1616, %v1612
  %v1737 = vpack.c.b16 %v1621, %v1617
  %v1738 = vpack.c.b16 %v1622, %v1618
  %v1739 = vpack.c.b16 %v1623, %v1619
  %v1740 = vpack.c.b16 %v1624, %v1620
  %v1741 = vpack.c.b16 %v1629, %v1625
  %v1742 = vpack.c.b16 %v1630, %v1626
  %v1743 = vpack.c.b16 %v1631, %v1627
  %v1744 = vpack.c.b16 %v1632, %v1628
  %v1745 = vpack.c.b16 %v1637, %v1633
  %v1746 = vpack.c.b16 %v1638, %v1634
  %v1747 = vpack.c.b16 %v1639, %v1635
  %v1748 = vpack.c.b16 %v1640, %v1636
  %v1749 = vpack.c.b16 %v1645, %v1641
  %v1750 = vpack.c.b16 %v1646, %v1642
  %v1751 = vpack.c.b16 %v1647, %v1643
  %v1752 = vpack.c.b16 %v1648, %v1644
  %v1753 = vpack.c.b16 %v1653, %v1649
  %v1754 = vpack.c.b16 %v1654, %v1650
  %v1755 = vpack.c.b16 %v1655, %v1651
  %v1756 = vpack.c.b16 %v1656, %v1652
  %v1757 = vpack.c.b16 %v1661, %v1657
  %v1758 = vpack.c.b16 %v1662, %v1658
  %v1759 = vpack.c.b16 %v1663, %v1659
  %v1760 = vpack.c.b16 %v1664, %v1660
  %v1761 = vpack.c.b16 %v1669, %v1665
  %v1762 = vpack.c.b16 %v1670, %v1666
  %v1763 = vpack.c.b16 %v1671, %v1667
  %v1764 = vpack.c.b16 %v1672, %v1668
  %v1765 = vpack.c.b16 %v1677, %v1673
  %v1766 = vpack.c.b16 %v1678, %v1674
  %v1767 = vpack.c.b16 %v1679, %v1675
  %v1768 = vpack.c.b16 %v1680, %v1676
  %v1769 = vpack.c.b16 %v1685, %v1681
  %v1770 = vpack.c.b16 %v1686, %v1682
  %v1771 = vpack.c.b16 %v1687, %v1683
  %v1772 = vpack.c.b16 %v1688, %v1684
  %v1773 = vpack.c.b16 %v1693, %v1689
  %v1774 = vpack.c.b16 %v1694, %v1690
  %v1775 = vpack.c.b16 %v1695, %v1691
  %v1776 = vpack.c.b16 %v1696, %v1692
  %v1777 = vpack.c.b16 %v1701, %v1697
  %v1778 = vpack.c.b16 %v1702, %v1698
  %v1779 = vpack.c.b16 %v1703, %v1699
  %v1780 = vpack.c.b16 %v1704, %v1700
  %v1781 = vpack.c.b16 %v1709, %v1705
  %v1782 = vpack.c.b16 %v1710, %v1706
  %v1783 = vpack.c.b16 %v1711, %v1707
  %v1784 = vpack.c.b16 %v1712, %v1708
  %v1785 = vpack.c.b16 %v1717, %v1713
  %v1786 = vpack.c.b16 %v1718, %v1714
  %v1787 = vpack.c.b16 %v1719, %v1715
  %v1788 = vpack.c.b16 %v1720, %v1716
  %v1789 = vpack.c.b16 %v1725, %v1721
  %v1790 = vpack.c.b16 %v1726, %v1722
  %v1791 = vpack.c.b16 %v1727, %v1723
  %v1792 = vpack.c.b16 %v1728, %v1724
  %1857 = vmatprep.subr.bf16.mxu0 %v1730
  %1858 = vmatpush1.bf16.msra.mxu0 %v1729
  %1859 = vmatprep.subr.bf16.mxu0 %v1734
  %1860 = vmatpush1.bf16.msra.mxu0 %v1733
  %1861 = vmatprep.subr.bf16.mxu0 %v1738
  %1862 = vmatpush1.bf16.msra.mxu0 %v1737
  %1863 = vmatprep.subr.bf16.mxu0 %v1742
  %1864 = vmatpush1.bf16.msra.mxu0 %v1741
  %1865 = vmatprep.subr.bf16.mxu0 %v1746
  %1866 = vmatpush1.bf16.msra.mxu0 %v1745
  %1867 = vmatprep.subr.bf16.mxu0 %v1750
  %1868 = vmatpush1.bf16.msra.mxu0 %v1749
  %1869 = vmatprep.subr.bf16.mxu0 %v1754
  %1870 = vmatpush1.bf16.msra.mxu0 %v1753
  %1871 = vmatprep.subr.bf16.mxu0 %v1758
  %1872 = vmatpush1.bf16.msra.mxu0 %v1757
  %1873 = vmatprep.subr.bf16.mxu0 %v1762
  %1874 = vmatpush1.bf16.msra.mxu0 %v1761
  %1875 = vmatprep.subr.bf16.mxu0 %v1766
  %1876 = vmatpush1.bf16.msra.mxu0 %v1765
  %1877 = vmatprep.subr.bf16.mxu0 %v1770
  %1878 = vmatpush1.bf16.msra.mxu0 %v1769
  %1879 = vmatprep.subr.bf16.mxu0 %v1774
  %1880 = vmatpush1.bf16.msra.mxu0 %v1773
  %1881 = vmatprep.subr.bf16.mxu0 %v1778
  %1882 = vmatpush1.bf16.msra.mxu0 %v1777
  %1883 = vmatprep.subr.bf16.mxu0 %v1782
  %1884 = vmatpush1.bf16.msra.mxu0 %v1781
  %1885 = vmatprep.subr.bf16.mxu0 %v1786
  %1886 = vmatpush1.bf16.msra.mxu0 %v1785
  %1887 = vmatprep.subr.bf16.mxu0 %v1790
  %1888 = vmatpush1.bf16.msra.mxu0 %v1789
  %1889 = vmatprep.mubr.bf16.mxu0 %v1536
  %1890 = vmatmul.mubr.bf16.gmra.mrb[0].mxu0 %v1535
  %v1891 = vpop.f32.mrb[0].mxu0
  %v1892 = vadd.f32 0.0, %v1891
  %v1893 = vpop.f32.mrb[0].mxu0
  %v1894 = vadd.f32 0.0, %v1893
  %v1895 = vpop.f32.mrb[0].mxu0
  %v1896 = vpop.f32.mrb[0].mxu0
  %1897 = vdwg.mxu0
  %1898 = vmatprep.subr.bf16.mxu0 %v1732
  %1899 = vmatpush1.bf16.msra.mxu0 %v1731
  %1900 = vmatprep.subr.bf16.mxu0 %v1736
  %1901 = vmatpush1.bf16.msra.mxu0 %v1735
  %1902 = vmatprep.subr.bf16.mxu0 %v1740
  %1903 = vmatpush1.bf16.msra.mxu0 %v1739
  %1904 = vmatprep.subr.bf16.mxu0 %v1744
  %1905 = vmatpush1.bf16.msra.mxu0 %v1743
  %1906 = vmatprep.subr.bf16.mxu0 %v1748
  %1907 = vmatpush1.bf16.msra.mxu0 %v1747
  %1908 = vmatprep.subr.bf16.mxu0 %v1752
  %1909 = vmatpush1.bf16.msra.mxu0 %v1751
  %1910 = vmatprep.subr.bf16.mxu0 %v1756
  %1911 = vmatpush1.bf16.msra.mxu0 %v1755
  %1912 = vmatprep.subr.bf16.mxu0 %v1760
  %1913 = vmatpush1.bf16.msra.mxu0 %v1759
  %1914 = vmatprep.subr.bf16.mxu0 %v1764
  %1915 = vmatpush1.bf16.msra.mxu0 %v1763
  %1916 = vmatprep.subr.bf16.mxu0 %v1768
  %1917 = vmatpush1.bf16.msra.mxu0 %v1767
  %1918 = vmatprep.subr.bf16.mxu0 %v1772
  %1919 = vmatpush1.bf16.msra.mxu0 %v1771
  %1920 = vmatprep.subr.bf16.mxu0 %v1776
  %1921 = vmatpush1.bf16.msra.mxu0 %v1775
  %1922 = vmatprep.subr.bf16.mxu0 %v1780
  %1923 = vmatpush1.bf16.msra.mxu0 %v1779
  %1924 = vmatprep.subr.bf16.mxu0 %v1784
  %1925 = vmatpush1.bf16.msra.mxu0 %v1783
  %1926 = vmatprep.subr.bf16.mxu0 %v1788
  %1927 = vmatpush1.bf16.msra.mxu0 %v1787
  %1928 = vmatprep.subr.bf16.mxu0 %v1792
  %1929 = vmatpush1.bf16.msra.mxu0 %v1791
  %1930 = vmatprep.mubr.bf16.mxu0 %v1536
  %1931 = vmatmul.mubr.bf16.gmra.mrb[0].mxu0 %v1535
  %v1932 = vpop.f32.mrb[0].mxu0
  %v1933 = vadd.f32 0.0, %v1932
  %v1934 = vpop.f32.mrb[0].mxu0
  %v1935 = vadd.f32 0.0, %v1934
  %v1936 = vpop.f32.mrb[0].mxu0
  %v1937 = vpop.f32.mrb[0].mxu0
  %1938 = vdwg.mxu0
  %v1939 = vxor.u32 %v1892, 2147483648
  %v1940 = vmul.f32 %v1939, 1.442695
  %v1941 = vpow.pop %v1940
  %v1942 = vadd.f32 %v1941, 1.0
  %v1943 = vrcp.pop %v1942
  %v1944 = vmul.f32 1.0, %v1943
  %v1945 = vxor.u32 %v1894, 2147483648
  %v1946 = vmul.f32 %v1945, 1.442695
  %v1947 = vpow.pop %v1946
  %v1948 = vadd.f32 %v1947, 1.0
  %v1949 = vrcp.pop %v1948
  %v1950 = vmul.f32 1.0, %v1949
  %v1951 = vtanh.pop %v1933
  %v1952 = vxor.u32 %v1935, 2147483648
  %v1953 = vmul.f32 %v1952, 1.442695
  %v1954 = vpow.pop %v1953
  %v1955 = vadd.f32 %v1954, 1.0
  %v1956 = vrcp.pop %v1955
  %v1957 = vmul.f32 1.0, %v1956
  %v1958 = vmul.f32 %v1950, %v1221
  %v1959 = vmul.f32 %v1944, %v1951
  %v1960 = vadd.f32 %v1958, %v1959
  %v1961 = vtanh.pop %v1960
  %v1962 = vmul.f32 %v1957, %v1961
  %v1963 = vmul.f32 %v352, %v1962
  %1964 = vadd.xlane.f32.xlu0 %v1963
  %v1965 = vpop.xlane.xlu0 %1964
  %v1966 = vmul.f32 %v475, %v1962
  %1967 = vadd.xlane.f32.xlu0 %v1966
  %v1968 = vpop.xlane.xlu0 %1967
  %v1969 = vmul.f32 %v598, %v1962
  %1970 = vadd.xlane.f32.xlu0 %v1969
  %v1971 = vpop.xlane.xlu0 %1970
  %v1972 = vmul.f32 %v721, %v1962
  %1973 = vadd.xlane.f32.xlu0 %v1972
  %v1974 = vpop.xlane.xlu0 %1973
  %v1975 = vmul.f32 %v844, %v1962
  %1976 = vadd.xlane.f32.xlu0 %v1975
  %v1977 = vpop.xlane.xlu0 %1976
  %v1978 = vmul.f32 %v967, %v1962
  %1979 = vadd.xlane.f32.xlu0 %v1978
  %v1980 = vpop.xlane.xlu0 %1979
  %v1981 = vmul.f32 %v1090, %v1962
  %1982 = vadd.xlane.f32.xlu0 %v1981
  %v1983 = vpop.xlane.xlu0 %1982
  %v1984 = vmul.f32 %v1213, %v1962
  %1985 = vadd.xlane.f32.xlu0 %v1984
  %v1986 = vpop.xlane.xlu0 %1985
  %v1987 = vmax.f32 %v1965, %v1968
  %v1988 = vmax.f32 %v1987, %v1971
  %v1989 = vmax.f32 %v1988, %v1974
  %v1990 = vmax.f32 %v1989, %v1977
  %v1991 = vmax.f32 %v1990, %v1980
  %v1992 = vmax.f32 %v1991, %v1983
  %v1993 = vmax.f32 %v1992, %v1986
  %v1994 = vsub.f32 %v1965, %v1993
  %v1995 = vmul.f32 %v1994, 1.442695
  %v1996 = vpow.pop %v1995
  %v1997 = vsub.f32 %v1968, %v1993
  %v1998 = vmul.f32 %v1997, 1.442695
  %v1999 = vpow.pop %v1998
  %v2000 = vsub.f32 %v1971, %v1993
  %v2001 = vmul.f32 %v2000, 1.442695
  %v2002 = vpow.pop %v2001
  %v2003 = vsub.f32 %v1974, %v1993
  %v2004 = vmul.f32 %v2003, 1.442695
  %v2005 = vpow.pop %v2004
  %v2006 = vsub.f32 %v1977, %v1993
  %v2007 = vmul.f32 %v2006, 1.442695
  %v2008 = vpow.pop %v2007
  %v2009 = vsub.f32 %v1980, %v1993
  %v2010 = vmul.f32 %v2009, 1.442695
  %v2011 = vpow.pop %v2010
  %v2012 = vsub.f32 %v1983, %v1993
  %v2013 = vmul.f32 %v2012, 1.442695
  %v2014 = vpow.pop %v2013
  %v2015 = vsub.f32 %v1986, %v1993
  %v2016 = vmul.f32 %v2015, 1.442695
  %v2017 = vpow.pop %v2016
  %v2018 = vadd.f32 %v1996, %v1999
  %v2019 = vadd.f32 %v2018, %v2002
  %v2020 = vadd.f32 %v2019, %v2005
  %v2021 = vadd.f32 %v2020, %v2008
  %v2022 = vadd.f32 %v2021, %v2011
  %v2023 = vadd.f32 %v2022, %v2014
  %v2024 = vadd.f32 %v2023, %v2017
  %v2025 = vrcp.pop %v2024
  %v2026 = vmul.f32 %v1996, %v2025
  %v2027 = vmul.f32 %v2026, %v352
  %v2028 = vmul.f32 %v1999, %v2025
  %v2029 = vmul.f32 %v2028, %v475
  %v2030 = vadd.f32 %v2027, %v2029
  %v2031 = vmul.f32 %v2002, %v2025
  %v2032 = vmul.f32 %v2031, %v598
  %v2033 = vadd.f32 %v2030, %v2032
  %v2034 = vmul.f32 %v2005, %v2025
  %v2035 = vmul.f32 %v2034, %v721
  %v2036 = vadd.f32 %v2033, %v2035
  %v2037 = vmul.f32 %v2008, %v2025
  %v2038 = vmul.f32 %v2037, %v844
  %v2039 = vadd.f32 %v2036, %v2038
  %v2040 = vmul.f32 %v2011, %v2025
  %v2041 = vmul.f32 %v2040, %v967
  %v2042 = vadd.f32 %v2039, %v2041
  %v2043 = vmul.f32 %v2014, %v2025
  %v2044 = vmul.f32 %v2043, %v1090
  %v2045 = vadd.f32 %v2042, %v2044
  %v2046 = vmul.f32 %v2017, %v2025
  %v2047 = vmul.f32 %v2046, %v1213
  %v2048 = vadd.f32 %v2045, %v2047
  %v2049 = vpack.c.bf16 %v2048, %v2048
  %v2050 = vpack.c.bf16 %v1962, %v1962
  %v2052 = vlaneseq
  %v2053 = vshrl.u32 %v2052, 7
  %v2054 = vsub.s32 0, %v2053
  %v2055 = vrot.slane %v1512, %v2054
  %v2089 = vunpack.c.l.b16 %v1480
  %v2090 = vunpack.c.l.b16 %v1481
  %v2091 = vunpack.c.l.b16 %v1482
  %v2092 = vunpack.c.l.b16 %v1483
  %v2093 = vunpack.c.l.b16 %v1484
  %v2094 = vunpack.c.l.b16 %v1485
  %v2095 = vunpack.c.l.b16 %v1486
  %v2096 = vunpack.c.l.b16 %v1487
  %v2097 = vunpack.c.l.b16 %v1488
  %v2098 = vunpack.c.l.b16 %v1489
  %v2099 = vunpack.c.l.b16 %v1490
  %v2100 = vunpack.c.l.b16 %v1491
  %v2101 = vunpack.c.l.b16 %v1492
  %v2102 = vunpack.c.l.b16 %v1493
  %v2103 = vunpack.c.l.b16 %v1494
  %v2104 = vunpack.c.l.b16 %v1495
  %v2105 = vunpack.c.l.b16 %v1496
  %v2106 = vunpack.c.l.b16 %v1497
  %v2107 = vunpack.c.l.b16 %v1498
  %v2108 = vunpack.c.l.b16 %v1499
  %v2109 = vunpack.c.l.b16 %v1500
  %v2110 = vunpack.c.l.b16 %v1501
  %v2111 = vunpack.c.l.b16 %v1502
  %v2112 = vunpack.c.l.b16 %v1503
  %v2113 = vunpack.c.l.b16 %v1504
  %v2114 = vunpack.c.l.b16 %v1505
  %v2115 = vunpack.c.l.b16 %v1506
  %v2116 = vunpack.c.l.b16 %v1507
  %v2117 = vunpack.c.l.b16 %v1508
  %v2118 = vunpack.c.l.b16 %v1509
  %v2119 = vunpack.c.l.b16 %v1510
  %v2120 = vunpack.c.l.b16 %v1511
  %v2121 = vpack.c.b16 %v2090, %v2089
  %v2122 = vpack.c.b16 %v2092, %v2091
  %v2123 = vpack.c.b16 %v2094, %v2093
  %v2124 = vpack.c.b16 %v2096, %v2095
  %v2125 = vpack.c.b16 %v2098, %v2097
  %v2126 = vpack.c.b16 %v2100, %v2099
  %v2127 = vpack.c.b16 %v2102, %v2101
  %v2128 = vpack.c.b16 %v2104, %v2103
  %v2129 = vpack.c.b16 %v2106, %v2105
  %v2130 = vpack.c.b16 %v2108, %v2107
  %v2131 = vpack.c.b16 %v2110, %v2109
  %v2132 = vpack.c.b16 %v2112, %v2111
  %v2133 = vpack.c.b16 %v2114, %v2113
  %v2134 = vpack.c.b16 %v2116, %v2115
  %v2135 = vpack.c.b16 %v2118, %v2117
  %v2136 = vpack.c.b16 %v2120, %v2119
  %2153 = vmatprep.subr.bf16.mxu0 0
  %2154 = vmatpush1.bf16.msra.mxu0 %v2121
  %2155 = vmatprep.subr.bf16.mxu0 0
  %2156 = vmatpush1.bf16.msra.mxu0 %v2122
  %2157 = vmatprep.subr.bf16.mxu0 0
  %2158 = vmatpush1.bf16.msra.mxu0 %v2123
  %2159 = vmatprep.subr.bf16.mxu0 0
  %2160 = vmatpush1.bf16.msra.mxu0 %v2124
  %2161 = vmatprep.subr.bf16.mxu0 0
  %2162 = vmatpush1.bf16.msra.mxu0 %v2125
  %2163 = vmatprep.subr.bf16.mxu0 0
  %2164 = vmatpush1.bf16.msra.mxu0 %v2126
  %2165 = vmatprep.subr.bf16.mxu0 0
  %2166 = vmatpush1.bf16.msra.mxu0 %v2127
  %2167 = vmatprep.subr.bf16.mxu0 0
  %2168 = vmatpush1.bf16.msra.mxu0 %v2128
  %2169 = vmatprep.subr.bf16.mxu0 0
  %2170 = vmatpush1.bf16.msra.mxu0 %v2129
  %2171 = vmatprep.subr.bf16.mxu0 0
  %2172 = vmatpush1.bf16.msra.mxu0 %v2130
  %2173 = vmatprep.subr.bf16.mxu0 0
  %2174 = vmatpush1.bf16.msra.mxu0 %v2131
  %2175 = vmatprep.subr.bf16.mxu0 0
  %2176 = vmatpush1.bf16.msra.mxu0 %v2132
  %2177 = vmatprep.subr.bf16.mxu0 0
  %2178 = vmatpush1.bf16.msra.mxu0 %v2133
  %2179 = vmatprep.subr.bf16.mxu0 0
  %2180 = vmatpush1.bf16.msra.mxu0 %v2134
  %2181 = vmatprep.subr.bf16.mxu0 0
  %2182 = vmatpush1.bf16.msra.mxu0 %v2135
  %2183 = vmatprep.subr.bf16.mxu0 0
  %2184 = vmatpush1.bf16.msra.mxu0 %v2136
  %2185 = vmatprep.mubr.bf16.mxu0 %v2050
  %2186 = vmatmul.mubr.bf16.gmra.mrb[0].mxu0 %v2049
  %v2187 = vpop.f32.mrb[0].mxu0
  %v2188 = vadd.f32 %v2055, %v2187
  %v2189 = vpop.f32.mrb[0].mxu0
  %v2190 = vpop.f32.mrb[0].mxu0
  %v2191 = vpop.f32.mrb[0].mxu0
  %2192 = vdwg.mxu0
  %v2193 = vtanh.pop %v2188
  %v2194 = vpack.c.bf16 %v2193, %v2193
  %v2196 = vlaneseq
  %v2197 = vshrl.u32 %v2196, 7
  %v2198 = vsub.s32 0, %v2197
  %v2199 = vrot.slane %v1529, %v2198
  %v2217 = vunpack.c.l.b16 %v1513
  %v2218 = vunpack.c.l.b16 %v1514
  %v2219 = vunpack.c.l.b16 %v1515
  %v2220 = vunpack.c.l.b16 %v1516
  %v2221 = vunpack.c.l.b16 %v1517
  %v2222 = vunpack.c.l.b16 %v1518
  %v2223 = vunpack.c.l.b16 %v1519
  %v2224 = vunpack.c.l.b16 %v1520
  %v2225 = vunpack.c.l.b16 %v1521
  %v2226 = vunpack.c.l.b16 %v1522
  %v2227 = vunpack.c.l.b16 %v1523
  %v2228 = vunpack.c.l.b16 %v1524
  %v2229 = vunpack.c.l.b16 %v1525
  %v2230 = vunpack.c.l.b16 %v1526
  %v2231 = vunpack.c.l.b16 %v1527
  %v2232 = vunpack.c.l.b16 %v1528
  %v2233 = vpack.c.b16 %v2218, %v2217
  %v2234 = vpack.c.b16 %v2220, %v2219
  %v2235 = vpack.c.b16 %v2222, %v2221
  %v2236 = vpack.c.b16 %v2224, %v2223
  %v2237 = vpack.c.b16 %v2226, %v2225
  %v2238 = vpack.c.b16 %v2228, %v2227
  %v2239 = vpack.c.b16 %v2230, %v2229
  %v2240 = vpack.c.b16 %v2232, %v2231
  %2249 = vmatprep.subr.bf16.mxu0 0
  %2250 = vmatpush1.bf16.msra.mxu0 %v2233
  %2251 = vmatprep.subr.bf16.mxu0 0
  %2252 = vmatpush1.bf16.msra.mxu0 %v2234
  %2253 = vmatprep.subr.bf16.mxu0 0
  %2254 = vmatpush1.bf16.msra.mxu0 %v2235
  %2255 = vmatprep.subr.bf16.mxu0 0
  %2256 = vmatpush1.bf16.msra.mxu0 %v2236
  %2257 = vmatprep.subr.bf16.mxu0 0
  %2258 = vmatpush1.bf16.msra.mxu0 %v2237
  %2259 = vmatprep.subr.bf16.mxu0 0
  %2260 = vmatpush1.bf16.msra.mxu0 %v2238
  %2261 = vmatprep.subr.bf16.mxu0 0
  %2262 = vmatpush1.bf16.msra.mxu0 %v2239
  %2263 = vmatprep.subr.bf16.mxu0 0
  %2264 = vmatpush1.bf16.msra.mxu0 %v2240
  %2265 = vmatprep.subr.bf16.mxu0 0
  %2266 = vmatpush1.bf16.msra.mxu0 0
  %2267 = vmatprep.subr.bf16.mxu0 0
  %2268 = vmatpush1.bf16.msra.mxu0 0
  %2269 = vmatprep.subr.bf16.mxu0 0
  %2270 = vmatpush1.bf16.msra.mxu0 0
  %2271 = vmatprep.subr.bf16.mxu0 0
  %2272 = vmatpush1.bf16.msra.mxu0 0
  %2273 = vmatprep.subr.bf16.mxu0 0
  %2274 = vmatpush1.bf16.msra.mxu0 0
  %2275 = vmatprep.subr.bf16.mxu0 0
  %2276 = vmatpush1.bf16.msra.mxu0 0
  %2277 = vmatprep.subr.bf16.mxu0 0
  %2278 = vmatpush1.bf16.msra.mxu0 0
  %2279 = vmatprep.subr.bf16.mxu0 0
  %2280 = vmatpush1.bf16.msra.mxu0 0
  %2281 = vmatprep.mubr.bf16.mxu0 0
  %2282 = vmatmul.mubr.bf16.gmra.mrb[0].mxu0 %v2194
  %v2283 = vpop.f32.mrb[0].mxu0
  %v2284 = vadd.f32 %v2199, %v2283
  %v2285 = vpop.f32.mrb[0].mxu0
  %v2286 = vpop.f32.mrb[0].mxu0
  %v2287 = vpop.f32.mrb[0].mxu0
  %2288 = vdwg.mxu0
  %2289 = vmax.xlane.f32.xlu0 %v2284
  %v2290 = vpop.xlane.xlu0 %2289
  %vm2291 = vcmp.ge.f32.partialorder %v2284, %v2290
  %v2292 = vsel %vm2291, %v1531, 128
  %v2293 = vand.u32 %v2292, 65535
  %v2294 = vshra.s32 %v2292, 16
  %v2295 = vcvt.s32.f32 %v2293
  %v2296 = vcvt.s32.f32 %v2294
  %2297 = vmin.xlane.f32.xlu0 %v2296
  %v2298 = vpop.xlane.xlu0 %2297
  %vm2299 = vcmp.eq.f32.partialorder %v2296, %v2298
  %v2300 = vsel %vm2299, %v2295, inf
  %2301 = vmin.xlane.f32.xlu0 %v2300
  %v2302 = vpop.xlane.xlu0 %2301
  %v2303 = vcvt.f32.s32 %v2302
  %v2304 = vcvt.f32.s32 %v2298
  %v2305 = vshll.u32 %v2304, 16
  %v2306 = vadd.s32 %v2305, %v2303
  %vm2307 = vcmp.eq.s32.totalorder %v1531, %v2306
  %v2308 = vsel %vm2307, 1, 0
  %v2309 = vcvt.s32.f32 %v2308
  %v2310 = vpack.c.bf16 %v2309, %v2309
  %v2311 = vsub.f32 %v2284, %v2290
  %v2312 = vmul.f32 %v2311, 1.442695
  %v2313 = vpow.pop %v2312
  %2314 = vadd.xlane.f32.xlu0 %v2313
  %v2315 = vpop.xlane.xlu0 %2314
  %v2316 = vlog2.pop %v2315
  %v2317 = vmul.f32 %v2316, 0.6931472
  %v2318 = vadd.f32 %v2290, %v2317
  %v2319 = vsub.f32 %v2284, %v2318
  %2320 = vst [vmem:[%s12] sm:$0xff] %v2319
  %2321 = vmatprep.subr.bf16.mxu0 %v1730
  %2322 = vmatpush1.bf16.msra.mxu0 %v1729
  %2323 = vmatprep.subr.bf16.mxu0 %v1734
  %2324 = vmatpush1.bf16.msra.mxu0 %v1733
  %2325 = vmatprep.subr.bf16.mxu0 %v1738
  %2326 = vmatpush1.bf16.msra.mxu0 %v1737
  %2327 = vmatprep.subr.bf16.mxu0 %v1742
  %2328 = vmatpush1.bf16.msra.mxu0 %v1741
  %2329 = vmatprep.subr.bf16.mxu0 %v1746
  %2330 = vmatpush1.bf16.msra.mxu0 %v1745
  %2331 = vmatprep.subr.bf16.mxu0 %v1750
  %2332 = vmatpush1.bf16.msra.mxu0 %v1749
  %2333 = vmatprep.subr.bf16.mxu0 %v1754
  %2334 = vmatpush1.bf16.msra.mxu0 %v1753
  %2335 = vmatprep.subr.bf16.mxu0 %v1758
  %2336 = vmatpush1.bf16.msra.mxu0 %v1757
  %2337 = vmatprep.subr.bf16.mxu0 %v1762
  %2338 = vmatpush1.bf16.msra.mxu0 %v1761
  %2339 = vmatprep.subr.bf16.mxu0 %v1766
  %2340 = vmatpush1.bf16.msra.mxu0 %v1765
  %2341 = vmatprep.subr.bf16.mxu0 %v1770
  %2342 = vmatpush1.bf16.msra.mxu0 %v1769
  %2343 = vmatprep.subr.bf16.mxu0 %v1774
  %2344 = vmatpush1.bf16.msra.mxu0 %v1773
  %2345 = vmatprep.subr.bf16.mxu0 %v1778
  %2346 = vmatpush1.bf16.msra.mxu0 %v1777
  %2347 = vmatprep.subr.bf16.mxu0 %v1782
  %2348 = vmatpush1.bf16.msra.mxu0 %v1781
  %2349 = vmatprep.subr.bf16.mxu0 %v1786
  %2350 = vmatpush1.bf16.msra.mxu0 %v1785
  %2351 = vmatprep.subr.bf16.mxu0 %v1790
  %2352 = vmatpush1.bf16.msra.mxu0 %v1789
  %2353 = vmatprep.mubr.bf16.mxu0 %v2050
  %2354 = vmatmul.mubr.bf16.gmra.mrb[0].mxu0 %v2310
  %v2355 = vpop.f32.mrb[0].mxu0
  %v2356 = vadd.f32 0.0, %v2355
  %v2357 = vpop.f32.mrb[0].mxu0
  %v2358 = vadd.f32 0.0, %v2357
  %v2359 = vpop.f32.mrb[0].mxu0
  %v2360 = vpop.f32.mrb[0].mxu0
  %2361 = vdwg.mxu0
  %2362 = vmatprep.subr.bf16.mxu0 %v1732
  %2363 = vmatpush1.bf16.msra.mxu0 %v1731
  %2364 = vmatprep.subr.bf16.mxu0 %v1736
  %2365 = vmatpush1.bf16.msra.mxu0 %v1735
  %2366 = vmatprep.subr.bf16.mxu0 %v1740
  %2367 = vmatpush1.bf16.msra.mxu0 %v1739
  %2368 = vmatprep.subr.bf16.mxu0 %v1744
  %2369 = vmatpush1.bf16.msra.mxu0 %v1743
  %2370 = vmatprep.subr.bf16.mxu0 %v1748
  %2371 = vmatpush1.bf16.msra.mxu0 %v1747
  %2372 = vmatprep.subr.bf16.mxu0 %v1752
  %2373 = vmatpush1.bf16.msra.mxu0 %v1751
  %2374 = vmatprep.subr.bf16.mxu0 %v1756
  %2375 = vmatpush1.bf16.msra.mxu0 %v1755
  %2376 = vmatprep.subr.bf16.mxu0 %v1760
  %2377 = vmatpush1.bf16.msra.mxu0 %v1759
  %2378 = vmatprep.subr.bf16.mxu0 %v1764
  %2379 = vmatpush1.bf16.msra.mxu0 %v1763
  %2380 = vmatprep.subr.bf16.mxu0 %v1768
  %2381 = vmatpush1.bf16.msra.mxu0 %v1767
  %2382 = vmatprep.subr.bf16.mxu0 %v1772
  %2383 = vmatpush1.bf16.msra.mxu0 %v1771
  %2384 = vmatprep.subr.bf16.mxu0 %v1776
  %2385 = vmatpush1.bf16.msra.mxu0 %v1775
  %2386 = vmatprep.subr.bf16.mxu0 %v1780
  %2387 = vmatpush1.bf16.msra.mxu0 %v1779
  %2388 = vmatprep.subr.bf16.mxu0 %v1784
  %2389 = vmatpush1.bf16.msra.mxu0 %v1783
  %2390 = vmatprep.subr.bf16.mxu0 %v1788
  %2391 = vmatpush1.bf16.msra.mxu0 %v1787
  %2392 = vmatprep.subr.bf16.mxu0 %v1792
  %2393 = vmatpush1.bf16.msra.mxu0 %v1791
  %2394 = vmatprep.mubr.bf16.mxu0 %v2050
  %2395 = vmatmul.mubr.bf16.gmra.mrb[0].mxu0 %v2310
  %v2396 = vpop.f32.mrb[0].mxu0
  %v2397 = vadd.f32 0.0, %v2396
  %v2398 = vpop.f32.mrb[0].mxu0
  %v2399 = vadd.f32 0.0, %v2398
  %v2400 = vpop.f32.mrb[0].mxu0
  %v2401 = vpop.f32.mrb[0].mxu0
  %2402 = vdwg.mxu0
  %v2403 = vxor.u32 %v2356, 2147483648
  %v2404 = vmul.f32 %v2403, 1.442695
  %v2405 = vpow.pop %v2404
  %v2406 = vadd.f32 %v2405, 1.0
  %v2407 = vrcp.pop %v2406
  %v2408 = vmul.f32 1.0, %v2407
  %v2409 = vxor.u32 %v2358, 2147483648
  %v2410 = vmul.f32 %v2409, 1.442695
  %v2411 = vpow.pop %v2410
  %v2412 = vadd.f32 %v2411, 1.0
  %v2413 = vrcp.pop %v2412
  %v2414 = vmul.f32 1.0, %v2413
  %v2415 = vtanh.pop %v2397
  %v2416 = vxor.u32 %v2399, 2147483648
  %v2417 = vmul.f32 %v2416, 1.442695
  %v2418 = vpow.pop %v2417
  %v2419 = vadd.f32 %v2418, 1.0
  %v2420 = vrcp.pop %v2419
  %v2421 = vmul.f32 1.0, %v2420
  %v2422 = vmul.f32 %v2414, %v1960
  %v2423 = vmul.f32 %v2408, %v2415
  %v2424 = vadd.f32 %v2422, %v2423
  %v2425 = vtanh.pop %v2424
  %v2426 = vmul.f32 %v2421, %v2425
  %v2427 = vmul.f32 %v352, %v2426
  %2428 = vadd.xlane.f32.xlu0 %v2427
  %v2429 = vpop.xlane.xlu0 %2428
  %v2430 = vmul.f32 %v475, %v2426
  %2431 = vadd.xlane.f32.xlu0 %v2430
  %v2432 = vpop.xlane.xlu0 %2431
  %v2433 = vmul.f32 %v598, %v2426
  %2434 = vadd.xlane.f32.xlu0 %v2433
  %v2435 = vpop.xlane.xlu0 %2434
  %v2436 = vmul.f32 %v721, %v2426
  %2437 = vadd.xlane.f32.xlu0 %v2436
  %v2438 = vpop.xlane.xlu0 %2437
  %v2439 = vmul.f32 %v844, %v2426
  %2440 = vadd.xlane.f32.xlu0 %v2439
  %v2441 = vpop.xlane.xlu0 %2440
  %v2442 = vmul.f32 %v967, %v2426
  %2443 = vadd.xlane.f32.xlu0 %v2442
  %v2444 = vpop.xlane.xlu0 %2443
  %v2445 = vmul.f32 %v1090, %v2426
  %2446 = vadd.xlane.f32.xlu0 %v2445
  %v2447 = vpop.xlane.xlu0 %2446
  %v2448 = vmul.f32 %v1213, %v2426
  %2449 = vadd.xlane.f32.xlu0 %v2448
  %v2450 = vpop.xlane.xlu0 %2449
  %v2451 = vmax.f32 %v2429, %v2432
  %v2452 = vmax.f32 %v2451, %v2435
  %v2453 = vmax.f32 %v2452, %v2438
  %v2454 = vmax.f32 %v2453, %v2441
  %v2455 = vmax.f32 %v2454, %v2444
  %v2456 = vmax.f32 %v2455, %v2447
  %v2457 = vmax.f32 %v2456, %v2450
  %v2458 = vsub.f32 %v2429, %v2457
  %v2459 = vmul.f32 %v2458, 1.442695
  %v2460 = vpow.pop %v2459
  %v2461 = vsub.f32 %v2432, %v2457
  %v2462 = vmul.f32 %v2461, 1.442695
  %v2463 = vpow.pop %v2462
  %v2464 = vsub.f32 %v2435, %v2457
  %v2465 = vmul.f32 %v2464, 1.442695
  %v2466 = vpow.pop %v2465
  %v2467 = vsub.f32 %v2438, %v2457
  %v2468 = vmul.f32 %v2467, 1.442695
  %v2469 = vpow.pop %v2468
  %v2470 = vsub.f32 %v2441, %v2457
  %v2471 = vmul.f32 %v2470, 1.442695
  %v2472 = vpow.pop %v2471
  %v2473 = vsub.f32 %v2444, %v2457
  %v2474 = vmul.f32 %v2473, 1.442695
  %v2475 = vpow.pop %v2474
  %v2476 = vsub.f32 %v2447, %v2457
  %v2477 = vmul.f32 %v2476, 1.442695
  %v2478 = vpow.pop %v2477
  %v2479 = vsub.f32 %v2450, %v2457
  %v2480 = vmul.f32 %v2479, 1.442695
  %v2481 = vpow.pop %v2480
  %v2482 = vadd.f32 %v2460, %v2463
  %v2483 = vadd.f32 %v2482, %v2466
  %v2484 = vadd.f32 %v2483, %v2469
  %v2485 = vadd.f32 %v2484, %v2472
  %v2486 = vadd.f32 %v2485, %v2475
  %v2487 = vadd.f32 %v2486, %v2478
  %v2488 = vadd.f32 %v2487, %v2481
  %v2489 = vrcp.pop %v2488
  %v2490 = vmul.f32 %v2460, %v2489
  %v2491 = vmul.f32 %v2490, %v352
  %v2492 = vmul.f32 %v2463, %v2489
  %v2493 = vmul.f32 %v2492, %v475
  %v2494 = vadd.f32 %v2491, %v2493
  %v2495 = vmul.f32 %v2466, %v2489
  %v2496 = vmul.f32 %v2495, %v598
  %v2497 = vadd.f32 %v2494, %v2496
  %v2498 = vmul.f32 %v2469, %v2489
  %v2499 = vmul.f32 %v2498, %v721
  %v2500 = vadd.f32 %v2497, %v2499
  %v2501 = vmul.f32 %v2472, %v2489
  %v2502 = vmul.f32 %v2501, %v844
  %v2503 = vadd.f32 %v2500, %v2502
  %v2504 = vmul.f32 %v2475, %v2489
  %v2505 = vmul.f32 %v2504, %v967
  %v2506 = vadd.f32 %v2503, %v2505
  %v2507 = vmul.f32 %v2478, %v2489
  %v2508 = vmul.f32 %v2507, %v1090
  %v2509 = vadd.f32 %v2506, %v2508
  %v2510 = vmul.f32 %v2481, %v2489
  %v2511 = vmul.f32 %v2510, %v1213
  %v2512 = vadd.f32 %v2509, %v2511
  %v2513 = vpack.c.bf16 %v2512, %v2512
  %v2514 = vpack.c.bf16 %v2426, %v2426
  %2515 = vmatprep.subr.bf16.mxu0 0
  %2516 = vmatpush1.bf16.msra.mxu0 %v2121
  %2517 = vmatprep.subr.bf16.mxu0 0
  %2518 = vmatpush1.bf16.msra.mxu0 %v2122
  %2519 = vmatprep.subr.bf16.mxu0 0
  %2520 = vmatpush1.bf16.msra.mxu0 %v2123
  %2521 = vmatprep.subr.bf16.mxu0 0
  %2522 = vmatpush1.bf16.msra.mxu0 %v2124
  %2523 = vmatprep.subr.bf16.mxu0 0
  %2524 = vmatpush1.bf16.msra.mxu0 %v2125
  %2525 = vmatprep.subr.bf16.mxu0 0
  %2526 = vmatpush1.bf16.msra.mxu0 %v2126
  %2527 = vmatprep.subr.bf16.mxu0 0
  %2528 = vmatpush1.bf16.msra.mxu0 %v2127
  %2529 = vmatprep.subr.bf16.mxu0 0
  %2530 = vmatpush1.bf16.msra.mxu0 %v2128
  %2531 = vmatprep.subr.bf16.mxu0 0
  %2532 = vmatpush1.bf16.msra.mxu0 %v2129
  %2533 = vmatprep.subr.bf16.mxu0 0
  %2534 = vmatpush1.bf16.msra.mxu0 %v2130
  %2535 = vmatprep.subr.bf16.mxu0 0
  %2536 = vmatpush1.bf16.msra.mxu0 %v2131
  %2537 = vmatprep.subr.bf16.mxu0 0
  %2538 = vmatpush1.bf16.msra.mxu0 %v2132
  %2539 = vmatprep.subr.bf16.mxu0 0
  %2540 = vmatpush1.bf16.msra.mxu0 %v2133
  %2541 = vmatprep.subr.bf16.mxu0 0
  %2542 = vmatpush1.bf16.msra.mxu0 %v2134
  %2543 = vmatprep.subr.bf16.mxu0 0
  %2544 = vmatpush1.bf16.msra.mxu0 %v2135
  %2545 = vmatprep.subr.bf16.mxu0 0
  %2546 = vmatpush1.bf16.msra.mxu0 %v2136
  %2547 = vmatprep.mubr.bf16.mxu0 %v2514
  %2548 = vmatmul.mubr.bf16.gmra.mrb[0].mxu0 %v2513
  %v2549 = vpop.f32.mrb[0].mxu0
  %v2550 = vadd.f32 %v2055, %v2549
  %v2551 = vpop.f32.mrb[0].mxu0
  %v2552 = vpop.f32.mrb[0].mxu0
  %v2553 = vpop.f32.mrb[0].mxu0
  %2554 = vdwg.mxu0
  %v2555 = vtanh.pop %v2550
  %v2556 = vpack.c.bf16 %v2555, %v2555
  %2557 = vmatprep.subr.bf16.mxu0 0
  %2558 = vmatpush1.bf16.msra.mxu0 %v2233
  %2559 = vmatprep.subr.bf16.mxu0 0
  %2560 = vmatpush1.bf16.msra.mxu0 %v2234
  %2561 = vmatprep.subr.bf16.mxu0 0
  %2562 = vmatpush1.bf16.msra.mxu0 %v2235
  %2563 = vmatprep.subr.bf16.mxu0 0
  %2564 = vmatpush1.bf16.msra.mxu0 %v2236
  %2565 = vmatprep.subr.bf16.mxu0 0
  %2566 = vmatpush1.bf16.msra.mxu0 %v2237
  %2567 = vmatprep.subr.bf16.mxu0 0
  %2568 = vmatpush1.bf16.msra.mxu0 %v2238
  %2569 = vmatprep.subr.bf16.mxu0 0
  %2570 = vmatpush1.bf16.msra.mxu0 %v2239
  %2571 = vmatprep.subr.bf16.mxu0 0
  %2572 = vmatpush1.bf16.msra.mxu0 %v2240
  %2573 = vmatprep.subr.bf16.mxu0 0
  %2574 = vmatpush1.bf16.msra.mxu0 0
  %2575 = vmatprep.subr.bf16.mxu0 0
  %2576 = vmatpush1.bf16.msra.mxu0 0
  %2577 = vmatprep.subr.bf16.mxu0 0
  %2578 = vmatpush1.bf16.msra.mxu0 0
  %2579 = vmatprep.subr.bf16.mxu0 0
  %2580 = vmatpush1.bf16.msra.mxu0 0
  %2581 = vmatprep.subr.bf16.mxu0 0
  %2582 = vmatpush1.bf16.msra.mxu0 0
  %2583 = vmatprep.subr.bf16.mxu0 0
  %2584 = vmatpush1.bf16.msra.mxu0 0
  %2585 = vmatprep.subr.bf16.mxu0 0
  %2586 = vmatpush1.bf16.msra.mxu0 0
  %2587 = vmatprep.subr.bf16.mxu0 0
  %2588 = vmatpush1.bf16.msra.mxu0 0
  %2589 = vmatprep.mubr.bf16.mxu0 0
  %2590 = vmatmul.mubr.bf16.gmra.mrb[0].mxu0 %v2556
  %v2591 = vpop.f32.mrb[0].mxu0
  %v2592 = vadd.f32 %v2199, %v2591
  %v2593 = vpop.f32.mrb[0].mxu0
  %v2594 = vpop.f32.mrb[0].mxu0
  %v2595 = vpop.f32.mrb[0].mxu0
  %2596 = vdwg.mxu0
  %2597 = vmax.xlane.f32.xlu0 %v2592
  %v2598 = vpop.xlane.xlu0 %2597
  %vm2599 = vcmp.ge.f32.partialorder %v2592, %v2598
  %v2600 = vsel %vm2599, %v1531, 128
  %v2601 = vand.u32 %v2600, 65535
  %v2602 = vshra.s32 %v2600, 16
  %v2603 = vcvt.s32.f32 %v2601
  %v2604 = vcvt.s32.f32 %v2602
  %2605 = vmin.xlane.f32.xlu0 %v2604
  %v2606 = vpop.xlane.xlu0 %2605
  %vm2607 = vcmp.eq.f32.partialorder %v2604, %v2606
  %v2608 = vsel %vm2607, %v2603, inf
  %2609 = vmin.xlane.f32.xlu0 %v2608
  %v2610 = vpop.xlane.xlu0 %2609
  %v2611 = vcvt.f32.s32 %v2610
  %v2612 = vcvt.f32.s32 %v2606
  %v2613 = vshll.u32 %v2612, 16
  %v2614 = vadd.s32 %v2613, %v2611
  %vm2615 = vcmp.eq.s32.totalorder %v1531, %v2614
  %v2616 = vsel %vm2615, 1, 0
  %v2617 = vcvt.s32.f32 %v2616
  %v2618 = vpack.c.bf16 %v2617, %v2617
  %v2619 = vsub.f32 %v2592, %v2598
  %v2620 = vmul.f32 %v2619, 1.442695
  %v2621 = vpow.pop %v2620
  %2622 = vadd.xlane.f32.xlu0 %v2621
  %v2623 = vpop.xlane.xlu0 %2622
  %v2624 = vlog2.pop %v2623
  %v2625 = vmul.f32 %v2624, 0.6931472
  %v2626 = vadd.f32 %v2598, %v2625
  %v2627 = vsub.f32 %v2592, %v2626
  %s2628 = scalar_lea.vmem %s12, 8
  %2629 = vst [vmem:[%s2628] sm:$0xff] %v2627
  %2630 = vmatprep.subr.bf16.mxu0 %v1730
  %2631 = vmatpush1.bf16.msra.mxu0 %v1729
  %2632 = vmatprep.subr.bf16.mxu0 %v1734
  %2633 = vmatpush1.bf16.msra.mxu0 %v1733
  %2634 = vmatprep.subr.bf16.mxu0 %v1738
  %2635 = vmatpush1.bf16.msra.mxu0 %v1737
  %2636 = vmatprep.subr.bf16.mxu0 %v1742
  %2637 = vmatpush1.bf16.msra.mxu0 %v1741
  %2638 = vmatprep.subr.bf16.mxu0 %v1746
  %2639 = vmatpush1.bf16.msra.mxu0 %v1745
  %2640 = vmatprep.subr.bf16.mxu0 %v1750
  %2641 = vmatpush1.bf16.msra.mxu0 %v1749
  %2642 = vmatprep.subr.bf16.mxu0 %v1754
  %2643 = vmatpush1.bf16.msra.mxu0 %v1753
  %2644 = vmatprep.subr.bf16.mxu0 %v1758
  %2645 = vmatpush1.bf16.msra.mxu0 %v1757
  %2646 = vmatprep.subr.bf16.mxu0 %v1762
  %2647 = vmatpush1.bf16.msra.mxu0 %v1761
  %2648 = vmatprep.subr.bf16.mxu0 %v1766
  %2649 = vmatpush1.bf16.msra.mxu0 %v1765
  %2650 = vmatprep.subr.bf16.mxu0 %v1770
  %2651 = vmatpush1.bf16.msra.mxu0 %v1769
  %2652 = vmatprep.subr.bf16.mxu0 %v1774
  %2653 = vmatpush1.bf16.msra.mxu0 %v1773
  %2654 = vmatprep.subr.bf16.mxu0 %v1778
  %2655 = vmatpush1.bf16.msra.mxu0 %v1777
  %2656 = vmatprep.subr.bf16.mxu0 %v1782
  %2657 = vmatpush1.bf16.msra.mxu0 %v1781
  %2658 = vmatprep.subr.bf16.mxu0 %v1786
  %2659 = vmatpush1.bf16.msra.mxu0 %v1785
  %2660 = vmatprep.subr.bf16.mxu0 %v1790
  %2661 = vmatpush1.bf16.msra.mxu0 %v1789
  %2662 = vmatprep.mubr.bf16.mxu0 %v2514
  %2663 = vmatmul.mubr.bf16.gmra.mrb[0].mxu0 %v2618
  %v2664 = vpop.f32.mrb[0].mxu0
  %v2665 = vadd.f32 0.0, %v2664
  %v2666 = vpop.f32.mrb[0].mxu0
  %v2667 = vadd.f32 0.0, %v2666
  %v2668 = vpop.f32.mrb[0].mxu0
  %v2669 = vpop.f32.mrb[0].mxu0
  %2670 = vdwg.mxu0
  %2671 = vmatprep.subr.bf16.mxu0 %v1732
  %2672 = vmatpush1.bf16.msra.mxu0 %v1731
  %2673 = vmatprep.subr.bf16.mxu0 %v1736
  %2674 = vmatpush1.bf16.msra.mxu0 %v1735
  %2675 = vmatprep.subr.bf16.mxu0 %v1740
  %2676 = vmatpush1.bf16.msra.mxu0 %v1739
  %2677 = vmatprep.subr.bf16.mxu0 %v1744
  %2678 = vmatpush1.bf16.msra.mxu0 %v1743
  %2679 = vmatprep.subr.bf16.mxu0 %v1748
  %2680 = vmatpush1.bf16.msra.mxu0 %v1747
  %2681 = vmatprep.subr.bf16.mxu0 %v1752
  %2682 = vmatpush1.bf16.msra.mxu0 %v1751
  %2683 = vmatprep.subr.bf16.mxu0 %v1756
  %2684 = vmatpush1.bf16.msra.mxu0 %v1755
  %2685 = vmatprep.subr.bf16.mxu0 %v1760
  %2686 = vmatpush1.bf16.msra.mxu0 %v1759
  %2687 = vmatprep.subr.bf16.mxu0 %v1764
  %2688 = vmatpush1.bf16.msra.mxu0 %v1763
  %2689 = vmatprep.subr.bf16.mxu0 %v1768
  %2690 = vmatpush1.bf16.msra.mxu0 %v1767
  %2691 = vmatprep.subr.bf16.mxu0 %v1772
  %2692 = vmatpush1.bf16.msra.mxu0 %v1771
  %2693 = vmatprep.subr.bf16.mxu0 %v1776
  %2694 = vmatpush1.bf16.msra.mxu0 %v1775
  %2695 = vmatprep.subr.bf16.mxu0 %v1780
  %2696 = vmatpush1.bf16.msra.mxu0 %v1779
  %2697 = vmatprep.subr.bf16.mxu0 %v1784
  %2698 = vmatpush1.bf16.msra.mxu0 %v1783
  %2699 = vmatprep.subr.bf16.mxu0 %v1788
  %2700 = vmatpush1.bf16.msra.mxu0 %v1787
  %2701 = vmatprep.subr.bf16.mxu0 %v1792
  %2702 = vmatpush1.bf16.msra.mxu0 %v1791
  %2703 = vmatprep.mubr.bf16.mxu0 %v2514
  %2704 = vmatmul.mubr.bf16.gmra.mrb[0].mxu0 %v2618
  %v2705 = vpop.f32.mrb[0].mxu0
  %v2706 = vadd.f32 0.0, %v2705
  %v2707 = vpop.f32.mrb[0].mxu0
  %v2708 = vadd.f32 0.0, %v2707
  %v2709 = vpop.f32.mrb[0].mxu0
  %v2710 = vpop.f32.mrb[0].mxu0
  %2711 = vdwg.mxu0
  %v2712 = vxor.u32 %v2665, 2147483648
  %v2713 = vmul.f32 %v2712, 1.442695
  %v2714 = vpow.pop %v2713
  %v2715 = vadd.f32 %v2714, 1.0
  %v2716 = vrcp.pop %v2715
  %v2717 = vmul.f32 1.0, %v2716
  %v2718 = vxor.u32 %v2667, 2147483648
  %v2719 = vmul.f32 %v2718, 1.442695
  %v2720 = vpow.pop %v2719
  %v2721 = vadd.f32 %v2720, 1.0
  %v2722 = vrcp.pop %v2721
  %v2723 = vmul.f32 1.0, %v2722
  %v2724 = vtanh.pop %v2706
  %v2725 = vxor.u32 %v2708, 2147483648
  %v2726 = vmul.f32 %v2725, 1.442695
  %v2727 = vpow.pop %v2726
  %v2728 = vadd.f32 %v2727, 1.0
  %v2729 = vrcp.pop %v2728
  %v2730 = vmul.f32 1.0, %v2729
  %v2731 = vmul.f32 %v2723, %v2424
  %v2732 = vmul.f32 %v2717, %v2724
  %v2733 = vadd.f32 %v2731, %v2732
  %v2734 = vtanh.pop %v2733
  %v2735 = vmul.f32 %v2730, %v2734
  %v2736 = vmul.f32 %v352, %v2735
  %2737 = vadd.xlane.f32.xlu0 %v2736
  %v2738 = vpop.xlane.xlu0 %2737
  %v2739 = vmul.f32 %v475, %v2735
  %2740 = vadd.xlane.f32.xlu0 %v2739
  %v2741 = vpop.xlane.xlu0 %2740
  %v2742 = vmul.f32 %v598, %v2735
  %2743 = vadd.xlane.f32.xlu0 %v2742
  %v2744 = vpop.xlane.xlu0 %2743
  %v2745 = vmul.f32 %v721, %v2735
  %2746 = vadd.xlane.f32.xlu0 %v2745
  %v2747 = vpop.xlane.xlu0 %2746
  %v2748 = vmul.f32 %v844, %v2735
  %2749 = vadd.xlane.f32.xlu0 %v2748
  %v2750 = vpop.xlane.xlu0 %2749
  %v2751 = vmul.f32 %v967, %v2735
  %2752 = vadd.xlane.f32.xlu0 %v2751
  %v2753 = vpop.xlane.xlu0 %2752
  %v2754 = vmul.f32 %v1090, %v2735
  %2755 = vadd.xlane.f32.xlu0 %v2754
  %v2756 = vpop.xlane.xlu0 %2755
  %v2757 = vmul.f32 %v1213, %v2735
  %2758 = vadd.xlane.f32.xlu0 %v2757
  %v2759 = vpop.xlane.xlu0 %2758
  %v2760 = vmax.f32 %v2738, %v2741
  %v2761 = vmax.f32 %v2760, %v2744
  %v2762 = vmax.f32 %v2761, %v2747
  %v2763 = vmax.f32 %v2762, %v2750
  %v2764 = vmax.f32 %v2763, %v2753
  %v2765 = vmax.f32 %v2764, %v2756
  %v2766 = vmax.f32 %v2765, %v2759
  %v2767 = vsub.f32 %v2738, %v2766
  %v2768 = vmul.f32 %v2767, 1.442695
  %v2769 = vpow.pop %v2768
  %v2770 = vsub.f32 %v2741, %v2766
  %v2771 = vmul.f32 %v2770, 1.442695
  %v2772 = vpow.pop %v2771
  %v2773 = vsub.f32 %v2744, %v2766
  %v2774 = vmul.f32 %v2773, 1.442695
  %v2775 = vpow.pop %v2774
  %v2776 = vsub.f32 %v2747, %v2766
  %v2777 = vmul.f32 %v2776, 1.442695
  %v2778 = vpow.pop %v2777
  %v2779 = vsub.f32 %v2750, %v2766
  %v2780 = vmul.f32 %v2779, 1.442695
  %v2781 = vpow.pop %v2780
  %v2782 = vsub.f32 %v2753, %v2766
  %v2783 = vmul.f32 %v2782, 1.442695
  %v2784 = vpow.pop %v2783
  %v2785 = vsub.f32 %v2756, %v2766
  %v2786 = vmul.f32 %v2785, 1.442695
  %v2787 = vpow.pop %v2786
  %v2788 = vsub.f32 %v2759, %v2766
  %v2789 = vmul.f32 %v2788, 1.442695
  %v2790 = vpow.pop %v2789
  %v2791 = vadd.f32 %v2769, %v2772
  %v2792 = vadd.f32 %v2791, %v2775
  %v2793 = vadd.f32 %v2792, %v2778
  %v2794 = vadd.f32 %v2793, %v2781
  %v2795 = vadd.f32 %v2794, %v2784
  %v2796 = vadd.f32 %v2795, %v2787
  %v2797 = vadd.f32 %v2796, %v2790
  %v2798 = vrcp.pop %v2797
  %v2799 = vmul.f32 %v2769, %v2798
  %v2800 = vmul.f32 %v2799, %v352
  %v2801 = vmul.f32 %v2772, %v2798
  %v2802 = vmul.f32 %v2801, %v475
  %v2803 = vadd.f32 %v2800, %v2802
  %v2804 = vmul.f32 %v2775, %v2798
  %v2805 = vmul.f32 %v2804, %v598
  %v2806 = vadd.f32 %v2803, %v2805
  %v2807 = vmul.f32 %v2778, %v2798
  %v2808 = vmul.f32 %v2807, %v721
  %v2809 = vadd.f32 %v2806, %v2808
  %v2810 = vmul.f32 %v2781, %v2798
  %v2811 = vmul.f32 %v2810, %v844
  %v2812 = vadd.f32 %v2809, %v2811
  %v2813 = vmul.f32 %v2784, %v2798
  %v2814 = vmul.f32 %v2813, %v967
  %v2815 = vadd.f32 %v2812, %v2814
  %v2816 = vmul.f32 %v2787, %v2798
  %v2817 = vmul.f32 %v2816, %v1090
  %v2818 = vadd.f32 %v2815, %v2817
  %v2819 = vmul.f32 %v2790, %v2798
  %v2820 = vmul.f32 %v2819, %v1213
  %v2821 = vadd.f32 %v2818, %v2820
  %v2822 = vpack.c.bf16 %v2821, %v2821
  %v2823 = vpack.c.bf16 %v2735, %v2735
  %2824 = vmatprep.subr.bf16.mxu0 0
  %2825 = vmatpush1.bf16.msra.mxu0 %v2121
  %2826 = vmatprep.subr.bf16.mxu0 0
  %2827 = vmatpush1.bf16.msra.mxu0 %v2122
  %2828 = vmatprep.subr.bf16.mxu0 0
  %2829 = vmatpush1.bf16.msra.mxu0 %v2123
  %2830 = vmatprep.subr.bf16.mxu0 0
  %2831 = vmatpush1.bf16.msra.mxu0 %v2124
  %2832 = vmatprep.subr.bf16.mxu0 0
  %2833 = vmatpush1.bf16.msra.mxu0 %v2125
  %2834 = vmatprep.subr.bf16.mxu0 0
  %2835 = vmatpush1.bf16.msra.mxu0 %v2126
  %2836 = vmatprep.subr.bf16.mxu0 0
  %2837 = vmatpush1.bf16.msra.mxu0 %v2127
  %2838 = vmatprep.subr.bf16.mxu0 0
  %2839 = vmatpush1.bf16.msra.mxu0 %v2128
  %2840 = vmatprep.subr.bf16.mxu0 0
  %2841 = vmatpush1.bf16.msra.mxu0 %v2129
  %2842 = vmatprep.subr.bf16.mxu0 0
  %2843 = vmatpush1.bf16.msra.mxu0 %v2130
  %2844 = vmatprep.subr.bf16.mxu0 0
  %2845 = vmatpush1.bf16.msra.mxu0 %v2131
  %2846 = vmatprep.subr.bf16.mxu0 0
  %2847 = vmatpush1.bf16.msra.mxu0 %v2132
  %2848 = vmatprep.subr.bf16.mxu0 0
  %2849 = vmatpush1.bf16.msra.mxu0 %v2133
  %2850 = vmatprep.subr.bf16.mxu0 0
  %2851 = vmatpush1.bf16.msra.mxu0 %v2134
  %2852 = vmatprep.subr.bf16.mxu0 0
  %2853 = vmatpush1.bf16.msra.mxu0 %v2135
  %2854 = vmatprep.subr.bf16.mxu0 0
  %2855 = vmatpush1.bf16.msra.mxu0 %v2136
  %2856 = vmatprep.mubr.bf16.mxu0 %v2823
  %2857 = vmatmul.mubr.bf16.gmra.mrb[0].mxu0 %v2822
  %v2858 = vpop.f32.mrb[0].mxu0
  %v2859 = vadd.f32 %v2055, %v2858
  %v2860 = vpop.f32.mrb[0].mxu0
  %v2861 = vpop.f32.mrb[0].mxu0
  %v2862 = vpop.f32.mrb[0].mxu0
  %2863 = vdwg.mxu0
  %v2864 = vtanh.pop %v2859
  %v2865 = vpack.c.bf16 %v2864, %v2864
  %2866 = vmatprep.subr.bf16.mxu0 0
  %2867 = vmatpush1.bf16.msra.mxu0 %v2233
  %2868 = vmatprep.subr.bf16.mxu0 0
  %2869 = vmatpush1.bf16.msra.mxu0 %v2234
  %2870 = vmatprep.subr.bf16.mxu0 0
  %2871 = vmatpush1.bf16.msra.mxu0 %v2235
  %2872 = vmatprep.subr.bf16.mxu0 0
  %2873 = vmatpush1.bf16.msra.mxu0 %v2236
  %2874 = vmatprep.subr.bf16.mxu0 0
  %2875 = vmatpush1.bf16.msra.mxu0 %v2237
  %2876 = vmatprep.subr.bf16.mxu0 0
  %2877 = vmatpush1.bf16.msra.mxu0 %v2238
  %2878 = vmatprep.subr.bf16.mxu0 0
  %2879 = vmatpush1.bf16.msra.mxu0 %v2239
  %2880 = vmatprep.subr.bf16.mxu0 0
  %2881 = vmatpush1.bf16.msra.mxu0 %v2240
  %2882 = vmatprep.subr.bf16.mxu0 0
  %2883 = vmatpush1.bf16.msra.mxu0 0
  %2884 = vmatprep.subr.bf16.mxu0 0
  %2885 = vmatpush1.bf16.msra.mxu0 0
  %2886 = vmatprep.subr.bf16.mxu0 0
  %2887 = vmatpush1.bf16.msra.mxu0 0
  %2888 = vmatprep.subr.bf16.mxu0 0
  %2889 = vmatpush1.bf16.msra.mxu0 0
  %2890 = vmatprep.subr.bf16.mxu0 0
  %2891 = vmatpush1.bf16.msra.mxu0 0
  %2892 = vmatprep.subr.bf16.mxu0 0
  %2893 = vmatpush1.bf16.msra.mxu0 0
  %2894 = vmatprep.subr.bf16.mxu0 0
  %2895 = vmatpush1.bf16.msra.mxu0 0
  %2896 = vmatprep.subr.bf16.mxu0 0
  %2897 = vmatpush1.bf16.msra.mxu0 0
  %2898 = vmatprep.mubr.bf16.mxu0 0
  %2899 = vmatmul.mubr.bf16.gmra.mrb[0].mxu0 %v2865
  %v2900 = vpop.f32.mrb[0].mxu0
  %v2901 = vadd.f32 %v2199, %v2900
  %v2902 = vpop.f32.mrb[0].mxu0
  %v2903 = vpop.f32.mrb[0].mxu0
  %v2904 = vpop.f32.mrb[0].mxu0
  %2905 = vdwg.mxu0
  %2906 = vmax.xlane.f32.xlu0 %v2901
  %v2907 = vpop.xlane.xlu0 %2906
  %vm2908 = vcmp.ge.f32.partialorder %v2901, %v2907
  %v2909 = vsel %vm2908, %v1531, 128
  %v2910 = vand.u32 %v2909, 65535
  %v2911 = vshra.s32 %v2909, 16
  %v2912 = vcvt.s32.f32 %v2910
  %v2913 = vcvt.s32.f32 %v2911
  %2914 = vmin.xlane.f32.xlu0 %v2913
  %v2915 = vpop.xlane.xlu0 %2914
  %vm2916 = vcmp.eq.f32.partialorder %v2913, %v2915
  %v2917 = vsel %vm2916, %v2912, inf
  %2918 = vmin.xlane.f32.xlu0 %v2917
  %v2919 = vpop.xlane.xlu0 %2918
  %v2920 = vcvt.f32.s32 %v2919
  %v2921 = vcvt.f32.s32 %v2915
  %v2922 = vshll.u32 %v2921, 16
  %v2923 = vadd.s32 %v2922, %v2920
  %vm2924 = vcmp.eq.s32.totalorder %v1531, %v2923
  %v2925 = vsel %vm2924, 1, 0
  %v2926 = vcvt.s32.f32 %v2925
  %v2927 = vpack.c.bf16 %v2926, %v2926
  %v2928 = vsub.f32 %v2901, %v2907
  %v2929 = vmul.f32 %v2928, 1.442695
  %v2930 = vpow.pop %v2929
  %2931 = vadd.xlane.f32.xlu0 %v2930
  %v2932 = vpop.xlane.xlu0 %2931
  %v2933 = vlog2.pop %v2932
  %v2934 = vmul.f32 %v2933, 0.6931472
  %v2935 = vadd.f32 %v2907, %v2934
  %v2936 = vsub.f32 %v2901, %v2935
  %s2937 = scalar_lea.vmem %s12, 16
  %2938 = vst [vmem:[%s2937] sm:$0xff] %v2936
  %2939 = vmatprep.subr.bf16.mxu0 %v1730
  %2940 = vmatpush1.bf16.msra.mxu0 %v1729
  %2941 = vmatprep.subr.bf16.mxu0 %v1734
  %2942 = vmatpush1.bf16.msra.mxu0 %v1733
  %2943 = vmatprep.subr.bf16.mxu0 %v1738
  %2944 = vmatpush1.bf16.msra.mxu0 %v1737
  %2945 = vmatprep.subr.bf16.mxu0 %v1742
  %2946 = vmatpush1.bf16.msra.mxu0 %v1741
  %2947 = vmatprep.subr.bf16.mxu0 %v1746
  %2948 = vmatpush1.bf16.msra.mxu0 %v1745
  %2949 = vmatprep.subr.bf16.mxu0 %v1750
  %2950 = vmatpush1.bf16.msra.mxu0 %v1749
  %2951 = vmatprep.subr.bf16.mxu0 %v1754
  %2952 = vmatpush1.bf16.msra.mxu0 %v1753
  %2953 = vmatprep.subr.bf16.mxu0 %v1758
  %2954 = vmatpush1.bf16.msra.mxu0 %v1757
  %2955 = vmatprep.subr.bf16.mxu0 %v1762
  %2956 = vmatpush1.bf16.msra.mxu0 %v1761
  %2957 = vmatprep.subr.bf16.mxu0 %v1766
  %2958 = vmatpush1.bf16.msra.mxu0 %v1765
  %2959 = vmatprep.subr.bf16.mxu0 %v1770
  %2960 = vmatpush1.bf16.msra.mxu0 %v1769
  %2961 = vmatprep.subr.bf16.mxu0 %v1774
  %2962 = vmatpush1.bf16.msra.mxu0 %v1773
  %2963 = vmatprep.subr.bf16.mxu0 %v1778
  %2964 = vmatpush1.bf16.msra.mxu0 %v1777
  %2965 = vmatprep.subr.bf16.mxu0 %v1782
  %2966 = vmatpush1.bf16.msra.mxu0 %v1781
  %2967 = vmatprep.subr.bf16.mxu0 %v1786
  %2968 = vmatpush1.bf16.msra.mxu0 %v1785
  %2969 = vmatprep.subr.bf16.mxu0 %v1790
  %2970 = vmatpush1.bf16.msra.mxu0 %v1789
  %2971 = vmatprep.mubr.bf16.mxu0 %v2823
  %2972 = vmatmul.mubr.bf16.gmra.mrb[0].mxu0 %v2927
  %v2973 = vpop.f32.mrb[0].mxu0
  %v2974 = vadd.f32 0.0, %v2973
  %v2975 = vpop.f32.mrb[0].mxu0
  %v2976 = vadd.f32 0.0, %v2975
  %v2977 = vpop.f32.mrb[0].mxu0
  %v2978 = vpop.f32.mrb[0].mxu0
  %2979 = vdwg.mxu0
  %2980 = vmatprep.subr.bf16.mxu0 %v1732
  %2981 = vmatpush1.bf16.msra.mxu0 %v1731
  %2982 = vmatprep.subr.bf16.mxu0 %v1736
  %2983 = vmatpush1.bf16.msra.mxu0 %v1735
  %2984 = vmatprep.subr.bf16.mxu0 %v1740
  %2985 = vmatpush1.bf16.msra.mxu0 %v1739
  %2986 = vmatprep.subr.bf16.mxu0 %v1744
  %2987 = vmatpush1.bf16.msra.mxu0 %v1743
  %2988 = vmatprep.subr.bf16.mxu0 %v1748
  %2989 = vmatpush1.bf16.msra.mxu0 %v1747
  %2990 = vmatprep.subr.bf16.mxu0 %v1752
  %2991 = vmatpush1.bf16.msra.mxu0 %v1751
  %2992 = vmatprep.subr.bf16.mxu0 %v1756
  %2993 = vmatpush1.bf16.msra.mxu0 %v1755
  %2994 = vmatprep.subr.bf16.mxu0 %v1760
  %2995 = vmatpush1.bf16.msra.mxu0 %v1759
  %2996 = vmatprep.subr.bf16.mxu0 %v1764
  %2997 = vmatpush1.bf16.msra.mxu0 %v1763
  %2998 = vmatprep.subr.bf16.mxu0 %v1768
  %2999 = vmatpush1.bf16.msra.mxu0 %v1767
  %3000 = vmatprep.subr.bf16.mxu0 %v1772
  %3001 = vmatpush1.bf16.msra.mxu0 %v1771
  %3002 = vmatprep.subr.bf16.mxu0 %v1776
  %3003 = vmatpush1.bf16.msra.mxu0 %v1775
  %3004 = vmatprep.subr.bf16.mxu0 %v1780
  %3005 = vmatpush1.bf16.msra.mxu0 %v1779
  %3006 = vmatprep.subr.bf16.mxu0 %v1784
  %3007 = vmatpush1.bf16.msra.mxu0 %v1783
  %3008 = vmatprep.subr.bf16.mxu0 %v1788
  %3009 = vmatpush1.bf16.msra.mxu0 %v1787
  %3010 = vmatprep.subr.bf16.mxu0 %v1792
  %3011 = vmatpush1.bf16.msra.mxu0 %v1791
  %3012 = vmatprep.mubr.bf16.mxu0 %v2823
  %3013 = vmatmul.mubr.bf16.gmra.mrb[0].mxu0 %v2927
  %v3014 = vpop.f32.mrb[0].mxu0
  %v3015 = vadd.f32 0.0, %v3014
  %v3016 = vpop.f32.mrb[0].mxu0
  %v3017 = vadd.f32 0.0, %v3016
  %v3018 = vpop.f32.mrb[0].mxu0
  %v3019 = vpop.f32.mrb[0].mxu0
  %3020 = vdwg.mxu0
  %v3021 = vxor.u32 %v2974, 2147483648
  %v3022 = vmul.f32 %v3021, 1.442695
  %v3023 = vpow.pop %v3022
  %v3024 = vadd.f32 %v3023, 1.0
  %v3025 = vrcp.pop %v3024
  %v3026 = vmul.f32 1.0, %v3025
  %v3027 = vxor.u32 %v2976, 2147483648
  %v3028 = vmul.f32 %v3027, 1.442695
  %v3029 = vpow.pop %v3028
  %v3030 = vadd.f32 %v3029, 1.0
  %v3031 = vrcp.pop %v3030
  %v3032 = vmul.f32 1.0, %v3031
  %v3033 = vtanh.pop %v3015
  %v3034 = vxor.u32 %v3017, 2147483648
  %v3035 = vmul.f32 %v3034, 1.442695
  %v3036 = vpow.pop %v3035
  %v3037 = vadd.f32 %v3036, 1.0
  %v3038 = vrcp.pop %v3037
  %v3039 = vmul.f32 1.0, %v3038
  %v3040 = vmul.f32 %v3032, %v2733
  %v3041 = vmul.f32 %v3026, %v3033
  %v3042 = vadd.f32 %v3040, %v3041
  %v3043 = vtanh.pop %v3042
  %v3044 = vmul.f32 %v3039, %v3043
  %v3045 = vmul.f32 %v352, %v3044
  %3046 = vadd.xlane.f32.xlu0 %v3045
  %v3047 = vpop.xlane.xlu0 %3046
  %v3048 = vmul.f32 %v475, %v3044
  %3049 = vadd.xlane.f32.xlu0 %v3048
  %v3050 = vpop.xlane.xlu0 %3049
  %v3051 = vmul.f32 %v598, %v3044
  %3052 = vadd.xlane.f32.xlu0 %v3051
  %v3053 = vpop.xlane.xlu0 %3052
  %v3054 = vmul.f32 %v721, %v3044
  %3055 = vadd.xlane.f32.xlu0 %v3054
  %v3056 = vpop.xlane.xlu0 %3055
  %v3057 = vmul.f32 %v844, %v3044
  %3058 = vadd.xlane.f32.xlu0 %v3057
  %v3059 = vpop.xlane.xlu0 %3058
  %v3060 = vmul.f32 %v967, %v3044
  %3061 = vadd.xlane.f32.xlu0 %v3060
  %v3062 = vpop.xlane.xlu0 %3061
  %v3063 = vmul.f32 %v1090, %v3044
  %3064 = vadd.xlane.f32.xlu0 %v3063
  %v3065 = vpop.xlane.xlu0 %3064
  %v3066 = vmul.f32 %v1213, %v3044
  %3067 = vadd.xlane.f32.xlu0 %v3066
  %v3068 = vpop.xlane.xlu0 %3067
  %v3069 = vmax.f32 %v3047, %v3050
  %v3070 = vmax.f32 %v3069, %v3053
  %v3071 = vmax.f32 %v3070, %v3056
  %v3072 = vmax.f32 %v3071, %v3059
  %v3073 = vmax.f32 %v3072, %v3062
  %v3074 = vmax.f32 %v3073, %v3065
  %v3075 = vmax.f32 %v3074, %v3068
  %v3076 = vsub.f32 %v3047, %v3075
  %v3077 = vmul.f32 %v3076, 1.442695
  %v3078 = vpow.pop %v3077
  %v3079 = vsub.f32 %v3050, %v3075
  %v3080 = vmul.f32 %v3079, 1.442695
  %v3081 = vpow.pop %v3080
  %v3082 = vsub.f32 %v3053, %v3075
  %v3083 = vmul.f32 %v3082, 1.442695
  %v3084 = vpow.pop %v3083
  %v3085 = vsub.f32 %v3056, %v3075
  %v3086 = vmul.f32 %v3085, 1.442695
  %v3087 = vpow.pop %v3086
  %v3088 = vsub.f32 %v3059, %v3075
  %v3089 = vmul.f32 %v3088, 1.442695
  %v3090 = vpow.pop %v3089
  %v3091 = vsub.f32 %v3062, %v3075
  %v3092 = vmul.f32 %v3091, 1.442695
  %v3093 = vpow.pop %v3092
  %v3094 = vsub.f32 %v3065, %v3075
  %v3095 = vmul.f32 %v3094, 1.442695
  %v3096 = vpow.pop %v3095
  %v3097 = vsub.f32 %v3068, %v3075
  %v3098 = vmul.f32 %v3097, 1.442695
  %v3099 = vpow.pop %v3098
  %v3100 = vadd.f32 %v3078, %v3081
  %v3101 = vadd.f32 %v3100, %v3084
  %v3102 = vadd.f32 %v3101, %v3087
  %v3103 = vadd.f32 %v3102, %v3090
  %v3104 = vadd.f32 %v3103, %v3093
  %v3105 = vadd.f32 %v3104, %v3096
  %v3106 = vadd.f32 %v3105, %v3099
  %v3107 = vrcp.pop %v3106
  %v3108 = vmul.f32 %v3078, %v3107
  %v3109 = vmul.f32 %v3108, %v352
  %v3110 = vmul.f32 %v3081, %v3107
  %v3111 = vmul.f32 %v3110, %v475
  %v3112 = vadd.f32 %v3109, %v3111
  %v3113 = vmul.f32 %v3084, %v3107
  %v3114 = vmul.f32 %v3113, %v598
  %v3115 = vadd.f32 %v3112, %v3114
  %v3116 = vmul.f32 %v3087, %v3107
  %v3117 = vmul.f32 %v3116, %v721
  %v3118 = vadd.f32 %v3115, %v3117
  %v3119 = vmul.f32 %v3090, %v3107
  %v3120 = vmul.f32 %v3119, %v844
  %v3121 = vadd.f32 %v3118, %v3120
  %v3122 = vmul.f32 %v3093, %v3107
  %v3123 = vmul.f32 %v3122, %v967
  %v3124 = vadd.f32 %v3121, %v3123
  %v3125 = vmul.f32 %v3096, %v3107
  %v3126 = vmul.f32 %v3125, %v1090
  %v3127 = vadd.f32 %v3124, %v3126
  %v3128 = vmul.f32 %v3099, %v3107
  %v3129 = vmul.f32 %v3128, %v1213
  %v3130 = vadd.f32 %v3127, %v3129
  %v3131 = vpack.c.bf16 %v3130, %v3130
  %v3132 = vpack.c.bf16 %v3044, %v3044
  %3133 = vmatprep.subr.bf16.mxu0 0
  %3134 = vmatpush1.bf16.msra.mxu0 %v2121
  %3135 = vmatprep.subr.bf16.mxu0 0
  %3136 = vmatpush1.bf16.msra.mxu0 %v2122
  %3137 = vmatprep.subr.bf16.mxu0 0
  %3138 = vmatpush1.bf16.msra.mxu0 %v2123
  %3139 = vmatprep.subr.bf16.mxu0 0
  %3140 = vmatpush1.bf16.msra.mxu0 %v2124
  %3141 = vmatprep.subr.bf16.mxu0 0
  %3142 = vmatpush1.bf16.msra.mxu0 %v2125
  %3143 = vmatprep.subr.bf16.mxu0 0
  %3144 = vmatpush1.bf16.msra.mxu0 %v2126
  %3145 = vmatprep.subr.bf16.mxu0 0
  %3146 = vmatpush1.bf16.msra.mxu0 %v2127
  %3147 = vmatprep.subr.bf16.mxu0 0
  %3148 = vmatpush1.bf16.msra.mxu0 %v2128
  %3149 = vmatprep.subr.bf16.mxu0 0
  %3150 = vmatpush1.bf16.msra.mxu0 %v2129
  %3151 = vmatprep.subr.bf16.mxu0 0
  %3152 = vmatpush1.bf16.msra.mxu0 %v2130
  %3153 = vmatprep.subr.bf16.mxu0 0
  %3154 = vmatpush1.bf16.msra.mxu0 %v2131
  %3155 = vmatprep.subr.bf16.mxu0 0
  %3156 = vmatpush1.bf16.msra.mxu0 %v2132
  %3157 = vmatprep.subr.bf16.mxu0 0
  %3158 = vmatpush1.bf16.msra.mxu0 %v2133
  %3159 = vmatprep.subr.bf16.mxu0 0
  %3160 = vmatpush1.bf16.msra.mxu0 %v2134
  %3161 = vmatprep.subr.bf16.mxu0 0
  %3162 = vmatpush1.bf16.msra.mxu0 %v2135
  %3163 = vmatprep.subr.bf16.mxu0 0
  %3164 = vmatpush1.bf16.msra.mxu0 %v2136
  %3165 = vmatprep.mubr.bf16.mxu0 %v3132
  %3166 = vmatmul.mubr.bf16.gmra.mrb[0].mxu0 %v3131
  %v3167 = vpop.f32.mrb[0].mxu0
  %v3168 = vadd.f32 %v2055, %v3167
  %v3169 = vpop.f32.mrb[0].mxu0
  %v3170 = vpop.f32.mrb[0].mxu0
  %v3171 = vpop.f32.mrb[0].mxu0
  %3172 = vdwg.mxu0
  %v3173 = vtanh.pop %v3168
  %v3174 = vpack.c.bf16 %v3173, %v3173
  %3175 = vmatprep.subr.bf16.mxu0 0
  %3176 = vmatpush1.bf16.msra.mxu0 %v2233
  %3177 = vmatprep.subr.bf16.mxu0 0
  %3178 = vmatpush1.bf16.msra.mxu0 %v2234
  %3179 = vmatprep.subr.bf16.mxu0 0
  %3180 = vmatpush1.bf16.msra.mxu0 %v2235
  %3181 = vmatprep.subr.bf16.mxu0 0
  %3182 = vmatpush1.bf16.msra.mxu0 %v2236
  %3183 = vmatprep.subr.bf16.mxu0 0
  %3184 = vmatpush1.bf16.msra.mxu0 %v2237
  %3185 = vmatprep.subr.bf16.mxu0 0
  %3186 = vmatpush1.bf16.msra.mxu0 %v2238
  %3187 = vmatprep.subr.bf16.mxu0 0
  %3188 = vmatpush1.bf16.msra.mxu0 %v2239
  %3189 = vmatprep.subr.bf16.mxu0 0
  %3190 = vmatpush1.bf16.msra.mxu0 %v2240
  %3191 = vmatprep.subr.bf16.mxu0 0
  %3192 = vmatpush1.bf16.msra.mxu0 0
  %3193 = vmatprep.subr.bf16.mxu0 0
  %3194 = vmatpush1.bf16.msra.mxu0 0
  %3195 = vmatprep.subr.bf16.mxu0 0
  %3196 = vmatpush1.bf16.msra.mxu0 0
  %3197 = vmatprep.subr.bf16.mxu0 0
  %3198 = vmatpush1.bf16.msra.mxu0 0
  %3199 = vmatprep.subr.bf16.mxu0 0
  %3200 = vmatpush1.bf16.msra.mxu0 0
  %3201 = vmatprep.subr.bf16.mxu0 0
  %3202 = vmatpush1.bf16.msra.mxu0 0
  %3203 = vmatprep.subr.bf16.mxu0 0
  %3204 = vmatpush1.bf16.msra.mxu0 0
  %3205 = vmatprep.subr.bf16.mxu0 0
  %3206 = vmatpush1.bf16.msra.mxu0 0
  %3207 = vmatprep.mubr.bf16.mxu0 0
  %3208 = vmatmul.mubr.bf16.gmra.mrb[0].mxu0 %v3174
  %v3209 = vpop.f32.mrb[0].mxu0
  %v3210 = vadd.f32 %v2199, %v3209
  %v3211 = vpop.f32.mrb[0].mxu0
  %v3212 = vpop.f32.mrb[0].mxu0
  %v3213 = vpop.f32.mrb[0].mxu0
  %3214 = vdwg.mxu0
  %3215 = vmax.xlane.f32.xlu0 %v3210
  %v3216 = vpop.xlane.xlu0 %3215
  %vm3217 = vcmp.ge.f32.partialorder %v3210, %v3216
  %v3218 = vsel %vm3217, %v1531, 128
  %v3219 = vand.u32 %v3218, 65535
  %v3220 = vshra.s32 %v3218, 16
  %v3221 = vcvt.s32.f32 %v3219
  %v3222 = vcvt.s32.f32 %v3220
  %3223 = vmin.xlane.f32.xlu0 %v3222
  %v3224 = vpop.xlane.xlu0 %3223
  %vm3225 = vcmp.eq.f32.partialorder %v3222, %v3224
  %v3226 = vsel %vm3225, %v3221, inf
  %3227 = vmin.xlane.f32.xlu0 %v3226
  %v3228 = vpop.xlane.xlu0 %3227
  %v3229 = vcvt.f32.s32 %v3228
  %v3230 = vcvt.f32.s32 %v3224
  %v3231 = vshll.u32 %v3230, 16
  %v3232 = vadd.s32 %v3231, %v3229
  %vm3233 = vcmp.eq.s32.totalorder %v1531, %v3232
  %v3234 = vsel %vm3233, 1, 0
  %v3235 = vcvt.s32.f32 %v3234
  %v3236 = vpack.c.bf16 %v3235, %v3235
  %v3237 = vsub.f32 %v3210, %v3216
  %v3238 = vmul.f32 %v3237, 1.442695
  %v3239 = vpow.pop %v3238
  %3240 = vadd.xlane.f32.xlu0 %v3239
  %v3241 = vpop.xlane.xlu0 %3240
  %v3242 = vlog2.pop %v3241
  %v3243 = vmul.f32 %v3242, 0.6931472
  %v3244 = vadd.f32 %v3216, %v3243
  %v3245 = vsub.f32 %v3210, %v3244
  %s3246 = scalar_lea.vmem %s12, 24
  %3247 = vst [vmem:[%s3246] sm:$0xff] %v3245
  %3248 = vmatprep.subr.bf16.mxu0 %v1730
  %3249 = vmatpush1.bf16.msra.mxu0 %v1729
  %3250 = vmatprep.subr.bf16.mxu0 %v1734
  %3251 = vmatpush1.bf16.msra.mxu0 %v1733
  %3252 = vmatprep.subr.bf16.mxu0 %v1738
  %3253 = vmatpush1.bf16.msra.mxu0 %v1737
  %3254 = vmatprep.subr.bf16.mxu0 %v1742
  %3255 = vmatpush1.bf16.msra.mxu0 %v1741
  %3256 = vmatprep.subr.bf16.mxu0 %v1746
  %3257 = vmatpush1.bf16.msra.mxu0 %v1745
  %3258 = vmatprep.subr.bf16.mxu0 %v1750
  %3259 = vmatpush1.bf16.msra.mxu0 %v1749
  %3260 = vmatprep.subr.bf16.mxu0 %v1754
  %3261 = vmatpush1.bf16.msra.mxu0 %v1753
  %3262 = vmatprep.subr.bf16.mxu0 %v1758
  %3263 = vmatpush1.bf16.msra.mxu0 %v1757
  %3264 = vmatprep.subr.bf16.mxu0 %v1762
  %3265 = vmatpush1.bf16.msra.mxu0 %v1761
  %3266 = vmatprep.subr.bf16.mxu0 %v1766
  %3267 = vmatpush1.bf16.msra.mxu0 %v1765
  %3268 = vmatprep.subr.bf16.mxu0 %v1770
  %3269 = vmatpush1.bf16.msra.mxu0 %v1769
  %3270 = vmatprep.subr.bf16.mxu0 %v1774
  %3271 = vmatpush1.bf16.msra.mxu0 %v1773
  %3272 = vmatprep.subr.bf16.mxu0 %v1778
  %3273 = vmatpush1.bf16.msra.mxu0 %v1777
  %3274 = vmatprep.subr.bf16.mxu0 %v1782
  %3275 = vmatpush1.bf16.msra.mxu0 %v1781
  %3276 = vmatprep.subr.bf16.mxu0 %v1786
  %3277 = vmatpush1.bf16.msra.mxu0 %v1785
  %3278 = vmatprep.subr.bf16.mxu0 %v1790
  %3279 = vmatpush1.bf16.msra.mxu0 %v1789
  %3280 = vmatprep.mubr.bf16.mxu0 %v3132
  %3281 = vmatmul.mubr.bf16.gmra.mrb[0].mxu0 %v3236
  %v3282 = vpop.f32.mrb[0].mxu0
  %v3283 = vadd.f32 0.0, %v3282
  %v3284 = vpop.f32.mrb[0].mxu0
  %v3285 = vadd.f32 0.0, %v3284
  %v3286 = vpop.f32.mrb[0].mxu0
  %v3287 = vpop.f32.mrb[0].mxu0
  %3288 = vdwg.mxu0
  %3289 = vmatprep.subr.bf16.mxu0 %v1732
  %3290 = vmatpush1.bf16.msra.mxu0 %v1731
  %3291 = vmatprep.subr.bf16.mxu0 %v1736
  %3292 = vmatpush1.bf16.msra.mxu0 %v1735
  %3293 = vmatprep.subr.bf16.mxu0 %v1740
  %3294 = vmatpush1.bf16.msra.mxu0 %v1739
  %3295 = vmatprep.subr.bf16.mxu0 %v1744
  %3296 = vmatpush1.bf16.msra.mxu0 %v1743
  %3297 = vmatprep.subr.bf16.mxu0 %v1748
  %3298 = vmatpush1.bf16.msra.mxu0 %v1747
  %3299 = vmatprep.subr.bf16.mxu0 %v1752
  %3300 = vmatpush1.bf16.msra.mxu0 %v1751
  %3301 = vmatprep.subr.bf16.mxu0 %v1756
  %3302 = vmatpush1.bf16.msra.mxu0 %v1755
  %3303 = vmatprep.subr.bf16.mxu0 %v1760
  %3304 = vmatpush1.bf16.msra.mxu0 %v1759
  %3305 = vmatprep.subr.bf16.mxu0 %v1764
  %3306 = vmatpush1.bf16.msra.mxu0 %v1763
  %3307 = vmatprep.subr.bf16.mxu0 %v1768
  %3308 = vmatpush1.bf16.msra.mxu0 %v1767
  %3309 = vmatprep.subr.bf16.mxu0 %v1772
  %3310 = vmatpush1.bf16.msra.mxu0 %v1771
  %3311 = vmatprep.subr.bf16.mxu0 %v1776
  %3312 = vmatpush1.bf16.msra.mxu0 %v1775
  %3313 = vmatprep.subr.bf16.mxu0 %v1780
  %3314 = vmatpush1.bf16.msra.mxu0 %v1779
  %3315 = vmatprep.subr.bf16.mxu0 %v1784
  %3316 = vmatpush1.bf16.msra.mxu0 %v1783
  %3317 = vmatprep.subr.bf16.mxu0 %v1788
  %3318 = vmatpush1.bf16.msra.mxu0 %v1787
  %3319 = vmatprep.subr.bf16.mxu0 %v1792
  %3320 = vmatpush1.bf16.msra.mxu0 %v1791
  %3321 = vmatprep.mubr.bf16.mxu0 %v3132
  %3322 = vmatmul.mubr.bf16.gmra.mrb[0].mxu0 %v3236
  %v3323 = vpop.f32.mrb[0].mxu0
  %v3324 = vadd.f32 0.0, %v3323
  %v3325 = vpop.f32.mrb[0].mxu0
  %v3326 = vadd.f32 0.0, %v3325
  %v3327 = vpop.f32.mrb[0].mxu0
  %v3328 = vpop.f32.mrb[0].mxu0
  %3329 = vdwg.mxu0
  %v3330 = vxor.u32 %v3283, 2147483648
  %v3331 = vmul.f32 %v3330, 1.442695
  %v3332 = vpow.pop %v3331
  %v3333 = vadd.f32 %v3332, 1.0
  %v3334 = vrcp.pop %v3333
  %v3335 = vmul.f32 1.0, %v3334
  %v3336 = vxor.u32 %v3285, 2147483648
  %v3337 = vmul.f32 %v3336, 1.442695
  %v3338 = vpow.pop %v3337
  %v3339 = vadd.f32 %v3338, 1.0
  %v3340 = vrcp.pop %v3339
  %v3341 = vmul.f32 1.0, %v3340
  %v3342 = vtanh.pop %v3324
  %v3343 = vxor.u32 %v3326, 2147483648
  %v3344 = vmul.f32 %v3343, 1.442695
  %v3345 = vpow.pop %v3344
  %v3346 = vadd.f32 %v3345, 1.0
  %v3347 = vrcp.pop %v3346
  %v3348 = vmul.f32 1.0, %v3347
  %v3349 = vmul.f32 %v3341, %v3042
  %v3350 = vmul.f32 %v3335, %v3342
  %v3351 = vadd.f32 %v3349, %v3350
  %v3352 = vtanh.pop %v3351
  %v3353 = vmul.f32 %v3348, %v3352
  %v3354 = vmul.f32 %v352, %v3353
  %3355 = vadd.xlane.f32.xlu0 %v3354
  %v3356 = vpop.xlane.xlu0 %3355
  %v3357 = vmul.f32 %v475, %v3353
  %3358 = vadd.xlane.f32.xlu0 %v3357
  %v3359 = vpop.xlane.xlu0 %3358
  %v3360 = vmul.f32 %v598, %v3353
  %3361 = vadd.xlane.f32.xlu0 %v3360
  %v3362 = vpop.xlane.xlu0 %3361
  %v3363 = vmul.f32 %v721, %v3353
  %3364 = vadd.xlane.f32.xlu0 %v3363
  %v3365 = vpop.xlane.xlu0 %3364
  %v3366 = vmul.f32 %v844, %v3353
  %3367 = vadd.xlane.f32.xlu0 %v3366
  %v3368 = vpop.xlane.xlu0 %3367
  %v3369 = vmul.f32 %v967, %v3353
  %3370 = vadd.xlane.f32.xlu0 %v3369
  %v3371 = vpop.xlane.xlu0 %3370
  %v3372 = vmul.f32 %v1090, %v3353
  %3373 = vadd.xlane.f32.xlu0 %v3372
  %v3374 = vpop.xlane.xlu0 %3373
  %v3375 = vmul.f32 %v1213, %v3353
  %3376 = vadd.xlane.f32.xlu0 %v3375
  %v3377 = vpop.xlane.xlu0 %3376
  %v3378 = vmax.f32 %v3356, %v3359
  %v3379 = vmax.f32 %v3378, %v3362
  %v3380 = vmax.f32 %v3379, %v3365
  %v3381 = vmax.f32 %v3380, %v3368
  %v3382 = vmax.f32 %v3381, %v3371
  %v3383 = vmax.f32 %v3382, %v3374
  %v3384 = vmax.f32 %v3383, %v3377
  %v3385 = vsub.f32 %v3356, %v3384
  %v3386 = vmul.f32 %v3385, 1.442695
  %v3387 = vpow.pop %v3386
  %v3388 = vsub.f32 %v3359, %v3384
  %v3389 = vmul.f32 %v3388, 1.442695
  %v3390 = vpow.pop %v3389
  %v3391 = vsub.f32 %v3362, %v3384
  %v3392 = vmul.f32 %v3391, 1.442695
  %v3393 = vpow.pop %v3392
  %v3394 = vsub.f32 %v3365, %v3384
  %v3395 = vmul.f32 %v3394, 1.442695
  %v3396 = vpow.pop %v3395
  %v3397 = vsub.f32 %v3368, %v3384
  %v3398 = vmul.f32 %v3397, 1.442695
  %v3399 = vpow.pop %v3398
  %v3400 = vsub.f32 %v3371, %v3384
  %v3401 = vmul.f32 %v3400, 1.442695
  %v3402 = vpow.pop %v3401
  %v3403 = vsub.f32 %v3374, %v3384
  %v3404 = vmul.f32 %v3403, 1.442695
  %v3405 = vpow.pop %v3404
  %v3406 = vsub.f32 %v3377, %v3384
  %v3407 = vmul.f32 %v3406, 1.442695
  %v3408 = vpow.pop %v3407
  %v3409 = vadd.f32 %v3387, %v3390
  %v3410 = vadd.f32 %v3409, %v3393
  %v3411 = vadd.f32 %v3410, %v3396
  %v3412 = vadd.f32 %v3411, %v3399
  %v3413 = vadd.f32 %v3412, %v3402
  %v3414 = vadd.f32 %v3413, %v3405
  %v3415 = vadd.f32 %v3414, %v3408
  %v3416 = vrcp.pop %v3415
  %v3417 = vmul.f32 %v3387, %v3416
  %v3418 = vmul.f32 %v3417, %v352
  %v3419 = vmul.f32 %v3390, %v3416
  %v3420 = vmul.f32 %v3419, %v475
  %v3421 = vadd.f32 %v3418, %v3420
  %v3422 = vmul.f32 %v3393, %v3416
  %v3423 = vmul.f32 %v3422, %v598
  %v3424 = vadd.f32 %v3421, %v3423
  %v3425 = vmul.f32 %v3396, %v3416
  %v3426 = vmul.f32 %v3425, %v721
  %v3427 = vadd.f32 %v3424, %v3426
  %v3428 = vmul.f32 %v3399, %v3416
  %v3429 = vmul.f32 %v3428, %v844
  %v3430 = vadd.f32 %v3427, %v3429
  %v3431 = vmul.f32 %v3402, %v3416
  %v3432 = vmul.f32 %v3431, %v967
  %v3433 = vadd.f32 %v3430, %v3432
  %v3434 = vmul.f32 %v3405, %v3416
  %v3435 = vmul.f32 %v3434, %v1090
  %v3436 = vadd.f32 %v3433, %v3435
  %v3437 = vmul.f32 %v3408, %v3416
  %v3438 = vmul.f32 %v3437, %v1213
  %v3439 = vadd.f32 %v3436, %v3438
  %v3440 = vpack.c.bf16 %v3439, %v3439
  %v3441 = vpack.c.bf16 %v3353, %v3353
  %3442 = vmatprep.subr.bf16.mxu0 0
  %3443 = vmatpush1.bf16.msra.mxu0 %v2121
  %3444 = vmatprep.subr.bf16.mxu0 0
  %3445 = vmatpush1.bf16.msra.mxu0 %v2122
  %3446 = vmatprep.subr.bf16.mxu0 0
  %3447 = vmatpush1.bf16.msra.mxu0 %v2123
  %3448 = vmatprep.subr.bf16.mxu0 0
  %3449 = vmatpush1.bf16.msra.mxu0 %v2124
  %3450 = vmatprep.subr.bf16.mxu0 0
  %3451 = vmatpush1.bf16.msra.mxu0 %v2125
  %3452 = vmatprep.subr.bf16.mxu0 0
  %3453 = vmatpush1.bf16.msra.mxu0 %v2126
  %3454 = vmatprep.subr.bf16.mxu0 0
  %3455 = vmatpush1.bf16.msra.mxu0 %v2127
  %3456 = vmatprep.subr.bf16.mxu0 0
  %3457 = vmatpush1.bf16.msra.mxu0 %v2128
  %3458 = vmatprep.subr.bf16.mxu0 0
  %3459 = vmatpush1.bf16.msra.mxu0 %v2129
  %3460 = vmatprep.subr.bf16.mxu0 0
  %3461 = vmatpush1.bf16.msra.mxu0 %v2130
  %3462 = vmatprep.subr.bf16.mxu0 0
  %3463 = vmatpush1.bf16.msra.mxu0 %v2131
  %3464 = vmatprep.subr.bf16.mxu0 0
  %3465 = vmatpush1.bf16.msra.mxu0 %v2132
  %3466 = vmatprep.subr.bf16.mxu0 0
  %3467 = vmatpush1.bf16.msra.mxu0 %v2133
  %3468 = vmatprep.subr.bf16.mxu0 0
  %3469 = vmatpush1.bf16.msra.mxu0 %v2134
  %3470 = vmatprep.subr.bf16.mxu0 0
  %3471 = vmatpush1.bf16.msra.mxu0 %v2135
  %3472 = vmatprep.subr.bf16.mxu0 0
  %3473 = vmatpush1.bf16.msra.mxu0 %v2136
  %3474 = vmatprep.mubr.bf16.mxu0 %v3441
  %3475 = vmatmul.mubr.bf16.gmra.mrb[0].mxu0 %v3440
  %v3476 = vpop.f32.mrb[0].mxu0
  %v3477 = vadd.f32 %v2055, %v3476
  %v3478 = vpop.f32.mrb[0].mxu0
  %v3479 = vpop.f32.mrb[0].mxu0
  %v3480 = vpop.f32.mrb[0].mxu0
  %3481 = vdwg.mxu0
  %v3482 = vtanh.pop %v3477
  %v3483 = vpack.c.bf16 %v3482, %v3482
  %3484 = vmatprep.subr.bf16.mxu0 0
  %3485 = vmatpush1.bf16.msra.mxu0 %v2233
  %3486 = vmatprep.subr.bf16.mxu0 0
  %3487 = vmatpush1.bf16.msra.mxu0 %v2234
  %3488 = vmatprep.subr.bf16.mxu0 0
  %3489 = vmatpush1.bf16.msra.mxu0 %v2235
  %3490 = vmatprep.subr.bf16.mxu0 0
  %3491 = vmatpush1.bf16.msra.mxu0 %v2236
  %3492 = vmatprep.subr.bf16.mxu0 0
  %3493 = vmatpush1.bf16.msra.mxu0 %v2237
  %3494 = vmatprep.subr.bf16.mxu0 0
  %3495 = vmatpush1.bf16.msra.mxu0 %v2238
  %3496 = vmatprep.subr.bf16.mxu0 0
  %3497 = vmatpush1.bf16.msra.mxu0 %v2239
  %3498 = vmatprep.subr.bf16.mxu0 0
  %3499 = vmatpush1.bf16.msra.mxu0 %v2240
  %3500 = vmatprep.subr.bf16.mxu0 0
  %3501 = vmatpush1.bf16.msra.mxu0 0
  %3502 = vmatprep.subr.bf16.mxu0 0
  %3503 = vmatpush1.bf16.msra.mxu0 0
  %3504 = vmatprep.subr.bf16.mxu0 0
  %3505 = vmatpush1.bf16.msra.mxu0 0
  %3506 = vmatprep.subr.bf16.mxu0 0
  %3507 = vmatpush1.bf16.msra.mxu0 0
  %3508 = vmatprep.subr.bf16.mxu0 0
  %3509 = vmatpush1.bf16.msra.mxu0 0
  %3510 = vmatprep.subr.bf16.mxu0 0
  %3511 = vmatpush1.bf16.msra.mxu0 0
  %3512 = vmatprep.subr.bf16.mxu0 0
  %3513 = vmatpush1.bf16.msra.mxu0 0
  %3514 = vmatprep.subr.bf16.mxu0 0
  %3515 = vmatpush1.bf16.msra.mxu0 0
  %3516 = vmatprep.mubr.bf16.mxu0 0
  %3517 = vmatmul.mubr.bf16.gmra.mrb[0].mxu0 %v3483
  %v3518 = vpop.f32.mrb[0].mxu0
  %v3519 = vadd.f32 %v2199, %v3518
  %v3520 = vpop.f32.mrb[0].mxu0
  %v3521 = vpop.f32.mrb[0].mxu0
  %v3522 = vpop.f32.mrb[0].mxu0
  %3523 = vdwg.mxu0
  %3524 = vmax.xlane.f32.xlu0 %v3519
  %v3525 = vpop.xlane.xlu0 %3524
  %vm3526 = vcmp.ge.f32.partialorder %v3519, %v3525
  %v3527 = vsel %vm3526, %v1531, 128
  %v3528 = vand.u32 %v3527, 65535
  %v3529 = vshra.s32 %v3527, 16
  %v3530 = vcvt.s32.f32 %v3528
  %v3531 = vcvt.s32.f32 %v3529
  %3532 = vmin.xlane.f32.xlu0 %v3531
  %v3533 = vpop.xlane.xlu0 %3532
  %vm3534 = vcmp.eq.f32.partialorder %v3531, %v3533
  %v3535 = vsel %vm3534, %v3530, inf
  %3536 = vmin.xlane.f32.xlu0 %v3535
  %v3537 = vpop.xlane.xlu0 %3536
  %v3538 = vcvt.f32.s32 %v3537
  %v3539 = vcvt.f32.s32 %v3533
  %v3540 = vshll.u32 %v3539, 16
  %v3541 = vadd.s32 %v3540, %v3538
  %vm3542 = vcmp.eq.s32.totalorder %v1531, %v3541
  %v3543 = vsel %vm3542, 1, 0
  %v3544 = vcvt.s32.f32 %v3543
  %v3545 = vpack.c.bf16 %v3544, %v3544
  %v3546 = vsub.f32 %v3519, %v3525
  %v3547 = vmul.f32 %v3546, 1.442695
  %v3548 = vpow.pop %v3547
  %3549 = vadd.xlane.f32.xlu0 %v3548
  %v3550 = vpop.xlane.xlu0 %3549
  %v3551 = vlog2.pop %v3550
  %v3552 = vmul.f32 %v3551, 0.6931472
  %v3553 = vadd.f32 %v3525, %v3552
  %v3554 = vsub.f32 %v3519, %v3553
  %s3555 = scalar_lea.vmem %s12, 32
  %3556 = vst [vmem:[%s3555] sm:$0xff] %v3554
  %3557 = vmatprep.subr.bf16.mxu0 %v1730
  %3558 = vmatpush1.bf16.msra.mxu0 %v1729
  %3559 = vmatprep.subr.bf16.mxu0 %v1734
  %3560 = vmatpush1.bf16.msra.mxu0 %v1733
  %3561 = vmatprep.subr.bf16.mxu0 %v1738
  %3562 = vmatpush1.bf16.msra.mxu0 %v1737
  %3563 = vmatprep.subr.bf16.mxu0 %v1742
  %3564 = vmatpush1.bf16.msra.mxu0 %v1741
  %3565 = vmatprep.subr.bf16.mxu0 %v1746
  %3566 = vmatpush1.bf16.msra.mxu0 %v1745
  %3567 = vmatprep.subr.bf16.mxu0 %v1750
  %3568 = vmatpush1.bf16.msra.mxu0 %v1749
  %3569 = vmatprep.subr.bf16.mxu0 %v1754
  %3570 = vmatpush1.bf16.msra.mxu0 %v1753
  %3571 = vmatprep.subr.bf16.mxu0 %v1758
  %3572 = vmatpush1.bf16.msra.mxu0 %v1757
  %3573 = vmatprep.subr.bf16.mxu0 %v1762
  %3574 = vmatpush1.bf16.msra.mxu0 %v1761
  %3575 = vmatprep.subr.bf16.mxu0 %v1766
  %3576 = vmatpush1.bf16.msra.mxu0 %v1765
  %3577 = vmatprep.subr.bf16.mxu0 %v1770
  %3578 = vmatpush1.bf16.msra.mxu0 %v1769
  %3579 = vmatprep.subr.bf16.mxu0 %v1774
  %3580 = vmatpush1.bf16.msra.mxu0 %v1773
  %3581 = vmatprep.subr.bf16.mxu0 %v1778
  %3582 = vmatpush1.bf16.msra.mxu0 %v1777
  %3583 = vmatprep.subr.bf16.mxu0 %v1782
  %3584 = vmatpush1.bf16.msra.mxu0 %v1781
  %3585 = vmatprep.subr.bf16.mxu0 %v1786
  %3586 = vmatpush1.bf16.msra.mxu0 %v1785
  %3587 = vmatprep.subr.bf16.mxu0 %v1790
  %3588 = vmatpush1.bf16.msra.mxu0 %v1789
  %3589 = vmatprep.mubr.bf16.mxu0 %v3441
  %3590 = vmatmul.mubr.bf16.gmra.mrb[0].mxu0 %v3545
  %v3591 = vpop.f32.mrb[0].mxu0
  %v3592 = vadd.f32 0.0, %v3591
  %v3593 = vpop.f32.mrb[0].mxu0
  %v3594 = vadd.f32 0.0, %v3593
  %v3595 = vpop.f32.mrb[0].mxu0
  %v3596 = vpop.f32.mrb[0].mxu0
  %3597 = vdwg.mxu0
  %3598 = vmatprep.subr.bf16.mxu0 %v1732
  %3599 = vmatpush1.bf16.msra.mxu0 %v1731
  %3600 = vmatprep.subr.bf16.mxu0 %v1736
  %3601 = vmatpush1.bf16.msra.mxu0 %v1735
  %3602 = vmatprep.subr.bf16.mxu0 %v1740
  %3603 = vmatpush1.bf16.msra.mxu0 %v1739
  %3604 = vmatprep.subr.bf16.mxu0 %v1744
  %3605 = vmatpush1.bf16.msra.mxu0 %v1743
  %3606 = vmatprep.subr.bf16.mxu0 %v1748
  %3607 = vmatpush1.bf16.msra.mxu0 %v1747
  %3608 = vmatprep.subr.bf16.mxu0 %v1752
  %3609 = vmatpush1.bf16.msra.mxu0 %v1751
  %3610 = vmatprep.subr.bf16.mxu0 %v1756
  %3611 = vmatpush1.bf16.msra.mxu0 %v1755
  %3612 = vmatprep.subr.bf16.mxu0 %v1760
  %3613 = vmatpush1.bf16.msra.mxu0 %v1759
  %3614 = vmatprep.subr.bf16.mxu0 %v1764
  %3615 = vmatpush1.bf16.msra.mxu0 %v1763
  %3616 = vmatprep.subr.bf16.mxu0 %v1768
  %3617 = vmatpush1.bf16.msra.mxu0 %v1767
  %3618 = vmatprep.subr.bf16.mxu0 %v1772
  %3619 = vmatpush1.bf16.msra.mxu0 %v1771
  %3620 = vmatprep.subr.bf16.mxu0 %v1776
  %3621 = vmatpush1.bf16.msra.mxu0 %v1775
  %3622 = vmatprep.subr.bf16.mxu0 %v1780
  %3623 = vmatpush1.bf16.msra.mxu0 %v1779
  %3624 = vmatprep.subr.bf16.mxu0 %v1784
  %3625 = vmatpush1.bf16.msra.mxu0 %v1783
  %3626 = vmatprep.subr.bf16.mxu0 %v1788
  %3627 = vmatpush1.bf16.msra.mxu0 %v1787
  %3628 = vmatprep.subr.bf16.mxu0 %v1792
  %3629 = vmatpush1.bf16.msra.mxu0 %v1791
  %3630 = vmatprep.mubr.bf16.mxu0 %v3441
  %3631 = vmatmul.mubr.bf16.gmra.mrb[0].mxu0 %v3545
  %v3632 = vpop.f32.mrb[0].mxu0
  %v3633 = vadd.f32 0.0, %v3632
  %v3634 = vpop.f32.mrb[0].mxu0
  %v3635 = vadd.f32 0.0, %v3634
  %v3636 = vpop.f32.mrb[0].mxu0
  %v3637 = vpop.f32.mrb[0].mxu0
  %3638 = vdwg.mxu0
  %v3639 = vxor.u32 %v3592, 2147483648
  %v3640 = vmul.f32 %v3639, 1.442695
  %v3641 = vpow.pop %v3640
  %v3642 = vadd.f32 %v3641, 1.0
  %v3643 = vrcp.pop %v3642
  %v3644 = vmul.f32 1.0, %v3643
  %v3645 = vxor.u32 %v3594, 2147483648
  %v3646 = vmul.f32 %v3645, 1.442695
  %v3647 = vpow.pop %v3646
  %v3648 = vadd.f32 %v3647, 1.0
  %v3649 = vrcp.pop %v3648
  %v3650 = vmul.f32 1.0, %v3649
  %v3651 = vtanh.pop %v3633
  %v3652 = vxor.u32 %v3635, 2147483648
  %v3653 = vmul.f32 %v3652, 1.442695
  %v3654 = vpow.pop %v3653
  %v3655 = vadd.f32 %v3654, 1.0
  %v3656 = vrcp.pop %v3655
  %v3657 = vmul.f32 1.0, %v3656
  %v3658 = vmul.f32 %v3650, %v3351
  %v3659 = vmul.f32 %v3644, %v3651
  %v3660 = vadd.f32 %v3658, %v3659
  %v3661 = vtanh.pop %v3660
  %v3662 = vmul.f32 %v3657, %v3661
  %v3663 = vmul.f32 %v352, %v3662
  %3664 = vadd.xlane.f32.xlu0 %v3663
  %v3665 = vpop.xlane.xlu0 %3664
  %v3666 = vmul.f32 %v475, %v3662
  %3667 = vadd.xlane.f32.xlu0 %v3666
  %v3668 = vpop.xlane.xlu0 %3667
  %v3669 = vmul.f32 %v598, %v3662
  %3670 = vadd.xlane.f32.xlu0 %v3669
  %v3671 = vpop.xlane.xlu0 %3670
  %v3672 = vmul.f32 %v721, %v3662
  %3673 = vadd.xlane.f32.xlu0 %v3672
  %v3674 = vpop.xlane.xlu0 %3673
  %v3675 = vmul.f32 %v844, %v3662
  %3676 = vadd.xlane.f32.xlu0 %v3675
  %v3677 = vpop.xlane.xlu0 %3676
  %v3678 = vmul.f32 %v967, %v3662
  %3679 = vadd.xlane.f32.xlu0 %v3678
  %v3680 = vpop.xlane.xlu0 %3679
  %v3681 = vmul.f32 %v1090, %v3662
  %3682 = vadd.xlane.f32.xlu0 %v3681
  %v3683 = vpop.xlane.xlu0 %3682
  %v3684 = vmul.f32 %v1213, %v3662
  %3685 = vadd.xlane.f32.xlu0 %v3684
  %v3686 = vpop.xlane.xlu0 %3685
  %v3687 = vmax.f32 %v3665, %v3668
  %v3688 = vmax.f32 %v3687, %v3671
  %v3689 = vmax.f32 %v3688, %v3674
  %v3690 = vmax.f32 %v3689, %v3677
  %v3691 = vmax.f32 %v3690, %v3680
  %v3692 = vmax.f32 %v3691, %v3683
  %v3693 = vmax.f32 %v3692, %v3686
  %v3694 = vsub.f32 %v3665, %v3693
  %v3695 = vmul.f32 %v3694, 1.442695
  %v3696 = vpow.pop %v3695
  %v3697 = vsub.f32 %v3668, %v3693
  %v3698 = vmul.f32 %v3697, 1.442695
  %v3699 = vpow.pop %v3698
  %v3700 = vsub.f32 %v3671, %v3693
  %v3701 = vmul.f32 %v3700, 1.442695
  %v3702 = vpow.pop %v3701
  %v3703 = vsub.f32 %v3674, %v3693
  %v3704 = vmul.f32 %v3703, 1.442695
  %v3705 = vpow.pop %v3704
  %v3706 = vsub.f32 %v3677, %v3693
  %v3707 = vmul.f32 %v3706, 1.442695
  %v3708 = vpow.pop %v3707
  %v3709 = vsub.f32 %v3680, %v3693
  %v3710 = vmul.f32 %v3709, 1.442695
  %v3711 = vpow.pop %v3710
  %v3712 = vsub.f32 %v3683, %v3693
  %v3713 = vmul.f32 %v3712, 1.442695
  %v3714 = vpow.pop %v3713
  %v3715 = vsub.f32 %v3686, %v3693
  %v3716 = vmul.f32 %v3715, 1.442695
  %v3717 = vpow.pop %v3716
  %v3718 = vadd.f32 %v3696, %v3699
  %v3719 = vadd.f32 %v3718, %v3702
  %v3720 = vadd.f32 %v3719, %v3705
  %v3721 = vadd.f32 %v3720, %v3708
  %v3722 = vadd.f32 %v3721, %v3711
  %v3723 = vadd.f32 %v3722, %v3714
  %v3724 = vadd.f32 %v3723, %v3717
  %v3725 = vrcp.pop %v3724
  %v3726 = vmul.f32 %v3696, %v3725
  %v3727 = vmul.f32 %v3726, %v352
  %v3728 = vmul.f32 %v3699, %v3725
  %v3729 = vmul.f32 %v3728, %v475
  %v3730 = vadd.f32 %v3727, %v3729
  %v3731 = vmul.f32 %v3702, %v3725
  %v3732 = vmul.f32 %v3731, %v598
  %v3733 = vadd.f32 %v3730, %v3732
  %v3734 = vmul.f32 %v3705, %v3725
  %v3735 = vmul.f32 %v3734, %v721
  %v3736 = vadd.f32 %v3733, %v3735
  %v3737 = vmul.f32 %v3708, %v3725
  %v3738 = vmul.f32 %v3737, %v844
  %v3739 = vadd.f32 %v3736, %v3738
  %v3740 = vmul.f32 %v3711, %v3725
  %v3741 = vmul.f32 %v3740, %v967
  %v3742 = vadd.f32 %v3739, %v3741
  %v3743 = vmul.f32 %v3714, %v3725
  %v3744 = vmul.f32 %v3743, %v1090
  %v3745 = vadd.f32 %v3742, %v3744
  %v3746 = vmul.f32 %v3717, %v3725
  %v3747 = vmul.f32 %v3746, %v1213
  %v3748 = vadd.f32 %v3745, %v3747
  %v3749 = vpack.c.bf16 %v3748, %v3748
  %v3750 = vpack.c.bf16 %v3662, %v3662
  %3751 = vmatprep.subr.bf16.mxu0 0
  %3752 = vmatpush1.bf16.msra.mxu0 %v2121
  %3753 = vmatprep.subr.bf16.mxu0 0
  %3754 = vmatpush1.bf16.msra.mxu0 %v2122
  %3755 = vmatprep.subr.bf16.mxu0 0
  %3756 = vmatpush1.bf16.msra.mxu0 %v2123
  %3757 = vmatprep.subr.bf16.mxu0 0
  %3758 = vmatpush1.bf16.msra.mxu0 %v2124
  %3759 = vmatprep.subr.bf16.mxu0 0
  %3760 = vmatpush1.bf16.msra.mxu0 %v2125
  %3761 = vmatprep.subr.bf16.mxu0 0
  %3762 = vmatpush1.bf16.msra.mxu0 %v2126
  %3763 = vmatprep.subr.bf16.mxu0 0
  %3764 = vmatpush1.bf16.msra.mxu0 %v2127
  %3765 = vmatprep.subr.bf16.mxu0 0
  %3766 = vmatpush1.bf16.msra.mxu0 %v2128
  %3767 = vmatprep.subr.bf16.mxu0 0
  %3768 = vmatpush1.bf16.msra.mxu0 %v2129
  %3769 = vmatprep.subr.bf16.mxu0 0
  %3770 = vmatpush1.bf16.msra.mxu0 %v2130
  %3771 = vmatprep.subr.bf16.mxu0 0
  %3772 = vmatpush1.bf16.msra.mxu0 %v2131
  %3773 = vmatprep.subr.bf16.mxu0 0
  %3774 = vmatpush1.bf16.msra.mxu0 %v2132
  %3775 = vmatprep.subr.bf16.mxu0 0
  %3776 = vmatpush1.bf16.msra.mxu0 %v2133
  %3777 = vmatprep.subr.bf16.mxu0 0
  %3778 = vmatpush1.bf16.msra.mxu0 %v2134
  %3779 = vmatprep.subr.bf16.mxu0 0
  %3780 = vmatpush1.bf16.msra.mxu0 %v2135
  %3781 = vmatprep.subr.bf16.mxu0 0
  %3782 = vmatpush1.bf16.msra.mxu0 %v2136
  %3783 = vmatprep.mubr.bf16.mxu0 %v3750
  %3784 = vmatmul.mubr.bf16.gmra.mrb[0].mxu0 %v3749
  %v3785 = vpop.f32.mrb[0].mxu0
  %v3786 = vadd.f32 %v2055, %v3785
  %v3787 = vpop.f32.mrb[0].mxu0
  %v3788 = vpop.f32.mrb[0].mxu0
  %v3789 = vpop.f32.mrb[0].mxu0
  %3790 = vdwg.mxu0
  %v3791 = vtanh.pop %v3786
  %v3792 = vpack.c.bf16 %v3791, %v3791
  %3793 = vmatprep.subr.bf16.mxu0 0
  %3794 = vmatpush1.bf16.msra.mxu0 %v2233
  %3795 = vmatprep.subr.bf16.mxu0 0
  %3796 = vmatpush1.bf16.msra.mxu0 %v2234
  %3797 = vmatprep.subr.bf16.mxu0 0
  %3798 = vmatpush1.bf16.msra.mxu0 %v2235
  %3799 = vmatprep.subr.bf16.mxu0 0
  %3800 = vmatpush1.bf16.msra.mxu0 %v2236
  %3801 = vmatprep.subr.bf16.mxu0 0
  %3802 = vmatpush1.bf16.msra.mxu0 %v2237
  %3803 = vmatprep.subr.bf16.mxu0 0
  %3804 = vmatpush1.bf16.msra.mxu0 %v2238
  %3805 = vmatprep.subr.bf16.mxu0 0
  %3806 = vmatpush1.bf16.msra.mxu0 %v2239
  %3807 = vmatprep.subr.bf16.mxu0 0
  %3808 = vmatpush1.bf16.msra.mxu0 %v2240
  %3809 = vmatprep.subr.bf16.mxu0 0
  %3810 = vmatpush1.bf16.msra.mxu0 0
  %3811 = vmatprep.subr.bf16.mxu0 0
  %3812 = vmatpush1.bf16.msra.mxu0 0
  %3813 = vmatprep.subr.bf16.mxu0 0
  %3814 = vmatpush1.bf16.msra.mxu0 0
  %3815 = vmatprep.subr.bf16.mxu0 0
  %3816 = vmatpush1.bf16.msra.mxu0 0
  %3817 = vmatprep.subr.bf16.mxu0 0
  %3818 = vmatpush1.bf16.msra.mxu0 0
  %3819 = vmatprep.subr.bf16.mxu0 0
  %3820 = vmatpush1.bf16.msra.mxu0 0
  %3821 = vmatprep.subr.bf16.mxu0 0
  %3822 = vmatpush1.bf16.msra.mxu0 0
  %3823 = vmatprep.subr.bf16.mxu0 0
  %3824 = vmatpush1.bf16.msra.mxu0 0
  %3825 = vmatprep.mubr.bf16.mxu0 0
  %3826 = vmatmul.mubr.bf16.gmra.mrb[0].mxu0 %v3792
  %v3827 = vpop.f32.mrb[0].mxu0
  %v3828 = vadd.f32 %v2199, %v3827
  %v3829 = vpop.f32.mrb[0].mxu0
  %v3830 = vpop.f32.mrb[0].mxu0
  %v3831 = vpop.f32.mrb[0].mxu0
  %3832 = vdwg.mxu0
  %3833 = vmax.xlane.f32.xlu0 %v3828
  %v3834 = vpop.xlane.xlu0 %3833
  %vm3835 = vcmp.ge.f32.partialorder %v3828, %v3834
  %v3836 = vsel %vm3835, %v1531, 128
  %v3837 = vand.u32 %v3836, 65535
  %v3838 = vshra.s32 %v3836, 16
  %v3839 = vcvt.s32.f32 %v3837
  %v3840 = vcvt.s32.f32 %v3838
  %3841 = vmin.xlane.f32.xlu0 %v3840
  %v3842 = vpop.xlane.xlu0 %3841
  %vm3843 = vcmp.eq.f32.partialorder %v3840, %v3842
  %v3844 = vsel %vm3843, %v3839, inf
  %3845 = vmin.xlane.f32.xlu0 %v3844
  %v3846 = vpop.xlane.xlu0 %3845
  %v3847 = vcvt.f32.s32 %v3846
  %v3848 = vcvt.f32.s32 %v3842
  %v3849 = vshll.u32 %v3848, 16
  %v3850 = vadd.s32 %v3849, %v3847
  %vm3851 = vcmp.eq.s32.totalorder %v1531, %v3850
  %v3852 = vsel %vm3851, 1, 0
  %v3853 = vcvt.s32.f32 %v3852
  %v3854 = vpack.c.bf16 %v3853, %v3853
  %v3855 = vsub.f32 %v3828, %v3834
  %v3856 = vmul.f32 %v3855, 1.442695
  %v3857 = vpow.pop %v3856
  %3858 = vadd.xlane.f32.xlu0 %v3857
  %v3859 = vpop.xlane.xlu0 %3858
  %v3860 = vlog2.pop %v3859
  %v3861 = vmul.f32 %v3860, 0.6931472
  %v3862 = vadd.f32 %v3834, %v3861
  %v3863 = vsub.f32 %v3828, %v3862
  %s3864 = scalar_lea.vmem %s12, 40
  %3865 = vst [vmem:[%s3864] sm:$0xff] %v3863
  %3866 = vmatprep.subr.bf16.mxu0 %v1730
  %3867 = vmatpush1.bf16.msra.mxu0 %v1729
  %3868 = vmatprep.subr.bf16.mxu0 %v1734
  %3869 = vmatpush1.bf16.msra.mxu0 %v1733
  %3870 = vmatprep.subr.bf16.mxu0 %v1738
  %3871 = vmatpush1.bf16.msra.mxu0 %v1737
  %3872 = vmatprep.subr.bf16.mxu0 %v1742
  %3873 = vmatpush1.bf16.msra.mxu0 %v1741
  %3874 = vmatprep.subr.bf16.mxu0 %v1746
  %3875 = vmatpush1.bf16.msra.mxu0 %v1745
  %3876 = vmatprep.subr.bf16.mxu0 %v1750
  %3877 = vmatpush1.bf16.msra.mxu0 %v1749
  %3878 = vmatprep.subr.bf16.mxu0 %v1754
  %3879 = vmatpush1.bf16.msra.mxu0 %v1753
  %3880 = vmatprep.subr.bf16.mxu0 %v1758
  %3881 = vmatpush1.bf16.msra.mxu0 %v1757
  %3882 = vmatprep.subr.bf16.mxu0 %v1762
  %3883 = vmatpush1.bf16.msra.mxu0 %v1761
  %3884 = vmatprep.subr.bf16.mxu0 %v1766
  %3885 = vmatpush1.bf16.msra.mxu0 %v1765
  %3886 = vmatprep.subr.bf16.mxu0 %v1770
  %3887 = vmatpush1.bf16.msra.mxu0 %v1769
  %3888 = vmatprep.subr.bf16.mxu0 %v1774
  %3889 = vmatpush1.bf16.msra.mxu0 %v1773
  %3890 = vmatprep.subr.bf16.mxu0 %v1778
  %3891 = vmatpush1.bf16.msra.mxu0 %v1777
  %3892 = vmatprep.subr.bf16.mxu0 %v1782
  %3893 = vmatpush1.bf16.msra.mxu0 %v1781
  %3894 = vmatprep.subr.bf16.mxu0 %v1786
  %3895 = vmatpush1.bf16.msra.mxu0 %v1785
  %3896 = vmatprep.subr.bf16.mxu0 %v1790
  %3897 = vmatpush1.bf16.msra.mxu0 %v1789
  %3898 = vmatprep.mubr.bf16.mxu0 %v3750
  %3899 = vmatmul.mubr.bf16.gmra.mrb[0].mxu0 %v3854
  %v3900 = vpop.f32.mrb[0].mxu0
  %v3901 = vadd.f32 0.0, %v3900
  %v3902 = vpop.f32.mrb[0].mxu0
  %v3903 = vadd.f32 0.0, %v3902
  %v3904 = vpop.f32.mrb[0].mxu0
  %v3905 = vpop.f32.mrb[0].mxu0
  %3906 = vdwg.mxu0
  %3907 = vmatprep.subr.bf16.mxu0 %v1732
  %3908 = vmatpush1.bf16.msra.mxu0 %v1731
  %3909 = vmatprep.subr.bf16.mxu0 %v1736
  %3910 = vmatpush1.bf16.msra.mxu0 %v1735
  %3911 = vmatprep.subr.bf16.mxu0 %v1740
  %3912 = vmatpush1.bf16.msra.mxu0 %v1739
  %3913 = vmatprep.subr.bf16.mxu0 %v1744
  %3914 = vmatpush1.bf16.msra.mxu0 %v1743
  %3915 = vmatprep.subr.bf16.mxu0 %v1748
  %3916 = vmatpush1.bf16.msra.mxu0 %v1747
  %3917 = vmatprep.subr.bf16.mxu0 %v1752
  %3918 = vmatpush1.bf16.msra.mxu0 %v1751
  %3919 = vmatprep.subr.bf16.mxu0 %v1756
  %3920 = vmatpush1.bf16.msra.mxu0 %v1755
  %3921 = vmatprep.subr.bf16.mxu0 %v1760
  %3922 = vmatpush1.bf16.msra.mxu0 %v1759
  %3923 = vmatprep.subr.bf16.mxu0 %v1764
  %3924 = vmatpush1.bf16.msra.mxu0 %v1763
  %3925 = vmatprep.subr.bf16.mxu0 %v1768
  %3926 = vmatpush1.bf16.msra.mxu0 %v1767
  %3927 = vmatprep.subr.bf16.mxu0 %v1772
  %3928 = vmatpush1.bf16.msra.mxu0 %v1771
  %3929 = vmatprep.subr.bf16.mxu0 %v1776
  %3930 = vmatpush1.bf16.msra.mxu0 %v1775
  %3931 = vmatprep.subr.bf16.mxu0 %v1780
  %3932 = vmatpush1.bf16.msra.mxu0 %v1779
  %3933 = vmatprep.subr.bf16.mxu0 %v1784
  %3934 = vmatpush1.bf16.msra.mxu0 %v1783
  %3935 = vmatprep.subr.bf16.mxu0 %v1788
  %3936 = vmatpush1.bf16.msra.mxu0 %v1787
  %3937 = vmatprep.subr.bf16.mxu0 %v1792
  %3938 = vmatpush1.bf16.msra.mxu0 %v1791
  %3939 = vmatprep.mubr.bf16.mxu0 %v3750
  %3940 = vmatmul.mubr.bf16.gmra.mrb[0].mxu0 %v3854
  %v3941 = vpop.f32.mrb[0].mxu0
  %v3942 = vadd.f32 0.0, %v3941
  %v3943 = vpop.f32.mrb[0].mxu0
  %v3944 = vadd.f32 0.0, %v3943
  %v3945 = vpop.f32.mrb[0].mxu0
  %v3946 = vpop.f32.mrb[0].mxu0
  %3947 = vdwg.mxu0
  %v3948 = vxor.u32 %v3901, 2147483648
  %v3949 = vmul.f32 %v3948, 1.442695
  %v3950 = vpow.pop %v3949
  %v3951 = vadd.f32 %v3950, 1.0
  %v3952 = vrcp.pop %v3951
  %v3953 = vmul.f32 1.0, %v3952
  %v3954 = vxor.u32 %v3903, 2147483648
  %v3955 = vmul.f32 %v3954, 1.442695
  %v3956 = vpow.pop %v3955
  %v3957 = vadd.f32 %v3956, 1.0
  %v3958 = vrcp.pop %v3957
  %v3959 = vmul.f32 1.0, %v3958
  %v3960 = vtanh.pop %v3942
  %v3961 = vxor.u32 %v3944, 2147483648
  %v3962 = vmul.f32 %v3961, 1.442695
  %v3963 = vpow.pop %v3962
  %v3964 = vadd.f32 %v3963, 1.0
  %v3965 = vrcp.pop %v3964
  %v3966 = vmul.f32 1.0, %v3965
  %v3967 = vmul.f32 %v3959, %v3660
  %v3968 = vmul.f32 %v3953, %v3960
  %v3969 = vadd.f32 %v3967, %v3968
  %v3970 = vtanh.pop %v3969
  %v3971 = vmul.f32 %v3966, %v3970
  %v3972 = vmul.f32 %v352, %v3971
  %3973 = vadd.xlane.f32.xlu0 %v3972
  %v3974 = vpop.xlane.xlu0 %3973
  %v3975 = vmul.f32 %v475, %v3971
  %3976 = vadd.xlane.f32.xlu0 %v3975
  %v3977 = vpop.xlane.xlu0 %3976
  %v3978 = vmul.f32 %v598, %v3971
  %3979 = vadd.xlane.f32.xlu0 %v3978
  %v3980 = vpop.xlane.xlu0 %3979
  %v3981 = vmul.f32 %v721, %v3971
  %3982 = vadd.xlane.f32.xlu0 %v3981
  %v3983 = vpop.xlane.xlu0 %3982
  %v3984 = vmul.f32 %v844, %v3971
  %3985 = vadd.xlane.f32.xlu0 %v3984
  %v3986 = vpop.xlane.xlu0 %3985
  %v3987 = vmul.f32 %v967, %v3971
  %3988 = vadd.xlane.f32.xlu0 %v3987
  %v3989 = vpop.xlane.xlu0 %3988
  %v3990 = vmul.f32 %v1090, %v3971
  %3991 = vadd.xlane.f32.xlu0 %v3990
  %v3992 = vpop.xlane.xlu0 %3991
  %v3993 = vmul.f32 %v1213, %v3971
  %3994 = vadd.xlane.f32.xlu0 %v3993
  %v3995 = vpop.xlane.xlu0 %3994
  %v3996 = vmax.f32 %v3974, %v3977
  %v3997 = vmax.f32 %v3996, %v3980
  %v3998 = vmax.f32 %v3997, %v3983
  %v3999 = vmax.f32 %v3998, %v3986
  %v4000 = vmax.f32 %v3999, %v3989
  %v4001 = vmax.f32 %v4000, %v3992
  %v4002 = vmax.f32 %v4001, %v3995
  %v4003 = vsub.f32 %v3974, %v4002
  %v4004 = vmul.f32 %v4003, 1.442695
  %v4005 = vpow.pop %v4004
  %v4006 = vsub.f32 %v3977, %v4002
  %v4007 = vmul.f32 %v4006, 1.442695
  %v4008 = vpow.pop %v4007
  %v4009 = vsub.f32 %v3980, %v4002
  %v4010 = vmul.f32 %v4009, 1.442695
  %v4011 = vpow.pop %v4010
  %v4012 = vsub.f32 %v3983, %v4002
  %v4013 = vmul.f32 %v4012, 1.442695
  %v4014 = vpow.pop %v4013
  %v4015 = vsub.f32 %v3986, %v4002
  %v4016 = vmul.f32 %v4015, 1.442695
  %v4017 = vpow.pop %v4016
  %v4018 = vsub.f32 %v3989, %v4002
  %v4019 = vmul.f32 %v4018, 1.442695
  %v4020 = vpow.pop %v4019
  %v4021 = vsub.f32 %v3992, %v4002
  %v4022 = vmul.f32 %v4021, 1.442695
  %v4023 = vpow.pop %v4022
  %v4024 = vsub.f32 %v3995, %v4002
  %v4025 = vmul.f32 %v4024, 1.442695
  %v4026 = vpow.pop %v4025
  %v4027 = vadd.f32 %v4005, %v4008
  %v4028 = vadd.f32 %v4027, %v4011
  %v4029 = vadd.f32 %v4028, %v4014
  %v4030 = vadd.f32 %v4029, %v4017
  %v4031 = vadd.f32 %v4030, %v4020
  %v4032 = vadd.f32 %v4031, %v4023
  %v4033 = vadd.f32 %v4032, %v4026
  %v4034 = vrcp.pop %v4033
  %v4035 = vmul.f32 %v4005, %v4034
  %v4036 = vmul.f32 %v4035, %v352
  %v4037 = vmul.f32 %v4008, %v4034
  %v4038 = vmul.f32 %v4037, %v475
  %v4039 = vadd.f32 %v4036, %v4038
  %v4040 = vmul.f32 %v4011, %v4034
  %v4041 = vmul.f32 %v4040, %v598
  %v4042 = vadd.f32 %v4039, %v4041
  %v4043 = vmul.f32 %v4014, %v4034
  %v4044 = vmul.f32 %v4043, %v721
  %v4045 = vadd.f32 %v4042, %v4044
  %v4046 = vmul.f32 %v4017, %v4034
  %v4047 = vmul.f32 %v4046, %v844
  %v4048 = vadd.f32 %v4045, %v4047
  %v4049 = vmul.f32 %v4020, %v4034
  %v4050 = vmul.f32 %v4049, %v967
  %v4051 = vadd.f32 %v4048, %v4050
  %v4052 = vmul.f32 %v4023, %v4034
  %v4053 = vmul.f32 %v4052, %v1090
  %v4054 = vadd.f32 %v4051, %v4053
  %v4055 = vmul.f32 %v4026, %v4034
  %v4056 = vmul.f32 %v4055, %v1213
  %v4057 = vadd.f32 %v4054, %v4056
  %v4058 = vpack.c.bf16 %v4057, %v4057
  %v4059 = vpack.c.bf16 %v3971, %v3971
  %4060 = vmatprep.subr.bf16.mxu0 0
  %4061 = vmatpush1.bf16.msra.mxu0 %v2121
  %4062 = vmatprep.subr.bf16.mxu0 0
  %4063 = vmatpush1.bf16.msra.mxu0 %v2122
  %4064 = vmatprep.subr.bf16.mxu0 0
  %4065 = vmatpush1.bf16.msra.mxu0 %v2123
  %4066 = vmatprep.subr.bf16.mxu0 0
  %4067 = vmatpush1.bf16.msra.mxu0 %v2124
  %4068 = vmatprep.subr.bf16.mxu0 0
  %4069 = vmatpush1.bf16.msra.mxu0 %v2125
  %4070 = vmatprep.subr.bf16.mxu0 0
  %4071 = vmatpush1.bf16.msra.mxu0 %v2126
  %4072 = vmatprep.subr.bf16.mxu0 0
  %4073 = vmatpush1.bf16.msra.mxu0 %v2127
  %4074 = vmatprep.subr.bf16.mxu0 0
  %4075 = vmatpush1.bf16.msra.mxu0 %v2128
  %4076 = vmatprep.subr.bf16.mxu0 0
  %4077 = vmatpush1.bf16.msra.mxu0 %v2129
  %4078 = vmatprep.subr.bf16.mxu0 0
  %4079 = vmatpush1.bf16.msra.mxu0 %v2130
  %4080 = vmatprep.subr.bf16.mxu0 0
  %4081 = vmatpush1.bf16.msra.mxu0 %v2131
  %4082 = vmatprep.subr.bf16.mxu0 0
  %4083 = vmatpush1.bf16.msra.mxu0 %v2132
  %4084 = vmatprep.subr.bf16.mxu0 0
  %4085 = vmatpush1.bf16.msra.mxu0 %v2133
  %4086 = vmatprep.subr.bf16.mxu0 0
  %4087 = vmatpush1.bf16.msra.mxu0 %v2134
  %4088 = vmatprep.subr.bf16.mxu0 0
  %4089 = vmatpush1.bf16.msra.mxu0 %v2135
  %4090 = vmatprep.subr.bf16.mxu0 0
  %4091 = vmatpush1.bf16.msra.mxu0 %v2136
  %4092 = vmatprep.mubr.bf16.mxu0 %v4059
  %4093 = vmatmul.mubr.bf16.gmra.mrb[0].mxu0 %v4058
  %v4094 = vpop.f32.mrb[0].mxu0
  %v4095 = vadd.f32 %v2055, %v4094
  %v4096 = vpop.f32.mrb[0].mxu0
  %v4097 = vpop.f32.mrb[0].mxu0
  %v4098 = vpop.f32.mrb[0].mxu0
  %4099 = vdwg.mxu0
  %v4100 = vtanh.pop %v4095
  %v4101 = vpack.c.bf16 %v4100, %v4100
  %4102 = vmatprep.subr.bf16.mxu0 0
  %4103 = vmatpush1.bf16.msra.mxu0 %v2233
  %4104 = vmatprep.subr.bf16.mxu0 0
  %4105 = vmatpush1.bf16.msra.mxu0 %v2234
  %4106 = vmatprep.subr.bf16.mxu0 0
  %4107 = vmatpush1.bf16.msra.mxu0 %v2235
  %4108 = vmatprep.subr.bf16.mxu0 0
  %4109 = vmatpush1.bf16.msra.mxu0 %v2236
  %4110 = vmatprep.subr.bf16.mxu0 0
  %4111 = vmatpush1.bf16.msra.mxu0 %v2237
  %4112 = vmatprep.subr.bf16.mxu0 0
  %4113 = vmatpush1.bf16.msra.mxu0 %v2238
  %4114 = vmatprep.subr.bf16.mxu0 0
  %4115 = vmatpush1.bf16.msra.mxu0 %v2239
  %4116 = vmatprep.subr.bf16.mxu0 0
  %4117 = vmatpush1.bf16.msra.mxu0 %v2240
  %4118 = vmatprep.subr.bf16.mxu0 0
  %4119 = vmatpush1.bf16.msra.mxu0 0
  %4120 = vmatprep.subr.bf16.mxu0 0
  %4121 = vmatpush1.bf16.msra.mxu0 0
  %4122 = vmatprep.subr.bf16.mxu0 0
  %4123 = vmatpush1.bf16.msra.mxu0 0
  %4124 = vmatprep.subr.bf16.mxu0 0
  %4125 = vmatpush1.bf16.msra.mxu0 0
  %4126 = vmatprep.subr.bf16.mxu0 0
  %4127 = vmatpush1.bf16.msra.mxu0 0
  %4128 = vmatprep.subr.bf16.mxu0 0
  %4129 = vmatpush1.bf16.msra.mxu0 0
  %4130 = vmatprep.subr.bf16.mxu0 0
  %4131 = vmatpush1.bf16.msra.mxu0 0
  %4132 = vmatprep.subr.bf16.mxu0 0
  %4133 = vmatpush1.bf16.msra.mxu0 0
  %4134 = vmatprep.mubr.bf16.mxu0 0
  %4135 = vmatmul.mubr.bf16.gmra.mrb[0].mxu0 %v4101
  %v4136 = vpop.f32.mrb[0].mxu0
  %v4137 = vadd.f32 %v2199, %v4136
  %v4138 = vpop.f32.mrb[0].mxu0
  %v4139 = vpop.f32.mrb[0].mxu0
  %v4140 = vpop.f32.mrb[0].mxu0
  %4141 = vdwg.mxu0
  %4142 = vmax.xlane.f32.xlu0 %v4137
  %v4143 = vpop.xlane.xlu0 %4142
  %vm4144 = vcmp.ge.f32.partialorder %v4137, %v4143
  %v4145 = vsel %vm4144, %v1531, 128
  %v4146 = vand.u32 %v4145, 65535
  %v4147 = vshra.s32 %v4145, 16
  %v4148 = vcvt.s32.f32 %v4146
  %v4149 = vcvt.s32.f32 %v4147
  %4150 = vmin.xlane.f32.xlu0 %v4149
  %v4151 = vpop.xlane.xlu0 %4150
  %vm4152 = vcmp.eq.f32.partialorder %v4149, %v4151
  %v4153 = vsel %vm4152, %v4148, inf
  %4154 = vmin.xlane.f32.xlu0 %v4153
  %v4155 = vpop.xlane.xlu0 %4154
  %v4156 = vcvt.f32.s32 %v4155
  %v4157 = vcvt.f32.s32 %v4151
  %v4158 = vshll.u32 %v4157, 16
  %v4159 = vadd.s32 %v4158, %v4156
  %vm4160 = vcmp.eq.s32.totalorder %v1531, %v4159
  %v4161 = vsel %vm4160, 1, 0
  %v4162 = vcvt.s32.f32 %v4161
  %v4163 = vpack.c.bf16 %v4162, %v4162
  %v4164 = vsub.f32 %v4137, %v4143
  %v4165 = vmul.f32 %v4164, 1.442695
  %v4166 = vpow.pop %v4165
  %4167 = vadd.xlane.f32.xlu0 %v4166
  %v4168 = vpop.xlane.xlu0 %4167
  %v4169 = vlog2.pop %v4168
  %v4170 = vmul.f32 %v4169, 0.6931472
  %v4171 = vadd.f32 %v4143, %v4170
  %v4172 = vsub.f32 %v4137, %v4171
  %s4173 = scalar_lea.vmem %s12, 48
  %4174 = vst [vmem:[%s4173] sm:$0xff] %v4172
  %4175 = vmatprep.subr.bf16.mxu0 %v1730
  %4176 = vmatpush1.bf16.msra.mxu0 %v1729
  %4177 = vmatprep.subr.bf16.mxu0 %v1734
  %4178 = vmatpush1.bf16.msra.mxu0 %v1733
  %4179 = vmatprep.subr.bf16.mxu0 %v1738
  %4180 = vmatpush1.bf16.msra.mxu0 %v1737
  %4181 = vmatprep.subr.bf16.mxu0 %v1742
  %4182 = vmatpush1.bf16.msra.mxu0 %v1741
  %4183 = vmatprep.subr.bf16.mxu0 %v1746
  %4184 = vmatpush1.bf16.msra.mxu0 %v1745
  %4185 = vmatprep.subr.bf16.mxu0 %v1750
  %4186 = vmatpush1.bf16.msra.mxu0 %v1749
  %4187 = vmatprep.subr.bf16.mxu0 %v1754
  %4188 = vmatpush1.bf16.msra.mxu0 %v1753
  %4189 = vmatprep.subr.bf16.mxu0 %v1758
  %4190 = vmatpush1.bf16.msra.mxu0 %v1757
  %4191 = vmatprep.subr.bf16.mxu0 %v1762
  %4192 = vmatpush1.bf16.msra.mxu0 %v1761
  %4193 = vmatprep.subr.bf16.mxu0 %v1766
  %4194 = vmatpush1.bf16.msra.mxu0 %v1765
  %4195 = vmatprep.subr.bf16.mxu0 %v1770
  %4196 = vmatpush1.bf16.msra.mxu0 %v1769
  %4197 = vmatprep.subr.bf16.mxu0 %v1774
  %4198 = vmatpush1.bf16.msra.mxu0 %v1773
  %4199 = vmatprep.subr.bf16.mxu0 %v1778
  %4200 = vmatpush1.bf16.msra.mxu0 %v1777
  %4201 = vmatprep.subr.bf16.mxu0 %v1782
  %4202 = vmatpush1.bf16.msra.mxu0 %v1781
  %4203 = vmatprep.subr.bf16.mxu0 %v1786
  %4204 = vmatpush1.bf16.msra.mxu0 %v1785
  %4205 = vmatprep.subr.bf16.mxu0 %v1790
  %4206 = vmatpush1.bf16.msra.mxu0 %v1789
  %4207 = vmatprep.mubr.bf16.mxu0 %v4059
  %4208 = vmatmul.mubr.bf16.gmra.mrb[0].mxu0 %v4163
  %v4209 = vpop.f32.mrb[0].mxu0
  %v4210 = vadd.f32 0.0, %v4209
  %v4211 = vpop.f32.mrb[0].mxu0
  %v4212 = vadd.f32 0.0, %v4211
  %v4213 = vpop.f32.mrb[0].mxu0
  %v4214 = vpop.f32.mrb[0].mxu0
  %4215 = vdwg.mxu0
  %4216 = vmatprep.subr.bf16.mxu0 %v1732
  %4217 = vmatpush1.bf16.msra.mxu0 %v1731
  %4218 = vmatprep.subr.bf16.mxu0 %v1736
  %4219 = vmatpush1.bf16.msra.mxu0 %v1735
  %4220 = vmatprep.subr.bf16.mxu0 %v1740
  %4221 = vmatpush1.bf16.msra.mxu0 %v1739
  %4222 = vmatprep.subr.bf16.mxu0 %v1744
  %4223 = vmatpush1.bf16.msra.mxu0 %v1743
  %4224 = vmatprep.subr.bf16.mxu0 %v1748
  %4225 = vmatpush1.bf16.msra.mxu0 %v1747
  %4226 = vmatprep.subr.bf16.mxu0 %v1752
  %4227 = vmatpush1.bf16.msra.mxu0 %v1751
  %4228 = vmatprep.subr.bf16.mxu0 %v1756
  %4229 = vmatpush1.bf16.msra.mxu0 %v1755
  %4230 = vmatprep.subr.bf16.mxu0 %v1760
  %4231 = vmatpush1.bf16.msra.mxu0 %v1759
  %4232 = vmatprep.subr.bf16.mxu0 %v1764
  %4233 = vmatpush1.bf16.msra.mxu0 %v1763
  %4234 = vmatprep.subr.bf16.mxu0 %v1768
  %4235 = vmatpush1.bf16.msra.mxu0 %v1767
  %4236 = vmatprep.subr.bf16.mxu0 %v1772
  %4237 = vmatpush1.bf16.msra.mxu0 %v1771
  %4238 = vmatprep.subr.bf16.mxu0 %v1776
  %4239 = vmatpush1.bf16.msra.mxu0 %v1775
  %4240 = vmatprep.subr.bf16.mxu0 %v1780
  %4241 = vmatpush1.bf16.msra.mxu0 %v1779
  %4242 = vmatprep.subr.bf16.mxu0 %v1784
  %4243 = vmatpush1.bf16.msra.mxu0 %v1783
  %4244 = vmatprep.subr.bf16.mxu0 %v1788
  %4245 = vmatpush1.bf16.msra.mxu0 %v1787
  %4246 = vmatprep.subr.bf16.mxu0 %v1792
  %4247 = vmatpush1.bf16.msra.mxu0 %v1791
  %4248 = vmatprep.mubr.bf16.mxu0 %v4059
  %4249 = vmatmul.mubr.bf16.gmra.mrb[0].mxu0 %v4163
  %v4250 = vpop.f32.mrb[0].mxu0
  %v4251 = vadd.f32 0.0, %v4250
  %v4252 = vpop.f32.mrb[0].mxu0
  %v4253 = vadd.f32 0.0, %v4252
  %v4254 = vpop.f32.mrb[0].mxu0
  %v4255 = vpop.f32.mrb[0].mxu0
  %4256 = vdwg.mxu0
  %v4257 = vxor.u32 %v4210, 2147483648
  %v4258 = vmul.f32 %v4257, 1.442695
  %v4259 = vpow.pop %v4258
  %v4260 = vadd.f32 %v4259, 1.0
  %v4261 = vrcp.pop %v4260
  %v4262 = vmul.f32 1.0, %v4261
  %v4263 = vxor.u32 %v4212, 2147483648
  %v4264 = vmul.f32 %v4263, 1.442695
  %v4265 = vpow.pop %v4264
  %v4266 = vadd.f32 %v4265, 1.0
  %v4267 = vrcp.pop %v4266
  %v4268 = vmul.f32 1.0, %v4267
  %v4269 = vtanh.pop %v4251
  %v4270 = vxor.u32 %v4253, 2147483648
  %v4271 = vmul.f32 %v4270, 1.442695
  %v4272 = vpow.pop %v4271
  %v4273 = vadd.f32 %v4272, 1.0
  %v4274 = vrcp.pop %v4273
  %v4275 = vmul.f32 1.0, %v4274
  %v4276 = vmul.f32 %v4268, %v3969
  %v4277 = vmul.f32 %v4262, %v4269
  %v4278 = vadd.f32 %v4276, %v4277
  %v4279 = vtanh.pop %v4278
  %v4280 = vmul.f32 %v4275, %v4279
  %v4281 = vmul.f32 %v352, %v4280
  %4282 = vadd.xlane.f32.xlu0 %v4281
  %v4283 = vpop.xlane.xlu0 %4282
  %v4284 = vmul.f32 %v475, %v4280
  %4285 = vadd.xlane.f32.xlu0 %v4284
  %v4286 = vpop.xlane.xlu0 %4285
  %v4287 = vmul.f32 %v598, %v4280
  %4288 = vadd.xlane.f32.xlu0 %v4287
  %v4289 = vpop.xlane.xlu0 %4288
  %v4290 = vmul.f32 %v721, %v4280
  %4291 = vadd.xlane.f32.xlu0 %v4290
  %v4292 = vpop.xlane.xlu0 %4291
  %v4293 = vmul.f32 %v844, %v4280
  %4294 = vadd.xlane.f32.xlu0 %v4293
  %v4295 = vpop.xlane.xlu0 %4294
  %v4296 = vmul.f32 %v967, %v4280
  %4297 = vadd.xlane.f32.xlu0 %v4296
  %v4298 = vpop.xlane.xlu0 %4297
  %v4299 = vmul.f32 %v1090, %v4280
  %4300 = vadd.xlane.f32.xlu0 %v4299
  %v4301 = vpop.xlane.xlu0 %4300
  %v4302 = vmul.f32 %v1213, %v4280
  %4303 = vadd.xlane.f32.xlu0 %v4302
  %v4304 = vpop.xlane.xlu0 %4303
  %v4305 = vmax.f32 %v4283, %v4286
  %v4306 = vmax.f32 %v4305, %v4289
  %v4307 = vmax.f32 %v4306, %v4292
  %v4308 = vmax.f32 %v4307, %v4295
  %v4309 = vmax.f32 %v4308, %v4298
  %v4310 = vmax.f32 %v4309, %v4301
  %v4311 = vmax.f32 %v4310, %v4304
  %v4312 = vsub.f32 %v4283, %v4311
  %v4313 = vmul.f32 %v4312, 1.442695
  %v4314 = vpow.pop %v4313
  %v4315 = vsub.f32 %v4286, %v4311
  %v4316 = vmul.f32 %v4315, 1.442695
  %v4317 = vpow.pop %v4316
  %v4318 = vsub.f32 %v4289, %v4311
  %v4319 = vmul.f32 %v4318, 1.442695
  %v4320 = vpow.pop %v4319
  %v4321 = vsub.f32 %v4292, %v4311
  %v4322 = vmul.f32 %v4321, 1.442695
  %v4323 = vpow.pop %v4322
  %v4324 = vsub.f32 %v4295, %v4311
  %v4325 = vmul.f32 %v4324, 1.442695
  %v4326 = vpow.pop %v4325
  %v4327 = vsub.f32 %v4298, %v4311
  %v4328 = vmul.f32 %v4327, 1.442695
  %v4329 = vpow.pop %v4328
  %v4330 = vsub.f32 %v4301, %v4311
  %v4331 = vmul.f32 %v4330, 1.442695
  %v4332 = vpow.pop %v4331
  %v4333 = vsub.f32 %v4304, %v4311
  %v4334 = vmul.f32 %v4333, 1.442695
  %v4335 = vpow.pop %v4334
  %v4336 = vadd.f32 %v4314, %v4317
  %v4337 = vadd.f32 %v4336, %v4320
  %v4338 = vadd.f32 %v4337, %v4323
  %v4339 = vadd.f32 %v4338, %v4326
  %v4340 = vadd.f32 %v4339, %v4329
  %v4341 = vadd.f32 %v4340, %v4332
  %v4342 = vadd.f32 %v4341, %v4335
  %v4343 = vrcp.pop %v4342
  %v4344 = vmul.f32 %v4314, %v4343
  %v4345 = vmul.f32 %v4344, %v352
  %v4346 = vmul.f32 %v4317, %v4343
  %v4347 = vmul.f32 %v4346, %v475
  %v4348 = vadd.f32 %v4345, %v4347
  %v4349 = vmul.f32 %v4320, %v4343
  %v4350 = vmul.f32 %v4349, %v598
  %v4351 = vadd.f32 %v4348, %v4350
  %v4352 = vmul.f32 %v4323, %v4343
  %v4353 = vmul.f32 %v4352, %v721
  %v4354 = vadd.f32 %v4351, %v4353
  %v4355 = vmul.f32 %v4326, %v4343
  %v4356 = vmul.f32 %v4355, %v844
  %v4357 = vadd.f32 %v4354, %v4356
  %v4358 = vmul.f32 %v4329, %v4343
  %v4359 = vmul.f32 %v4358, %v967
  %v4360 = vadd.f32 %v4357, %v4359
  %v4361 = vmul.f32 %v4332, %v4343
  %v4362 = vmul.f32 %v4361, %v1090
  %v4363 = vadd.f32 %v4360, %v4362
  %v4364 = vmul.f32 %v4335, %v4343
  %v4365 = vmul.f32 %v4364, %v1213
  %v4366 = vadd.f32 %v4363, %v4365
  %v4367 = vpack.c.bf16 %v4366, %v4366
  %v4368 = vpack.c.bf16 %v4280, %v4280
  %4369 = vmatprep.subr.bf16.mxu0 0
  %4370 = vmatpush1.bf16.msra.mxu0 %v2121
  %4371 = vmatprep.subr.bf16.mxu0 0
  %4372 = vmatpush1.bf16.msra.mxu0 %v2122
  %4373 = vmatprep.subr.bf16.mxu0 0
  %4374 = vmatpush1.bf16.msra.mxu0 %v2123
  %4375 = vmatprep.subr.bf16.mxu0 0
  %4376 = vmatpush1.bf16.msra.mxu0 %v2124
  %4377 = vmatprep.subr.bf16.mxu0 0
  %4378 = vmatpush1.bf16.msra.mxu0 %v2125
  %4379 = vmatprep.subr.bf16.mxu0 0
  %4380 = vmatpush1.bf16.msra.mxu0 %v2126
  %4381 = vmatprep.subr.bf16.mxu0 0
  %4382 = vmatpush1.bf16.msra.mxu0 %v2127
  %4383 = vmatprep.subr.bf16.mxu0 0
  %4384 = vmatpush1.bf16.msra.mxu0 %v2128
  %4385 = vmatprep.subr.bf16.mxu0 0
  %4386 = vmatpush1.bf16.msra.mxu0 %v2129
  %4387 = vmatprep.subr.bf16.mxu0 0
  %4388 = vmatpush1.bf16.msra.mxu0 %v2130
  %4389 = vmatprep.subr.bf16.mxu0 0
  %4390 = vmatpush1.bf16.msra.mxu0 %v2131
  %4391 = vmatprep.subr.bf16.mxu0 0
  %4392 = vmatpush1.bf16.msra.mxu0 %v2132
  %4393 = vmatprep.subr.bf16.mxu0 0
  %4394 = vmatpush1.bf16.msra.mxu0 %v2133
  %4395 = vmatprep.subr.bf16.mxu0 0
  %4396 = vmatpush1.bf16.msra.mxu0 %v2134
  %4397 = vmatprep.subr.bf16.mxu0 0
  %4398 = vmatpush1.bf16.msra.mxu0 %v2135
  %4399 = vmatprep.subr.bf16.mxu0 0
  %4400 = vmatpush1.bf16.msra.mxu0 %v2136
  %4401 = vmatprep.mubr.bf16.mxu0 %v4368
  %4402 = vmatmul.mubr.bf16.gmra.mrb[0].mxu0 %v4367
  %v4403 = vpop.f32.mrb[0].mxu0
  %v4404 = vadd.f32 %v2055, %v4403
  %v4405 = vpop.f32.mrb[0].mxu0
  %v4406 = vpop.f32.mrb[0].mxu0
  %v4407 = vpop.f32.mrb[0].mxu0
  %4408 = vdwg.mxu0
  %v4409 = vtanh.pop %v4404
  %v4410 = vpack.c.bf16 %v4409, %v4409
  %4411 = vmatprep.subr.bf16.mxu0 0
  %4412 = vmatpush1.bf16.msra.mxu0 %v2233
  %4413 = vmatprep.subr.bf16.mxu0 0
  %4414 = vmatpush1.bf16.msra.mxu0 %v2234
  %4415 = vmatprep.subr.bf16.mxu0 0
  %4416 = vmatpush1.bf16.msra.mxu0 %v2235
  %4417 = vmatprep.subr.bf16.mxu0 0
  %4418 = vmatpush1.bf16.msra.mxu0 %v2236
  %4419 = vmatprep.subr.bf16.mxu0 0
  %4420 = vmatpush1.bf16.msra.mxu0 %v2237
  %4421 = vmatprep.subr.bf16.mxu0 0
  %4422 = vmatpush1.bf16.msra.mxu0 %v2238
  %4423 = vmatprep.subr.bf16.mxu0 0
  %4424 = vmatpush1.bf16.msra.mxu0 %v2239
  %4425 = vmatprep.subr.bf16.mxu0 0
  %4426 = vmatpush1.bf16.msra.mxu0 %v2240
  %4427 = vmatprep.subr.bf16.mxu0 0
  %4428 = vmatpush1.bf16.msra.mxu0 0
  %4429 = vmatprep.subr.bf16.mxu0 0
  %4430 = vmatpush1.bf16.msra.mxu0 0
  %4431 = vmatprep.subr.bf16.mxu0 0
  %4432 = vmatpush1.bf16.msra.mxu0 0
  %4433 = vmatprep.subr.bf16.mxu0 0
  %4434 = vmatpush1.bf16.msra.mxu0 0
  %4435 = vmatprep.subr.bf16.mxu0 0
  %4436 = vmatpush1.bf16.msra.mxu0 0
  %4437 = vmatprep.subr.bf16.mxu0 0
  %4438 = vmatpush1.bf16.msra.mxu0 0
  %4439 = vmatprep.subr.bf16.mxu0 0
  %4440 = vmatpush1.bf16.msra.mxu0 0
  %4441 = vmatprep.subr.bf16.mxu0 0
  %4442 = vmatpush1.bf16.msra.mxu0 0
  %4443 = vmatprep.mubr.bf16.mxu0 0
  %4444 = vmatmul.mubr.bf16.gmra.mrb[0].mxu0 %v4410
  %v4445 = vpop.f32.mrb[0].mxu0
  %v4446 = vadd.f32 %v2199, %v4445
  %v4447 = vpop.f32.mrb[0].mxu0
  %v4448 = vpop.f32.mrb[0].mxu0
  %v4449 = vpop.f32.mrb[0].mxu0
  %4450 = vdwg.mxu0
  %4451 = vmax.xlane.f32.xlu0 %v4446
  %v4452 = vpop.xlane.xlu0 %4451
  %v4453 = vsub.f32 %v4446, %v4452
  %v4454 = vmul.f32 %v4453, 1.442695
  %v4455 = vpow.pop %v4454
  %4456 = vadd.xlane.f32.xlu0 %v4455
  %v4457 = vpop.xlane.xlu0 %4456
  %v4458 = vlog2.pop %v4457
  %v4459 = vmul.f32 %v4458, 0.6931472
  %v4460 = vadd.f32 %v4452, %v4459
  %v4461 = vsub.f32 %v4446, %v4460
  %s4462 = scalar_lea.vmem %s12, 56
  %4463 = vst [vmem:[%s4462] sm:$0xff] %v4461
  // Predicated region
  $region46: #{autos_forward.1} parent=0 // pred_check
    _
  $region47: #{autos_forward.1} parent=0 // pred_check_branch
    %4465 = sbr.rel (0) target = $region49
  $region48: #{autos_forward.1} parent=0 // pred_region
    _
  $region49: #{autos_forward.1} parent=0 // pred_fallthru
    _
  // Predicated region
  $region50: #{autos_forward.1} parent=0 // pred_check
    _
  $region51: #{autos_forward.1} parent=0 // pred_check_branch
    %4467 = sbr.rel (0) target = $region53
  $region52: #{autos_forward.1} parent=0 // pred_region
    _
  $region53: #{autos_forward.1} parent=0 // pred_fallthru
    _
  // Predicated region
  $region54: #{autos_forward.1} parent=0 // pred_check
    _
  $region55: #{autos_forward.1} parent=0 // pred_check_branch
    %4469 = sbr.rel (0) target = $region57
  $region56: #{autos_forward.1} parent=0 // pred_region
    _
  $region57: #{autos_forward.1} parent=0 // pred_fallthru
    _
  // Predicated region
  $region58: #{autos_forward.1} parent=0 // pred_check
    _
  $region59: #{autos_forward.1} parent=0 // pred_check_branch
    %4471 = sbr.rel (0) target = $region61
  $region60: #{autos_forward.1} parent=0 // pred_region
    _
  $region61: #{autos_forward.1} parent=0 // pred_fallthru
    _

</llo_original>
